<compile_context>
chip_gen: v7x
topology: tpu7x:2x2x1
jax: 0.10.0
libtpu: 0.0.40
codegen_flags: <defaults>
</compile_context>

<pallas_src>
import functools

import numpy as np
import jax
import jax.numpy as jnp
from jax.experimental import pallas as pl
from jax.experimental.pallas import tpu as pltpu

# ---------------- config (stand-in for argparse args) ----------------
N_CLASSES = 4
LATENT_DIM = 8
IMG_SIZE = 16
CHANNELS = 3
INIT_SIZE = IMG_SIZE // 2 ** 3          # 2
BATCH = 2
C0 = 128                                # width of the conv trunk

# ConvTranspose2d(k=4, s=2, p=1), per spatial dim, split by output parity:
#   out[2q + 0] = x[q-1]*w[3] + x[q]*w[1]
#   out[2q + 1] = x[q  ]*w[2] + x[q+1]*w[0]
_TAPS = {0: ((-1, 3), (0, 1)), 1: ((0, 2), (1, 0))}     # phase -> ((d, k), (d, k))


def _phase_slots():
    slots = []
    for py in range(2):
        for px in range(2):
            s = []
            for dy, kh in _TAPS[py]:
                for dx, kw in _TAPS[px]:
                    s.append((dy, kh, dx, kw))
            slots.append(tuple(s))
    return tuple(slots)


_PHASE_SLOTS = _phase_slots()
# shift id = (dy+1)*3 + (dx+1), matching the row-block order of the S matrices.
_PHASE_SHIFT_IDS = tuple(
    tuple((dy + 1) * 3 + (dx + 1) for (dy, _, dx, _) in slots)
    for slots in _PHASE_SLOTS)


def _full_spec(shape):
    nd = len(shape)
    return pl.BlockSpec(shape, lambda *_: (0,) * nd)


# ---------------- constant structure matrices (built once, in numpy) ----------------
@functools.lru_cache(maxsize=None)
def _structure_mats(batch):
    def ridx(h, w, b, wdim):                       # rows ordered (h, w, b)
        return (h * wdim + w) * batch + b

    def shift_stack(hdim, wdim):
        # Row-stack of the 9 boundary-zero shift operators (dy, dx in {-1,0,1}).
        rr = hdim * wdim * batch
        s = np.zeros((9 * rr, rr), np.float32)
        for dy in (-1, 0, 1):
            for dx in (-1, 0, 1):
                blk = ((dy + 1) * 3 + (dx + 1)) * rr
                for h in range(hdim):
                    hs = h + dy
                    if not 0 <= hs < hdim:
                        continue
                    for w in range(wdim):
                        ws = w + dx
                        if not 0 <= ws < wdim:
                            continue
                        for b in range(batch):
                            s[blk + ridx(h, w, b, wdim), ridx(hs, ws, b, wdim)] = 1.0
        return s

    def interleave(hdim, wdim):
        # Permutation: phase-blocked rows (p*R + r) -> full-res rows
        # ((2q+py)*2W + 2r+px)*B + b.
        rr = hdim * wdim * batch
        m = np.zeros((4 * rr, 4 * rr), np.float32)
        for py in range(2):
            for px in range(2):
                p = py * 2 + px
                for q in range(hdim):
                    for r in range(wdim):
                        for b in range(batch):
                            n = ((2 * q + py) * (2 * wdim) + (2 * r + px)) * batch + b
                            m[n, p * rr + ridx(q, r, b, wdim)] = 1.0
        return m

    h1 = INIT_SIZE
    s1 = shift_stack(h1, h1)
    i1 = interleave(h1, h1)
    s2 = shift_stack(2 * h1, 2 * h1)
    i2 = interleave(2 * h1, 2 * h1)
    s3 = shift_stack(4 * h1, 4 * h1)
    i3 = interleave(4 * h1, 4 * h1)
    m2 = s2 @ i1          # fold conv1's phase interleave into conv2's shifts
    m3 = s3 @ i2          # fold conv2's phase interleave into conv3's shifts
    return (jnp.asarray(s1), jnp.asarray(m2), jnp.asarray(m3), jnp.asarray(i3))


# ---------------- in-kernel helpers ----------------
def _bn(x, g, b, eps):
    n = x.shape[0]
    mean = jnp.sum(x, axis=0, keepdims=True) * (1.0 / n)
    xc = x - mean
    var = jnp.sum(xc * xc, axis=0, keepdims=True) * (1.0 / n)     # biased var
    return xc * jax.lax.rsqrt(var + eps) * g + b


def _leaky(x):
    return jnp.where(x > 0, x, 0.2 * x)


def _phase_conv(xs_all, w_ref, r):
    """xs_all: (9r, Cin) row-stack of the 9 shifted inputs.
       w_ref[p]: (4*Cin, Cout).  Returns (4r, Cout) row-concat of phase outputs."""
    outs = []
    for p in range(4):
        patches = jnp.concatenate(
            [xs_all[s * r:(s + 1) * r, :] for s in _PHASE_SHIFT_IDS[p]], axis=1)
        outs.append(jnp.dot(patches, w_ref[p],
                            preferred_element_type=jnp.float32))
    return jnp.concatenate(outs, axis=0)


# ---------------- the fused generator kernel ----------------
def _generator_kernel(linx_ref, wl_ref, bl_ref,
                      g1_ref, b1_ref, g2_ref, b2_ref,
                      s1_ref, w1_ref, cb1_ref,
                      m2_ref, w2_ref, cb2_ref,
                      m3_ref, w3_ref, cb3_ref,
                      i3_ref, out_ref):
    r1 = s1_ref.shape[1]                       # init^2 * B

    # Linear: (init^2*B, s0*din) @ (s0*din, 128) -> rows (spatial, batch), lanes=channel
    x = jnp.dot(linx_ref[...], wl_ref[...],
                preferred_element_type=jnp.float32) + bl_ref[...]
    x = _bn(x, g1_ref[...], b1_ref[...], 1e-5)                    # BatchNorm2d(128)

    # ConvT1 128 -> 128
    xs = jnp.dot(s1_ref[...], x, preferred_element_type=jnp.float32)
    x = _phase_conv(xs, w1_ref, r1) + cb1_ref[...]
    x = _leaky(_bn(x, g2_ref[...], b2_ref[...], 0.8))             # BN(eps=0.8)+LeakyReLU

    # ConvT2 128 -> 64 (channels zero-padded to 128 lanes)
    xs = jnp.dot(m2_ref[...], x, preferred_element_type=jnp.float32)
    x = _leaky(_phase_conv(xs, w2_ref, 4 * r1) + cb2_ref[...])

    # ConvT3 64 -> channels, Tanh
    xs = jnp.dot(m3_ref[...], x, preferred_element_type=jnp.float32)
    x = jnp.tanh(_phase_conv(xs, w3_ref, 16 * r1) + cb3_ref[...])

    # Undo phase blocking: permute rows to (oy*W + ox)*B + b order.
    out_ref[...] = jnp.dot(i3_ref[...], x, preferred_element_type=jnp.float32)


# ---------------- parameter init (torch layout) & preparation ----------------
def init_raw_params(key):
    ks = jax.random.split(key, 8)

    def rnd(k, shape, scale):
        return scale * jax.random.normal(k, shape, jnp.float32)

    din = LATENT_DIM + N_CLASSES
    dout = C0 * INIT_SIZE ** 2
    return {
        "emb":   rnd(ks[0], (N_CLASSES, N_CLASSES), 1.0),
        "lin_w": rnd(ks[1], (dout, din), 0.05),
        "lin_b": rnd(ks[2], (dout,), 0.05),
        "bn1_g": jnp.ones((C0,), jnp.float32),
        "bn1_b": jnp.zeros((C0,), jnp.float32),
        "ct1_w": rnd(ks[3], (C0, C0, 4, 4), 0.05),
        "ct1_b": rnd(ks[4], (C0,), 0.05),
        "bn2_g": jnp.ones((C0,), jnp.float32),
        "bn2_b": jnp.zeros((C0,), jnp.float32),
        "ct2_w": rnd(ks[5], (C0, 64, 4, 4), 0.05),
        "ct2_b": rnd(ks[6], (64,), 0.05),
        "ct3_w": rnd(ks[7], (64, CHANNELS, 4, 4), 0.05),
        "ct3_b": jnp.zeros((CHANNELS,), jnp.float32),
    }


def _phase_weights(w_pt):
    """PyTorch ConvTranspose2d weight (Cin, Cout, 4, 4) -> (4, 4*Cin, Cout)."""
    blocks = []
    for slots in _PHASE_SLOTS:
        blocks.append(jnp.concatenate(
            [w_pt[:, :, kh, kw] for (_, kh, _, kw) in slots], axis=0))
    return jnp.stack(blocks, axis=0)


def prepare_params(raw, batch):
    s0 = INIT_SIZE ** 2
    din = LATENT_DIM + N_CLASSES
    # Linear weight arranged so one (s0*B, s0*din) @ (s0*din, 128) dot directly
    # emits rows ordered (spatial, batch) with channels on lanes.
    w_lin = (raw["lin_w"].reshape(C0, s0, din)     # (c, s, k)
             .transpose(1, 2, 0)                   # (s, k, c)
             .reshape(s0 * din, C0))
    b_lin = jnp.repeat(raw["lin_b"].reshape(C0, s0).T, batch, axis=0)   # (s0*B, 128)

    w2p = jnp.pad(_phase_weights(raw["ct2_w"]), ((0, 0), (0, 0), (0, C0 - 64)))
    cb2 = jnp.pad(raw["ct2_b"], (0, C0 - 64)).reshape(1, C0)
    ct3_w_pad = jnp.pad(raw["ct3_w"], ((0, C0 - 64), (0, 0), (0, 0), (0, 0)))

    return {
        "emb": raw["emb"],
        "w_lin": w_lin, "b_lin": b_lin,
        "bn1_g": raw["bn1_g"].reshape(1, C0), "bn1_b": raw["bn1_b"].reshape(1, C0),
        "bn2_g": raw["bn2_g"].reshape(1, C0), "bn2_b": raw["bn2_b"].reshape(1, C0),
        "w1p": _phase_weights(raw["ct1_w"]), "cb1": raw["ct1_b"].reshape(1, C0),
        "w2p": w2p, "cb2": cb2,
        "w3p": _phase_weights(ct3_w_pad), "cb3": raw["ct3_b"].reshape(1, CHANNELS),
    }


# ---------------- full generator forward ----------------
def generator_forward(params, z, label):
    batch = z.shape[0]
    s0 = INIT_SIZE ** 2

    emb = params["emb"][label]                       # embedding gather (XLA glue)
    lin_in = jnp.concatenate([z, emb], axis=1)       # (B, latent + n_classes)
    # Block-diagonal expansion so the fused kernel's first dot produces the
    # (spatial, batch)-ordered activation directly (tiny XLA op on (B, din)).
    lin_big = jnp.kron(jnp.eye(s0, dtype=lin_in.dtype), lin_in)   # (s0*B, s0*din)

    s1, m2, m3, i3 = _structure_mats(batch)
    args = (lin_big, params["w_lin"], params["b_lin"],
            params["bn1_g"], params["bn1_b"], params["bn2_g"], params["bn2_b"],
            s1, params["w1p"], params["cb1"],
            m2, params["w2p"], params["cb2"],
            m3, params["w3p"], params["cb3"],
            i3)
    rows_out = IMG_SIZE * IMG_SIZE * batch
    out2d = pl.pallas_call(
        _generator_kernel,
        out_shape=jax.ShapeDtypeStruct((rows_out, CHANNELS), jnp.float32),
        grid=(1,),
        in_specs=[_full_spec(a.shape) for a in args],
        out_specs=_full_spec((rows_out, CHANNELS)),
        compiler_params=pltpu.CompilerParams(
            dimension_semantics=("arbitrary",)),
    )(*args)

    # rows are (oy*W + ox)*B + b  ->  NCHW (tiny 6 KB transpose outside).
    # TODO(synk): emitting a lane-dense NCHW slab directly from the kernel would
    # need an in-kernel lane<->sublane relayout; skipped (output is only 6 KB).
    return out2d.reshape(IMG_SIZE, IMG_SIZE, batch, CHANNELS).transpose(2, 3, 0, 1)


if __name__ == "__main__":
    key = jax.random.PRNGKey(0)
    kp, kz, kl = jax.random.split(key, 3)
    raw = init_raw_params(kp)
    params = prepare_params(raw, BATCH)

    z = jax.random.normal(kz, (BATCH, LATENT_DIM), jnp.float32)
    label = jax.random.randint(kl, (BATCH,), 0, N_CLASSES)

    img = jax.jit(generator_forward)(params, z, label)
    jax.block_until_ready(img)

    assert img.shape == (BATCH, CHANNELS, IMG_SIZE, IMG_SIZE), img.shape
    assert bool(jnp.all(jnp.isfinite(img)))
    print("KERNEL_OK")
</pallas_src>

<mosaic_0001>
module attributes {stable_mosaic.version = 11 : i64} {
  func.func @_generator_kernel(%arg0: i32, %arg1: memref<8x48xf32, #tpu.memory_space<vmem>>, %arg2: memref<48x128xf32, #tpu.memory_space<vmem>>, %arg3: memref<8x128xf32, #tpu.memory_space<vmem>>, %arg4: memref<1x128xf32, #tpu.memory_space<vmem>>, %arg5: memref<1x128xf32, #tpu.memory_space<vmem>>, %arg6: memref<1x128xf32, #tpu.memory_space<vmem>>, %arg7: memref<1x128xf32, #tpu.memory_space<vmem>>, %arg8: memref<72x8xf32, #tpu.memory_space<vmem>>, %arg9: memref<4x512x128xf32, #tpu.memory_space<vmem>>, %arg10: memref<1x128xf32, #tpu.memory_space<vmem>>, %arg11: memref<288x32xf32, #tpu.memory_space<vmem>>, %arg12: memref<4x512x128xf32, #tpu.memory_space<vmem>>, %arg13: memref<1x128xf32, #tpu.memory_space<vmem>>, %arg14: memref<1152x128xf32, #tpu.memory_space<vmem>>, %arg15: memref<4x512x3xf32, #tpu.memory_space<vmem>>, %arg16: memref<1x3xf32, #tpu.memory_space<vmem>>, %arg17: memref<512x512xf32, #tpu.memory_space<vmem>>, %arg18: memref<512x3xf32, #tpu.memory_space<vmem>>) attributes {dimension_semantics = [#tpu.dimension_semantics<arbitrary>], iteration_bounds = array<i64: 1>, scalar_prefetch = 0 : i64, scratch_operands = 0 : i64, tpu.core_type = #tpu.core_type<tc>, window_params = [{pipeline_mode = #tpu.pipeline_mode<synchronous>, transform_indices = @transform_0, window_bounds = array<i64: 8, 48>}, {pipeline_mode = #tpu.pipeline_mode<synchronous>, transform_indices = @transform_1, window_bounds = array<i64: 48, 128>}, {pipeline_mode = #tpu.pipeline_mode<synchronous>, transform_indices = @transform_2, window_bounds = array<i64: 8, 128>}, {pipeline_mode = #tpu.pipeline_mode<synchronous>, transform_indices = @transform_3, window_bounds = array<i64: 1, 128>}, {pipeline_mode = #tpu.pipeline_mode<synchronous>, transform_indices = @transform_4, window_bounds = array<i64: 1, 128>}, {pipeline_mode = #tpu.pipeline_mode<synchronous>, transform_indices = @transform_5, window_bounds = array<i64: 1, 128>}, {pipeline_mode = #tpu.pipeline_mode<synchronous>, transform_indices = @transform_6, window_bounds = array<i64: 1, 128>}, {pipeline_mode = #tpu.pipeline_mode<synchronous>, transform_indices = @transform_7, window_bounds = array<i64: 72, 8>}, {pipeline_mode = #tpu.pipeline_mode<synchronous>, transform_indices = @transform_8, window_bounds = array<i64: 4, 512, 128>}, {pipeline_mode = #tpu.pipeline_mode<synchronous>, transform_indices = @transform_9, window_bounds = array<i64: 1, 128>}, {pipeline_mode = #tpu.pipeline_mode<synchronous>, transform_indices = @transform_10, window_bounds = array<i64: 288, 32>}, {pipeline_mode = #tpu.pipeline_mode<synchronous>, transform_indices = @transform_11, window_bounds = array<i64: 4, 512, 128>}, {pipeline_mode = #tpu.pipeline_mode<synchronous>, transform_indices = @transform_12, window_bounds = array<i64: 1, 128>}, {pipeline_mode = #tpu.pipeline_mode<synchronous>, transform_indices = @transform_13, window_bounds = array<i64: 1152, 128>}, {pipeline_mode = #tpu.pipeline_mode<synchronous>, transform_indices = @transform_14, window_bounds = array<i64: 4, 512, 3>}, {pipeline_mode = #tpu.pipeline_mode<synchronous>, transform_indices = @transform_15, window_bounds = array<i64: 1, 3>}, {pipeline_mode = #tpu.pipeline_mode<synchronous>, transform_indices = @transform_16, window_bounds = array<i64: 512, 512>}, {pipeline_mode = #tpu.pipeline_mode<synchronous>, transform_indices = @transform_17, window_bounds = array<i64: 512, 3>}]} {
    %c0 = arith.constant 0 : index
    %c0_0 = arith.constant 0 : index
    %0 = vector.load %arg1[%c0, %c0_0] : memref<8x48xf32, #tpu.memory_space<vmem>>, vector<8x48xf32>
    %c0_1 = arith.constant 0 : index
    %c0_2 = arith.constant 0 : index
    %1 = vector.load %arg2[%c0_1, %c0_2] : memref<48x128xf32, #tpu.memory_space<vmem>>, vector<48x128xf32>
    %cst = arith.constant dense<0.000000e+00> : vector<8x128xf32>
    %2 = tpu.matmul %0, %1, %cst {dimension_numbers = #tpu.dot_dimension_numbers<[1], [0], [0], [1], [0, 0, 1, 1], [], []>} : vector<8x48xf32>, vector<48x128xf32>, vector<8x128xf32> -> vector<8x128xf32>
    %c0_3 = arith.constant 0 : index
    %c0_4 = arith.constant 0 : index
    %3 = vector.load %arg3[%c0_3, %c0_4] : memref<8x128xf32, #tpu.memory_space<vmem>>, vector<8x128xf32>
    %4 = arith.addf %2, %3 : vector<8x128xf32>
    %c0_5 = arith.constant 0 : index
    %c0_6 = arith.constant 0 : index
    %5 = vector.load %arg4[%c0_5, %c0_6] : memref<1x128xf32, #tpu.memory_space<vmem>>, vector<1x128xf32>
    %c0_7 = arith.constant 0 : index
    %c0_8 = arith.constant 0 : index
    %6 = vector.load %arg5[%c0_7, %c0_8] : memref<1x128xf32, #tpu.memory_space<vmem>>, vector<1x128xf32>
    %cst_9 = arith.constant dense<0.000000e+00> : vector<128xf32>
    %7 = vector.multi_reduction <add>, %4, %cst_9 [0] : vector<8x128xf32> to vector<128xf32>
    %8 = vector.shape_cast %7 : vector<128xf32> to vector<1x128xf32>
    %cst_10 = arith.constant 1.250000e-01 : f32
    %9 = vector.broadcast %cst_10 : f32 to vector<1x128xf32>
    %10 = arith.mulf %8, %9 : vector<1x128xf32>
    %11 = vector.broadcast %10 : vector<1x128xf32> to vector<8x128xf32>
    %12 = arith.subf %4, %11 : vector<8x128xf32>
    %13 = arith.mulf %12, %12 : vector<8x128xf32>
    %cst_11 = arith.constant dense<0.000000e+00> : vector<128xf32>
    %14 = vector.multi_reduction <add>, %13, %cst_11 [0] : vector<8x128xf32> to vector<128xf32>
    %15 = vector.shape_cast %14 : vector<128xf32> to vector<1x128xf32>
    %cst_12 = arith.constant 1.250000e-01 : f32
    %16 = vector.broadcast %cst_12 : f32 to vector<1x128xf32>
    %17 = arith.mulf %15, %16 : vector<1x128xf32>
    %cst_13 = arith.constant 9.99999974E-6 : f32
    %18 = vector.broadcast %cst_13 : f32 to vector<1x128xf32>
    %19 = arith.addf %17, %18 : vector<1x128xf32>
    %20 = math.rsqrt %19 : vector<1x128xf32>
    %21 = vector.broadcast %20 : vector<1x128xf32> to vector<8x128xf32>
    %22 = arith.mulf %12, %21 : vector<8x128xf32>
    %23 = vector.broadcast %5 : vector<1x128xf32> to vector<8x128xf32>
    %24 = arith.mulf %22, %23 : vector<8x128xf32>
    %25 = vector.broadcast %6 : vector<1x128xf32> to vector<8x128xf32>
    %26 = arith.addf %24, %25 : vector<8x128xf32>
    %c0_14 = arith.constant 0 : index
    %c0_15 = arith.constant 0 : index
    %27 = vector.load %arg8[%c0_14, %c0_15] : memref<72x8xf32, #tpu.memory_space<vmem>>, vector<72x8xf32>
    %cst_16 = arith.constant dense<0.000000e+00> : vector<72x128xf32>
    %28 = tpu.matmul %27, %26, %cst_16 {dimension_numbers = #tpu.dot_dimension_numbers<[1], [0], [0], [1], [0, 0, 1, 1], [], []>} : vector<72x8xf32>, vector<8x128xf32>, vector<72x128xf32> -> vector<72x128xf32>
    %29 = vector.extract_strided_slice %28 {offsets = [0, 0], sizes = [8, 128], strides = [1, 1]} : vector<72x128xf32> to vector<8x128xf32>
    %30 = vector.extract_strided_slice %28 {offsets = [8, 0], sizes = [8, 128], strides = [1, 1]} : vector<72x128xf32> to vector<8x128xf32>
    %31 = vector.extract_strided_slice %28 {offsets = [24, 0], sizes = [8, 128], strides = [1, 1]} : vector<72x128xf32> to vector<8x128xf32>
    %32 = vector.extract_strided_slice %28 {offsets = [32, 0], sizes = [8, 128], strides = [1, 1]} : vector<72x128xf32> to vector<8x128xf32>
    %33 = tpu.concatenate %29, %30, %31, %32 in 1 : vector<8x128xf32>, vector<8x128xf32>, vector<8x128xf32>, vector<8x128xf32> -> vector<8x512xf32>
    %c0_17 = arith.constant 0 : index
    %c0_18 = arith.constant 0 : index
    %c0_19 = arith.constant 0 : index
    %34 = vector.load %arg9[%c0_17, %c0_18, %c0_19] : memref<4x512x128xf32, #tpu.memory_space<vmem>>, vector<1x512x128xf32>
    %35 = vector.shape_cast %34 : vector<1x512x128xf32> to vector<512x128xf32>
    %cst_20 = arith.constant dense<0.000000e+00> : vector<8x128xf32>
    %36 = tpu.matmul %33, %35, %cst_20 {dimension_numbers = #tpu.dot_dimension_numbers<[1], [0], [0], [1], [0, 0, 1, 1], [], []>} : vector<8x512xf32>, vector<512x128xf32>, vector<8x128xf32> -> vector<8x128xf32>
    %37 = vector.extract_strided_slice %28 {offsets = [8, 0], sizes = [8, 128], strides = [1, 1]} : vector<72x128xf32> to vector<8x128xf32>
    %38 = vector.extract_strided_slice %28 {offsets = [16, 0], sizes = [8, 128], strides = [1, 1]} : vector<72x128xf32> to vector<8x128xf32>
    %39 = vector.extract_strided_slice %28 {offsets = [32, 0], sizes = [8, 128], strides = [1, 1]} : vector<72x128xf32> to vector<8x128xf32>
    %40 = vector.extract_strided_slice %28 {offsets = [40, 0], sizes = [8, 128], strides = [1, 1]} : vector<72x128xf32> to vector<8x128xf32>
    %41 = tpu.concatenate %37, %38, %39, %40 in 1 : vector<8x128xf32>, vector<8x128xf32>, vector<8x128xf32>, vector<8x128xf32> -> vector<8x512xf32>
    %c1 = arith.constant 1 : index
    %c0_21 = arith.constant 0 : index
    %c0_22 = arith.constant 0 : index
    %42 = vector.load %arg9[%c1, %c0_21, %c0_22] : memref<4x512x128xf32, #tpu.memory_space<vmem>>, vector<1x512x128xf32>
    %43 = vector.shape_cast %42 : vector<1x512x128xf32> to vector<512x128xf32>
    %cst_23 = arith.constant dense<0.000000e+00> : vector<8x128xf32>
    %44 = tpu.matmul %41, %43, %cst_23 {dimension_numbers = #tpu.dot_dimension_numbers<[1], [0], [0], [1], [0, 0, 1, 1], [], []>} : vector<8x512xf32>, vector<512x128xf32>, vector<8x128xf32> -> vector<8x128xf32>
    %45 = vector.extract_strided_slice %28 {offsets = [24, 0], sizes = [8, 128], strides = [1, 1]} : vector<72x128xf32> to vector<8x128xf32>
    %46 = vector.extract_strided_slice %28 {offsets = [32, 0], sizes = [8, 128], strides = [1, 1]} : vector<72x128xf32> to vector<8x128xf32>
    %47 = vector.extract_strided_slice %28 {offsets = [48, 0], sizes = [8, 128], strides = [1, 1]} : vector<72x128xf32> to vector<8x128xf32>
    %48 = vector.extract_strided_slice %28 {offsets = [56, 0], sizes = [8, 128], strides = [1, 1]} : vector<72x128xf32> to vector<8x128xf32>
    %49 = tpu.concatenate %45, %46, %47, %48 in 1 : vector<8x128xf32>, vector<8x128xf32>, vector<8x128xf32>, vector<8x128xf32> -> vector<8x512xf32>
    %c2 = arith.constant 2 : index
    %c0_24 = arith.constant 0 : index
    %c0_25 = arith.constant 0 : index
    %50 = vector.load %arg9[%c2, %c0_24, %c0_25] : memref<4x512x128xf32, #tpu.memory_space<vmem>>, vector<1x512x128xf32>
    %51 = vector.shape_cast %50 : vector<1x512x128xf32> to vector<512x128xf32>
    %cst_26 = arith.constant dense<0.000000e+00> : vector<8x128xf32>
    %52 = tpu.matmul %49, %51, %cst_26 {dimension_numbers = #tpu.dot_dimension_numbers<[1], [0], [0], [1], [0, 0, 1, 1], [], []>} : vector<8x512xf32>, vector<512x128xf32>, vector<8x128xf32> -> vector<8x128xf32>
    %53 = vector.extract_strided_slice %28 {offsets = [32, 0], sizes = [8, 128], strides = [1, 1]} : vector<72x128xf32> to vector<8x128xf32>
    %54 = vector.extract_strided_slice %28 {offsets = [40, 0], sizes = [8, 128], strides = [1, 1]} : vector<72x128xf32> to vector<8x128xf32>
    %55 = vector.extract_strided_slice %28 {offsets = [56, 0], sizes = [8, 128], strides = [1, 1]} : vector<72x128xf32> to vector<8x128xf32>
    %56 = vector.extract_strided_slice %28 {offsets = [64, 0], sizes = [8, 128], strides = [1, 1]} : vector<72x128xf32> to vector<8x128xf32>
    %57 = tpu.concatenate %53, %54, %55, %56 in 1 : vector<8x128xf32>, vector<8x128xf32>, vector<8x128xf32>, vector<8x128xf32> -> vector<8x512xf32>
    %c3 = arith.constant 3 : index
    %c0_27 = arith.constant 0 : index
    %c0_28 = arith.constant 0 : index
    %58 = vector.load %arg9[%c3, %c0_27, %c0_28] : memref<4x512x128xf32, #tpu.memory_space<vmem>>, vector<1x512x128xf32>
    %59 = vector.shape_cast %58 : vector<1x512x128xf32> to vector<512x128xf32>
    %cst_29 = arith.constant dense<0.000000e+00> : vector<8x128xf32>
    %60 = tpu.matmul %57, %59, %cst_29 {dimension_numbers = #tpu.dot_dimension_numbers<[1], [0], [0], [1], [0, 0, 1, 1], [], []>} : vector<8x512xf32>, vector<512x128xf32>, vector<8x128xf32> -> vector<8x128xf32>
    %61 = tpu.concatenate %36, %44, %52, %60 in 0 : vector<8x128xf32>, vector<8x128xf32>, vector<8x128xf32>, vector<8x128xf32> -> vector<32x128xf32>
    %c0_30 = arith.constant 0 : index
    %c0_31 = arith.constant 0 : index
    %62 = vector.load %arg10[%c0_30, %c0_31] : memref<1x128xf32, #tpu.memory_space<vmem>>, vector<1x128xf32>
    %63 = vector.broadcast %62 : vector<1x128xf32> to vector<32x128xf32>
    %64 = arith.addf %61, %63 : vector<32x128xf32>
    %c0_32 = arith.constant 0 : index
    %c0_33 = arith.constant 0 : index
    %65 = vector.load %arg6[%c0_32, %c0_33] : memref<1x128xf32, #tpu.memory_space<vmem>>, vector<1x128xf32>
    %c0_34 = arith.constant 0 : index
    %c0_35 = arith.constant 0 : index
    %66 = vector.load %arg7[%c0_34, %c0_35] : memref<1x128xf32, #tpu.memory_space<vmem>>, vector<1x128xf32>
    %cst_36 = arith.constant dense<0.000000e+00> : vector<128xf32>
    %67 = vector.multi_reduction <add>, %64, %cst_36 [0] : vector<32x128xf32> to vector<128xf32>
    %68 = vector.shape_cast %67 : vector<128xf32> to vector<1x128xf32>
    %cst_37 = arith.constant 3.125000e-02 : f32
    %69 = vector.broadcast %cst_37 : f32 to vector<1x128xf32>
    %70 = arith.mulf %68, %69 : vector<1x128xf32>
    %71 = vector.broadcast %70 : vector<1x128xf32> to vector<32x128xf32>
    %72 = arith.subf %64, %71 : vector<32x128xf32>
    %73 = arith.mulf %72, %72 : vector<32x128xf32>
    %cst_38 = arith.constant dense<0.000000e+00> : vector<128xf32>
    %74 = vector.multi_reduction <add>, %73, %cst_38 [0] : vector<32x128xf32> to vector<128xf32>
    %75 = vector.shape_cast %74 : vector<128xf32> to vector<1x128xf32>
    %cst_39 = arith.constant 3.125000e-02 : f32
    %76 = vector.broadcast %cst_39 : f32 to vector<1x128xf32>
    %77 = arith.mulf %75, %76 : vector<1x128xf32>
    %cst_40 = arith.constant 8.000000e-01 : f32
    %78 = vector.broadcast %cst_40 : f32 to vector<1x128xf32>
    %79 = arith.addf %77, %78 : vector<1x128xf32>
    %80 = math.rsqrt %79 : vector<1x128xf32>
    %81 = vector.broadcast %80 : vector<1x128xf32> to vector<32x128xf32>
    %82 = arith.mulf %72, %81 : vector<32x128xf32>
    %83 = vector.broadcast %65 : vector<1x128xf32> to vector<32x128xf32>
    %84 = arith.mulf %82, %83 : vector<32x128xf32>
    %85 = vector.broadcast %66 : vector<1x128xf32> to vector<32x128xf32>
    %86 = arith.addf %84, %85 : vector<32x128xf32>
    %cst_41 = arith.constant 0.000000e+00 : f32
    %87 = vector.broadcast %cst_41 : f32 to vector<32x128xf32>
    %88 = arith.cmpf ogt, %86, %87 : vector<32x128xf32>
    %cst_42 = arith.constant 2.000000e-01 : f32
    %89 = vector.broadcast %cst_42 : f32 to vector<32x128xf32>
    %90 = arith.mulf %89, %86 : vector<32x128xf32>
    %91 = arith.select %88, %86, %90 : vector<32x128xi1>, vector<32x128xf32>
    %c0_43 = arith.constant 0 : index
    %c0_44 = arith.constant 0 : index
    %92 = vector.load %arg11[%c0_43, %c0_44] : memref<288x32xf32, #tpu.memory_space<vmem>>, vector<288x32xf32>
    %cst_45 = arith.constant dense<0.000000e+00> : vector<288x128xf32>
    %93 = tpu.matmul %92, %91, %cst_45 {dimension_numbers = #tpu.dot_dimension_numbers<[1], [0], [0], [1], [0, 0, 1, 1], [], []>} : vector<288x32xf32>, vector<32x128xf32>, vector<288x128xf32> -> vector<288x128xf32>
    %94 = vector.extract_strided_slice %93 {offsets = [0, 0], sizes = [32, 128], strides = [1, 1]} : vector<288x128xf32> to vector<32x128xf32>
    %95 = vector.extract_strided_slice %93 {offsets = [32, 0], sizes = [32, 128], strides = [1, 1]} : vector<288x128xf32> to vector<32x128xf32>
    %96 = vector.extract_strided_slice %93 {offsets = [96, 0], sizes = [32, 128], strides = [1, 1]} : vector<288x128xf32> to vector<32x128xf32>
    %97 = vector.extract_strided_slice %93 {offsets = [128, 0], sizes = [32, 128], strides = [1, 1]} : vector<288x128xf32> to vector<32x128xf32>
    %98 = tpu.concatenate %94, %95, %96, %97 in 1 : vector<32x128xf32>, vector<32x128xf32>, vector<32x128xf32>, vector<32x128xf32> -> vector<32x512xf32>
    %c0_46 = arith.constant 0 : index
    %c0_47 = arith.constant 0 : index
    %c0_48 = arith.constant 0 : index
    %99 = vector.load %arg12[%c0_46, %c0_47, %c0_48] : memref<4x512x128xf32, #tpu.memory_space<vmem>>, vector<1x512x128xf32>
    %100 = vector.shape_cast %99 : vector<1x512x128xf32> to vector<512x128xf32>
    %cst_49 = arith.constant dense<0.000000e+00> : vector<32x128xf32>
    %101 = tpu.matmul %98, %100, %cst_49 {dimension_numbers = #tpu.dot_dimension_numbers<[1], [0], [0], [1], [0, 0, 1, 1], [], []>} : vector<32x512xf32>, vector<512x128xf32>, vector<32x128xf32> -> vector<32x128xf32>
    %102 = vector.extract_strided_slice %93 {offsets = [32, 0], sizes = [32, 128], strides = [1, 1]} : vector<288x128xf32> to vector<32x128xf32>
    %103 = vector.extract_strided_slice %93 {offsets = [64, 0], sizes = [32, 128], strides = [1, 1]} : vector<288x128xf32> to vector<32x128xf32>
    %104 = vector.extract_strided_slice %93 {offsets = [128, 0], sizes = [32, 128], strides = [1, 1]} : vector<288x128xf32> to vector<32x128xf32>
    %105 = vector.extract_strided_slice %93 {offsets = [160, 0], sizes = [32, 128], strides = [1, 1]} : vector<288x128xf32> to vector<32x128xf32>
    %106 = tpu.concatenate %102, %103, %104, %105 in 1 : vector<32x128xf32>, vector<32x128xf32>, vector<32x128xf32>, vector<32x128xf32> -> vector<32x512xf32>
    %c1_50 = arith.constant 1 : index
    %c0_51 = arith.constant 0 : index
    %c0_52 = arith.constant 0 : index
    %107 = vector.load %arg12[%c1_50, %c0_51, %c0_52] : memref<4x512x128xf32, #tpu.memory_space<vmem>>, vector<1x512x128xf32>
    %108 = vector.shape_cast %107 : vector<1x512x128xf32> to vector<512x128xf32>
    %cst_53 = arith.constant dense<0.000000e+00> : vector<32x128xf32>
    %109 = tpu.matmul %106, %108, %cst_53 {dimension_numbers = #tpu.dot_dimension_numbers<[1], [0], [0], [1], [0, 0, 1, 1], [], []>} : vector<32x512xf32>, vector<512x128xf32>, vector<32x128xf32> -> vector<32x128xf32>
    %110 = vector.extract_strided_slice %93 {offsets = [96, 0], sizes = [32, 128], strides = [1, 1]} : vector<288x128xf32> to vector<32x128xf32>
    %111 = vector.extract_strided_slice %93 {offsets = [128, 0], sizes = [32, 128], strides = [1, 1]} : vector<288x128xf32> to vector<32x128xf32>
    %112 = vector.extract_strided_slice %93 {offsets = [192, 0], sizes = [32, 128], strides = [1, 1]} : vector<288x128xf32> to vector<32x128xf32>
    %113 = vector.extract_strided_slice %93 {offsets = [224, 0], sizes = [32, 128], strides = [1, 1]} : vector<288x128xf32> to vector<32x128xf32>
    %114 = tpu.concatenate %110, %111, %112, %113 in 1 : vector<32x128xf32>, vector<32x128xf32>, vector<32x128xf32>, vector<32x128xf32> -> vector<32x512xf32>
    %c2_54 = arith.constant 2 : index
    %c0_55 = arith.constant 0 : index
    %c0_56 = arith.constant 0 : index
    %115 = vector.load %arg12[%c2_54, %c0_55, %c0_56] : memref<4x512x128xf32, #tpu.memory_space<vmem>>, vector<1x512x128xf32>
    %116 = vector.shape_cast %115 : vector<1x512x128xf32> to vector<512x128xf32>
    %cst_57 = arith.constant dense<0.000000e+00> : vector<32x128xf32>
    %117 = tpu.matmul %114, %116, %cst_57 {dimension_numbers = #tpu.dot_dimension_numbers<[1], [0], [0], [1], [0, 0, 1, 1], [], []>} : vector<32x512xf32>, vector<512x128xf32>, vector<32x128xf32> -> vector<32x128xf32>
    %118 = vector.extract_strided_slice %93 {offsets = [128, 0], sizes = [32, 128], strides = [1, 1]} : vector<288x128xf32> to vector<32x128xf32>
    %119 = vector.extract_strided_slice %93 {offsets = [160, 0], sizes = [32, 128], strides = [1, 1]} : vector<288x128xf32> to vector<32x128xf32>
    %120 = vector.extract_strided_slice %93 {offsets = [224, 0], sizes = [32, 128], strides = [1, 1]} : vector<288x128xf32> to vector<32x128xf32>
    %121 = vector.extract_strided_slice %93 {offsets = [256, 0], sizes = [32, 128], strides = [1, 1]} : vector<288x128xf32> to vector<32x128xf32>
    %122 = tpu.concatenate %118, %119, %120, %121 in 1 : vector<32x128xf32>, vector<32x128xf32>, vector<32x128xf32>, vector<32x128xf32> -> vector<32x512xf32>
    %c3_58 = arith.constant 3 : index
    %c0_59 = arith.constant 0 : index
    %c0_60 = arith.constant 0 : index
    %123 = vector.load %arg12[%c3_58, %c0_59, %c0_60] : memref<4x512x128xf32, #tpu.memory_space<vmem>>, vector<1x512x128xf32>
    %124 = vector.shape_cast %123 : vector<1x512x128xf32> to vector<512x128xf32>
    %cst_61 = arith.constant dense<0.000000e+00> : vector<32x128xf32>
    %125 = tpu.matmul %122, %124, %cst_61 {dimension_numbers = #tpu.dot_dimension_numbers<[1], [0], [0], [1], [0, 0, 1, 1], [], []>} : vector<32x512xf32>, vector<512x128xf32>, vector<32x128xf32> -> vector<32x128xf32>
    %126 = tpu.concatenate %101, %109, %117, %125 in 0 : vector<32x128xf32>, vector<32x128xf32>, vector<32x128xf32>, vector<32x128xf32> -> vector<128x128xf32>
    %c0_62 = arith.constant 0 : index
    %c0_63 = arith.constant 0 : index
    %127 = vector.load %arg13[%c0_62, %c0_63] : memref<1x128xf32, #tpu.memory_space<vmem>>, vector<1x128xf32>
    %128 = vector.broadcast %127 : vector<1x128xf32> to vector<128x128xf32>
    %129 = arith.addf %126, %128 : vector<128x128xf32>
    %cst_64 = arith.constant 0.000000e+00 : f32
    %130 = vector.broadcast %cst_64 : f32 to vector<128x128xf32>
    %131 = arith.cmpf ogt, %129, %130 : vector<128x128xf32>
    %cst_65 = arith.constant 2.000000e-01 : f32
    %132 = vector.broadcast %cst_65 : f32 to vector<128x128xf32>
    %133 = arith.mulf %132, %129 : vector<128x128xf32>
    %134 = arith.select %131, %129, %133 : vector<128x128xi1>, vector<128x128xf32>
    %c0_66 = arith.constant 0 : index
    %c0_67 = arith.constant 0 : index
    %135 = vector.load %arg14[%c0_66, %c0_67] : memref<1152x128xf32, #tpu.memory_space<vmem>>, vector<1152x128xf32>
    %cst_68 = arith.constant dense<0.000000e+00> : vector<1152x128xf32>
    %136 = tpu.matmul %135, %134, %cst_68 {dimension_numbers = #tpu.dot_dimension_numbers<[1], [0], [0], [1], [0, 0, 1, 1], [], []>} : vector<1152x128xf32>, vector<128x128xf32>, vector<1152x128xf32> -> vector<1152x128xf32>
    %137 = vector.extract_strided_slice %136 {offsets = [0, 0], sizes = [128, 128], strides = [1, 1]} : vector<1152x128xf32> to vector<128x128xf32>
    %138 = vector.extract_strided_slice %136 {offsets = [128, 0], sizes = [128, 128], strides = [1, 1]} : vector<1152x128xf32> to vector<128x128xf32>
    %139 = vector.extract_strided_slice %136 {offsets = [384, 0], sizes = [128, 128], strides = [1, 1]} : vector<1152x128xf32> to vector<128x128xf32>
    %140 = vector.extract_strided_slice %136 {offsets = [512, 0], sizes = [128, 128], strides = [1, 1]} : vector<1152x128xf32> to vector<128x128xf32>
    %141 = tpu.concatenate %137, %138, %139, %140 in 1 : vector<128x128xf32>, vector<128x128xf32>, vector<128x128xf32>, vector<128x128xf32> -> vector<128x512xf32>
    %c0_69 = arith.constant 0 : index
    %c0_70 = arith.constant 0 : index
    %c0_71 = arith.constant 0 : index
    %142 = vector.load %arg15[%c0_69, %c0_70, %c0_71] : memref<4x512x3xf32, #tpu.memory_space<vmem>>, vector<1x512x3xf32>
    %143 = vector.shape_cast %142 : vector<1x512x3xf32> to vector<512x3xf32>
    %cst_72 = arith.constant dense<0.000000e+00> : vector<128x3xf32>
    %144 = tpu.matmul %141, %143, %cst_72 {dimension_numbers = #tpu.dot_dimension_numbers<[1], [0], [0], [1], [0, 0, 1, 1], [], []>} : vector<128x512xf32>, vector<512x3xf32>, vector<128x3xf32> -> vector<128x3xf32>
    %145 = vector.extract_strided_slice %136 {offsets = [128, 0], sizes = [128, 128], strides = [1, 1]} : vector<1152x128xf32> to vector<128x128xf32>
    %146 = vector.extract_strided_slice %136 {offsets = [256, 0], sizes = [128, 128], strides = [1, 1]} : vector<1152x128xf32> to vector<128x128xf32>
    %147 = vector.extract_strided_slice %136 {offsets = [512, 0], sizes = [128, 128], strides = [1, 1]} : vector<1152x128xf32> to vector<128x128xf32>
    %148 = vector.extract_strided_slice %136 {offsets = [640, 0], sizes = [128, 128], strides = [1, 1]} : vector<1152x128xf32> to vector<128x128xf32>
    %149 = tpu.concatenate %145, %146, %147, %148 in 1 : vector<128x128xf32>, vector<128x128xf32>, vector<128x128xf32>, vector<128x128xf32> -> vector<128x512xf32>
    %c1_73 = arith.constant 1 : index
    %c0_74 = arith.constant 0 : index
    %c0_75 = arith.constant 0 : index
    %150 = vector.load %arg15[%c1_73, %c0_74, %c0_75] : memref<4x512x3xf32, #tpu.memory_space<vmem>>, vector<1x512x3xf32>
    %151 = vector.shape_cast %150 : vector<1x512x3xf32> to vector<512x3xf32>
    %cst_76 = arith.constant dense<0.000000e+00> : vector<128x3xf32>
    %152 = tpu.matmul %149, %151, %cst_76 {dimension_numbers = #tpu.dot_dimension_numbers<[1], [0], [0], [1], [0, 0, 1, 1], [], []>} : vector<128x512xf32>, vector<512x3xf32>, vector<128x3xf32> -> vector<128x3xf32>
    %153 = vector.extract_strided_slice %136 {offsets = [384, 0], sizes = [128, 128], strides = [1, 1]} : vector<1152x128xf32> to vector<128x128xf32>
    %154 = vector.extract_strided_slice %136 {offsets = [512, 0], sizes = [128, 128], strides = [1, 1]} : vector<1152x128xf32> to vector<128x128xf32>
    %155 = vector.extract_strided_slice %136 {offsets = [768, 0], sizes = [128, 128], strides = [1, 1]} : vector<1152x128xf32> to vector<128x128xf32>
    %156 = vector.extract_strided_slice %136 {offsets = [896, 0], sizes = [128, 128], strides = [1, 1]} : vector<1152x128xf32> to vector<128x128xf32>
    %157 = tpu.concatenate %153, %154, %155, %156 in 1 : vector<128x128xf32>, vector<128x128xf32>, vector<128x128xf32>, vector<128x128xf32> -> vector<128x512xf32>
    %c2_77 = arith.constant 2 : index
    %c0_78 = arith.constant 0 : index
    %c0_79 = arith.constant 0 : index
    %158 = vector.load %arg15[%c2_77, %c0_78, %c0_79] : memref<4x512x3xf32, #tpu.memory_space<vmem>>, vector<1x512x3xf32>
    %159 = vector.shape_cast %158 : vector<1x512x3xf32> to vector<512x3xf32>
    %cst_80 = arith.constant dense<0.000000e+00> : vector<128x3xf32>
    %160 = tpu.matmul %157, %159, %cst_80 {dimension_numbers = #tpu.dot_dimension_numbers<[1], [0], [0], [1], [0, 0, 1, 1], [], []>} : vector<128x512xf32>, vector<512x3xf32>, vector<128x3xf32> -> vector<128x3xf32>
    %161 = vector.extract_strided_slice %136 {offsets = [512, 0], sizes = [128, 128], strides = [1, 1]} : vector<1152x128xf32> to vector<128x128xf32>
    %162 = vector.extract_strided_slice %136 {offsets = [640, 0], sizes = [128, 128], strides = [1, 1]} : vector<1152x128xf32> to vector<128x128xf32>
    %163 = vector.extract_strided_slice %136 {offsets = [896, 0], sizes = [128, 128], strides = [1, 1]} : vector<1152x128xf32> to vector<128x128xf32>
    %164 = vector.extract_strided_slice %136 {offsets = [1024, 0], sizes = [128, 128], strides = [1, 1]} : vector<1152x128xf32> to vector<128x128xf32>
    %165 = tpu.concatenate %161, %162, %163, %164 in 1 : vector<128x128xf32>, vector<128x128xf32>, vector<128x128xf32>, vector<128x128xf32> -> vector<128x512xf32>
    %c3_81 = arith.constant 3 : index
    %c0_82 = arith.constant 0 : index
    %c0_83 = arith.constant 0 : index
    %166 = vector.load %arg15[%c3_81, %c0_82, %c0_83] : memref<4x512x3xf32, #tpu.memory_space<vmem>>, vector<1x512x3xf32>
    %167 = vector.shape_cast %166 : vector<1x512x3xf32> to vector<512x3xf32>
    %cst_84 = arith.constant dense<0.000000e+00> : vector<128x3xf32>
    %168 = tpu.matmul %165, %167, %cst_84 {dimension_numbers = #tpu.dot_dimension_numbers<[1], [0], [0], [1], [0, 0, 1, 1], [], []>} : vector<128x512xf32>, vector<512x3xf32>, vector<128x3xf32> -> vector<128x3xf32>
    %169 = tpu.concatenate %144, %152, %160, %168 in 0 : vector<128x3xf32>, vector<128x3xf32>, vector<128x3xf32>, vector<128x3xf32> -> vector<512x3xf32>
    %c0_85 = arith.constant 0 : index
    %c0_86 = arith.constant 0 : index
    %170 = vector.load %arg16[%c0_85, %c0_86] : memref<1x3xf32, #tpu.memory_space<vmem>>, vector<1x3xf32>
    %171 = vector.broadcast %170 : vector<1x3xf32> to vector<512x3xf32>
    %172 = arith.addf %169, %171 : vector<512x3xf32>
    %173 = math.tanh %172 : vector<512x3xf32>
    %c0_87 = arith.constant 0 : index
    %c0_88 = arith.constant 0 : index
    %174 = vector.load %arg17[%c0_87, %c0_88] : memref<512x512xf32, #tpu.memory_space<vmem>>, vector<512x512xf32>
    %cst_89 = arith.constant dense<0.000000e+00> : vector<512x3xf32>
    %175 = tpu.matmul %174, %173, %cst_89 {dimension_numbers = #tpu.dot_dimension_numbers<[1], [0], [0], [1], [0, 0, 1, 1], [], []>} : vector<512x512xf32>, vector<512x3xf32>, vector<512x3xf32> -> vector<512x3xf32>
    %c0_90 = arith.constant 0 : index
    %c0_91 = arith.constant 0 : index
    %176 = vector.load %arg18[%c0_90, %c0_91] : memref<512x3xf32, #tpu.memory_space<vmem>>, vector<512x3xf32>
    tpu.vector_store %arg18[%c0_90, %c0_91], %175 {strides = array<i32>} : memref<512x3xf32, #tpu.memory_space<vmem>>, vector<512x3xf32>,
    return
  }
  func.func @transform_0(%arg0: i32) -> (i32, i32) {
    %c0_i32 = arith.constant 0 : i32
    %c0_i32_0 = arith.constant 0 : i32
    %c0_i32_1 = arith.constant 0 : i32
    return %c0_i32, %c0_i32_0 : i32, i32
  }
  func.func @transform_1(%arg0: i32) -> (i32, i32) {
    %c0_i32 = arith.constant 0 : i32
    %c0_i32_0 = arith.constant 0 : i32
    %c0_i32_1 = arith.constant 0 : i32
    return %c0_i32, %c0_i32_0 : i32, i32
  }
  func.func @transform_2(%arg0: i32) -> (i32, i32) {
    %c0_i32 = arith.constant 0 : i32
    %c0_i32_0 = arith.constant 0 : i32
    %c0_i32_1 = arith.constant 0 : i32
    return %c0_i32, %c0_i32_0 : i32, i32
  }
  func.func @transform_3(%arg0: i32) -> (i32, i32) {
    %c0_i32 = arith.constant 0 : i32
    %c0_i32_0 = arith.constant 0 : i32
    %c0_i32_1 = arith.constant 0 : i32
    return %c0_i32, %c0_i32_0 : i32, i32
  }
  func.func @transform_4(%arg0: i32) -> (i32, i32) {
    %c0_i32 = arith.constant 0 : i32
    %c0_i32_0 = arith.constant 0 : i32
    %c0_i32_1 = arith.constant 0 : i32
    return %c0_i32, %c0_i32_0 : i32, i32
  }
  func.func @transform_5(%arg0: i32) -> (i32, i32) {
    %c0_i32 = arith.constant 0 : i32
    %c0_i32_0 = arith.constant 0 : i32
    %c0_i32_1 = arith.constant 0 : i32
    return %c0_i32, %c0_i32_0 : i32, i32
  }
  func.func @transform_6(%arg0: i32) -> (i32, i32) {
    %c0_i32 = arith.constant 0 : i32
    %c0_i32_0 = arith.constant 0 : i32
    %c0_i32_1 = arith.constant 0 : i32
    return %c0_i32, %c0_i32_0 : i32, i32
  }
  func.func @transform_7(%arg0: i32) -> (i32, i32) {
    %c0_i32 = arith.constant 0 : i32
    %c0_i32_0 = arith.constant 0 : i32
    %c0_i32_1 = arith.constant 0 : i32
    return %c0_i32, %c0_i32_0 : i32, i32
  }
  func.func @transform_8(%arg0: i32) -> (i32, i32, i32) {
    %c0_i32 = arith.constant 0 : i32
    %c0_i32_0 = arith.constant 0 : i32
    %c0_i32_1 = arith.constant 0 : i32
    %c0_i32_2 = arith.constant 0 : i32
    return %c0_i32, %c0_i32_0, %c0_i32_1 : i32, i32, i32
  }
  func.func @transform_9(%arg0: i32) -> (i32, i32) {
    %c0_i32 = arith.constant 0 : i32
    %c0_i32_0 = arith.constant 0 : i32
    %c0_i32_1 = arith.constant 0 : i32
    return %c0_i32, %c0_i32_0 : i32, i32
  }
  func.func @transform_10(%arg0: i32) -> (i32, i32) {
    %c0_i32 = arith.constant 0 : i32
    %c0_i32_0 = arith.constant 0 : i32
    %c0_i32_1 = arith.constant 0 : i32
    return %c0_i32, %c0_i32_0 : i32, i32
  }
  func.func @transform_11(%arg0: i32) -> (i32, i32, i32) {
    %c0_i32 = arith.constant 0 : i32
    %c0_i32_0 = arith.constant 0 : i32
    %c0_i32_1 = arith.constant 0 : i32
    %c0_i32_2 = arith.constant 0 : i32
    return %c0_i32, %c0_i32_0, %c0_i32_1 : i32, i32, i32
  }
  func.func @transform_12(%arg0: i32) -> (i32, i32) {
    %c0_i32 = arith.constant 0 : i32
    %c0_i32_0 = arith.constant 0 : i32
    %c0_i32_1 = arith.constant 0 : i32
    return %c0_i32, %c0_i32_0 : i32, i32
  }
  func.func @transform_13(%arg0: i32) -> (i32, i32) {
    %c0_i32 = arith.constant 0 : i32
    %c0_i32_0 = arith.constant 0 : i32
    %c0_i32_1 = arith.constant 0 : i32
    return %c0_i32, %c0_i32_0 : i32, i32
  }
  func.func @transform_14(%arg0: i32) -> (i32, i32, i32) {
    %c0_i32 = arith.constant 0 : i32
    %c0_i32_0 = arith.constant 0 : i32
    %c0_i32_1 = arith.constant 0 : i32
    %c0_i32_2 = arith.constant 0 : i32
    return %c0_i32, %c0_i32_0, %c0_i32_1 : i32, i32, i32
  }
  func.func @transform_15(%arg0: i32) -> (i32, i32) {
    %c0_i32 = arith.constant 0 : i32
    %c0_i32_0 = arith.constant 0 : i32
    %c0_i32_1 = arith.constant 0 : i32
    return %c0_i32, %c0_i32_0 : i32, i32
  }
  func.func @transform_16(%arg0: i32) -> (i32, i32) {
    %c0_i32 = arith.constant 0 : i32
    %c0_i32_0 = arith.constant 0 : i32
    %c0_i32_1 = arith.constant 0 : i32
    return %c0_i32, %c0_i32_0 : i32, i32
  }
  func.func @transform_17(%arg0: i32) -> (i32, i32) {
    %c0_i32 = arith.constant 0 : i32
    %c0_i32_0 = arith.constant 0 : i32
    %c0_i32_1 = arith.constant 0 : i32
    return %c0_i32, %c0_i32_0 : i32, i32
  }
}

</mosaic_0001>

<llo_original>
// kernel: generator_forward.1
$region0: #{generator_forward.1}
  #allocation0 [shape = 'u32[]', space=smem, size = 0x4, offset = 0x4, fixed_abs, tag = 'smem constant byte address 0x4 - core index']
  #allocation1 [shape = 'u32[144,128]{1,0:T(1,128)}', space=vmem, size = 0x12000, scoped, tag = 'internal scratch']
  %s0 = inlined_call_operand.vmem [shape: f32[8,48], index: 0, kind: input, shape index: {}]
  %s1 = inlined_call_operand.vmem [shape: f32[48,128], index: 1, kind: input, shape index: {}]
  %s2 = inlined_call_operand.vmem [shape: f32[8,128], index: 2, kind: input, shape index: {}]
  %s3 = inlined_call_operand.vmem [shape: f32[1,128], index: 3, kind: input, shape index: {}]
  %s4 = inlined_call_operand.vmem [shape: f32[1,128], index: 4, kind: input, shape index: {}]
  %s5 = inlined_call_operand.vmem [shape: f32[1,128], index: 5, kind: input, shape index: {}]
  %s6 = inlined_call_operand.vmem [shape: f32[1,128], index: 6, kind: input, shape index: {}]
  %s7 = inlined_call_operand.vmem [shape: f32[72,8], index: 7, kind: input, shape index: {}]
  %s8 = inlined_call_operand.vmem [shape: f32[4,512,128], index: 8, kind: input, shape index: {}]
  %s9 = inlined_call_operand.vmem [shape: f32[1,128], index: 9, kind: input, shape index: {}]
  %s10 = inlined_call_operand.hbm [shape: f32[288,32], index: 10, kind: input, shape index: {}]
  %s11 = inlined_call_operand.hbm [shape: f32[4,512,128], index: 11, kind: input, shape index: {}]
  %s12 = inlined_call_operand.vmem [shape: f32[1,128], index: 12, kind: input, shape index: {}]
  %s13 = inlined_call_operand.hbm [shape: f32[1152,128], index: 13, kind: input, shape index: {}]
  %s14 = inlined_call_operand.vmem [shape: f32[4,512,3], index: 14, kind: input, shape index: {}]
  %s15 = inlined_call_operand.vmem [shape: f32[1,3], index: 15, kind: input, shape index: {}]
  %s16 = inlined_call_operand.hbm [shape: f32[512,512], index: 16, kind: input, shape index: {}]
  %s17 = inlined_call_operand.vmem [shape: f32[512,3], index: 17, kind: output, shape index: {}]
  %s18 = sld [smem:[#allocation0]]
  $region94: #{generator_forward.1} parent=0
    _
  %s20 = ssub.s32 1, %s18
  %s21 = scalar_select 0, %s20, %s18
  $region1: #{generator_forward.1} parent=0
    #allocation2 [shape = 'u8[147456]{0}', space=vmem, size = 0x24000, scoped, tag = 'input window, operand 10, single buffered']
    #allocation3 [shape = 's32[1]{0}', space=sflag, size = 0x4, scoped, tag = 'scoped memory for generator_forward.1']
    #allocation4 [shape = 'u8[1048576]{0}', space=vmem, size = 0x100000, scoped, tag = 'input window, operand 11, single buffered']
    #allocation5 [shape = 's32[1]{0}', space=sflag, size = 0x4, scoped, tag = 'scoped memory for generator_forward.1']
    #allocation6 [shape = 'u8[589824]{0}', space=vmem, size = 0x90000, scoped, tag = 'input window, operand 13, single buffered']
    #allocation7 [shape = 'u8[1048576]{0}', space=vmem, size = 0x100000, scoped, tag = 'input window, operand 16, single buffered']
    #allocation8 [shape = 's32[1]{0}', space=sflag, size = 0x4, scoped, tag = 'scoped memory for generator_forward.1']
    %22 = vsyncpa [#allocation3], 0
    %23 = vsyncpa [#allocation5], 0
    %24 = vsyncpa [#allocation8], 0
    // Predicated region
    $region2: #{generator_forward.1} parent=1 // pred_check
      _
    $region3: #{generator_forward.1} parent=1 // pred_check_branch
      %26 = sbr.rel (0) target = $region5
    $region4: #{generator_forward.1} parent=1 // pred_region
      _
    $region5: #{generator_forward.1} parent=1 // pred_fallthru
      _
    // Predicated region
    $region6: #{generator_forward.1} parent=1 // pred_check
      _
    $region7: #{generator_forward.1} parent=1 // pred_check_branch
      %28 = sbr.rel (0) target = $region9
    $region8: #{generator_forward.1} parent=1 // pred_region
      _
    $region9: #{generator_forward.1} parent=1 // pred_fallthru
      _
    // Predicated region
    $region10: #{generator_forward.1} parent=1 // pred_check
      _
    $region11: #{generator_forward.1} parent=1 // pred_check_branch
      %30 = sbr.rel (0) target = $region13
    $region12: #{generator_forward.1} parent=1 // pred_region
      _
    $region13: #{generator_forward.1} parent=1 // pred_fallthru
      _
    // Predicated region
    $region14: #{generator_forward.1} parent=1 // pred_check
      _
    $region15: #{generator_forward.1} parent=1 // pred_check_branch
      %32 = sbr.rel (0) target = $region17
    $region16: #{generator_forward.1} parent=1 // pred_region
      _
    $region17: #{generator_forward.1} parent=1 // pred_fallthru
      _
    // Predicated region
    $region18: #{generator_forward.1} parent=1 // pred_check
      _
    $region19: #{generator_forward.1} parent=1 // pred_check_branch
      %34 = sbr.rel (0) target = $region21
    $region20: #{generator_forward.1} parent=1 // pred_region
      _
    $region21: #{generator_forward.1} parent=1 // pred_fallthru
      _
    // Predicated region
    $region22: #{generator_forward.1} parent=1 // pred_check
      _
    $region23: #{generator_forward.1} parent=1 // pred_check_branch
      %36 = sbr.rel (0) target = $region25
    $region24: #{generator_forward.1} parent=1 // pred_region
      _
    $region25: #{generator_forward.1} parent=1 // pred_fallthru
      _
    // Predicated region
    $region26: #{generator_forward.1} parent=1 // pred_check
      _
    $region27: #{generator_forward.1} parent=1 // pred_check_branch
      %38 = sbr.rel (0) target = $region29
    $region28: #{generator_forward.1} parent=1 // pred_region
      _
    $region29: #{generator_forward.1} parent=1 // pred_fallthru
      _
    // Predicated region
    $region30: #{generator_forward.1} parent=1 // pred_check
      _
    $region31: #{generator_forward.1} parent=1 // pred_check_branch
      %40 = sbr.rel (0) target = $region33
    $region32: #{generator_forward.1} parent=1 // pred_region
      _
    $region33: #{generator_forward.1} parent=1 // pred_fallthru
      _
    // Predicated region
    $region34: #{generator_forward.1} parent=1 // pred_check
      _
    $region35: #{generator_forward.1} parent=1 // pred_check_branch
      %42 = sbr.rel (0) target = $region37
    $region36: #{generator_forward.1} parent=1 // pred_region
      _
    $region37: #{generator_forward.1} parent=1 // pred_fallthru
      _
    // Predicated region
    $region38: #{generator_forward.1} parent=1 // pred_check
      _
    $region39: #{generator_forward.1} parent=1 // pred_check_branch
      %44 = sbr.rel (0) target = $region41
    $region40: #{generator_forward.1} parent=1 // pred_region
      _
    $region41: #{generator_forward.1} parent=1 // pred_fallthru
      _
    // Predicated region
    $region42: #{generator_forward.1} parent=1 // pred_check
      _
    $region43: #{generator_forward.1} parent=1 // pred_check_branch
      %46 = sbr.rel (0) target = $region45
    $region44: #{generator_forward.1} parent=1 // pred_region
      %s48 = ssub.s32 4608, 4608
      %49 = vsyncadd [#allocation3], %s48
      %s50 = sshll.u32 [#allocation2], 4
      %s51 = int_to_ptr.vmem [resolvable:$true] %s50
      %56 = dma.hbm_to_vmem [thread:$0]  %s10, 4608, %s51, [#allocation3], 128, 128, 8
    $region45: #{generator_forward.1} parent=1 // pred_fallthru
      _
    // Predicated region
    $region46: #{generator_forward.1} parent=1 // pred_check
      _
    $region47: #{generator_forward.1} parent=1 // pred_check_branch
      %58 = sbr.rel (0) target = $region49
    $region48: #{generator_forward.1} parent=1 // pred_region
      %s60 = ssub.s32 32768, 32768
      %61 = vsyncadd [#allocation5], %s60
      %s62 = sshll.u32 [#allocation4], 4
      %s63 = int_to_ptr.vmem [resolvable:$true] %s62
      %68 = dma.hbm_to_vmem [thread:$0]  %s11, 32768, %s63, [#allocation5], 128, 128, 8
    $region49: #{generator_forward.1} parent=1 // pred_fallthru
      _
    // Predicated region
    $region50: #{generator_forward.1} parent=1 // pred_check
      _
    $region51: #{generator_forward.1} parent=1 // pred_check_branch
      %70 = sbr.rel (0) target = $region53
    $region52: #{generator_forward.1} parent=1 // pred_region
      _
    $region53: #{generator_forward.1} parent=1 // pred_fallthru
      _
    // Predicated region
    $region54: #{generator_forward.1} parent=1 // pred_check
      _
    $region55: #{generator_forward.1} parent=1 // pred_check_branch
      %72 = sbr.rel (0) target = $region57
    $region56: #{generator_forward.1} parent=1 // pred_region
      %s74 = ssub.s32 18432, 18432
      %75 = vsyncadd [#allocation5], %s74
      %s76 = sshll.u32 [#allocation6], 4
      %s77 = int_to_ptr.vmem [resolvable:$true] %s76
      %82 = dma.hbm_to_vmem [thread:$0]  %s13, 18432, %s77, [#allocation5], 128, 128, 8
    $region57: #{generator_forward.1} parent=1 // pred_fallthru
      _
    // Predicated region
    $region58: #{generator_forward.1} parent=1 // pred_check
      _
    $region59: #{generator_forward.1} parent=1 // pred_check_branch
      %84 = sbr.rel (0) target = $region61
    $region60: #{generator_forward.1} parent=1 // pred_region
      _
    $region61: #{generator_forward.1} parent=1 // pred_fallthru
      _
    // Predicated region
    $region62: #{generator_forward.1} parent=1 // pred_check
      _
    $region63: #{generator_forward.1} parent=1 // pred_check_branch
      %86 = sbr.rel (0) target = $region65
    $region64: #{generator_forward.1} parent=1 // pred_region
      _
    $region65: #{generator_forward.1} parent=1 // pred_fallthru
      _
    // Predicated region
    $region66: #{generator_forward.1} parent=1 // pred_check
      _
    $region67: #{generator_forward.1} parent=1 // pred_check_branch
      %88 = sbr.rel (0) target = $region69
    $region68: #{generator_forward.1} parent=1 // pred_region
      %s90 = ssub.s32 32768, 32768
      %91 = vsyncadd [#allocation8], %s90
      %s92 = sshll.u32 [#allocation7], 4
      %s93 = int_to_ptr.vmem [resolvable:$true] %s92
      %98 = dma.hbm_to_vmem [thread:$0]  %s16, 32768, %s93, [#allocation8], 512, 512, 32
    $region69: #{generator_forward.1} parent=1 // pred_fallthru
      _
    // Predicated region
    $region70: #{generator_forward.1} parent=1 // pred_check
      _
    $region71: #{generator_forward.1} parent=1 // pred_check_branch
      %100 = sbr.rel (0) target = $region73
    $region72: #{generator_forward.1} parent=1 // pred_region
      %101 = dma.done [#allocation3], 4608
    $region73: #{generator_forward.1} parent=1 // pred_fallthru
      _
    // Predicated region
    $region74: #{generator_forward.1} parent=1 // pred_check
      _
    $region75: #{generator_forward.1} parent=1 // pred_check_branch
      %103 = sbr.rel (0) target = $region77
    $region76: #{generator_forward.1} parent=1 // pred_region
      %104 = dma.done [#allocation5], 32768
    $region77: #{generator_forward.1} parent=1 // pred_fallthru
      _
    // Predicated region
    $region78: #{generator_forward.1} parent=1 // pred_check
      _
    $region79: #{generator_forward.1} parent=1 // pred_check_branch
      %106 = sbr.rel (0) target = $region81
    $region80: #{generator_forward.1} parent=1 // pred_region
      %107 = dma.done [#allocation5], 18432
    $region81: #{generator_forward.1} parent=1 // pred_fallthru
      _
    // Predicated region
    $region82: #{generator_forward.1} parent=1 // pred_check
      _
    $region83: #{generator_forward.1} parent=1 // pred_check_branch
      %109 = sbr.rel (0) target = $region85
    $region84: #{generator_forward.1} parent=1 // pred_region
      %110 = dma.done [#allocation8], 32768
    $region85: #{generator_forward.1} parent=1 // pred_fallthru
      _
    %v111 = vld [vmem:[%s0] sm:$0xff]
    %v112 = vld [vmem:[%s1] sm:$0xff]
    %v113 = vld [vmem:[%s1 + $0x8] sm:$0xff]
    %v114 = vld [vmem:[%s1 + $0x10] sm:$0xff]
    %v115 = vld [vmem:[%s1 + $0x18] sm:$0xff]
    %v116 = vld [vmem:[%s1 + $0x20] sm:$0xff]
    %v117 = vld [vmem:[%s1 + $0x28] sm:$0xff]
    %v118 = vld [vmem:[%s2] sm:$0xff]
    %vm119 = vcmask 392192
    %v121 = vsel %vm119, %v111, 0
    %123 = vmatprep.subr.mxu0 0.0
    %124 = vmatpush1.msra.mxu0 %v112
    %125 = vmatprep.subr.mxu0 0.0
    %126 = vmatpush1.msra.mxu0 %v113
    %127 = vmatprep.subr.mxu0 0.0
    %128 = vmatpush1.msra.mxu0 %v114
    %129 = vmatprep.subr.mxu0 0.0
    %130 = vmatpush1.msra.mxu0 %v115
    %131 = vmatprep.subr.mxu0 0.0
    %132 = vmatpush1.msra.mxu0 %v116
    %133 = vmatprep.subr.mxu0 0.0
    %134 = vmatpush1.msra.mxu0 %v117
    %135 = vmatprep.subr.mxu0 0.0
    %136 = vmatpush1.msra.mxu0 0.0
    %137 = vmatprep.subr.mxu0 0.0
    %138 = vmatpush1.msra.mxu0 0.0
    %139 = vmatprep.subr.mxu0 0.0
    %140 = vmatpush1.msra.mxu0 0.0
    %141 = vmatprep.subr.mxu0 0.0
    %142 = vmatpush1.msra.mxu0 0.0
    %143 = vmatprep.subr.mxu0 0.0
    %144 = vmatpush1.msra.mxu0 0.0
    %145 = vmatprep.subr.mxu0 0.0
    %146 = vmatpush1.msra.mxu0 0.0
    %147 = vmatprep.subr.mxu0 0.0
    %148 = vmatpush1.msra.mxu0 0.0
    %149 = vmatprep.subr.mxu0 0.0
    %150 = vmatpush1.msra.mxu0 0.0
    %151 = vmatprep.subr.mxu0 0.0
    %152 = vmatpush1.msra.mxu0 0.0
    %153 = vmatprep.subr.mxu0 0.0
    %154 = vmatpush1.msra.mxu0 0.0
    %155 = vmatprep.subr.mxu0 0.0
    %156 = vmatpush1.msra.mxu0 0.0
    %157 = vmatprep.subr.mxu0 0.0
    %158 = vmatpush1.msra.mxu0 0.0
    %159 = vmatprep.subr.mxu0 0.0
    %160 = vmatpush1.msra.mxu0 0.0
    %161 = vmatprep.subr.mxu0 0.0
    %162 = vmatpush1.msra.mxu0 0.0
    %163 = vmatprep.subr.mxu0 0.0
    %164 = vmatpush1.msra.mxu0 0.0
    %165 = vmatprep.subr.mxu0 0.0
    %166 = vmatpush1.msra.mxu0 0.0
    %167 = vmatprep.subr.mxu0 0.0
    %168 = vmatpush1.msra.mxu0 0.0
    %169 = vmatprep.subr.mxu0 0.0
    %170 = vmatpush1.msra.mxu0 0.0
    %171 = vmatprep.subr.mxu0 0.0
    %172 = vmatpush1.msra.mxu0 0.0
    %173 = vmatprep.subr.mxu0 0.0
    %174 = vmatpush1.msra.mxu0 0.0
    %175 = vmatprep.subr.mxu0 0.0
    %176 = vmatpush1.msra.mxu0 0.0
    %177 = vmatprep.subr.mxu0 0.0
    %178 = vmatpush1.msra.mxu0 0.0
    %179 = vmatprep.subr.mxu0 0.0
    %180 = vmatpush1.msra.mxu0 0.0
    %181 = vmatprep.subr.mxu0 0.0
    %182 = vmatpush1.msra.mxu0 0.0
    %183 = vmatprep.subr.mxu0 0.0
    %184 = vmatpush1.msra.mxu0 0.0
    %185 = vmatprep.subr.mxu0 0.0
    %186 = vmatpush1.msra.mxu0 0.0
    %187 = vmatprep.mubr.f32.mxu0 0.0
    %188 = vmatmul.mubr.f32.gmra.mrb[0].mxu0 %v121
    %v189 = vpop.f32.mrb[0].mxu0
    %v190 = vadd.f32 %v118, %v189
    %v191 = vpop.f32.mrb[0].mxu0
    %192 = vdwg.mxu0
    %v193 = vld [vmem:[%s3] sm:$0x1]
    %v194 = vld [vmem:[%s4] sm:$0x1]
    %v195 = vrot.slane %v190, 4
    %v196 = vadd.f32 %v190, %v195
    %v197 = vrot.slane %v196, 2
    %v198 = vadd.f32 %v196, %v197
    %v199 = vrot.slane %v198, 1
    %v200 = vadd.f32 %v198, %v199
    %v201 = vmul.f32 %v200, 0.125
    %v202 = vsub.f32 %v190, %v201
    %v203 = vmul.f32 %v202, %v202
    %v204 = vrot.slane %v203, 4
    %v205 = vadd.f32 %v203, %v204
    %v206 = vrot.slane %v205, 2
    %v207 = vadd.f32 %v205, %v206
    %v208 = vrot.slane %v207, 1
    %v209 = vadd.f32 %v207, %v208
    %v210 = vmul.f32 %v209, 0.125
    %v211 = vadd.f32 %v210, 1e-05
    %v212 = vrsqrt.pop %v211
    %v213 = vmul.f32 %v202, %v212
    %v215 = vlaneseq
    %v216 = vshrl.u32 %v215, 7
    %v217 = vsub.s32 0, %v216
    %v218 = vrot.slane %v193, %v217
    %v220 = vmul.f32 %v213, %v218
    %v222 = vlaneseq
    %v223 = vshrl.u32 %v222, 7
    %v224 = vsub.s32 0, %v223
    %v225 = vrot.slane %v194, %v224
    %v227 = vadd.f32 %v220, %v225
    %v228 = vld [vmem:[%s7] sm:$0xff]
    %v229 = vld [vmem:[%s7 + $0x8] sm:$0xff]
    %v230 = vld [vmem:[%s7 + $0x10] sm:$0xff]
    %v231 = vld [vmem:[%s7 + $0x18] sm:$0xff]
    %v232 = vld [vmem:[%s7 + $0x20] sm:$0xff]
    %v233 = vld [vmem:[%s7 + $0x28] sm:$0xff]
    %v234 = vld [vmem:[%s7 + $0x30] sm:$0xff]
    %v235 = vld [vmem:[%s7 + $0x38] sm:$0xff]
    %v236 = vld [vmem:[%s7 + $0x40] sm:$0xff]
    %vm237 = vcmask 64512
    %v239 = vsel %vm237, %v228, 0
    %v242 = vsel %vm237, %v229, 0
    %v245 = vsel %vm237, %v230, 0
    %v248 = vsel %vm237, %v231, 0
    %v251 = vsel %vm237, %v232, 0
    %v254 = vsel %vm237, %v233, 0
    %v257 = vsel %vm237, %v234, 0
    %v260 = vsel %vm237, %v235, 0
    %v263 = vsel %vm237, %v236, 0
    %265 = vmatprep.subr.mxu0 0.0
    %266 = vmatpush1.msra.mxu0 %v227
    %267 = vmatprep.subr.mxu0 0.0
    %268 = vmatpush1.msra.mxu0 0.0
    %269 = vmatprep.subr.mxu0 0.0
    %270 = vmatpush1.msra.mxu0 0.0
    %271 = vmatprep.subr.mxu0 0.0
    %272 = vmatpush1.msra.mxu0 0.0
    %273 = vmatprep.subr.mxu0 0.0
    %274 = vmatpush1.msra.mxu0 0.0
    %275 = vmatprep.subr.mxu0 0.0
    %276 = vmatpush1.msra.mxu0 0.0
    %277 = vmatprep.subr.mxu0 0.0
    %278 = vmatpush1.msra.mxu0 0.0
    %279 = vmatprep.subr.mxu0 0.0
    %280 = vmatpush1.msra.mxu0 0.0
    %281 = vmatprep.subr.mxu0 0.0
    %282 = vmatpush1.msra.mxu0 0.0
    %283 = vmatprep.subr.mxu0 0.0
    %284 = vmatpush1.msra.mxu0 0.0
    %285 = vmatprep.subr.mxu0 0.0
    %286 = vmatpush1.msra.mxu0 0.0
    %287 = vmatprep.subr.mxu0 0.0
    %288 = vmatpush1.msra.mxu0 0.0
    %289 = vmatprep.subr.mxu0 0.0
    %290 = vmatpush1.msra.mxu0 0.0
    %291 = vmatprep.subr.mxu0 0.0
    %292 = vmatpush1.msra.mxu0 0.0
    %293 = vmatprep.subr.mxu0 0.0
    %294 = vmatpush1.msra.mxu0 0.0
    %295 = vmatprep.subr.mxu0 0.0
    %296 = vmatpush1.msra.mxu0 0.0
    %297 = vmatprep.subr.mxu0 0.0
    %298 = vmatpush1.msra.mxu0 0.0
    %299 = vmatprep.subr.mxu0 0.0
    %300 = vmatpush1.msra.mxu0 0.0
    %301 = vmatprep.subr.mxu0 0.0
    %302 = vmatpush1.msra.mxu0 0.0
    %303 = vmatprep.subr.mxu0 0.0
    %304 = vmatpush1.msra.mxu0 0.0
    %305 = vmatprep.subr.mxu0 0.0
    %306 = vmatpush1.msra.mxu0 0.0
    %307 = vmatprep.subr.mxu0 0.0
    %308 = vmatpush1.msra.mxu0 0.0
    %309 = vmatprep.subr.mxu0 0.0
    %310 = vmatpush1.msra.mxu0 0.0
    %311 = vmatprep.subr.mxu0 0.0
    %312 = vmatpush1.msra.mxu0 0.0
    %313 = vmatprep.subr.mxu0 0.0
    %314 = vmatpush1.msra.mxu0 0.0
    %315 = vmatprep.subr.mxu0 0.0
    %316 = vmatpush1.msra.mxu0 0.0
    %317 = vmatprep.subr.mxu0 0.0
    %318 = vmatpush1.msra.mxu0 0.0
    %319 = vmatprep.subr.mxu0 0.0
    %320 = vmatpush1.msra.mxu0 0.0
    %321 = vmatprep.subr.mxu0 0.0
    %322 = vmatpush1.msra.mxu0 0.0
    %323 = vmatprep.subr.mxu0 0.0
    %324 = vmatpush1.msra.mxu0 0.0
    %325 = vmatprep.subr.mxu0 0.0
    %326 = vmatpush1.msra.mxu0 0.0
    %327 = vmatprep.subr.mxu0 0.0
    %328 = vmatpush1.msra.mxu0 0.0
    %329 = vmatprep.mubr.f32.mxu0 0.0
    %330 = vmatmul.mubr.f32.gmra.mrb[0].mxu0 %v239
    %v331 = vpop.f32.mrb[0].mxu0
    %v332 = vadd.f32 0.0, %v331
    %v333 = vpop.f32.mrb[0].mxu0
    %334 = vmatprep.mubr.f32.mxu0 0.0
    %335 = vmatmul.mubr.f32.gmra.mrb[0].mxu0 %v242
    %v336 = vpop.f32.mrb[0].mxu0
    %v337 = vadd.f32 0.0, %v336
    %v338 = vpop.f32.mrb[0].mxu0
    %339 = vmatprep.mubr.f32.mxu0 0.0
    %340 = vmatmul.mubr.f32.gmra.mrb[0].mxu0 %v245
    %v341 = vpop.f32.mrb[0].mxu0
    %v342 = vadd.f32 0.0, %v341
    %v343 = vpop.f32.mrb[0].mxu0
    %344 = vmatprep.mubr.f32.mxu0 0.0
    %345 = vmatmul.mubr.f32.gmra.mrb[0].mxu0 %v248
    %v346 = vpop.f32.mrb[0].mxu0
    %v347 = vadd.f32 0.0, %v346
    %v348 = vpop.f32.mrb[0].mxu0
    %349 = vmatprep.mubr.f32.mxu0 0.0
    %350 = vmatmul.mubr.f32.gmra.mrb[0].mxu0 %v251
    %v351 = vpop.f32.mrb[0].mxu0
    %v352 = vadd.f32 0.0, %v351
    %v353 = vpop.f32.mrb[0].mxu0
    %354 = vmatprep.mubr.f32.mxu0 0.0
    %355 = vmatmul.mubr.f32.gmra.mrb[0].mxu0 %v254
    %v356 = vpop.f32.mrb[0].mxu0
    %v357 = vadd.f32 0.0, %v356
    %v358 = vpop.f32.mrb[0].mxu0
    %359 = vmatprep.mubr.f32.mxu0 0.0
    %360 = vmatmul.mubr.f32.gmra.mrb[0].mxu0 %v257
    %v361 = vpop.f32.mrb[0].mxu0
    %v362 = vadd.f32 0.0, %v361
    %v363 = vpop.f32.mrb[0].mxu0
    %364 = vmatprep.mubr.f32.mxu0 0.0
    %365 = vmatmul.mubr.f32.gmra.mrb[0].mxu0 %v260
    %v366 = vpop.f32.mrb[0].mxu0
    %v367 = vadd.f32 0.0, %v366
    %v368 = vpop.f32.mrb[0].mxu0
    %369 = vmatprep.mubr.f32.mxu0 0.0
    %370 = vmatmul.mubr.f32.gmra.mrb[0].mxu0 %v263
    %v371 = vpop.f32.mrb[0].mxu0
    %v372 = vadd.f32 0.0, %v371
    %v373 = vpop.f32.mrb[0].mxu0
    %374 = vdwg.mxu0
    %v375 = vld [vmem:[%s8] sm:$0xff]
    %v376 = vld [vmem:[%s8 + $0x8] sm:$0xff]
    %v377 = vld [vmem:[%s8 + $0x10] sm:$0xff]
    %v378 = vld [vmem:[%s8 + $0x18] sm:$0xff]
    %v379 = vld [vmem:[%s8 + $0x20] sm:$0xff]
    %v380 = vld [vmem:[%s8 + $0x28] sm:$0xff]
    %v381 = vld [vmem:[%s8 + $0x30] sm:$0xff]
    %v382 = vld [vmem:[%s8 + $0x38] sm:$0xff]
    %v383 = vld [vmem:[%s8 + $0x40] sm:$0xff]
    %v384 = vld [vmem:[%s8 + $0x48] sm:$0xff]
    %v385 = vld [vmem:[%s8 + $0x50] sm:$0xff]
    %v386 = vld [vmem:[%s8 + $0x58] sm:$0xff]
    %v387 = vld [vmem:[%s8 + $0x60] sm:$0xff]
    %v388 = vld [vmem:[%s8 + $0x68] sm:$0xff]
    %v389 = vld [vmem:[%s8 + $0x70] sm:$0xff]
    %v390 = vld [vmem:[%s8 + $0x78] sm:$0xff]
    %v391 = vld [vmem:[%s8 + $0x80] sm:$0xff]
    %v392 = vld [vmem:[%s8 + $0x88] sm:$0xff]
    %v393 = vld [vmem:[%s8 + $0x90] sm:$0xff]
    %v394 = vld [vmem:[%s8 + $0x98] sm:$0xff]
    %v395 = vld [vmem:[%s8 + $0xa0] sm:$0xff]
    %v396 = vld [vmem:[%s8 + $0xa8] sm:$0xff]
    %v397 = vld [vmem:[%s8 + $0xb0] sm:$0xff]
    %v398 = vld [vmem:[%s8 + $0xb8] sm:$0xff]
    %v399 = vld [vmem:[%s8 + $0xc0] sm:$0xff]
    %v400 = vld [vmem:[%s8 + $0xc8] sm:$0xff]
    %v401 = vld [vmem:[%s8 + $0xd0] sm:$0xff]
    %v402 = vld [vmem:[%s8 + $0xd8] sm:$0xff]
    %v403 = vld [vmem:[%s8 + $0xe0] sm:$0xff]
    %v404 = vld [vmem:[%s8 + $0xe8] sm:$0xff]
    %v405 = vld [vmem:[%s8 + $0xf0] sm:$0xff]
    %v406 = vld [vmem:[%s8 + $0xf8] sm:$0xff]
    %v407 = vld [vmem:[%s8 + $0x100] sm:$0xff]
    %v408 = vld [vmem:[%s8 + $0x108] sm:$0xff]
    %v409 = vld [vmem:[%s8 + $0x110] sm:$0xff]
    %v410 = vld [vmem:[%s8 + $0x118] sm:$0xff]
    %v411 = vld [vmem:[%s8 + $0x120] sm:$0xff]
    %v412 = vld [vmem:[%s8 + $0x128] sm:$0xff]
    %v413 = vld [vmem:[%s8 + $0x130] sm:$0xff]
    %v414 = vld [vmem:[%s8 + $0x138] sm:$0xff]
    %v415 = vld [vmem:[%s8 + $0x140] sm:$0xff]
    %v416 = vld [vmem:[%s8 + $0x148] sm:$0xff]
    %v417 = vld [vmem:[%s8 + $0x150] sm:$0xff]
    %v418 = vld [vmem:[%s8 + $0x158] sm:$0xff]
    %v419 = vld [vmem:[%s8 + $0x160] sm:$0xff]
    %v420 = vld [vmem:[%s8 + $0x168] sm:$0xff]
    %v421 = vld [vmem:[%s8 + $0x170] sm:$0xff]
    %v422 = vld [vmem:[%s8 + $0x178] sm:$0xff]
    %v423 = vld [vmem:[%s8 + $0x180] sm:$0xff]
    %v424 = vld [vmem:[%s8 + $0x188] sm:$0xff]
    %v425 = vld [vmem:[%s8 + $0x190] sm:$0xff]
    %v426 = vld [vmem:[%s8 + $0x198] sm:$0xff]
    %v427 = vld [vmem:[%s8 + $0x1a0] sm:$0xff]
    %v428 = vld [vmem:[%s8 + $0x1a8] sm:$0xff]
    %v429 = vld [vmem:[%s8 + $0x1b0] sm:$0xff]
    %v430 = vld [vmem:[%s8 + $0x1b8] sm:$0xff]
    %v431 = vld [vmem:[%s8 + $0x1c0] sm:$0xff]
    %v432 = vld [vmem:[%s8 + $0x1c8] sm:$0xff]
    %v433 = vld [vmem:[%s8 + $0x1d0] sm:$0xff]
    %v434 = vld [vmem:[%s8 + $0x1d8] sm:$0xff]
    %v435 = vld [vmem:[%s8 + $0x1e0] sm:$0xff]
    %v436 = vld [vmem:[%s8 + $0x1e8] sm:$0xff]
    %v437 = vld [vmem:[%s8 + $0x1f0] sm:$0xff]
    %v438 = vld [vmem:[%s8 + $0x1f8] sm:$0xff]
    %439 = vmatprep.subr.mxu0 0.0
    %440 = vmatpush1.msra.mxu0 %v375
    %441 = vmatprep.subr.mxu0 0.0
    %442 = vmatpush1.msra.mxu0 %v376
    %443 = vmatprep.subr.mxu0 0.0
    %444 = vmatpush1.msra.mxu0 %v377
    %445 = vmatprep.subr.mxu0 0.0
    %446 = vmatpush1.msra.mxu0 %v378
    %447 = vmatprep.subr.mxu0 0.0
    %448 = vmatpush1.msra.mxu0 %v379
    %449 = vmatprep.subr.mxu0 0.0
    %450 = vmatpush1.msra.mxu0 %v380
    %451 = vmatprep.subr.mxu0 0.0
    %452 = vmatpush1.msra.mxu0 %v381
    %453 = vmatprep.subr.mxu0 0.0
    %454 = vmatpush1.msra.mxu0 %v382
    %455 = vmatprep.subr.mxu0 0.0
    %456 = vmatpush1.msra.mxu0 %v383
    %457 = vmatprep.subr.mxu0 0.0
    %458 = vmatpush1.msra.mxu0 %v384
    %459 = vmatprep.subr.mxu0 0.0
    %460 = vmatpush1.msra.mxu0 %v385
    %461 = vmatprep.subr.mxu0 0.0
    %462 = vmatpush1.msra.mxu0 %v386
    %463 = vmatprep.subr.mxu0 0.0
    %464 = vmatpush1.msra.mxu0 %v387
    %465 = vmatprep.subr.mxu0 0.0
    %466 = vmatpush1.msra.mxu0 %v388
    %467 = vmatprep.subr.mxu0 0.0
    %468 = vmatpush1.msra.mxu0 %v389
    %469 = vmatprep.subr.mxu0 0.0
    %470 = vmatpush1.msra.mxu0 %v390
    %471 = vmatprep.subr.mxu0 0.0
    %472 = vmatpush1.msra.mxu0 %v391
    %473 = vmatprep.subr.mxu0 0.0
    %474 = vmatpush1.msra.mxu0 %v392
    %475 = vmatprep.subr.mxu0 0.0
    %476 = vmatpush1.msra.mxu0 %v393
    %477 = vmatprep.subr.mxu0 0.0
    %478 = vmatpush1.msra.mxu0 %v394
    %479 = vmatprep.subr.mxu0 0.0
    %480 = vmatpush1.msra.mxu0 %v395
    %481 = vmatprep.subr.mxu0 0.0
    %482 = vmatpush1.msra.mxu0 %v396
    %483 = vmatprep.subr.mxu0 0.0
    %484 = vmatpush1.msra.mxu0 %v397
    %485 = vmatprep.subr.mxu0 0.0
    %486 = vmatpush1.msra.mxu0 %v398
    %487 = vmatprep.subr.mxu0 0.0
    %488 = vmatpush1.msra.mxu0 %v399
    %489 = vmatprep.subr.mxu0 0.0
    %490 = vmatpush1.msra.mxu0 %v400
    %491 = vmatprep.subr.mxu0 0.0
    %492 = vmatpush1.msra.mxu0 %v401
    %493 = vmatprep.subr.mxu0 0.0
    %494 = vmatpush1.msra.mxu0 %v402
    %495 = vmatprep.subr.mxu0 0.0
    %496 = vmatpush1.msra.mxu0 %v403
    %497 = vmatprep.subr.mxu0 0.0
    %498 = vmatpush1.msra.mxu0 %v404
    %499 = vmatprep.subr.mxu0 0.0
    %500 = vmatpush1.msra.mxu0 %v405
    %501 = vmatprep.subr.mxu0 0.0
    %502 = vmatpush1.msra.mxu0 %v406
    %503 = vmatprep.mubr.f32.mxu0 %v337
    %504 = vmatmul.mubr.f32.gmra.mrb[0].mxu0 %v332
    %v505 = vpop.f32.mrb[0].mxu0
    %v506 = vadd.f32 0.0, %v505
    %v507 = vpop.f32.mrb[0].mxu0
    %508 = vdwg.mxu0
    %509 = vmatprep.subr.mxu0 0.0
    %510 = vmatpush1.msra.mxu0 %v407
    %511 = vmatprep.subr.mxu0 0.0
    %512 = vmatpush1.msra.mxu0 %v408
    %513 = vmatprep.subr.mxu0 0.0
    %514 = vmatpush1.msra.mxu0 %v409
    %515 = vmatprep.subr.mxu0 0.0
    %516 = vmatpush1.msra.mxu0 %v410
    %517 = vmatprep.subr.mxu0 0.0
    %518 = vmatpush1.msra.mxu0 %v411
    %519 = vmatprep.subr.mxu0 0.0
    %520 = vmatpush1.msra.mxu0 %v412
    %521 = vmatprep.subr.mxu0 0.0
    %522 = vmatpush1.msra.mxu0 %v413
    %523 = vmatprep.subr.mxu0 0.0
    %524 = vmatpush1.msra.mxu0 %v414
    %525 = vmatprep.subr.mxu0 0.0
    %526 = vmatpush1.msra.mxu0 %v415
    %527 = vmatprep.subr.mxu0 0.0
    %528 = vmatpush1.msra.mxu0 %v416
    %529 = vmatprep.subr.mxu0 0.0
    %530 = vmatpush1.msra.mxu0 %v417
    %531 = vmatprep.subr.mxu0 0.0
    %532 = vmatpush1.msra.mxu0 %v418
    %533 = vmatprep.subr.mxu0 0.0
    %534 = vmatpush1.msra.mxu0 %v419
    %535 = vmatprep.subr.mxu0 0.0
    %536 = vmatpush1.msra.mxu0 %v420
    %537 = vmatprep.subr.mxu0 0.0
    %538 = vmatpush1.msra.mxu0 %v421
    %539 = vmatprep.subr.mxu0 0.0
    %540 = vmatpush1.msra.mxu0 %v422
    %541 = vmatprep.subr.mxu0 0.0
    %542 = vmatpush1.msra.mxu0 %v423
    %543 = vmatprep.subr.mxu0 0.0
    %544 = vmatpush1.msra.mxu0 %v424
    %545 = vmatprep.subr.mxu0 0.0
    %546 = vmatpush1.msra.mxu0 %v425
    %547 = vmatprep.subr.mxu0 0.0
    %548 = vmatpush1.msra.mxu0 %v426
    %549 = vmatprep.subr.mxu0 0.0
    %550 = vmatpush1.msra.mxu0 %v427
    %551 = vmatprep.subr.mxu0 0.0
    %552 = vmatpush1.msra.mxu0 %v428
    %553 = vmatprep.subr.mxu0 0.0
    %554 = vmatpush1.msra.mxu0 %v429
    %555 = vmatprep.subr.mxu0 0.0
    %556 = vmatpush1.msra.mxu0 %v430
    %557 = vmatprep.subr.mxu0 0.0
    %558 = vmatpush1.msra.mxu0 %v431
    %559 = vmatprep.subr.mxu0 0.0
    %560 = vmatpush1.msra.mxu0 %v432
    %561 = vmatprep.subr.mxu0 0.0
    %562 = vmatpush1.msra.mxu0 %v433
    %563 = vmatprep.subr.mxu0 0.0
    %564 = vmatpush1.msra.mxu0 %v434
    %565 = vmatprep.subr.mxu0 0.0
    %566 = vmatpush1.msra.mxu0 %v435
    %567 = vmatprep.subr.mxu0 0.0
    %568 = vmatpush1.msra.mxu0 %v436
    %569 = vmatprep.subr.mxu0 0.0
    %570 = vmatpush1.msra.mxu0 %v437
    %571 = vmatprep.subr.mxu0 0.0
    %572 = vmatpush1.msra.mxu0 %v438
    %573 = vmatprep.mubr.f32.mxu0 %v352
    %574 = vmatmul.mubr.f32.gmra.mrb[0].mxu0 %v347
    %v575 = vpop.f32.mrb[0].mxu0
    %v576 = vadd.f32 %v506, %v575
    %v577 = vpop.f32.mrb[0].mxu0
    %578 = vdwg.mxu0
    %s579 = scalar_lea.vmem %s8, 512
    %v580 = vld [vmem:[%s579] sm:$0xff]
    %v581 = vld [vmem:[%s579 + $0x8] sm:$0xff]
    %v582 = vld [vmem:[%s579 + $0x10] sm:$0xff]
    %v583 = vld [vmem:[%s579 + $0x18] sm:$0xff]
    %v584 = vld [vmem:[%s579 + $0x20] sm:$0xff]
    %v585 = vld [vmem:[%s579 + $0x28] sm:$0xff]
    %v586 = vld [vmem:[%s579 + $0x30] sm:$0xff]
    %v587 = vld [vmem:[%s579 + $0x38] sm:$0xff]
    %v588 = vld [vmem:[%s579 + $0x40] sm:$0xff]
    %v589 = vld [vmem:[%s579 + $0x48] sm:$0xff]
    %v590 = vld [vmem:[%s579 + $0x50] sm:$0xff]
    %v591 = vld [vmem:[%s579 + $0x58] sm:$0xff]
    %v592 = vld [vmem:[%s579 + $0x60] sm:$0xff]
    %v593 = vld [vmem:[%s579 + $0x68] sm:$0xff]
    %v594 = vld [vmem:[%s579 + $0x70] sm:$0xff]
    %v595 = vld [vmem:[%s579 + $0x78] sm:$0xff]
    %v596 = vld [vmem:[%s579 + $0x80] sm:$0xff]
    %v597 = vld [vmem:[%s579 + $0x88] sm:$0xff]
    %v598 = vld [vmem:[%s579 + $0x90] sm:$0xff]
    %v599 = vld [vmem:[%s579 + $0x98] sm:$0xff]
    %v600 = vld [vmem:[%s579 + $0xa0] sm:$0xff]
    %v601 = vld [vmem:[%s579 + $0xa8] sm:$0xff]
    %v602 = vld [vmem:[%s579 + $0xb0] sm:$0xff]
    %v603 = vld [vmem:[%s579 + $0xb8] sm:$0xff]
    %v604 = vld [vmem:[%s579 + $0xc0] sm:$0xff]
    %v605 = vld [vmem:[%s579 + $0xc8] sm:$0xff]
    %v606 = vld [vmem:[%s579 + $0xd0] sm:$0xff]
    %v607 = vld [vmem:[%s579 + $0xd8] sm:$0xff]
    %v608 = vld [vmem:[%s579 + $0xe0] sm:$0xff]
    %v609 = vld [vmem:[%s579 + $0xe8] sm:$0xff]
    %v610 = vld [vmem:[%s579 + $0xf0] sm:$0xff]
    %v611 = vld [vmem:[%s579 + $0xf8] sm:$0xff]
    %v612 = vld [vmem:[%s579 + $0x100] sm:$0xff]
    %v613 = vld [vmem:[%s579 + $0x108] sm:$0xff]
    %v614 = vld [vmem:[%s579 + $0x110] sm:$0xff]
    %v615 = vld [vmem:[%s579 + $0x118] sm:$0xff]
    %v616 = vld [vmem:[%s579 + $0x120] sm:$0xff]
    %v617 = vld [vmem:[%s579 + $0x128] sm:$0xff]
    %v618 = vld [vmem:[%s579 + $0x130] sm:$0xff]
    %v619 = vld [vmem:[%s579 + $0x138] sm:$0xff]
    %v620 = vld [vmem:[%s579 + $0x140] sm:$0xff]
    %v621 = vld [vmem:[%s579 + $0x148] sm:$0xff]
    %v622 = vld [vmem:[%s579 + $0x150] sm:$0xff]
    %v623 = vld [vmem:[%s579 + $0x158] sm:$0xff]
    %v624 = vld [vmem:[%s579 + $0x160] sm:$0xff]
    %v625 = vld [vmem:[%s579 + $0x168] sm:$0xff]
    %v626 = vld [vmem:[%s579 + $0x170] sm:$0xff]
    %v627 = vld [vmem:[%s579 + $0x178] sm:$0xff]
    %v628 = vld [vmem:[%s579 + $0x180] sm:$0xff]
    %v629 = vld [vmem:[%s579 + $0x188] sm:$0xff]
    %v630 = vld [vmem:[%s579 + $0x190] sm:$0xff]
    %v631 = vld [vmem:[%s579 + $0x198] sm:$0xff]
    %v632 = vld [vmem:[%s579 + $0x1a0] sm:$0xff]
    %v633 = vld [vmem:[%s579 + $0x1a8] sm:$0xff]
    %v634 = vld [vmem:[%s579 + $0x1b0] sm:$0xff]
    %v635 = vld [vmem:[%s579 + $0x1b8] sm:$0xff]
    %v636 = vld [vmem:[%s579 + $0x1c0] sm:$0xff]
    %v637 = vld [vmem:[%s579 + $0x1c8] sm:$0xff]
    %v638 = vld [vmem:[%s579 + $0x1d0] sm:$0xff]
    %v639 = vld [vmem:[%s579 + $0x1d8] sm:$0xff]
    %v640 = vld [vmem:[%s579 + $0x1e0] sm:$0xff]
    %v641 = vld [vmem:[%s579 + $0x1e8] sm:$0xff]
    %v642 = vld [vmem:[%s579 + $0x1f0] sm:$0xff]
    %v643 = vld [vmem:[%s579 + $0x1f8] sm:$0xff]
    %644 = vmatprep.subr.mxu0 0.0
    %645 = vmatpush1.msra.mxu0 %v580
    %646 = vmatprep.subr.mxu0 0.0
    %647 = vmatpush1.msra.mxu0 %v581
    %648 = vmatprep.subr.mxu0 0.0
    %649 = vmatpush1.msra.mxu0 %v582
    %650 = vmatprep.subr.mxu0 0.0
    %651 = vmatpush1.msra.mxu0 %v583
    %652 = vmatprep.subr.mxu0 0.0
    %653 = vmatpush1.msra.mxu0 %v584
    %654 = vmatprep.subr.mxu0 0.0
    %655 = vmatpush1.msra.mxu0 %v585
    %656 = vmatprep.subr.mxu0 0.0
    %657 = vmatpush1.msra.mxu0 %v586
    %658 = vmatprep.subr.mxu0 0.0
    %659 = vmatpush1.msra.mxu0 %v587
    %660 = vmatprep.subr.mxu0 0.0
    %661 = vmatpush1.msra.mxu0 %v588
    %662 = vmatprep.subr.mxu0 0.0
    %663 = vmatpush1.msra.mxu0 %v589
    %664 = vmatprep.subr.mxu0 0.0
    %665 = vmatpush1.msra.mxu0 %v590
    %666 = vmatprep.subr.mxu0 0.0
    %667 = vmatpush1.msra.mxu0 %v591
    %668 = vmatprep.subr.mxu0 0.0
    %669 = vmatpush1.msra.mxu0 %v592
    %670 = vmatprep.subr.mxu0 0.0
    %671 = vmatpush1.msra.mxu0 %v593
    %672 = vmatprep.subr.mxu0 0.0
    %673 = vmatpush1.msra.mxu0 %v594
    %674 = vmatprep.subr.mxu0 0.0
    %675 = vmatpush1.msra.mxu0 %v595
    %676 = vmatprep.subr.mxu0 0.0
    %677 = vmatpush1.msra.mxu0 %v596
    %678 = vmatprep.subr.mxu0 0.0
    %679 = vmatpush1.msra.mxu0 %v597
    %680 = vmatprep.subr.mxu0 0.0
    %681 = vmatpush1.msra.mxu0 %v598
    %682 = vmatprep.subr.mxu0 0.0
    %683 = vmatpush1.msra.mxu0 %v599
    %684 = vmatprep.subr.mxu0 0.0
    %685 = vmatpush1.msra.mxu0 %v600
    %686 = vmatprep.subr.mxu0 0.0
    %687 = vmatpush1.msra.mxu0 %v601
    %688 = vmatprep.subr.mxu0 0.0
    %689 = vmatpush1.msra.mxu0 %v602
    %690 = vmatprep.subr.mxu0 0.0
    %691 = vmatpush1.msra.mxu0 %v603
    %692 = vmatprep.subr.mxu0 0.0
    %693 = vmatpush1.msra.mxu0 %v604
    %694 = vmatprep.subr.mxu0 0.0
    %695 = vmatpush1.msra.mxu0 %v605
    %696 = vmatprep.subr.mxu0 0.0
    %697 = vmatpush1.msra.mxu0 %v606
    %698 = vmatprep.subr.mxu0 0.0
    %699 = vmatpush1.msra.mxu0 %v607
    %700 = vmatprep.subr.mxu0 0.0
    %701 = vmatpush1.msra.mxu0 %v608
    %702 = vmatprep.subr.mxu0 0.0
    %703 = vmatpush1.msra.mxu0 %v609
    %704 = vmatprep.subr.mxu0 0.0
    %705 = vmatpush1.msra.mxu0 %v610
    %706 = vmatprep.subr.mxu0 0.0
    %707 = vmatpush1.msra.mxu0 %v611
    %708 = vmatprep.mubr.f32.mxu0 %v342
    %709 = vmatmul.mubr.f32.gmra.mrb[0].mxu0 %v337
    %v710 = vpop.f32.mrb[0].mxu0
    %v711 = vadd.f32 0.0, %v710
    %v712 = vpop.f32.mrb[0].mxu0
    %713 = vdwg.mxu0
    %714 = vmatprep.subr.mxu0 0.0
    %715 = vmatpush1.msra.mxu0 %v612
    %716 = vmatprep.subr.mxu0 0.0
    %717 = vmatpush1.msra.mxu0 %v613
    %718 = vmatprep.subr.mxu0 0.0
    %719 = vmatpush1.msra.mxu0 %v614
    %720 = vmatprep.subr.mxu0 0.0
    %721 = vmatpush1.msra.mxu0 %v615
    %722 = vmatprep.subr.mxu0 0.0
    %723 = vmatpush1.msra.mxu0 %v616
    %724 = vmatprep.subr.mxu0 0.0
    %725 = vmatpush1.msra.mxu0 %v617
    %726 = vmatprep.subr.mxu0 0.0
    %727 = vmatpush1.msra.mxu0 %v618
    %728 = vmatprep.subr.mxu0 0.0
    %729 = vmatpush1.msra.mxu0 %v619
    %730 = vmatprep.subr.mxu0 0.0
    %731 = vmatpush1.msra.mxu0 %v620
    %732 = vmatprep.subr.mxu0 0.0
    %733 = vmatpush1.msra.mxu0 %v621
    %734 = vmatprep.subr.mxu0 0.0
    %735 = vmatpush1.msra.mxu0 %v622
    %736 = vmatprep.subr.mxu0 0.0
    %737 = vmatpush1.msra.mxu0 %v623
    %738 = vmatprep.subr.mxu0 0.0
    %739 = vmatpush1.msra.mxu0 %v624
    %740 = vmatprep.subr.mxu0 0.0
    %741 = vmatpush1.msra.mxu0 %v625
    %742 = vmatprep.subr.mxu0 0.0
    %743 = vmatpush1.msra.mxu0 %v626
    %744 = vmatprep.subr.mxu0 0.0
    %745 = vmatpush1.msra.mxu0 %v627
    %746 = vmatprep.subr.mxu0 0.0
    %747 = vmatpush1.msra.mxu0 %v628
    %748 = vmatprep.subr.mxu0 0.0
    %749 = vmatpush1.msra.mxu0 %v629
    %750 = vmatprep.subr.mxu0 0.0
    %751 = vmatpush1.msra.mxu0 %v630
    %752 = vmatprep.subr.mxu0 0.0
    %753 = vmatpush1.msra.mxu0 %v631
    %754 = vmatprep.subr.mxu0 0.0
    %755 = vmatpush1.msra.mxu0 %v632
    %756 = vmatprep.subr.mxu0 0.0
    %757 = vmatpush1.msra.mxu0 %v633
    %758 = vmatprep.subr.mxu0 0.0
    %759 = vmatpush1.msra.mxu0 %v634
    %760 = vmatprep.subr.mxu0 0.0
    %761 = vmatpush1.msra.mxu0 %v635
    %762 = vmatprep.subr.mxu0 0.0
    %763 = vmatpush1.msra.mxu0 %v636
    %764 = vmatprep.subr.mxu0 0.0
    %765 = vmatpush1.msra.mxu0 %v637
    %766 = vmatprep.subr.mxu0 0.0
    %767 = vmatpush1.msra.mxu0 %v638
    %768 = vmatprep.subr.mxu0 0.0
    %769 = vmatpush1.msra.mxu0 %v639
    %770 = vmatprep.subr.mxu0 0.0
    %771 = vmatpush1.msra.mxu0 %v640
    %772 = vmatprep.subr.mxu0 0.0
    %773 = vmatpush1.msra.mxu0 %v641
    %774 = vmatprep.subr.mxu0 0.0
    %775 = vmatpush1.msra.mxu0 %v642
    %776 = vmatprep.subr.mxu0 0.0
    %777 = vmatpush1.msra.mxu0 %v643
    %778 = vmatprep.mubr.f32.mxu0 %v357
    %779 = vmatmul.mubr.f32.gmra.mrb[0].mxu0 %v352
    %v780 = vpop.f32.mrb[0].mxu0
    %v781 = vadd.f32 %v711, %v780
    %v782 = vpop.f32.mrb[0].mxu0
    %783 = vdwg.mxu0
    %s784 = scalar_lea.vmem %s8, 1024
    %v785 = vld [vmem:[%s784] sm:$0xff]
    %v786 = vld [vmem:[%s784 + $0x8] sm:$0xff]
    %v787 = vld [vmem:[%s784 + $0x10] sm:$0xff]
    %v788 = vld [vmem:[%s784 + $0x18] sm:$0xff]
    %v789 = vld [vmem:[%s784 + $0x20] sm:$0xff]
    %v790 = vld [vmem:[%s784 + $0x28] sm:$0xff]
    %v791 = vld [vmem:[%s784 + $0x30] sm:$0xff]
    %v792 = vld [vmem:[%s784 + $0x38] sm:$0xff]
    %v793 = vld [vmem:[%s784 + $0x40] sm:$0xff]
    %v794 = vld [vmem:[%s784 + $0x48] sm:$0xff]
    %v795 = vld [vmem:[%s784 + $0x50] sm:$0xff]
    %v796 = vld [vmem:[%s784 + $0x58] sm:$0xff]
    %v797 = vld [vmem:[%s784 + $0x60] sm:$0xff]
    %v798 = vld [vmem:[%s784 + $0x68] sm:$0xff]
    %v799 = vld [vmem:[%s784 + $0x70] sm:$0xff]
    %v800 = vld [vmem:[%s784 + $0x78] sm:$0xff]
    %v801 = vld [vmem:[%s784 + $0x80] sm:$0xff]
    %v802 = vld [vmem:[%s784 + $0x88] sm:$0xff]
    %v803 = vld [vmem:[%s784 + $0x90] sm:$0xff]
    %v804 = vld [vmem:[%s784 + $0x98] sm:$0xff]
    %v805 = vld [vmem:[%s784 + $0xa0] sm:$0xff]
    %v806 = vld [vmem:[%s784 + $0xa8] sm:$0xff]
    %v807 = vld [vmem:[%s784 + $0xb0] sm:$0xff]
    %v808 = vld [vmem:[%s784 + $0xb8] sm:$0xff]
    %v809 = vld [vmem:[%s784 + $0xc0] sm:$0xff]
    %v810 = vld [vmem:[%s784 + $0xc8] sm:$0xff]
    %v811 = vld [vmem:[%s784 + $0xd0] sm:$0xff]
    %v812 = vld [vmem:[%s784 + $0xd8] sm:$0xff]
    %v813 = vld [vmem:[%s784 + $0xe0] sm:$0xff]
    %v814 = vld [vmem:[%s784 + $0xe8] sm:$0xff]
    %v815 = vld [vmem:[%s784 + $0xf0] sm:$0xff]
    %v816 = vld [vmem:[%s784 + $0xf8] sm:$0xff]
    %v817 = vld [vmem:[%s784 + $0x100] sm:$0xff]
    %v818 = vld [vmem:[%s784 + $0x108] sm:$0xff]
    %v819 = vld [vmem:[%s784 + $0x110] sm:$0xff]
    %v820 = vld [vmem:[%s784 + $0x118] sm:$0xff]
    %v821 = vld [vmem:[%s784 + $0x120] sm:$0xff]
    %v822 = vld [vmem:[%s784 + $0x128] sm:$0xff]
    %v823 = vld [vmem:[%s784 + $0x130] sm:$0xff]
    %v824 = vld [vmem:[%s784 + $0x138] sm:$0xff]
    %v825 = vld [vmem:[%s784 + $0x140] sm:$0xff]
    %v826 = vld [vmem:[%s784 + $0x148] sm:$0xff]
    %v827 = vld [vmem:[%s784 + $0x150] sm:$0xff]
    %v828 = vld [vmem:[%s784 + $0x158] sm:$0xff]
    %v829 = vld [vmem:[%s784 + $0x160] sm:$0xff]
    %v830 = vld [vmem:[%s784 + $0x168] sm:$0xff]
    %v831 = vld [vmem:[%s784 + $0x170] sm:$0xff]
    %v832 = vld [vmem:[%s784 + $0x178] sm:$0xff]
    %v833 = vld [vmem:[%s784 + $0x180] sm:$0xff]
    %v834 = vld [vmem:[%s784 + $0x188] sm:$0xff]
    %v835 = vld [vmem:[%s784 + $0x190] sm:$0xff]
    %v836 = vld [vmem:[%s784 + $0x198] sm:$0xff]
    %v837 = vld [vmem:[%s784 + $0x1a0] sm:$0xff]
    %v838 = vld [vmem:[%s784 + $0x1a8] sm:$0xff]
    %v839 = vld [vmem:[%s784 + $0x1b0] sm:$0xff]
    %v840 = vld [vmem:[%s784 + $0x1b8] sm:$0xff]
    %v841 = vld [vmem:[%s784 + $0x1c0] sm:$0xff]
    %v842 = vld [vmem:[%s784 + $0x1c8] sm:$0xff]
    %v843 = vld [vmem:[%s784 + $0x1d0] sm:$0xff]
    %v844 = vld [vmem:[%s784 + $0x1d8] sm:$0xff]
    %v845 = vld [vmem:[%s784 + $0x1e0] sm:$0xff]
    %v846 = vld [vmem:[%s784 + $0x1e8] sm:$0xff]
    %v847 = vld [vmem:[%s784 + $0x1f0] sm:$0xff]
    %v848 = vld [vmem:[%s784 + $0x1f8] sm:$0xff]
    %849 = vmatprep.subr.mxu0 0.0
    %850 = vmatpush1.msra.mxu0 %v785
    %851 = vmatprep.subr.mxu0 0.0
    %852 = vmatpush1.msra.mxu0 %v786
    %853 = vmatprep.subr.mxu0 0.0
    %854 = vmatpush1.msra.mxu0 %v787
    %855 = vmatprep.subr.mxu0 0.0
    %856 = vmatpush1.msra.mxu0 %v788
    %857 = vmatprep.subr.mxu0 0.0
    %858 = vmatpush1.msra.mxu0 %v789
    %859 = vmatprep.subr.mxu0 0.0
    %860 = vmatpush1.msra.mxu0 %v790
    %861 = vmatprep.subr.mxu0 0.0
    %862 = vmatpush1.msra.mxu0 %v791
    %863 = vmatprep.subr.mxu0 0.0
    %864 = vmatpush1.msra.mxu0 %v792
    %865 = vmatprep.subr.mxu0 0.0
    %866 = vmatpush1.msra.mxu0 %v793
    %867 = vmatprep.subr.mxu0 0.0
    %868 = vmatpush1.msra.mxu0 %v794
    %869 = vmatprep.subr.mxu0 0.0
    %870 = vmatpush1.msra.mxu0 %v795
    %871 = vmatprep.subr.mxu0 0.0
    %872 = vmatpush1.msra.mxu0 %v796
    %873 = vmatprep.subr.mxu0 0.0
    %874 = vmatpush1.msra.mxu0 %v797
    %875 = vmatprep.subr.mxu0 0.0
    %876 = vmatpush1.msra.mxu0 %v798
    %877 = vmatprep.subr.mxu0 0.0
    %878 = vmatpush1.msra.mxu0 %v799
    %879 = vmatprep.subr.mxu0 0.0
    %880 = vmatpush1.msra.mxu0 %v800
    %881 = vmatprep.subr.mxu0 0.0
    %882 = vmatpush1.msra.mxu0 %v801
    %883 = vmatprep.subr.mxu0 0.0
    %884 = vmatpush1.msra.mxu0 %v802
    %885 = vmatprep.subr.mxu0 0.0
    %886 = vmatpush1.msra.mxu0 %v803
    %887 = vmatprep.subr.mxu0 0.0
    %888 = vmatpush1.msra.mxu0 %v804
    %889 = vmatprep.subr.mxu0 0.0
    %890 = vmatpush1.msra.mxu0 %v805
    %891 = vmatprep.subr.mxu0 0.0
    %892 = vmatpush1.msra.mxu0 %v806
    %893 = vmatprep.subr.mxu0 0.0
    %894 = vmatpush1.msra.mxu0 %v807
    %895 = vmatprep.subr.mxu0 0.0
    %896 = vmatpush1.msra.mxu0 %v808
    %897 = vmatprep.subr.mxu0 0.0
    %898 = vmatpush1.msra.mxu0 %v809
    %899 = vmatprep.subr.mxu0 0.0
    %900 = vmatpush1.msra.mxu0 %v810
    %901 = vmatprep.subr.mxu0 0.0
    %902 = vmatpush1.msra.mxu0 %v811
    %903 = vmatprep.subr.mxu0 0.0
    %904 = vmatpush1.msra.mxu0 %v812
    %905 = vmatprep.subr.mxu0 0.0
    %906 = vmatpush1.msra.mxu0 %v813
    %907 = vmatprep.subr.mxu0 0.0
    %908 = vmatpush1.msra.mxu0 %v814
    %909 = vmatprep.subr.mxu0 0.0
    %910 = vmatpush1.msra.mxu0 %v815
    %911 = vmatprep.subr.mxu0 0.0
    %912 = vmatpush1.msra.mxu0 %v816
    %913 = vmatprep.mubr.f32.mxu0 %v352
    %914 = vmatmul.mubr.f32.gmra.mrb[0].mxu0 %v347
    %v915 = vpop.f32.mrb[0].mxu0
    %v916 = vadd.f32 0.0, %v915
    %v917 = vpop.f32.mrb[0].mxu0
    %918 = vdwg.mxu0
    %919 = vmatprep.subr.mxu0 0.0
    %920 = vmatpush1.msra.mxu0 %v817
    %921 = vmatprep.subr.mxu0 0.0
    %922 = vmatpush1.msra.mxu0 %v818
    %923 = vmatprep.subr.mxu0 0.0
    %924 = vmatpush1.msra.mxu0 %v819
    %925 = vmatprep.subr.mxu0 0.0
    %926 = vmatpush1.msra.mxu0 %v820
    %927 = vmatprep.subr.mxu0 0.0
    %928 = vmatpush1.msra.mxu0 %v821
    %929 = vmatprep.subr.mxu0 0.0
    %930 = vmatpush1.msra.mxu0 %v822
    %931 = vmatprep.subr.mxu0 0.0
    %932 = vmatpush1.msra.mxu0 %v823
    %933 = vmatprep.subr.mxu0 0.0
    %934 = vmatpush1.msra.mxu0 %v824
    %935 = vmatprep.subr.mxu0 0.0
    %936 = vmatpush1.msra.mxu0 %v825
    %937 = vmatprep.subr.mxu0 0.0
    %938 = vmatpush1.msra.mxu0 %v826
    %939 = vmatprep.subr.mxu0 0.0
    %940 = vmatpush1.msra.mxu0 %v827
    %941 = vmatprep.subr.mxu0 0.0
    %942 = vmatpush1.msra.mxu0 %v828
    %943 = vmatprep.subr.mxu0 0.0
    %944 = vmatpush1.msra.mxu0 %v829
    %945 = vmatprep.subr.mxu0 0.0
    %946 = vmatpush1.msra.mxu0 %v830
    %947 = vmatprep.subr.mxu0 0.0
    %948 = vmatpush1.msra.mxu0 %v831
    %949 = vmatprep.subr.mxu0 0.0
    %950 = vmatpush1.msra.mxu0 %v832
    %951 = vmatprep.subr.mxu0 0.0
    %952 = vmatpush1.msra.mxu0 %v833
    %953 = vmatprep.subr.mxu0 0.0
    %954 = vmatpush1.msra.mxu0 %v834
    %955 = vmatprep.subr.mxu0 0.0
    %956 = vmatpush1.msra.mxu0 %v835
    %957 = vmatprep.subr.mxu0 0.0
    %958 = vmatpush1.msra.mxu0 %v836
    %959 = vmatprep.subr.mxu0 0.0
    %960 = vmatpush1.msra.mxu0 %v837
    %961 = vmatprep.subr.mxu0 0.0
    %962 = vmatpush1.msra.mxu0 %v838
    %963 = vmatprep.subr.mxu0 0.0
    %964 = vmatpush1.msra.mxu0 %v839
    %965 = vmatprep.subr.mxu0 0.0
    %966 = vmatpush1.msra.mxu0 %v840
    %967 = vmatprep.subr.mxu0 0.0
    %968 = vmatpush1.msra.mxu0 %v841
    %969 = vmatprep.subr.mxu0 0.0
    %970 = vmatpush1.msra.mxu0 %v842
    %971 = vmatprep.subr.mxu0 0.0
    %972 = vmatpush1.msra.mxu0 %v843
    %973 = vmatprep.subr.mxu0 0.0
    %974 = vmatpush1.msra.mxu0 %v844
    %975 = vmatprep.subr.mxu0 0.0
    %976 = vmatpush1.msra.mxu0 %v845
    %977 = vmatprep.subr.mxu0 0.0
    %978 = vmatpush1.msra.mxu0 %v846
    %979 = vmatprep.subr.mxu0 0.0
    %980 = vmatpush1.msra.mxu0 %v847
    %981 = vmatprep.subr.mxu0 0.0
    %982 = vmatpush1.msra.mxu0 %v848
    %983 = vmatprep.mubr.f32.mxu0 %v367
    %984 = vmatmul.mubr.f32.gmra.mrb[0].mxu0 %v362
    %v985 = vpop.f32.mrb[0].mxu0
    %v986 = vadd.f32 %v916, %v985
    %v987 = vpop.f32.mrb[0].mxu0
    %988 = vdwg.mxu0
    %s989 = scalar_lea.vmem %s8, 1536
    %v990 = vld [vmem:[%s989] sm:$0xff]
    %v991 = vld [vmem:[%s989 + $0x8] sm:$0xff]
    %v992 = vld [vmem:[%s989 + $0x10] sm:$0xff]
    %v993 = vld [vmem:[%s989 + $0x18] sm:$0xff]
    %v994 = vld [vmem:[%s989 + $0x20] sm:$0xff]
    %v995 = vld [vmem:[%s989 + $0x28] sm:$0xff]
    %v996 = vld [vmem:[%s989 + $0x30] sm:$0xff]
    %v997 = vld [vmem:[%s989 + $0x38] sm:$0xff]
    %v998 = vld [vmem:[%s989 + $0x40] sm:$0xff]
    %v999 = vld [vmem:[%s989 + $0x48] sm:$0xff]
    %v1000 = vld [vmem:[%s989 + $0x50] sm:$0xff]
    %v1001 = vld [vmem:[%s989 + $0x58] sm:$0xff]
    %v1002 = vld [vmem:[%s989 + $0x60] sm:$0xff]
    %v1003 = vld [vmem:[%s989 + $0x68] sm:$0xff]
    %v1004 = vld [vmem:[%s989 + $0x70] sm:$0xff]
    %v1005 = vld [vmem:[%s989 + $0x78] sm:$0xff]
    %v1006 = vld [vmem:[%s989 + $0x80] sm:$0xff]
    %v1007 = vld [vmem:[%s989 + $0x88] sm:$0xff]
    %v1008 = vld [vmem:[%s989 + $0x90] sm:$0xff]
    %v1009 = vld [vmem:[%s989 + $0x98] sm:$0xff]
    %v1010 = vld [vmem:[%s989 + $0xa0] sm:$0xff]
    %v1011 = vld [vmem:[%s989 + $0xa8] sm:$0xff]
    %v1012 = vld [vmem:[%s989 + $0xb0] sm:$0xff]
    %v1013 = vld [vmem:[%s989 + $0xb8] sm:$0xff]
    %v1014 = vld [vmem:[%s989 + $0xc0] sm:$0xff]
    %v1015 = vld [vmem:[%s989 + $0xc8] sm:$0xff]
    %v1016 = vld [vmem:[%s989 + $0xd0] sm:$0xff]
    %v1017 = vld [vmem:[%s989 + $0xd8] sm:$0xff]
    %v1018 = vld [vmem:[%s989 + $0xe0] sm:$0xff]
    %v1019 = vld [vmem:[%s989 + $0xe8] sm:$0xff]
    %v1020 = vld [vmem:[%s989 + $0xf0] sm:$0xff]
    %v1021 = vld [vmem:[%s989 + $0xf8] sm:$0xff]
    %v1022 = vld [vmem:[%s989 + $0x100] sm:$0xff]
    %v1023 = vld [vmem:[%s989 + $0x108] sm:$0xff]
    %v1024 = vld [vmem:[%s989 + $0x110] sm:$0xff]
    %v1025 = vld [vmem:[%s989 + $0x118] sm:$0xff]
    %v1026 = vld [vmem:[%s989 + $0x120] sm:$0xff]
    %v1027 = vld [vmem:[%s989 + $0x128] sm:$0xff]
    %v1028 = vld [vmem:[%s989 + $0x130] sm:$0xff]
    %v1029 = vld [vmem:[%s989 + $0x138] sm:$0xff]
    %v1030 = vld [vmem:[%s989 + $0x140] sm:$0xff]
    %v1031 = vld [vmem:[%s989 + $0x148] sm:$0xff]
    %v1032 = vld [vmem:[%s989 + $0x150] sm:$0xff]
    %v1033 = vld [vmem:[%s989 + $0x158] sm:$0xff]
    %v1034 = vld [vmem:[%s989 + $0x160] sm:$0xff]
    %v1035 = vld [vmem:[%s989 + $0x168] sm:$0xff]
    %v1036 = vld [vmem:[%s989 + $0x170] sm:$0xff]
    %v1037 = vld [vmem:[%s989 + $0x178] sm:$0xff]
    %v1038 = vld [vmem:[%s989 + $0x180] sm:$0xff]
    %v1039 = vld [vmem:[%s989 + $0x188] sm:$0xff]
    %v1040 = vld [vmem:[%s989 + $0x190] sm:$0xff]
    %v1041 = vld [vmem:[%s989 + $0x198] sm:$0xff]
    %v1042 = vld [vmem:[%s989 + $0x1a0] sm:$0xff]
    %v1043 = vld [vmem:[%s989 + $0x1a8] sm:$0xff]
    %v1044 = vld [vmem:[%s989 + $0x1b0] sm:$0xff]
    %v1045 = vld [vmem:[%s989 + $0x1b8] sm:$0xff]
    %v1046 = vld [vmem:[%s989 + $0x1c0] sm:$0xff]
    %v1047 = vld [vmem:[%s989 + $0x1c8] sm:$0xff]
    %v1048 = vld [vmem:[%s989 + $0x1d0] sm:$0xff]
    %v1049 = vld [vmem:[%s989 + $0x1d8] sm:$0xff]
    %v1050 = vld [vmem:[%s989 + $0x1e0] sm:$0xff]
    %v1051 = vld [vmem:[%s989 + $0x1e8] sm:$0xff]
    %v1052 = vld [vmem:[%s989 + $0x1f0] sm:$0xff]
    %v1053 = vld [vmem:[%s989 + $0x1f8] sm:$0xff]
    %1054 = vmatprep.subr.mxu0 0.0
    %1055 = vmatpush1.msra.mxu0 %v990
    %1056 = vmatprep.subr.mxu0 0.0
    %1057 = vmatpush1.msra.mxu0 %v991
    %1058 = vmatprep.subr.mxu0 0.0
    %1059 = vmatpush1.msra.mxu0 %v992
    %1060 = vmatprep.subr.mxu0 0.0
    %1061 = vmatpush1.msra.mxu0 %v993
    %1062 = vmatprep.subr.mxu0 0.0
    %1063 = vmatpush1.msra.mxu0 %v994
    %1064 = vmatprep.subr.mxu0 0.0
    %1065 = vmatpush1.msra.mxu0 %v995
    %1066 = vmatprep.subr.mxu0 0.0
    %1067 = vmatpush1.msra.mxu0 %v996
    %1068 = vmatprep.subr.mxu0 0.0
    %1069 = vmatpush1.msra.mxu0 %v997
    %1070 = vmatprep.subr.mxu0 0.0
    %1071 = vmatpush1.msra.mxu0 %v998
    %1072 = vmatprep.subr.mxu0 0.0
    %1073 = vmatpush1.msra.mxu0 %v999
    %1074 = vmatprep.subr.mxu0 0.0
    %1075 = vmatpush1.msra.mxu0 %v1000
    %1076 = vmatprep.subr.mxu0 0.0
    %1077 = vmatpush1.msra.mxu0 %v1001
    %1078 = vmatprep.subr.mxu0 0.0
    %1079 = vmatpush1.msra.mxu0 %v1002
    %1080 = vmatprep.subr.mxu0 0.0
    %1081 = vmatpush1.msra.mxu0 %v1003
    %1082 = vmatprep.subr.mxu0 0.0
    %1083 = vmatpush1.msra.mxu0 %v1004
    %1084 = vmatprep.subr.mxu0 0.0
    %1085 = vmatpush1.msra.mxu0 %v1005
    %1086 = vmatprep.subr.mxu0 0.0
    %1087 = vmatpush1.msra.mxu0 %v1006
    %1088 = vmatprep.subr.mxu0 0.0
    %1089 = vmatpush1.msra.mxu0 %v1007
    %1090 = vmatprep.subr.mxu0 0.0
    %1091 = vmatpush1.msra.mxu0 %v1008
    %1092 = vmatprep.subr.mxu0 0.0
    %1093 = vmatpush1.msra.mxu0 %v1009
    %1094 = vmatprep.subr.mxu0 0.0
    %1095 = vmatpush1.msra.mxu0 %v1010
    %1096 = vmatprep.subr.mxu0 0.0
    %1097 = vmatpush1.msra.mxu0 %v1011
    %1098 = vmatprep.subr.mxu0 0.0
    %1099 = vmatpush1.msra.mxu0 %v1012
    %1100 = vmatprep.subr.mxu0 0.0
    %1101 = vmatpush1.msra.mxu0 %v1013
    %1102 = vmatprep.subr.mxu0 0.0
    %1103 = vmatpush1.msra.mxu0 %v1014
    %1104 = vmatprep.subr.mxu0 0.0
    %1105 = vmatpush1.msra.mxu0 %v1015
    %1106 = vmatprep.subr.mxu0 0.0
    %1107 = vmatpush1.msra.mxu0 %v1016
    %1108 = vmatprep.subr.mxu0 0.0
    %1109 = vmatpush1.msra.mxu0 %v1017
    %1110 = vmatprep.subr.mxu0 0.0
    %1111 = vmatpush1.msra.mxu0 %v1018
    %1112 = vmatprep.subr.mxu0 0.0
    %1113 = vmatpush1.msra.mxu0 %v1019
    %1114 = vmatprep.subr.mxu0 0.0
    %1115 = vmatpush1.msra.mxu0 %v1020
    %1116 = vmatprep.subr.mxu0 0.0
    %1117 = vmatpush1.msra.mxu0 %v1021
    %1118 = vmatprep.mubr.f32.mxu0 %v357
    %1119 = vmatmul.mubr.f32.gmra.mrb[0].mxu0 %v352
    %v1120 = vpop.f32.mrb[0].mxu0
    %v1121 = vadd.f32 0.0, %v1120
    %v1122 = vpop.f32.mrb[0].mxu0
    %1123 = vdwg.mxu0
    %1124 = vmatprep.subr.mxu0 0.0
    %1125 = vmatpush1.msra.mxu0 %v1022
    %1126 = vmatprep.subr.mxu0 0.0
    %1127 = vmatpush1.msra.mxu0 %v1023
    %1128 = vmatprep.subr.mxu0 0.0
    %1129 = vmatpush1.msra.mxu0 %v1024
    %1130 = vmatprep.subr.mxu0 0.0
    %1131 = vmatpush1.msra.mxu0 %v1025
    %1132 = vmatprep.subr.mxu0 0.0
    %1133 = vmatpush1.msra.mxu0 %v1026
    %1134 = vmatprep.subr.mxu0 0.0
    %1135 = vmatpush1.msra.mxu0 %v1027
    %1136 = vmatprep.subr.mxu0 0.0
    %1137 = vmatpush1.msra.mxu0 %v1028
    %1138 = vmatprep.subr.mxu0 0.0
    %1139 = vmatpush1.msra.mxu0 %v1029
    %1140 = vmatprep.subr.mxu0 0.0
    %1141 = vmatpush1.msra.mxu0 %v1030
    %1142 = vmatprep.subr.mxu0 0.0
    %1143 = vmatpush1.msra.mxu0 %v1031
    %1144 = vmatprep.subr.mxu0 0.0
    %1145 = vmatpush1.msra.mxu0 %v1032
    %1146 = vmatprep.subr.mxu0 0.0
    %1147 = vmatpush1.msra.mxu0 %v1033
    %1148 = vmatprep.subr.mxu0 0.0
    %1149 = vmatpush1.msra.mxu0 %v1034
    %1150 = vmatprep.subr.mxu0 0.0
    %1151 = vmatpush1.msra.mxu0 %v1035
    %1152 = vmatprep.subr.mxu0 0.0
    %1153 = vmatpush1.msra.mxu0 %v1036
    %1154 = vmatprep.subr.mxu0 0.0
    %1155 = vmatpush1.msra.mxu0 %v1037
    %1156 = vmatprep.subr.mxu0 0.0
    %1157 = vmatpush1.msra.mxu0 %v1038
    %1158 = vmatprep.subr.mxu0 0.0
    %1159 = vmatpush1.msra.mxu0 %v1039
    %1160 = vmatprep.subr.mxu0 0.0
    %1161 = vmatpush1.msra.mxu0 %v1040
    %1162 = vmatprep.subr.mxu0 0.0
    %1163 = vmatpush1.msra.mxu0 %v1041
    %1164 = vmatprep.subr.mxu0 0.0
    %1165 = vmatpush1.msra.mxu0 %v1042
    %1166 = vmatprep.subr.mxu0 0.0
    %1167 = vmatpush1.msra.mxu0 %v1043
    %1168 = vmatprep.subr.mxu0 0.0
    %1169 = vmatpush1.msra.mxu0 %v1044
    %1170 = vmatprep.subr.mxu0 0.0
    %1171 = vmatpush1.msra.mxu0 %v1045
    %1172 = vmatprep.subr.mxu0 0.0
    %1173 = vmatpush1.msra.mxu0 %v1046
    %1174 = vmatprep.subr.mxu0 0.0
    %1175 = vmatpush1.msra.mxu0 %v1047
    %1176 = vmatprep.subr.mxu0 0.0
    %1177 = vmatpush1.msra.mxu0 %v1048
    %1178 = vmatprep.subr.mxu0 0.0
    %1179 = vmatpush1.msra.mxu0 %v1049
    %1180 = vmatprep.subr.mxu0 0.0
    %1181 = vmatpush1.msra.mxu0 %v1050
    %1182 = vmatprep.subr.mxu0 0.0
    %1183 = vmatpush1.msra.mxu0 %v1051
    %1184 = vmatprep.subr.mxu0 0.0
    %1185 = vmatpush1.msra.mxu0 %v1052
    %1186 = vmatprep.subr.mxu0 0.0
    %1187 = vmatpush1.msra.mxu0 %v1053
    %1188 = vmatprep.mubr.f32.mxu0 %v372
    %1189 = vmatmul.mubr.f32.gmra.mrb[0].mxu0 %v367
    %v1190 = vpop.f32.mrb[0].mxu0
    %v1191 = vadd.f32 %v1121, %v1190
    %v1192 = vpop.f32.mrb[0].mxu0
    %1193 = vdwg.mxu0
    %v1194 = vld [vmem:[%s9] sm:$0x1]
    %v1196 = vlaneseq
    %v1197 = vshrl.u32 %v1196, 7
    %v1198 = vsub.s32 0, %v1197
    %v1199 = vrot.slane %v1194, %v1198
    %v1201 = vadd.f32 %v576, %v1199
    %v1202 = vadd.f32 %v781, %v1199
    %v1203 = vadd.f32 %v986, %v1199
    %v1204 = vadd.f32 %v1191, %v1199
    %v1205 = vld [vmem:[%s5] sm:$0x1]
    %v1206 = vld [vmem:[%s6] sm:$0x1]
    %v1207 = vadd.f32 %v1201, %v1202
    %v1208 = vadd.f32 %v1207, %v1203
    %v1209 = vadd.f32 %v1208, %v1204
    %v1210 = vrot.slane %v1209, 4
    %v1211 = vadd.f32 %v1209, %v1210
    %v1212 = vrot.slane %v1211, 2
    %v1213 = vadd.f32 %v1211, %v1212
    %v1214 = vrot.slane %v1213, 1
    %v1215 = vadd.f32 %v1213, %v1214
    %v1216 = vmul.f32 %v1215, 0.03125
    %v1217 = vsub.f32 %v1201, %v1216
    %v1218 = vsub.f32 %v1202, %v1216
    %v1219 = vsub.f32 %v1203, %v1216
    %v1220 = vsub.f32 %v1204, %v1216
    %v1221 = vmul.f32 %v1217, %v1217
    %v1222 = vmul.f32 %v1218, %v1218
    %v1223 = vmul.f32 %v1219, %v1219
    %v1224 = vmul.f32 %v1220, %v1220
    %v1225 = vadd.f32 %v1221, %v1222
    %v1226 = vadd.f32 %v1225, %v1223
    %v1227 = vadd.f32 %v1226, %v1224
    %v1228 = vrot.slane %v1227, 4
    %v1229 = vadd.f32 %v1227, %v1228
    %v1230 = vrot.slane %v1229, 2
    %v1231 = vadd.f32 %v1229, %v1230
    %v1232 = vrot.slane %v1231, 1
    %v1233 = vadd.f32 %v1231, %v1232
    %v1234 = vmul.f32 %v1233, 0.03125
    %v1235 = vadd.f32 %v1234, 0.8
    %v1236 = vrsqrt.pop %v1235
    %v1237 = vmul.f32 %v1217, %v1236
    %v1238 = vmul.f32 %v1218, %v1236
    %v1239 = vmul.f32 %v1219, %v1236
    %v1240 = vmul.f32 %v1220, %v1236
    %v1242 = vlaneseq
    %v1243 = vshrl.u32 %v1242, 7
    %v1244 = vsub.s32 0, %v1243
    %v1245 = vrot.slane %v1205, %v1244
    %v1247 = vmul.f32 %v1237, %v1245
    %v1248 = vmul.f32 %v1238, %v1245
    %v1249 = vmul.f32 %v1239, %v1245
    %v1250 = vmul.f32 %v1240, %v1245
    %v1252 = vlaneseq
    %v1253 = vshrl.u32 %v1252, 7
    %v1254 = vsub.s32 0, %v1253
    %v1255 = vrot.slane %v1206, %v1254
    %v1257 = vadd.f32 %v1247, %v1255
    %v1258 = vadd.f32 %v1248, %v1255
    %v1259 = vadd.f32 %v1249, %v1255
    %v1260 = vadd.f32 %v1250, %v1255
    %vm1261 = vcmp.gt.f32.partialorder %v1257, 0.0
    %vm1262 = vcmp.gt.f32.partialorder %v1258, 0.0
    %vm1263 = vcmp.gt.f32.partialorder %v1259, 0.0
    %vm1264 = vcmp.gt.f32.partialorder %v1260, 0.0
    %v1265 = vmul.f32 %v1257, 0.2
    %v1266 = vmul.f32 %v1258, 0.2
    %v1267 = vmul.f32 %v1259, 0.2
    %v1268 = vmul.f32 %v1260, 0.2
    %v1269 = vsel %vm1261, %v1257, %v1265
    %v1270 = vsel %vm1262, %v1258, %v1266
    %v1271 = vsel %vm1263, %v1259, %v1267
    %v1272 = vsel %vm1264, %v1260, %v1268
    %v1273 = vld [vmem:[#allocation2] sm:$0xff]
    %v1274 = vld [vmem:[#allocation2 + $0x8] sm:$0xff]
    %v1275 = vld [vmem:[#allocation2 + $0x10] sm:$0xff]
    %v1276 = vld [vmem:[#allocation2 + $0x18] sm:$0xff]
    %v1277 = vld [vmem:[#allocation2 + $0x20] sm:$0xff]
    %v1278 = vld [vmem:[#allocation2 + $0x28] sm:$0xff]
    %v1279 = vld [vmem:[#allocation2 + $0x30] sm:$0xff]
    %v1280 = vld [vmem:[#allocation2 + $0x38] sm:$0xff]
    %v1281 = vld [vmem:[#allocation2 + $0x40] sm:$0xff]
    %v1282 = vld [vmem:[#allocation2 + $0x48] sm:$0xff]
    %v1283 = vld [vmem:[#allocation2 + $0x50] sm:$0xff]
    %v1284 = vld [vmem:[#allocation2 + $0x58] sm:$0xff]
    %v1285 = vld [vmem:[#allocation2 + $0x60] sm:$0xff]
    %v1286 = vld [vmem:[#allocation2 + $0x68] sm:$0xff]
    %v1287 = vld [vmem:[#allocation2 + $0x70] sm:$0xff]
    %v1288 = vld [vmem:[#allocation2 + $0x78] sm:$0xff]
    %v1289 = vld [vmem:[#allocation2 + $0x80] sm:$0xff]
    %v1290 = vld [vmem:[#allocation2 + $0x88] sm:$0xff]
    %v1291 = vld [vmem:[#allocation2 + $0x90] sm:$0xff]
    %v1292 = vld [vmem:[#allocation2 + $0x98] sm:$0xff]
    %v1293 = vld [vmem:[#allocation2 + $0xa0] sm:$0xff]
    %v1294 = vld [vmem:[#allocation2 + $0xa8] sm:$0xff]
    %v1295 = vld [vmem:[#allocation2 + $0xb0] sm:$0xff]
    %v1296 = vld [vmem:[#allocation2 + $0xb8] sm:$0xff]
    %v1297 = vld [vmem:[#allocation2 + $0xc0] sm:$0xff]
    %v1298 = vld [vmem:[#allocation2 + $0xc8] sm:$0xff]
    %v1299 = vld [vmem:[#allocation2 + $0xd0] sm:$0xff]
    %v1300 = vld [vmem:[#allocation2 + $0xd8] sm:$0xff]
    %v1301 = vld [vmem:[#allocation2 + $0xe0] sm:$0xff]
    %v1302 = vld [vmem:[#allocation2 + $0xe8] sm:$0xff]
    %v1303 = vld [vmem:[#allocation2 + $0xf0] sm:$0xff]
    %v1304 = vld [vmem:[#allocation2 + $0xf8] sm:$0xff]
    %v1305 = vld [vmem:[#allocation2 + $0x100] sm:$0xff]
    %v1306 = vld [vmem:[#allocation2 + $0x108] sm:$0xff]
    %v1307 = vld [vmem:[#allocation2 + $0x110] sm:$0xff]
    %v1308 = vld [vmem:[#allocation2 + $0x118] sm:$0xff]
    %vm1309 = vcmask 261120
    %v1311 = vsel %vm1309, %v1273, 0
    %v1314 = vsel %vm1309, %v1274, 0
    %v1317 = vsel %vm1309, %v1275, 0
    %v1320 = vsel %vm1309, %v1276, 0
    %v1323 = vsel %vm1309, %v1277, 0
    %v1326 = vsel %vm1309, %v1278, 0
    %v1329 = vsel %vm1309, %v1279, 0
    %v1332 = vsel %vm1309, %v1280, 0
    %v1335 = vsel %vm1309, %v1281, 0
    %v1338 = vsel %vm1309, %v1282, 0
    %v1341 = vsel %vm1309, %v1283, 0
    %v1344 = vsel %vm1309, %v1284, 0
    %v1347 = vsel %vm1309, %v1285, 0
    %v1350 = vsel %vm1309, %v1286, 0
    %v1353 = vsel %vm1309, %v1287, 0
    %v1356 = vsel %vm1309, %v1288, 0
    %v1359 = vsel %vm1309, %v1289, 0
    %v1362 = vsel %vm1309, %v1290, 0
    %v1365 = vsel %vm1309, %v1291, 0
    %v1368 = vsel %vm1309, %v1292, 0
    %v1371 = vsel %vm1309, %v1293, 0
    %v1374 = vsel %vm1309, %v1294, 0
    %v1377 = vsel %vm1309, %v1295, 0
    %v1380 = vsel %vm1309, %v1296, 0
    %v1383 = vsel %vm1309, %v1297, 0
    %v1386 = vsel %vm1309, %v1298, 0
    %v1389 = vsel %vm1309, %v1299, 0
    %v1392 = vsel %vm1309, %v1300, 0
    %v1395 = vsel %vm1309, %v1301, 0
    %v1398 = vsel %vm1309, %v1302, 0
    %v1401 = vsel %vm1309, %v1303, 0
    %v1404 = vsel %vm1309, %v1304, 0
    %v1407 = vsel %vm1309, %v1305, 0
    %v1410 = vsel %vm1309, %v1306, 0
    %v1413 = vsel %vm1309, %v1307, 0
    %v1416 = vsel %vm1309, %v1308, 0
    %1418 = vmatprep.subr.mxu0 0.0
    %1419 = vmatpush1.msra.mxu0 %v1269
    %1420 = vmatprep.subr.mxu0 0.0
    %1421 = vmatpush1.msra.mxu0 %v1270
    %1422 = vmatprep.subr.mxu0 0.0
    %1423 = vmatpush1.msra.mxu0 %v1271
    %1424 = vmatprep.subr.mxu0 0.0
    %1425 = vmatpush1.msra.mxu0 %v1272
    %1426 = vmatprep.subr.mxu0 0.0
    %1427 = vmatpush1.msra.mxu0 0.0
    %1428 = vmatprep.subr.mxu0 0.0
    %1429 = vmatpush1.msra.mxu0 0.0
    %1430 = vmatprep.subr.mxu0 0.0
    %1431 = vmatpush1.msra.mxu0 0.0
    %1432 = vmatprep.subr.mxu0 0.0
    %1433 = vmatpush1.msra.mxu0 0.0
    %1434 = vmatprep.subr.mxu0 0.0
    %1435 = vmatpush1.msra.mxu0 0.0
    %1436 = vmatprep.subr.mxu0 0.0
    %1437 = vmatpush1.msra.mxu0 0.0
    %1438 = vmatprep.subr.mxu0 0.0
    %1439 = vmatpush1.msra.mxu0 0.0
    %1440 = vmatprep.subr.mxu0 0.0
    %1441 = vmatpush1.msra.mxu0 0.0
    %1442 = vmatprep.subr.mxu0 0.0
    %1443 = vmatpush1.msra.mxu0 0.0
    %1444 = vmatprep.subr.mxu0 0.0
    %1445 = vmatpush1.msra.mxu0 0.0
    %1446 = vmatprep.subr.mxu0 0.0
    %1447 = vmatpush1.msra.mxu0 0.0
    %1448 = vmatprep.subr.mxu0 0.0
    %1449 = vmatpush1.msra.mxu0 0.0
    %1450 = vmatprep.subr.mxu0 0.0
    %1451 = vmatpush1.msra.mxu0 0.0
    %1452 = vmatprep.subr.mxu0 0.0
    %1453 = vmatpush1.msra.mxu0 0.0
    %1454 = vmatprep.subr.mxu0 0.0
    %1455 = vmatpush1.msra.mxu0 0.0
    %1456 = vmatprep.subr.mxu0 0.0
    %1457 = vmatpush1.msra.mxu0 0.0
    %1458 = vmatprep.subr.mxu0 0.0
    %1459 = vmatpush1.msra.mxu0 0.0
    %1460 = vmatprep.subr.mxu0 0.0
    %1461 = vmatpush1.msra.mxu0 0.0
    %1462 = vmatprep.subr.mxu0 0.0
    %1463 = vmatpush1.msra.mxu0 0.0
    %1464 = vmatprep.subr.mxu0 0.0
    %1465 = vmatpush1.msra.mxu0 0.0
    %1466 = vmatprep.subr.mxu0 0.0
    %1467 = vmatpush1.msra.mxu0 0.0
    %1468 = vmatprep.subr.mxu0 0.0
    %1469 = vmatpush1.msra.mxu0 0.0
    %1470 = vmatprep.subr.mxu0 0.0
    %1471 = vmatpush1.msra.mxu0 0.0
    %1472 = vmatprep.subr.mxu0 0.0
    %1473 = vmatpush1.msra.mxu0 0.0
    %1474 = vmatprep.subr.mxu0 0.0
    %1475 = vmatpush1.msra.mxu0 0.0
    %1476 = vmatprep.subr.mxu0 0.0
    %1477 = vmatpush1.msra.mxu0 0.0
    %1478 = vmatprep.subr.mxu0 0.0
    %1479 = vmatpush1.msra.mxu0 0.0
    %1480 = vmatprep.subr.mxu0 0.0
    %1481 = vmatpush1.msra.mxu0 0.0
    %1482 = vmatprep.mubr.f32.mxu0 0.0
    %1483 = vmatmul.mubr.f32.gmra.mrb[0].mxu0 %v1311
    %v1484 = vpop.f32.mrb[0].mxu0
    %v1485 = vadd.f32 0.0, %v1484
    %v1486 = vpop.f32.mrb[0].mxu0
    %1487 = vmatprep.mubr.f32.mxu0 0.0
    %1488 = vmatmul.mubr.f32.gmra.mrb[0].mxu0 %v1314
    %v1489 = vpop.f32.mrb[0].mxu0
    %v1490 = vadd.f32 0.0, %v1489
    %v1491 = vpop.f32.mrb[0].mxu0
    %1492 = vmatprep.mubr.f32.mxu0 0.0
    %1493 = vmatmul.mubr.f32.gmra.mrb[0].mxu0 %v1317
    %v1494 = vpop.f32.mrb[0].mxu0
    %v1495 = vadd.f32 0.0, %v1494
    %v1496 = vpop.f32.mrb[0].mxu0
    %1497 = vmatprep.mubr.f32.mxu0 0.0
    %1498 = vmatmul.mubr.f32.gmra.mrb[0].mxu0 %v1320
    %v1499 = vpop.f32.mrb[0].mxu0
    %v1500 = vadd.f32 0.0, %v1499
    %v1501 = vpop.f32.mrb[0].mxu0
    %1502 = vmatprep.mubr.f32.mxu0 0.0
    %1503 = vmatmul.mubr.f32.gmra.mrb[0].mxu0 %v1323
    %v1504 = vpop.f32.mrb[0].mxu0
    %v1505 = vadd.f32 0.0, %v1504
    %v1506 = vpop.f32.mrb[0].mxu0
    %1507 = vmatprep.mubr.f32.mxu0 0.0
    %1508 = vmatmul.mubr.f32.gmra.mrb[0].mxu0 %v1326
    %v1509 = vpop.f32.mrb[0].mxu0
    %v1510 = vadd.f32 0.0, %v1509
    %v1511 = vpop.f32.mrb[0].mxu0
    %1512 = vmatprep.mubr.f32.mxu0 0.0
    %1513 = vmatmul.mubr.f32.gmra.mrb[0].mxu0 %v1329
    %v1514 = vpop.f32.mrb[0].mxu0
    %v1515 = vadd.f32 0.0, %v1514
    %v1516 = vpop.f32.mrb[0].mxu0
    %1517 = vmatprep.mubr.f32.mxu0 0.0
    %1518 = vmatmul.mubr.f32.gmra.mrb[0].mxu0 %v1332
    %v1519 = vpop.f32.mrb[0].mxu0
    %v1520 = vadd.f32 0.0, %v1519
    %v1521 = vpop.f32.mrb[0].mxu0
    %1522 = vmatprep.mubr.f32.mxu0 0.0
    %1523 = vmatmul.mubr.f32.gmra.mrb[0].mxu0 %v1335
    %v1524 = vpop.f32.mrb[0].mxu0
    %v1525 = vadd.f32 0.0, %v1524
    %v1526 = vpop.f32.mrb[0].mxu0
    %1527 = vmatprep.mubr.f32.mxu0 0.0
    %1528 = vmatmul.mubr.f32.gmra.mrb[0].mxu0 %v1338
    %v1529 = vpop.f32.mrb[0].mxu0
    %v1530 = vadd.f32 0.0, %v1529
    %v1531 = vpop.f32.mrb[0].mxu0
    %1532 = vmatprep.mubr.f32.mxu0 0.0
    %1533 = vmatmul.mubr.f32.gmra.mrb[0].mxu0 %v1341
    %v1534 = vpop.f32.mrb[0].mxu0
    %v1535 = vadd.f32 0.0, %v1534
    %v1536 = vpop.f32.mrb[0].mxu0
    %1537 = vmatprep.mubr.f32.mxu0 0.0
    %1538 = vmatmul.mubr.f32.gmra.mrb[0].mxu0 %v1344
    %v1539 = vpop.f32.mrb[0].mxu0
    %v1540 = vadd.f32 0.0, %v1539
    %v1541 = vpop.f32.mrb[0].mxu0
    %1542 = vmatprep.mubr.f32.mxu0 0.0
    %1543 = vmatmul.mubr.f32.gmra.mrb[0].mxu0 %v1347
    %v1544 = vpop.f32.mrb[0].mxu0
    %v1545 = vadd.f32 0.0, %v1544
    %v1546 = vpop.f32.mrb[0].mxu0
    %1547 = vmatprep.mubr.f32.mxu0 0.0
    %1548 = vmatmul.mubr.f32.gmra.mrb[0].mxu0 %v1350
    %v1549 = vpop.f32.mrb[0].mxu0
    %v1550 = vadd.f32 0.0, %v1549
    %v1551 = vpop.f32.mrb[0].mxu0
    %1552 = vmatprep.mubr.f32.mxu0 0.0
    %1553 = vmatmul.mubr.f32.gmra.mrb[0].mxu0 %v1353
    %v1554 = vpop.f32.mrb[0].mxu0
    %v1555 = vadd.f32 0.0, %v1554
    %v1556 = vpop.f32.mrb[0].mxu0
    %1557 = vmatprep.mubr.f32.mxu0 0.0
    %1558 = vmatmul.mubr.f32.gmra.mrb[0].mxu0 %v1356
    %v1559 = vpop.f32.mrb[0].mxu0
    %v1560 = vadd.f32 0.0, %v1559
    %v1561 = vpop.f32.mrb[0].mxu0
    %1562 = vmatprep.mubr.f32.mxu0 0.0
    %1563 = vmatmul.mubr.f32.gmra.mrb[0].mxu0 %v1359
    %v1564 = vpop.f32.mrb[0].mxu0
    %v1565 = vadd.f32 0.0, %v1564
    %v1566 = vpop.f32.mrb[0].mxu0
    %1567 = vmatprep.mubr.f32.mxu0 0.0
    %1568 = vmatmul.mubr.f32.gmra.mrb[0].mxu0 %v1362
    %v1569 = vpop.f32.mrb[0].mxu0
    %v1570 = vadd.f32 0.0, %v1569
    %v1571 = vpop.f32.mrb[0].mxu0
    %1572 = vmatprep.mubr.f32.mxu0 0.0
    %1573 = vmatmul.mubr.f32.gmra.mrb[0].mxu0 %v1365
    %v1574 = vpop.f32.mrb[0].mxu0
    %v1575 = vadd.f32 0.0, %v1574
    %v1576 = vpop.f32.mrb[0].mxu0
    %1577 = vmatprep.mubr.f32.mxu0 0.0
    %1578 = vmatmul.mubr.f32.gmra.mrb[0].mxu0 %v1368
    %v1579 = vpop.f32.mrb[0].mxu0
    %v1580 = vadd.f32 0.0, %v1579
    %v1581 = vpop.f32.mrb[0].mxu0
    %1582 = vmatprep.mubr.f32.mxu0 0.0
    %1583 = vmatmul.mubr.f32.gmra.mrb[0].mxu0 %v1371
    %v1584 = vpop.f32.mrb[0].mxu0
    %v1585 = vadd.f32 0.0, %v1584
    %v1586 = vpop.f32.mrb[0].mxu0
    %1587 = vmatprep.mubr.f32.mxu0 0.0
    %1588 = vmatmul.mubr.f32.gmra.mrb[0].mxu0 %v1374
    %v1589 = vpop.f32.mrb[0].mxu0
    %v1590 = vadd.f32 0.0, %v1589
    %v1591 = vpop.f32.mrb[0].mxu0
    %1592 = vmatprep.mubr.f32.mxu0 0.0
    %1593 = vmatmul.mubr.f32.gmra.mrb[0].mxu0 %v1377
    %v1594 = vpop.f32.mrb[0].mxu0
    %v1595 = vadd.f32 0.0, %v1594
    %v1596 = vpop.f32.mrb[0].mxu0
    %1597 = vmatprep.mubr.f32.mxu0 0.0
    %1598 = vmatmul.mubr.f32.gmra.mrb[0].mxu0 %v1380
    %v1599 = vpop.f32.mrb[0].mxu0
    %v1600 = vadd.f32 0.0, %v1599
    %v1601 = vpop.f32.mrb[0].mxu0
    %1602 = vmatprep.mubr.f32.mxu0 0.0
    %1603 = vmatmul.mubr.f32.gmra.mrb[0].mxu0 %v1383
    %v1604 = vpop.f32.mrb[0].mxu0
    %v1605 = vadd.f32 0.0, %v1604
    %v1606 = vpop.f32.mrb[0].mxu0
    %1607 = vmatprep.mubr.f32.mxu0 0.0
    %1608 = vmatmul.mubr.f32.gmra.mrb[0].mxu0 %v1386
    %v1609 = vpop.f32.mrb[0].mxu0
    %v1610 = vadd.f32 0.0, %v1609
    %v1611 = vpop.f32.mrb[0].mxu0
    %1612 = vmatprep.mubr.f32.mxu0 0.0
    %1613 = vmatmul.mubr.f32.gmra.mrb[0].mxu0 %v1389
    %v1614 = vpop.f32.mrb[0].mxu0
    %v1615 = vadd.f32 0.0, %v1614
    %v1616 = vpop.f32.mrb[0].mxu0
    %1617 = vmatprep.mubr.f32.mxu0 0.0
    %1618 = vmatmul.mubr.f32.gmra.mrb[0].mxu0 %v1392
    %v1619 = vpop.f32.mrb[0].mxu0
    %v1620 = vadd.f32 0.0, %v1619
    %v1621 = vpop.f32.mrb[0].mxu0
    %1622 = vmatprep.mubr.f32.mxu0 0.0
    %1623 = vmatmul.mubr.f32.gmra.mrb[0].mxu0 %v1395
    %v1624 = vpop.f32.mrb[0].mxu0
    %v1625 = vadd.f32 0.0, %v1624
    %v1626 = vpop.f32.mrb[0].mxu0
    %1627 = vmatprep.mubr.f32.mxu0 0.0
    %1628 = vmatmul.mubr.f32.gmra.mrb[0].mxu0 %v1398
    %v1629 = vpop.f32.mrb[0].mxu0
    %v1630 = vadd.f32 0.0, %v1629
    %v1631 = vpop.f32.mrb[0].mxu0
    %1632 = vmatprep.mubr.f32.mxu0 0.0
    %1633 = vmatmul.mubr.f32.gmra.mrb[0].mxu0 %v1401
    %v1634 = vpop.f32.mrb[0].mxu0
    %v1635 = vadd.f32 0.0, %v1634
    %v1636 = vpop.f32.mrb[0].mxu0
    %1637 = vmatprep.mubr.f32.mxu0 0.0
    %1638 = vmatmul.mubr.f32.gmra.mrb[0].mxu0 %v1404
    %v1639 = vpop.f32.mrb[0].mxu0
    %v1640 = vadd.f32 0.0, %v1639
    %v1641 = vpop.f32.mrb[0].mxu0
    %1642 = vmatprep.mubr.f32.mxu0 0.0
    %1643 = vmatmul.mubr.f32.gmra.mrb[0].mxu0 %v1407
    %v1644 = vpop.f32.mrb[0].mxu0
    %v1645 = vadd.f32 0.0, %v1644
    %v1646 = vpop.f32.mrb[0].mxu0
    %1647 = vmatprep.mubr.f32.mxu0 0.0
    %1648 = vmatmul.mubr.f32.gmra.mrb[0].mxu0 %v1410
    %v1649 = vpop.f32.mrb[0].mxu0
    %v1650 = vadd.f32 0.0, %v1649
    %v1651 = vpop.f32.mrb[0].mxu0
    %1652 = vmatprep.mubr.f32.mxu0 0.0
    %1653 = vmatmul.mubr.f32.gmra.mrb[0].mxu0 %v1413
    %v1654 = vpop.f32.mrb[0].mxu0
    %v1655 = vadd.f32 0.0, %v1654
    %v1656 = vpop.f32.mrb[0].mxu0
    %1657 = vmatprep.mubr.f32.mxu0 0.0
    %1658 = vmatmul.mubr.f32.gmra.mrb[0].mxu0 %v1416
    %v1659 = vpop.f32.mrb[0].mxu0
    %v1660 = vadd.f32 0.0, %v1659
    %v1661 = vpop.f32.mrb[0].mxu0
    %1662 = vdwg.mxu0
    %v1663 = vld [vmem:[#allocation4] sm:$0xff]
    %v1664 = vld [vmem:[#allocation4 + $0x8] sm:$0xff]
    %v1665 = vld [vmem:[#allocation4 + $0x10] sm:$0xff]
    %v1666 = vld [vmem:[#allocation4 + $0x18] sm:$0xff]
    %v1667 = vld [vmem:[#allocation4 + $0x20] sm:$0xff]
    %v1668 = vld [vmem:[#allocation4 + $0x28] sm:$0xff]
    %v1669 = vld [vmem:[#allocation4 + $0x30] sm:$0xff]
    %v1670 = vld [vmem:[#allocation4 + $0x38] sm:$0xff]
    %v1671 = vld [vmem:[#allocation4 + $0x40] sm:$0xff]
    %v1672 = vld [vmem:[#allocation4 + $0x48] sm:$0xff]
    %v1673 = vld [vmem:[#allocation4 + $0x50] sm:$0xff]
    %v1674 = vld [vmem:[#allocation4 + $0x58] sm:$0xff]
    %v1675 = vld [vmem:[#allocation4 + $0x60] sm:$0xff]
    %v1676 = vld [vmem:[#allocation4 + $0x68] sm:$0xff]
    %v1677 = vld [vmem:[#allocation4 + $0x70] sm:$0xff]
    %v1678 = vld [vmem:[#allocation4 + $0x78] sm:$0xff]
    %v1679 = vld [vmem:[#allocation4 + $0x80] sm:$0xff]
    %v1680 = vld [vmem:[#allocation4 + $0x88] sm:$0xff]
    %v1681 = vld [vmem:[#allocation4 + $0x90] sm:$0xff]
    %v1682 = vld [vmem:[#allocation4 + $0x98] sm:$0xff]
    %v1683 = vld [vmem:[#allocation4 + $0xa0] sm:$0xff]
    %v1684 = vld [vmem:[#allocation4 + $0xa8] sm:$0xff]
    %v1685 = vld [vmem:[#allocation4 + $0xb0] sm:$0xff]
    %v1686 = vld [vmem:[#allocation4 + $0xb8] sm:$0xff]
    %v1687 = vld [vmem:[#allocation4 + $0xc0] sm:$0xff]
    %v1688 = vld [vmem:[#allocation4 + $0xc8] sm:$0xff]
    %v1689 = vld [vmem:[#allocation4 + $0xd0] sm:$0xff]
    %v1690 = vld [vmem:[#allocation4 + $0xd8] sm:$0xff]
    %v1691 = vld [vmem:[#allocation4 + $0xe0] sm:$0xff]
    %v1692 = vld [vmem:[#allocation4 + $0xe8] sm:$0xff]
    %v1693 = vld [vmem:[#allocation4 + $0xf0] sm:$0xff]
    %v1694 = vld [vmem:[#allocation4 + $0xf8] sm:$0xff]
    %v1695 = vld [vmem:[#allocation4 + $0x100] sm:$0xff]
    %v1696 = vld [vmem:[#allocation4 + $0x108] sm:$0xff]
    %v1697 = vld [vmem:[#allocation4 + $0x110] sm:$0xff]
    %v1698 = vld [vmem:[#allocation4 + $0x118] sm:$0xff]
    %v1699 = vld [vmem:[#allocation4 + $0x120] sm:$0xff]
    %v1700 = vld [vmem:[#allocation4 + $0x128] sm:$0xff]
    %v1701 = vld [vmem:[#allocation4 + $0x130] sm:$0xff]
    %v1702 = vld [vmem:[#allocation4 + $0x138] sm:$0xff]
    %v1703 = vld [vmem:[#allocation4 + $0x140] sm:$0xff]
    %v1704 = vld [vmem:[#allocation4 + $0x148] sm:$0xff]
    %v1705 = vld [vmem:[#allocation4 + $0x150] sm:$0xff]
    %v1706 = vld [vmem:[#allocation4 + $0x158] sm:$0xff]
    %v1707 = vld [vmem:[#allocation4 + $0x160] sm:$0xff]
    %v1708 = vld [vmem:[#allocation4 + $0x168] sm:$0xff]
    %v1709 = vld [vmem:[#allocation4 + $0x170] sm:$0xff]
    %v1710 = vld [vmem:[#allocation4 + $0x178] sm:$0xff]
    %v1711 = vld [vmem:[#allocation4 + $0x180] sm:$0xff]
    %v1712 = vld [vmem:[#allocation4 + $0x188] sm:$0xff]
    %v1713 = vld [vmem:[#allocation4 + $0x190] sm:$0xff]
    %v1714 = vld [vmem:[#allocation4 + $0x198] sm:$0xff]
    %v1715 = vld [vmem:[#allocation4 + $0x1a0] sm:$0xff]
    %v1716 = vld [vmem:[#allocation4 + $0x1a8] sm:$0xff]
    %v1717 = vld [vmem:[#allocation4 + $0x1b0] sm:$0xff]
    %v1718 = vld [vmem:[#allocation4 + $0x1b8] sm:$0xff]
    %v1719 = vld [vmem:[#allocation4 + $0x1c0] sm:$0xff]
    %v1720 = vld [vmem:[#allocation4 + $0x1c8] sm:$0xff]
    %v1721 = vld [vmem:[#allocation4 + $0x1d0] sm:$0xff]
    %v1722 = vld [vmem:[#allocation4 + $0x1d8] sm:$0xff]
    %v1723 = vld [vmem:[#allocation4 + $0x1e0] sm:$0xff]
    %v1724 = vld [vmem:[#allocation4 + $0x1e8] sm:$0xff]
    %v1725 = vld [vmem:[#allocation4 + $0x1f0] sm:$0xff]
    %v1726 = vld [vmem:[#allocation4 + $0x1f8] sm:$0xff]
    %1727 = vmatprep.subr.mxu0 0.0
    %1728 = vmatpush1.msra.mxu0 %v1663
    %1729 = vmatprep.subr.mxu0 0.0
    %1730 = vmatpush1.msra.mxu0 %v1664
    %1731 = vmatprep.subr.mxu0 0.0
    %1732 = vmatpush1.msra.mxu0 %v1665
    %1733 = vmatprep.subr.mxu0 0.0
    %1734 = vmatpush1.msra.mxu0 %v1666
    %1735 = vmatprep.subr.mxu0 0.0
    %1736 = vmatpush1.msra.mxu0 %v1667
    %1737 = vmatprep.subr.mxu0 0.0
    %1738 = vmatpush1.msra.mxu0 %v1668
    %1739 = vmatprep.subr.mxu0 0.0
    %1740 = vmatpush1.msra.mxu0 %v1669
    %1741 = vmatprep.subr.mxu0 0.0
    %1742 = vmatpush1.msra.mxu0 %v1670
    %1743 = vmatprep.subr.mxu0 0.0
    %1744 = vmatpush1.msra.mxu0 %v1671
    %1745 = vmatprep.subr.mxu0 0.0
    %1746 = vmatpush1.msra.mxu0 %v1672
    %1747 = vmatprep.subr.mxu0 0.0
    %1748 = vmatpush1.msra.mxu0 %v1673
    %1749 = vmatprep.subr.mxu0 0.0
    %1750 = vmatpush1.msra.mxu0 %v1674
    %1751 = vmatprep.subr.mxu0 0.0
    %1752 = vmatpush1.msra.mxu0 %v1675
    %1753 = vmatprep.subr.mxu0 0.0
    %1754 = vmatpush1.msra.mxu0 %v1676
    %1755 = vmatprep.subr.mxu0 0.0
    %1756 = vmatpush1.msra.mxu0 %v1677
    %1757 = vmatprep.subr.mxu0 0.0
    %1758 = vmatpush1.msra.mxu0 %v1678
    %1759 = vmatprep.subr.mxu0 0.0
    %1760 = vmatpush1.msra.mxu0 %v1679
    %1761 = vmatprep.subr.mxu0 0.0
    %1762 = vmatpush1.msra.mxu0 %v1680
    %1763 = vmatprep.subr.mxu0 0.0
    %1764 = vmatpush1.msra.mxu0 %v1681
    %1765 = vmatprep.subr.mxu0 0.0
    %1766 = vmatpush1.msra.mxu0 %v1682
    %1767 = vmatprep.subr.mxu0 0.0
    %1768 = vmatpush1.msra.mxu0 %v1683
    %1769 = vmatprep.subr.mxu0 0.0
    %1770 = vmatpush1.msra.mxu0 %v1684
    %1771 = vmatprep.subr.mxu0 0.0
    %1772 = vmatpush1.msra.mxu0 %v1685
    %1773 = vmatprep.subr.mxu0 0.0
    %1774 = vmatpush1.msra.mxu0 %v1686
    %1775 = vmatprep.subr.mxu0 0.0
    %1776 = vmatpush1.msra.mxu0 %v1687
    %1777 = vmatprep.subr.mxu0 0.0
    %1778 = vmatpush1.msra.mxu0 %v1688
    %1779 = vmatprep.subr.mxu0 0.0
    %1780 = vmatpush1.msra.mxu0 %v1689
    %1781 = vmatprep.subr.mxu0 0.0
    %1782 = vmatpush1.msra.mxu0 %v1690
    %1783 = vmatprep.subr.mxu0 0.0
    %1784 = vmatpush1.msra.mxu0 %v1691
    %1785 = vmatprep.subr.mxu0 0.0
    %1786 = vmatpush1.msra.mxu0 %v1692
    %1787 = vmatprep.subr.mxu0 0.0
    %1788 = vmatpush1.msra.mxu0 %v1693
    %1789 = vmatprep.subr.mxu0 0.0
    %1790 = vmatpush1.msra.mxu0 %v1694
    %1791 = vmatprep.mubr.f32.mxu0 %v1505
    %1792 = vmatmul.mubr.f32.gmra.mrb[0].mxu0 %v1485
    %v1793 = vpop.f32.mrb[0].mxu0
    %v1794 = vadd.f32 0.0, %v1793
    %v1795 = vpop.f32.mrb[0].mxu0
    %1796 = vmatprep.mubr.f32.mxu0 %v1510
    %1797 = vmatmul.mubr.f32.gmra.mrb[0].mxu0 %v1490
    %v1798 = vpop.f32.mrb[0].mxu0
    %v1799 = vadd.f32 0.0, %v1798
    %v1800 = vpop.f32.mrb[0].mxu0
    %1801 = vmatprep.mubr.f32.mxu0 %v1515
    %1802 = vmatmul.mubr.f32.gmra.mrb[0].mxu0 %v1495
    %v1803 = vpop.f32.mrb[0].mxu0
    %v1804 = vadd.f32 0.0, %v1803
    %v1805 = vpop.f32.mrb[0].mxu0
    %1806 = vmatprep.mubr.f32.mxu0 %v1520
    %1807 = vmatmul.mubr.f32.gmra.mrb[0].mxu0 %v1500
    %v1808 = vpop.f32.mrb[0].mxu0
    %v1809 = vadd.f32 0.0, %v1808
    %v1810 = vpop.f32.mrb[0].mxu0
    %1811 = vdwg.mxu0
    %1812 = vmatprep.subr.mxu0 0.0
    %1813 = vmatpush1.msra.mxu0 %v1695
    %1814 = vmatprep.subr.mxu0 0.0
    %1815 = vmatpush1.msra.mxu0 %v1696
    %1816 = vmatprep.subr.mxu0 0.0
    %1817 = vmatpush1.msra.mxu0 %v1697
    %1818 = vmatprep.subr.mxu0 0.0
    %1819 = vmatpush1.msra.mxu0 %v1698
    %1820 = vmatprep.subr.mxu0 0.0
    %1821 = vmatpush1.msra.mxu0 %v1699
    %1822 = vmatprep.subr.mxu0 0.0
    %1823 = vmatpush1.msra.mxu0 %v1700
    %1824 = vmatprep.subr.mxu0 0.0
    %1825 = vmatpush1.msra.mxu0 %v1701
    %1826 = vmatprep.subr.mxu0 0.0
    %1827 = vmatpush1.msra.mxu0 %v1702
    %1828 = vmatprep.subr.mxu0 0.0
    %1829 = vmatpush1.msra.mxu0 %v1703
    %1830 = vmatprep.subr.mxu0 0.0
    %1831 = vmatpush1.msra.mxu0 %v1704
    %1832 = vmatprep.subr.mxu0 0.0
    %1833 = vmatpush1.msra.mxu0 %v1705
    %1834 = vmatprep.subr.mxu0 0.0
    %1835 = vmatpush1.msra.mxu0 %v1706
    %1836 = vmatprep.subr.mxu0 0.0
    %1837 = vmatpush1.msra.mxu0 %v1707
    %1838 = vmatprep.subr.mxu0 0.0
    %1839 = vmatpush1.msra.mxu0 %v1708
    %1840 = vmatprep.subr.mxu0 0.0
    %1841 = vmatpush1.msra.mxu0 %v1709
    %1842 = vmatprep.subr.mxu0 0.0
    %1843 = vmatpush1.msra.mxu0 %v1710
    %1844 = vmatprep.subr.mxu0 0.0
    %1845 = vmatpush1.msra.mxu0 %v1711
    %1846 = vmatprep.subr.mxu0 0.0
    %1847 = vmatpush1.msra.mxu0 %v1712
    %1848 = vmatprep.subr.mxu0 0.0
    %1849 = vmatpush1.msra.mxu0 %v1713
    %1850 = vmatprep.subr.mxu0 0.0
    %1851 = vmatpush1.msra.mxu0 %v1714
    %1852 = vmatprep.subr.mxu0 0.0
    %1853 = vmatpush1.msra.mxu0 %v1715
    %1854 = vmatprep.subr.mxu0 0.0
    %1855 = vmatpush1.msra.mxu0 %v1716
    %1856 = vmatprep.subr.mxu0 0.0
    %1857 = vmatpush1.msra.mxu0 %v1717
    %1858 = vmatprep.subr.mxu0 0.0
    %1859 = vmatpush1.msra.mxu0 %v1718
    %1860 = vmatprep.subr.mxu0 0.0
    %1861 = vmatpush1.msra.mxu0 %v1719
    %1862 = vmatprep.subr.mxu0 0.0
    %1863 = vmatpush1.msra.mxu0 %v1720
    %1864 = vmatprep.subr.mxu0 0.0
    %1865 = vmatpush1.msra.mxu0 %v1721
    %1866 = vmatprep.subr.mxu0 0.0
    %1867 = vmatpush1.msra.mxu0 %v1722
    %1868 = vmatprep.subr.mxu0 0.0
    %1869 = vmatpush1.msra.mxu0 %v1723
    %1870 = vmatprep.subr.mxu0 0.0
    %1871 = vmatpush1.msra.mxu0 %v1724
    %1872 = vmatprep.subr.mxu0 0.0
    %1873 = vmatpush1.msra.mxu0 %v1725
    %1874 = vmatprep.subr.mxu0 0.0
    %1875 = vmatpush1.msra.mxu0 %v1726
    %1876 = vmatprep.mubr.f32.mxu0 %v1565
    %1877 = vmatmul.mubr.f32.gmra.mrb[0].mxu0 %v1545
    %v1878 = vpop.f32.mrb[0].mxu0
    %v1879 = vadd.f32 %v1794, %v1878
    %v1880 = vpop.f32.mrb[0].mxu0
    %1881 = vmatprep.mubr.f32.mxu0 %v1570
    %1882 = vmatmul.mubr.f32.gmra.mrb[0].mxu0 %v1550
    %v1883 = vpop.f32.mrb[0].mxu0
    %v1884 = vadd.f32 %v1799, %v1883
    %v1885 = vpop.f32.mrb[0].mxu0
    %1886 = vmatprep.mubr.f32.mxu0 %v1575
    %1887 = vmatmul.mubr.f32.gmra.mrb[0].mxu0 %v1555
    %v1888 = vpop.f32.mrb[0].mxu0
    %v1889 = vadd.f32 %v1804, %v1888
    %v1890 = vpop.f32.mrb[0].mxu0
    %1891 = vmatprep.mubr.f32.mxu0 %v1580
    %1892 = vmatmul.mubr.f32.gmra.mrb[0].mxu0 %v1560
    %v1893 = vpop.f32.mrb[0].mxu0
    %v1894 = vadd.f32 %v1809, %v1893
    %v1895 = vpop.f32.mrb[0].mxu0
    %1896 = vdwg.mxu0
    %s1897 = scalar_lea.vmem [#allocation4], 512
    %v1898 = vld [vmem:[%s1897] sm:$0xff]
    %v1899 = vld [vmem:[%s1897 + $0x8] sm:$0xff]
    %v1900 = vld [vmem:[%s1897 + $0x10] sm:$0xff]
    %v1901 = vld [vmem:[%s1897 + $0x18] sm:$0xff]
    %v1902 = vld [vmem:[%s1897 + $0x20] sm:$0xff]
    %v1903 = vld [vmem:[%s1897 + $0x28] sm:$0xff]
    %v1904 = vld [vmem:[%s1897 + $0x30] sm:$0xff]
    %v1905 = vld [vmem:[%s1897 + $0x38] sm:$0xff]
    %v1906 = vld [vmem:[%s1897 + $0x40] sm:$0xff]
    %v1907 = vld [vmem:[%s1897 + $0x48] sm:$0xff]
    %v1908 = vld [vmem:[%s1897 + $0x50] sm:$0xff]
    %v1909 = vld [vmem:[%s1897 + $0x58] sm:$0xff]
    %v1910 = vld [vmem:[%s1897 + $0x60] sm:$0xff]
    %v1911 = vld [vmem:[%s1897 + $0x68] sm:$0xff]
    %v1912 = vld [vmem:[%s1897 + $0x70] sm:$0xff]
    %v1913 = vld [vmem:[%s1897 + $0x78] sm:$0xff]
    %v1914 = vld [vmem:[%s1897 + $0x80] sm:$0xff]
    %v1915 = vld [vmem:[%s1897 + $0x88] sm:$0xff]
    %v1916 = vld [vmem:[%s1897 + $0x90] sm:$0xff]
    %v1917 = vld [vmem:[%s1897 + $0x98] sm:$0xff]
    %v1918 = vld [vmem:[%s1897 + $0xa0] sm:$0xff]
    %v1919 = vld [vmem:[%s1897 + $0xa8] sm:$0xff]
    %v1920 = vld [vmem:[%s1897 + $0xb0] sm:$0xff]
    %v1921 = vld [vmem:[%s1897 + $0xb8] sm:$0xff]
    %v1922 = vld [vmem:[%s1897 + $0xc0] sm:$0xff]
    %v1923 = vld [vmem:[%s1897 + $0xc8] sm:$0xff]
    %v1924 = vld [vmem:[%s1897 + $0xd0] sm:$0xff]
    %v1925 = vld [vmem:[%s1897 + $0xd8] sm:$0xff]
    %v1926 = vld [vmem:[%s1897 + $0xe0] sm:$0xff]
    %v1927 = vld [vmem:[%s1897 + $0xe8] sm:$0xff]
    %v1928 = vld [vmem:[%s1897 + $0xf0] sm:$0xff]
    %v1929 = vld [vmem:[%s1897 + $0xf8] sm:$0xff]
    %v1930 = vld [vmem:[%s1897 + $0x100] sm:$0xff]
    %v1931 = vld [vmem:[%s1897 + $0x108] sm:$0xff]
    %v1932 = vld [vmem:[%s1897 + $0x110] sm:$0xff]
    %v1933 = vld [vmem:[%s1897 + $0x118] sm:$0xff]
    %v1934 = vld [vmem:[%s1897 + $0x120] sm:$0xff]
    %v1935 = vld [vmem:[%s1897 + $0x128] sm:$0xff]
    %v1936 = vld [vmem:[%s1897 + $0x130] sm:$0xff]
    %v1937 = vld [vmem:[%s1897 + $0x138] sm:$0xff]
    %v1938 = vld [vmem:[%s1897 + $0x140] sm:$0xff]
    %v1939 = vld [vmem:[%s1897 + $0x148] sm:$0xff]
    %v1940 = vld [vmem:[%s1897 + $0x150] sm:$0xff]
    %v1941 = vld [vmem:[%s1897 + $0x158] sm:$0xff]
    %v1942 = vld [vmem:[%s1897 + $0x160] sm:$0xff]
    %v1943 = vld [vmem:[%s1897 + $0x168] sm:$0xff]
    %v1944 = vld [vmem:[%s1897 + $0x170] sm:$0xff]
    %v1945 = vld [vmem:[%s1897 + $0x178] sm:$0xff]
    %v1946 = vld [vmem:[%s1897 + $0x180] sm:$0xff]
    %v1947 = vld [vmem:[%s1897 + $0x188] sm:$0xff]
    %v1948 = vld [vmem:[%s1897 + $0x190] sm:$0xff]
    %v1949 = vld [vmem:[%s1897 + $0x198] sm:$0xff]
    %v1950 = vld [vmem:[%s1897 + $0x1a0] sm:$0xff]
    %v1951 = vld [vmem:[%s1897 + $0x1a8] sm:$0xff]
    %v1952 = vld [vmem:[%s1897 + $0x1b0] sm:$0xff]
    %v1953 = vld [vmem:[%s1897 + $0x1b8] sm:$0xff]
    %v1954 = vld [vmem:[%s1897 + $0x1c0] sm:$0xff]
    %v1955 = vld [vmem:[%s1897 + $0x1c8] sm:$0xff]
    %v1956 = vld [vmem:[%s1897 + $0x1d0] sm:$0xff]
    %v1957 = vld [vmem:[%s1897 + $0x1d8] sm:$0xff]
    %v1958 = vld [vmem:[%s1897 + $0x1e0] sm:$0xff]
    %v1959 = vld [vmem:[%s1897 + $0x1e8] sm:$0xff]
    %v1960 = vld [vmem:[%s1897 + $0x1f0] sm:$0xff]
    %v1961 = vld [vmem:[%s1897 + $0x1f8] sm:$0xff]
    %1962 = vmatprep.subr.mxu0 0.0
    %1963 = vmatpush1.msra.mxu0 %v1898
    %1964 = vmatprep.subr.mxu0 0.0
    %1965 = vmatpush1.msra.mxu0 %v1899
    %1966 = vmatprep.subr.mxu0 0.0
    %1967 = vmatpush1.msra.mxu0 %v1900
    %1968 = vmatprep.subr.mxu0 0.0
    %1969 = vmatpush1.msra.mxu0 %v1901
    %1970 = vmatprep.subr.mxu0 0.0
    %1971 = vmatpush1.msra.mxu0 %v1902
    %1972 = vmatprep.subr.mxu0 0.0
    %1973 = vmatpush1.msra.mxu0 %v1903
    %1974 = vmatprep.subr.mxu0 0.0
    %1975 = vmatpush1.msra.mxu0 %v1904
    %1976 = vmatprep.subr.mxu0 0.0
    %1977 = vmatpush1.msra.mxu0 %v1905
    %1978 = vmatprep.subr.mxu0 0.0
    %1979 = vmatpush1.msra.mxu0 %v1906
    %1980 = vmatprep.subr.mxu0 0.0
    %1981 = vmatpush1.msra.mxu0 %v1907
    %1982 = vmatprep.subr.mxu0 0.0
    %1983 = vmatpush1.msra.mxu0 %v1908
    %1984 = vmatprep.subr.mxu0 0.0
    %1985 = vmatpush1.msra.mxu0 %v1909
    %1986 = vmatprep.subr.mxu0 0.0
    %1987 = vmatpush1.msra.mxu0 %v1910
    %1988 = vmatprep.subr.mxu0 0.0
    %1989 = vmatpush1.msra.mxu0 %v1911
    %1990 = vmatprep.subr.mxu0 0.0
    %1991 = vmatpush1.msra.mxu0 %v1912
    %1992 = vmatprep.subr.mxu0 0.0
    %1993 = vmatpush1.msra.mxu0 %v1913
    %1994 = vmatprep.subr.mxu0 0.0
    %1995 = vmatpush1.msra.mxu0 %v1914
    %1996 = vmatprep.subr.mxu0 0.0
    %1997 = vmatpush1.msra.mxu0 %v1915
    %1998 = vmatprep.subr.mxu0 0.0
    %1999 = vmatpush1.msra.mxu0 %v1916
    %2000 = vmatprep.subr.mxu0 0.0
    %2001 = vmatpush1.msra.mxu0 %v1917
    %2002 = vmatprep.subr.mxu0 0.0
    %2003 = vmatpush1.msra.mxu0 %v1918
    %2004 = vmatprep.subr.mxu0 0.0
    %2005 = vmatpush1.msra.mxu0 %v1919
    %2006 = vmatprep.subr.mxu0 0.0
    %2007 = vmatpush1.msra.mxu0 %v1920
    %2008 = vmatprep.subr.mxu0 0.0
    %2009 = vmatpush1.msra.mxu0 %v1921
    %2010 = vmatprep.subr.mxu0 0.0
    %2011 = vmatpush1.msra.mxu0 %v1922
    %2012 = vmatprep.subr.mxu0 0.0
    %2013 = vmatpush1.msra.mxu0 %v1923
    %2014 = vmatprep.subr.mxu0 0.0
    %2015 = vmatpush1.msra.mxu0 %v1924
    %2016 = vmatprep.subr.mxu0 0.0
    %2017 = vmatpush1.msra.mxu0 %v1925
    %2018 = vmatprep.subr.mxu0 0.0
    %2019 = vmatpush1.msra.mxu0 %v1926
    %2020 = vmatprep.subr.mxu0 0.0
    %2021 = vmatpush1.msra.mxu0 %v1927
    %2022 = vmatprep.subr.mxu0 0.0
    %2023 = vmatpush1.msra.mxu0 %v1928
    %2024 = vmatprep.subr.mxu0 0.0
    %2025 = vmatpush1.msra.mxu0 %v1929
    %2026 = vmatprep.mubr.f32.mxu0 %v1525
    %2027 = vmatmul.mubr.f32.gmra.mrb[0].mxu0 %v1505
    %v2028 = vpop.f32.mrb[0].mxu0
    %v2029 = vadd.f32 0.0, %v2028
    %v2030 = vpop.f32.mrb[0].mxu0
    %2031 = vmatprep.mubr.f32.mxu0 %v1530
    %2032 = vmatmul.mubr.f32.gmra.mrb[0].mxu0 %v1510
    %v2033 = vpop.f32.mrb[0].mxu0
    %v2034 = vadd.f32 0.0, %v2033
    %v2035 = vpop.f32.mrb[0].mxu0
    %2036 = vmatprep.mubr.f32.mxu0 %v1535
    %2037 = vmatmul.mubr.f32.gmra.mrb[0].mxu0 %v1515
    %v2038 = vpop.f32.mrb[0].mxu0
    %v2039 = vadd.f32 0.0, %v2038
    %v2040 = vpop.f32.mrb[0].mxu0
    %2041 = vmatprep.mubr.f32.mxu0 %v1540
    %2042 = vmatmul.mubr.f32.gmra.mrb[0].mxu0 %v1520
    %v2043 = vpop.f32.mrb[0].mxu0
    %v2044 = vadd.f32 0.0, %v2043
    %v2045 = vpop.f32.mrb[0].mxu0
    %2046 = vdwg.mxu0
    %2047 = vmatprep.subr.mxu0 0.0
    %2048 = vmatpush1.msra.mxu0 %v1930
    %2049 = vmatprep.subr.mxu0 0.0
    %2050 = vmatpush1.msra.mxu0 %v1931
    %2051 = vmatprep.subr.mxu0 0.0
    %2052 = vmatpush1.msra.mxu0 %v1932
    %2053 = vmatprep.subr.mxu0 0.0
    %2054 = vmatpush1.msra.mxu0 %v1933
    %2055 = vmatprep.subr.mxu0 0.0
    %2056 = vmatpush1.msra.mxu0 %v1934
    %2057 = vmatprep.subr.mxu0 0.0
    %2058 = vmatpush1.msra.mxu0 %v1935
    %2059 = vmatprep.subr.mxu0 0.0
    %2060 = vmatpush1.msra.mxu0 %v1936
    %2061 = vmatprep.subr.mxu0 0.0
    %2062 = vmatpush1.msra.mxu0 %v1937
    %2063 = vmatprep.subr.mxu0 0.0
    %2064 = vmatpush1.msra.mxu0 %v1938
    %2065 = vmatprep.subr.mxu0 0.0
    %2066 = vmatpush1.msra.mxu0 %v1939
    %2067 = vmatprep.subr.mxu0 0.0
    %2068 = vmatpush1.msra.mxu0 %v1940
    %2069 = vmatprep.subr.mxu0 0.0
    %2070 = vmatpush1.msra.mxu0 %v1941
    %2071 = vmatprep.subr.mxu0 0.0
    %2072 = vmatpush1.msra.mxu0 %v1942
    %2073 = vmatprep.subr.mxu0 0.0
    %2074 = vmatpush1.msra.mxu0 %v1943
    %2075 = vmatprep.subr.mxu0 0.0
    %2076 = vmatpush1.msra.mxu0 %v1944
    %2077 = vmatprep.subr.mxu0 0.0
    %2078 = vmatpush1.msra.mxu0 %v1945
    %2079 = vmatprep.subr.mxu0 0.0
    %2080 = vmatpush1.msra.mxu0 %v1946
    %2081 = vmatprep.subr.mxu0 0.0
    %2082 = vmatpush1.msra.mxu0 %v1947
    %2083 = vmatprep.subr.mxu0 0.0
    %2084 = vmatpush1.msra.mxu0 %v1948
    %2085 = vmatprep.subr.mxu0 0.0
    %2086 = vmatpush1.msra.mxu0 %v1949
    %2087 = vmatprep.subr.mxu0 0.0
    %2088 = vmatpush1.msra.mxu0 %v1950
    %2089 = vmatprep.subr.mxu0 0.0
    %2090 = vmatpush1.msra.mxu0 %v1951
    %2091 = vmatprep.subr.mxu0 0.0
    %2092 = vmatpush1.msra.mxu0 %v1952
    %2093 = vmatprep.subr.mxu0 0.0
    %2094 = vmatpush1.msra.mxu0 %v1953
    %2095 = vmatprep.subr.mxu0 0.0
    %2096 = vmatpush1.msra.mxu0 %v1954
    %2097 = vmatprep.subr.mxu0 0.0
    %2098 = vmatpush1.msra.mxu0 %v1955
    %2099 = vmatprep.subr.mxu0 0.0
    %2100 = vmatpush1.msra.mxu0 %v1956
    %2101 = vmatprep.subr.mxu0 0.0
    %2102 = vmatpush1.msra.mxu0 %v1957
    %2103 = vmatprep.subr.mxu0 0.0
    %2104 = vmatpush1.msra.mxu0 %v1958
    %2105 = vmatprep.subr.mxu0 0.0
    %2106 = vmatpush1.msra.mxu0 %v1959
    %2107 = vmatprep.subr.mxu0 0.0
    %2108 = vmatpush1.msra.mxu0 %v1960
    %2109 = vmatprep.subr.mxu0 0.0
    %2110 = vmatpush1.msra.mxu0 %v1961
    %2111 = vmatprep.mubr.f32.mxu0 %v1585
    %2112 = vmatmul.mubr.f32.gmra.mrb[0].mxu0 %v1565
    %v2113 = vpop.f32.mrb[0].mxu0
    %v2114 = vadd.f32 %v2029, %v2113
    %v2115 = vpop.f32.mrb[0].mxu0
    %2116 = vmatprep.mubr.f32.mxu0 %v1590
    %2117 = vmatmul.mubr.f32.gmra.mrb[0].mxu0 %v1570
    %v2118 = vpop.f32.mrb[0].mxu0
    %v2119 = vadd.f32 %v2034, %v2118
    %v2120 = vpop.f32.mrb[0].mxu0
    %2121 = vmatprep.mubr.f32.mxu0 %v1595
    %2122 = vmatmul.mubr.f32.gmra.mrb[0].mxu0 %v1575
    %v2123 = vpop.f32.mrb[0].mxu0
    %v2124 = vadd.f32 %v2039, %v2123
    %v2125 = vpop.f32.mrb[0].mxu0
    %2126 = vmatprep.mubr.f32.mxu0 %v1600
    %2127 = vmatmul.mubr.f32.gmra.mrb[0].mxu0 %v1580
    %v2128 = vpop.f32.mrb[0].mxu0
    %v2129 = vadd.f32 %v2044, %v2128
    %v2130 = vpop.f32.mrb[0].mxu0
    %2131 = vdwg.mxu0
    %s2132 = scalar_lea.vmem [#allocation4], 1024
    %v2133 = vld [vmem:[%s2132] sm:$0xff]
    %v2134 = vld [vmem:[%s2132 + $0x8] sm:$0xff]
    %v2135 = vld [vmem:[%s2132 + $0x10] sm:$0xff]
    %v2136 = vld [vmem:[%s2132 + $0x18] sm:$0xff]
    %v2137 = vld [vmem:[%s2132 + $0x20] sm:$0xff]
    %v2138 = vld [vmem:[%s2132 + $0x28] sm:$0xff]
    %v2139 = vld [vmem:[%s2132 + $0x30] sm:$0xff]
    %v2140 = vld [vmem:[%s2132 + $0x38] sm:$0xff]
    %v2141 = vld [vmem:[%s2132 + $0x40] sm:$0xff]
    %v2142 = vld [vmem:[%s2132 + $0x48] sm:$0xff]
    %v2143 = vld [vmem:[%s2132 + $0x50] sm:$0xff]
    %v2144 = vld [vmem:[%s2132 + $0x58] sm:$0xff]
    %v2145 = vld [vmem:[%s2132 + $0x60] sm:$0xff]
    %v2146 = vld [vmem:[%s2132 + $0x68] sm:$0xff]
    %v2147 = vld [vmem:[%s2132 + $0x70] sm:$0xff]
    %v2148 = vld [vmem:[%s2132 + $0x78] sm:$0xff]
    %v2149 = vld [vmem:[%s2132 + $0x80] sm:$0xff]
    %v2150 = vld [vmem:[%s2132 + $0x88] sm:$0xff]
    %v2151 = vld [vmem:[%s2132 + $0x90] sm:$0xff]
    %v2152 = vld [vmem:[%s2132 + $0x98] sm:$0xff]
    %v2153 = vld [vmem:[%s2132 + $0xa0] sm:$0xff]
    %v2154 = vld [vmem:[%s2132 + $0xa8] sm:$0xff]
    %v2155 = vld [vmem:[%s2132 + $0xb0] sm:$0xff]
    %v2156 = vld [vmem:[%s2132 + $0xb8] sm:$0xff]
    %v2157 = vld [vmem:[%s2132 + $0xc0] sm:$0xff]
    %v2158 = vld [vmem:[%s2132 + $0xc8] sm:$0xff]
    %v2159 = vld [vmem:[%s2132 + $0xd0] sm:$0xff]
    %v2160 = vld [vmem:[%s2132 + $0xd8] sm:$0xff]
    %v2161 = vld [vmem:[%s2132 + $0xe0] sm:$0xff]
    %v2162 = vld [vmem:[%s2132 + $0xe8] sm:$0xff]
    %v2163 = vld [vmem:[%s2132 + $0xf0] sm:$0xff]
    %v2164 = vld [vmem:[%s2132 + $0xf8] sm:$0xff]
    %v2165 = vld [vmem:[%s2132 + $0x100] sm:$0xff]
    %v2166 = vld [vmem:[%s2132 + $0x108] sm:$0xff]
    %v2167 = vld [vmem:[%s2132 + $0x110] sm:$0xff]
    %v2168 = vld [vmem:[%s2132 + $0x118] sm:$0xff]
    %v2169 = vld [vmem:[%s2132 + $0x120] sm:$0xff]
    %v2170 = vld [vmem:[%s2132 + $0x128] sm:$0xff]
    %v2171 = vld [vmem:[%s2132 + $0x130] sm:$0xff]
    %v2172 = vld [vmem:[%s2132 + $0x138] sm:$0xff]
    %v2173 = vld [vmem:[%s2132 + $0x140] sm:$0xff]
    %v2174 = vld [vmem:[%s2132 + $0x148] sm:$0xff]
    %v2175 = vld [vmem:[%s2132 + $0x150] sm:$0xff]
    %v2176 = vld [vmem:[%s2132 + $0x158] sm:$0xff]
    %v2177 = vld [vmem:[%s2132 + $0x160] sm:$0xff]
    %v2178 = vld [vmem:[%s2132 + $0x168] sm:$0xff]
    %v2179 = vld [vmem:[%s2132 + $0x170] sm:$0xff]
    %v2180 = vld [vmem:[%s2132 + $0x178] sm:$0xff]
    %v2181 = vld [vmem:[%s2132 + $0x180] sm:$0xff]
    %v2182 = vld [vmem:[%s2132 + $0x188] sm:$0xff]
    %v2183 = vld [vmem:[%s2132 + $0x190] sm:$0xff]
    %v2184 = vld [vmem:[%s2132 + $0x198] sm:$0xff]
    %v2185 = vld [vmem:[%s2132 + $0x1a0] sm:$0xff]
    %v2186 = vld [vmem:[%s2132 + $0x1a8] sm:$0xff]
    %v2187 = vld [vmem:[%s2132 + $0x1b0] sm:$0xff]
    %v2188 = vld [vmem:[%s2132 + $0x1b8] sm:$0xff]
    %v2189 = vld [vmem:[%s2132 + $0x1c0] sm:$0xff]
    %v2190 = vld [vmem:[%s2132 + $0x1c8] sm:$0xff]
    %v2191 = vld [vmem:[%s2132 + $0x1d0] sm:$0xff]
    %v2192 = vld [vmem:[%s2132 + $0x1d8] sm:$0xff]
    %v2193 = vld [vmem:[%s2132 + $0x1e0] sm:$0xff]
    %v2194 = vld [vmem:[%s2132 + $0x1e8] sm:$0xff]
    %v2195 = vld [vmem:[%s2132 + $0x1f0] sm:$0xff]
    %v2196 = vld [vmem:[%s2132 + $0x1f8] sm:$0xff]
    %2197 = vmatprep.subr.mxu0 0.0
    %2198 = vmatpush1.msra.mxu0 %v2133
    %2199 = vmatprep.subr.mxu0 0.0
    %2200 = vmatpush1.msra.mxu0 %v2134
    %2201 = vmatprep.subr.mxu0 0.0
    %2202 = vmatpush1.msra.mxu0 %v2135
    %2203 = vmatprep.subr.mxu0 0.0
    %2204 = vmatpush1.msra.mxu0 %v2136
    %2205 = vmatprep.subr.mxu0 0.0
    %2206 = vmatpush1.msra.mxu0 %v2137
    %2207 = vmatprep.subr.mxu0 0.0
    %2208 = vmatpush1.msra.mxu0 %v2138
    %2209 = vmatprep.subr.mxu0 0.0
    %2210 = vmatpush1.msra.mxu0 %v2139
    %2211 = vmatprep.subr.mxu0 0.0
    %2212 = vmatpush1.msra.mxu0 %v2140
    %2213 = vmatprep.subr.mxu0 0.0
    %2214 = vmatpush1.msra.mxu0 %v2141
    %2215 = vmatprep.subr.mxu0 0.0
    %2216 = vmatpush1.msra.mxu0 %v2142
    %2217 = vmatprep.subr.mxu0 0.0
    %2218 = vmatpush1.msra.mxu0 %v2143
    %2219 = vmatprep.subr.mxu0 0.0
    %2220 = vmatpush1.msra.mxu0 %v2144
    %2221 = vmatprep.subr.mxu0 0.0
    %2222 = vmatpush1.msra.mxu0 %v2145
    %2223 = vmatprep.subr.mxu0 0.0
    %2224 = vmatpush1.msra.mxu0 %v2146
    %2225 = vmatprep.subr.mxu0 0.0
    %2226 = vmatpush1.msra.mxu0 %v2147
    %2227 = vmatprep.subr.mxu0 0.0
    %2228 = vmatpush1.msra.mxu0 %v2148
    %2229 = vmatprep.subr.mxu0 0.0
    %2230 = vmatpush1.msra.mxu0 %v2149
    %2231 = vmatprep.subr.mxu0 0.0
    %2232 = vmatpush1.msra.mxu0 %v2150
    %2233 = vmatprep.subr.mxu0 0.0
    %2234 = vmatpush1.msra.mxu0 %v2151
    %2235 = vmatprep.subr.mxu0 0.0
    %2236 = vmatpush1.msra.mxu0 %v2152
    %2237 = vmatprep.subr.mxu0 0.0
    %2238 = vmatpush1.msra.mxu0 %v2153
    %2239 = vmatprep.subr.mxu0 0.0
    %2240 = vmatpush1.msra.mxu0 %v2154
    %2241 = vmatprep.subr.mxu0 0.0
    %2242 = vmatpush1.msra.mxu0 %v2155
    %2243 = vmatprep.subr.mxu0 0.0
    %2244 = vmatpush1.msra.mxu0 %v2156
    %2245 = vmatprep.subr.mxu0 0.0
    %2246 = vmatpush1.msra.mxu0 %v2157
    %2247 = vmatprep.subr.mxu0 0.0
    %2248 = vmatpush1.msra.mxu0 %v2158
    %2249 = vmatprep.subr.mxu0 0.0
    %2250 = vmatpush1.msra.mxu0 %v2159
    %2251 = vmatprep.subr.mxu0 0.0
    %2252 = vmatpush1.msra.mxu0 %v2160
    %2253 = vmatprep.subr.mxu0 0.0
    %2254 = vmatpush1.msra.mxu0 %v2161
    %2255 = vmatprep.subr.mxu0 0.0
    %2256 = vmatpush1.msra.mxu0 %v2162
    %2257 = vmatprep.subr.mxu0 0.0
    %2258 = vmatpush1.msra.mxu0 %v2163
    %2259 = vmatprep.subr.mxu0 0.0
    %2260 = vmatpush1.msra.mxu0 %v2164
    %2261 = vmatprep.mubr.f32.mxu0 %v1565
    %2262 = vmatmul.mubr.f32.gmra.mrb[0].mxu0 %v1545
    %v2263 = vpop.f32.mrb[0].mxu0
    %v2264 = vadd.f32 0.0, %v2263
    %v2265 = vpop.f32.mrb[0].mxu0
    %2266 = vmatprep.mubr.f32.mxu0 %v1570
    %2267 = vmatmul.mubr.f32.gmra.mrb[0].mxu0 %v1550
    %v2268 = vpop.f32.mrb[0].mxu0
    %v2269 = vadd.f32 0.0, %v2268
    %v2270 = vpop.f32.mrb[0].mxu0
    %2271 = vmatprep.mubr.f32.mxu0 %v1575
    %2272 = vmatmul.mubr.f32.gmra.mrb[0].mxu0 %v1555
    %v2273 = vpop.f32.mrb[0].mxu0
    %v2274 = vadd.f32 0.0, %v2273
    %v2275 = vpop.f32.mrb[0].mxu0
    %2276 = vmatprep.mubr.f32.mxu0 %v1580
    %2277 = vmatmul.mubr.f32.gmra.mrb[0].mxu0 %v1560
    %v2278 = vpop.f32.mrb[0].mxu0
    %v2279 = vadd.f32 0.0, %v2278
    %v2280 = vpop.f32.mrb[0].mxu0
    %2281 = vdwg.mxu0
    %2282 = vmatprep.subr.mxu0 0.0
    %2283 = vmatpush1.msra.mxu0 %v2165
    %2284 = vmatprep.subr.mxu0 0.0
    %2285 = vmatpush1.msra.mxu0 %v2166
    %2286 = vmatprep.subr.mxu0 0.0
    %2287 = vmatpush1.msra.mxu0 %v2167
    %2288 = vmatprep.subr.mxu0 0.0
    %2289 = vmatpush1.msra.mxu0 %v2168
    %2290 = vmatprep.subr.mxu0 0.0
    %2291 = vmatpush1.msra.mxu0 %v2169
    %2292 = vmatprep.subr.mxu0 0.0
    %2293 = vmatpush1.msra.mxu0 %v2170
    %2294 = vmatprep.subr.mxu0 0.0
    %2295 = vmatpush1.msra.mxu0 %v2171
    %2296 = vmatprep.subr.mxu0 0.0
    %2297 = vmatpush1.msra.mxu0 %v2172
    %2298 = vmatprep.subr.mxu0 0.0
    %2299 = vmatpush1.msra.mxu0 %v2173
    %2300 = vmatprep.subr.mxu0 0.0
    %2301 = vmatpush1.msra.mxu0 %v2174
    %2302 = vmatprep.subr.mxu0 0.0
    %2303 = vmatpush1.msra.mxu0 %v2175
    %2304 = vmatprep.subr.mxu0 0.0
    %2305 = vmatpush1.msra.mxu0 %v2176
    %2306 = vmatprep.subr.mxu0 0.0
    %2307 = vmatpush1.msra.mxu0 %v2177
    %2308 = vmatprep.subr.mxu0 0.0
    %2309 = vmatpush1.msra.mxu0 %v2178
    %2310 = vmatprep.subr.mxu0 0.0
    %2311 = vmatpush1.msra.mxu0 %v2179
    %2312 = vmatprep.subr.mxu0 0.0
    %2313 = vmatpush1.msra.mxu0 %v2180
    %2314 = vmatprep.subr.mxu0 0.0
    %2315 = vmatpush1.msra.mxu0 %v2181
    %2316 = vmatprep.subr.mxu0 0.0
    %2317 = vmatpush1.msra.mxu0 %v2182
    %2318 = vmatprep.subr.mxu0 0.0
    %2319 = vmatpush1.msra.mxu0 %v2183
    %2320 = vmatprep.subr.mxu0 0.0
    %2321 = vmatpush1.msra.mxu0 %v2184
    %2322 = vmatprep.subr.mxu0 0.0
    %2323 = vmatpush1.msra.mxu0 %v2185
    %2324 = vmatprep.subr.mxu0 0.0
    %2325 = vmatpush1.msra.mxu0 %v2186
    %2326 = vmatprep.subr.mxu0 0.0
    %2327 = vmatpush1.msra.mxu0 %v2187
    %2328 = vmatprep.subr.mxu0 0.0
    %2329 = vmatpush1.msra.mxu0 %v2188
    %2330 = vmatprep.subr.mxu0 0.0
    %2331 = vmatpush1.msra.mxu0 %v2189
    %2332 = vmatprep.subr.mxu0 0.0
    %2333 = vmatpush1.msra.mxu0 %v2190
    %2334 = vmatprep.subr.mxu0 0.0
    %2335 = vmatpush1.msra.mxu0 %v2191
    %2336 = vmatprep.subr.mxu0 0.0
    %2337 = vmatpush1.msra.mxu0 %v2192
    %2338 = vmatprep.subr.mxu0 0.0
    %2339 = vmatpush1.msra.mxu0 %v2193
    %2340 = vmatprep.subr.mxu0 0.0
    %2341 = vmatpush1.msra.mxu0 %v2194
    %2342 = vmatprep.subr.mxu0 0.0
    %2343 = vmatpush1.msra.mxu0 %v2195
    %2344 = vmatprep.subr.mxu0 0.0
    %2345 = vmatpush1.msra.mxu0 %v2196
    %2346 = vmatprep.mubr.f32.mxu0 %v1625
    %2347 = vmatmul.mubr.f32.gmra.mrb[0].mxu0 %v1605
    %v2348 = vpop.f32.mrb[0].mxu0
    %v2349 = vadd.f32 %v2264, %v2348
    %v2350 = vpop.f32.mrb[0].mxu0
    %2351 = vmatprep.mubr.f32.mxu0 %v1630
    %2352 = vmatmul.mubr.f32.gmra.mrb[0].mxu0 %v1610
    %v2353 = vpop.f32.mrb[0].mxu0
    %v2354 = vadd.f32 %v2269, %v2353
    %v2355 = vpop.f32.mrb[0].mxu0
    %2356 = vmatprep.mubr.f32.mxu0 %v1635
    %2357 = vmatmul.mubr.f32.gmra.mrb[0].mxu0 %v1615
    %v2358 = vpop.f32.mrb[0].mxu0
    %v2359 = vadd.f32 %v2274, %v2358
    %v2360 = vpop.f32.mrb[0].mxu0
    %2361 = vmatprep.mubr.f32.mxu0 %v1640
    %2362 = vmatmul.mubr.f32.gmra.mrb[0].mxu0 %v1620
    %v2363 = vpop.f32.mrb[0].mxu0
    %v2364 = vadd.f32 %v2279, %v2363
    %v2365 = vpop.f32.mrb[0].mxu0
    %2366 = vdwg.mxu0
    %s2367 = scalar_lea.vmem [#allocation4], 1536
    %v2368 = vld [vmem:[%s2367] sm:$0xff]
    %v2369 = vld [vmem:[%s2367 + $0x8] sm:$0xff]
    %v2370 = vld [vmem:[%s2367 + $0x10] sm:$0xff]
    %v2371 = vld [vmem:[%s2367 + $0x18] sm:$0xff]
    %v2372 = vld [vmem:[%s2367 + $0x20] sm:$0xff]
    %v2373 = vld [vmem:[%s2367 + $0x28] sm:$0xff]
    %v2374 = vld [vmem:[%s2367 + $0x30] sm:$0xff]
    %v2375 = vld [vmem:[%s2367 + $0x38] sm:$0xff]
    %v2376 = vld [vmem:[%s2367 + $0x40] sm:$0xff]
    %v2377 = vld [vmem:[%s2367 + $0x48] sm:$0xff]
    %v2378 = vld [vmem:[%s2367 + $0x50] sm:$0xff]
    %v2379 = vld [vmem:[%s2367 + $0x58] sm:$0xff]
    %v2380 = vld [vmem:[%s2367 + $0x60] sm:$0xff]
    %v2381 = vld [vmem:[%s2367 + $0x68] sm:$0xff]
    %v2382 = vld [vmem:[%s2367 + $0x70] sm:$0xff]
    %v2383 = vld [vmem:[%s2367 + $0x78] sm:$0xff]
    %v2384 = vld [vmem:[%s2367 + $0x80] sm:$0xff]
    %v2385 = vld [vmem:[%s2367 + $0x88] sm:$0xff]
    %v2386 = vld [vmem:[%s2367 + $0x90] sm:$0xff]
    %v2387 = vld [vmem:[%s2367 + $0x98] sm:$0xff]
    %v2388 = vld [vmem:[%s2367 + $0xa0] sm:$0xff]
    %v2389 = vld [vmem:[%s2367 + $0xa8] sm:$0xff]
    %v2390 = vld [vmem:[%s2367 + $0xb0] sm:$0xff]
    %v2391 = vld [vmem:[%s2367 + $0xb8] sm:$0xff]
    %v2392 = vld [vmem:[%s2367 + $0xc0] sm:$0xff]
    %v2393 = vld [vmem:[%s2367 + $0xc8] sm:$0xff]
    %v2394 = vld [vmem:[%s2367 + $0xd0] sm:$0xff]
    %v2395 = vld [vmem:[%s2367 + $0xd8] sm:$0xff]
    %v2396 = vld [vmem:[%s2367 + $0xe0] sm:$0xff]
    %v2397 = vld [vmem:[%s2367 + $0xe8] sm:$0xff]
    %v2398 = vld [vmem:[%s2367 + $0xf0] sm:$0xff]
    %v2399 = vld [vmem:[%s2367 + $0xf8] sm:$0xff]
    %v2400 = vld [vmem:[%s2367 + $0x100] sm:$0xff]
    %v2401 = vld [vmem:[%s2367 + $0x108] sm:$0xff]
    %v2402 = vld [vmem:[%s2367 + $0x110] sm:$0xff]
    %v2403 = vld [vmem:[%s2367 + $0x118] sm:$0xff]
    %v2404 = vld [vmem:[%s2367 + $0x120] sm:$0xff]
    %v2405 = vld [vmem:[%s2367 + $0x128] sm:$0xff]
    %v2406 = vld [vmem:[%s2367 + $0x130] sm:$0xff]
    %v2407 = vld [vmem:[%s2367 + $0x138] sm:$0xff]
    %v2408 = vld [vmem:[%s2367 + $0x140] sm:$0xff]
    %v2409 = vld [vmem:[%s2367 + $0x148] sm:$0xff]
    %v2410 = vld [vmem:[%s2367 + $0x150] sm:$0xff]
    %v2411 = vld [vmem:[%s2367 + $0x158] sm:$0xff]
    %v2412 = vld [vmem:[%s2367 + $0x160] sm:$0xff]
    %v2413 = vld [vmem:[%s2367 + $0x168] sm:$0xff]
    %v2414 = vld [vmem:[%s2367 + $0x170] sm:$0xff]
    %v2415 = vld [vmem:[%s2367 + $0x178] sm:$0xff]
    %v2416 = vld [vmem:[%s2367 + $0x180] sm:$0xff]
    %v2417 = vld [vmem:[%s2367 + $0x188] sm:$0xff]
    %v2418 = vld [vmem:[%s2367 + $0x190] sm:$0xff]
    %v2419 = vld [vmem:[%s2367 + $0x198] sm:$0xff]
    %v2420 = vld [vmem:[%s2367 + $0x1a0] sm:$0xff]
    %v2421 = vld [vmem:[%s2367 + $0x1a8] sm:$0xff]
    %v2422 = vld [vmem:[%s2367 + $0x1b0] sm:$0xff]
    %v2423 = vld [vmem:[%s2367 + $0x1b8] sm:$0xff]
    %v2424 = vld [vmem:[%s2367 + $0x1c0] sm:$0xff]
    %v2425 = vld [vmem:[%s2367 + $0x1c8] sm:$0xff]
    %v2426 = vld [vmem:[%s2367 + $0x1d0] sm:$0xff]
    %v2427 = vld [vmem:[%s2367 + $0x1d8] sm:$0xff]
    %v2428 = vld [vmem:[%s2367 + $0x1e0] sm:$0xff]
    %v2429 = vld [vmem:[%s2367 + $0x1e8] sm:$0xff]
    %v2430 = vld [vmem:[%s2367 + $0x1f0] sm:$0xff]
    %v2431 = vld [vmem:[%s2367 + $0x1f8] sm:$0xff]
    %2432 = vmatprep.subr.mxu0 0.0
    %2433 = vmatpush1.msra.mxu0 %v2368
    %2434 = vmatprep.subr.mxu0 0.0
    %2435 = vmatpush1.msra.mxu0 %v2369
    %2436 = vmatprep.subr.mxu0 0.0
    %2437 = vmatpush1.msra.mxu0 %v2370
    %2438 = vmatprep.subr.mxu0 0.0
    %2439 = vmatpush1.msra.mxu0 %v2371
    %2440 = vmatprep.subr.mxu0 0.0
    %2441 = vmatpush1.msra.mxu0 %v2372
    %2442 = vmatprep.subr.mxu0 0.0
    %2443 = vmatpush1.msra.mxu0 %v2373
    %2444 = vmatprep.subr.mxu0 0.0
    %2445 = vmatpush1.msra.mxu0 %v2374
    %2446 = vmatprep.subr.mxu0 0.0
    %2447 = vmatpush1.msra.mxu0 %v2375
    %2448 = vmatprep.subr.mxu0 0.0
    %2449 = vmatpush1.msra.mxu0 %v2376
    %2450 = vmatprep.subr.mxu0 0.0
    %2451 = vmatpush1.msra.mxu0 %v2377
    %2452 = vmatprep.subr.mxu0 0.0
    %2453 = vmatpush1.msra.mxu0 %v2378
    %2454 = vmatprep.subr.mxu0 0.0
    %2455 = vmatpush1.msra.mxu0 %v2379
    %2456 = vmatprep.subr.mxu0 0.0
    %2457 = vmatpush1.msra.mxu0 %v2380
    %2458 = vmatprep.subr.mxu0 0.0
    %2459 = vmatpush1.msra.mxu0 %v2381
    %2460 = vmatprep.subr.mxu0 0.0
    %2461 = vmatpush1.msra.mxu0 %v2382
    %2462 = vmatprep.subr.mxu0 0.0
    %2463 = vmatpush1.msra.mxu0 %v2383
    %2464 = vmatprep.subr.mxu0 0.0
    %2465 = vmatpush1.msra.mxu0 %v2384
    %2466 = vmatprep.subr.mxu0 0.0
    %2467 = vmatpush1.msra.mxu0 %v2385
    %2468 = vmatprep.subr.mxu0 0.0
    %2469 = vmatpush1.msra.mxu0 %v2386
    %2470 = vmatprep.subr.mxu0 0.0
    %2471 = vmatpush1.msra.mxu0 %v2387
    %2472 = vmatprep.subr.mxu0 0.0
    %2473 = vmatpush1.msra.mxu0 %v2388
    %2474 = vmatprep.subr.mxu0 0.0
    %2475 = vmatpush1.msra.mxu0 %v2389
    %2476 = vmatprep.subr.mxu0 0.0
    %2477 = vmatpush1.msra.mxu0 %v2390
    %2478 = vmatprep.subr.mxu0 0.0
    %2479 = vmatpush1.msra.mxu0 %v2391
    %2480 = vmatprep.subr.mxu0 0.0
    %2481 = vmatpush1.msra.mxu0 %v2392
    %2482 = vmatprep.subr.mxu0 0.0
    %2483 = vmatpush1.msra.mxu0 %v2393
    %2484 = vmatprep.subr.mxu0 0.0
    %2485 = vmatpush1.msra.mxu0 %v2394
    %2486 = vmatprep.subr.mxu0 0.0
    %2487 = vmatpush1.msra.mxu0 %v2395
    %2488 = vmatprep.subr.mxu0 0.0
    %2489 = vmatpush1.msra.mxu0 %v2396
    %2490 = vmatprep.subr.mxu0 0.0
    %2491 = vmatpush1.msra.mxu0 %v2397
    %2492 = vmatprep.subr.mxu0 0.0
    %2493 = vmatpush1.msra.mxu0 %v2398
    %2494 = vmatprep.subr.mxu0 0.0
    %2495 = vmatpush1.msra.mxu0 %v2399
    %2496 = vmatprep.mubr.f32.mxu0 %v1585
    %2497 = vmatmul.mubr.f32.gmra.mrb[0].mxu0 %v1565
    %v2498 = vpop.f32.mrb[0].mxu0
    %v2499 = vadd.f32 0.0, %v2498
    %v2500 = vpop.f32.mrb[0].mxu0
    %2501 = vmatprep.mubr.f32.mxu0 %v1590
    %2502 = vmatmul.mubr.f32.gmra.mrb[0].mxu0 %v1570
    %v2503 = vpop.f32.mrb[0].mxu0
    %v2504 = vadd.f32 0.0, %v2503
    %v2505 = vpop.f32.mrb[0].mxu0
    %2506 = vmatprep.mubr.f32.mxu0 %v1595
    %2507 = vmatmul.mubr.f32.gmra.mrb[0].mxu0 %v1575
    %v2508 = vpop.f32.mrb[0].mxu0
    %v2509 = vadd.f32 0.0, %v2508
    %v2510 = vpop.f32.mrb[0].mxu0
    %2511 = vmatprep.mubr.f32.mxu0 %v1600
    %2512 = vmatmul.mubr.f32.gmra.mrb[0].mxu0 %v1580
    %v2513 = vpop.f32.mrb[0].mxu0
    %v2514 = vadd.f32 0.0, %v2513
    %v2515 = vpop.f32.mrb[0].mxu0
    %2516 = vdwg.mxu0
    %2517 = vmatprep.subr.mxu0 0.0
    %2518 = vmatpush1.msra.mxu0 %v2400
    %2519 = vmatprep.subr.mxu0 0.0
    %2520 = vmatpush1.msra.mxu0 %v2401
    %2521 = vmatprep.subr.mxu0 0.0
    %2522 = vmatpush1.msra.mxu0 %v2402
    %2523 = vmatprep.subr.mxu0 0.0
    %2524 = vmatpush1.msra.mxu0 %v2403
    %2525 = vmatprep.subr.mxu0 0.0
    %2526 = vmatpush1.msra.mxu0 %v2404
    %2527 = vmatprep.subr.mxu0 0.0
    %2528 = vmatpush1.msra.mxu0 %v2405
    %2529 = vmatprep.subr.mxu0 0.0
    %2530 = vmatpush1.msra.mxu0 %v2406
    %2531 = vmatprep.subr.mxu0 0.0
    %2532 = vmatpush1.msra.mxu0 %v2407
    %2533 = vmatprep.subr.mxu0 0.0
    %2534 = vmatpush1.msra.mxu0 %v2408
    %2535 = vmatprep.subr.mxu0 0.0
    %2536 = vmatpush1.msra.mxu0 %v2409
    %2537 = vmatprep.subr.mxu0 0.0
    %2538 = vmatpush1.msra.mxu0 %v2410
    %2539 = vmatprep.subr.mxu0 0.0
    %2540 = vmatpush1.msra.mxu0 %v2411
    %2541 = vmatprep.subr.mxu0 0.0
    %2542 = vmatpush1.msra.mxu0 %v2412
    %2543 = vmatprep.subr.mxu0 0.0
    %2544 = vmatpush1.msra.mxu0 %v2413
    %2545 = vmatprep.subr.mxu0 0.0
    %2546 = vmatpush1.msra.mxu0 %v2414
    %2547 = vmatprep.subr.mxu0 0.0
    %2548 = vmatpush1.msra.mxu0 %v2415
    %2549 = vmatprep.subr.mxu0 0.0
    %2550 = vmatpush1.msra.mxu0 %v2416
    %2551 = vmatprep.subr.mxu0 0.0
    %2552 = vmatpush1.msra.mxu0 %v2417
    %2553 = vmatprep.subr.mxu0 0.0
    %2554 = vmatpush1.msra.mxu0 %v2418
    %2555 = vmatprep.subr.mxu0 0.0
    %2556 = vmatpush1.msra.mxu0 %v2419
    %2557 = vmatprep.subr.mxu0 0.0
    %2558 = vmatpush1.msra.mxu0 %v2420
    %2559 = vmatprep.subr.mxu0 0.0
    %2560 = vmatpush1.msra.mxu0 %v2421
    %2561 = vmatprep.subr.mxu0 0.0
    %2562 = vmatpush1.msra.mxu0 %v2422
    %2563 = vmatprep.subr.mxu0 0.0
    %2564 = vmatpush1.msra.mxu0 %v2423
    %2565 = vmatprep.subr.mxu0 0.0
    %2566 = vmatpush1.msra.mxu0 %v2424
    %2567 = vmatprep.subr.mxu0 0.0
    %2568 = vmatpush1.msra.mxu0 %v2425
    %2569 = vmatprep.subr.mxu0 0.0
    %2570 = vmatpush1.msra.mxu0 %v2426
    %2571 = vmatprep.subr.mxu0 0.0
    %2572 = vmatpush1.msra.mxu0 %v2427
    %2573 = vmatprep.subr.mxu0 0.0
    %2574 = vmatpush1.msra.mxu0 %v2428
    %2575 = vmatprep.subr.mxu0 0.0
    %2576 = vmatpush1.msra.mxu0 %v2429
    %2577 = vmatprep.subr.mxu0 0.0
    %2578 = vmatpush1.msra.mxu0 %v2430
    %2579 = vmatprep.subr.mxu0 0.0
    %2580 = vmatpush1.msra.mxu0 %v2431
    %2581 = vmatprep.mubr.f32.mxu0 %v1645
    %2582 = vmatmul.mubr.f32.gmra.mrb[0].mxu0 %v1625
    %v2583 = vpop.f32.mrb[0].mxu0
    %v2584 = vadd.f32 %v2499, %v2583
    %v2585 = vpop.f32.mrb[0].mxu0
    %2586 = vmatprep.mubr.f32.mxu0 %v1650
    %2587 = vmatmul.mubr.f32.gmra.mrb[0].mxu0 %v1630
    %v2588 = vpop.f32.mrb[0].mxu0
    %v2589 = vadd.f32 %v2504, %v2588
    %v2590 = vpop.f32.mrb[0].mxu0
    %2591 = vmatprep.mubr.f32.mxu0 %v1655
    %2592 = vmatmul.mubr.f32.gmra.mrb[0].mxu0 %v1635
    %v2593 = vpop.f32.mrb[0].mxu0
    %v2594 = vadd.f32 %v2509, %v2593
    %v2595 = vpop.f32.mrb[0].mxu0
    %2596 = vmatprep.mubr.f32.mxu0 %v1660
    %2597 = vmatmul.mubr.f32.gmra.mrb[0].mxu0 %v1640
    %v2598 = vpop.f32.mrb[0].mxu0
    %v2599 = vadd.f32 %v2514, %v2598
    %v2600 = vpop.f32.mrb[0].mxu0
    %2601 = vdwg.mxu0
    %v2602 = vld [vmem:[%s12] sm:$0x1]
    %v2604 = vlaneseq
    %v2605 = vshrl.u32 %v2604, 7
    %v2606 = vsub.s32 0, %v2605
    %v2607 = vrot.slane %v2602, %v2606
    %v2609 = vadd.f32 %v1879, %v2607
    %v2610 = vadd.f32 %v1884, %v2607
    %v2611 = vadd.f32 %v1889, %v2607
    %v2612 = vadd.f32 %v1894, %v2607
    %v2613 = vadd.f32 %v2114, %v2607
    %v2614 = vadd.f32 %v2119, %v2607
    %v2615 = vadd.f32 %v2124, %v2607
    %v2616 = vadd.f32 %v2129, %v2607
    %v2617 = vadd.f32 %v2349, %v2607
    %v2618 = vadd.f32 %v2354, %v2607
    %v2619 = vadd.f32 %v2359, %v2607
    %v2620 = vadd.f32 %v2364, %v2607
    %v2621 = vadd.f32 %v2584, %v2607
    %v2622 = vadd.f32 %v2589, %v2607
    %v2623 = vadd.f32 %v2594, %v2607
    %v2624 = vadd.f32 %v2599, %v2607
    %vm2625 = vcmp.gt.f32.partialorder %v2609, 0.0
    %vm2626 = vcmp.gt.f32.partialorder %v2610, 0.0
    %vm2627 = vcmp.gt.f32.partialorder %v2611, 0.0
    %vm2628 = vcmp.gt.f32.partialorder %v2612, 0.0
    %vm2629 = vcmp.gt.f32.partialorder %v2613, 0.0
    %vm2630 = vcmp.gt.f32.partialorder %v2614, 0.0
    %vm2631 = vcmp.gt.f32.partialorder %v2615, 0.0
    %vm2632 = vcmp.gt.f32.partialorder %v2616, 0.0
    %vm2633 = vcmp.gt.f32.partialorder %v2617, 0.0
    %vm2634 = vcmp.gt.f32.partialorder %v2618, 0.0
    %vm2635 = vcmp.gt.f32.partialorder %v2619, 0.0
    %vm2636 = vcmp.gt.f32.partialorder %v2620, 0.0
    %vm2637 = vcmp.gt.f32.partialorder %v2621, 0.0
    %vm2638 = vcmp.gt.f32.partialorder %v2622, 0.0
    %vm2639 = vcmp.gt.f32.partialorder %v2623, 0.0
    %vm2640 = vcmp.gt.f32.partialorder %v2624, 0.0
    %v2641 = vmul.f32 %v2609, 0.2
    %v2642 = vmul.f32 %v2610, 0.2
    %v2643 = vmul.f32 %v2611, 0.2
    %v2644 = vmul.f32 %v2612, 0.2
    %v2645 = vmul.f32 %v2613, 0.2
    %v2646 = vmul.f32 %v2614, 0.2
    %v2647 = vmul.f32 %v2615, 0.2
    %v2648 = vmul.f32 %v2616, 0.2
    %v2649 = vmul.f32 %v2617, 0.2
    %v2650 = vmul.f32 %v2618, 0.2
    %v2651 = vmul.f32 %v2619, 0.2
    %v2652 = vmul.f32 %v2620, 0.2
    %v2653 = vmul.f32 %v2621, 0.2
    %v2654 = vmul.f32 %v2622, 0.2
    %v2655 = vmul.f32 %v2623, 0.2
    %v2656 = vmul.f32 %v2624, 0.2
    %v2657 = vsel %vm2625, %v2609, %v2641
    %v2658 = vsel %vm2626, %v2610, %v2642
    %v2659 = vsel %vm2627, %v2611, %v2643
    %v2660 = vsel %vm2628, %v2612, %v2644
    %v2661 = vsel %vm2629, %v2613, %v2645
    %v2662 = vsel %vm2630, %v2614, %v2646
    %v2663 = vsel %vm2631, %v2615, %v2647
    %v2664 = vsel %vm2632, %v2616, %v2648
    %v2665 = vsel %vm2633, %v2617, %v2649
    %v2666 = vsel %vm2634, %v2618, %v2650
    %v2667 = vsel %vm2635, %v2619, %v2651
    %v2668 = vsel %vm2636, %v2620, %v2652
    %v2669 = vsel %vm2637, %v2621, %v2653
    %v2670 = vsel %vm2638, %v2622, %v2654
    %v2671 = vsel %vm2639, %v2623, %v2655
    %v2672 = vsel %vm2640, %v2624, %v2656
    %v2673 = vld [vmem:[#allocation6] sm:$0xff]
    %v2674 = vld [vmem:[#allocation6 + $0x8] sm:$0xff]
    %v2675 = vld [vmem:[#allocation6 + $0x10] sm:$0xff]
    %v2676 = vld [vmem:[#allocation6 + $0x18] sm:$0xff]
    %v2677 = vld [vmem:[#allocation6 + $0x20] sm:$0xff]
    %v2678 = vld [vmem:[#allocation6 + $0x28] sm:$0xff]
    %v2679 = vld [vmem:[#allocation6 + $0x30] sm:$0xff]
    %v2680 = vld [vmem:[#allocation6 + $0x38] sm:$0xff]
    %v2681 = vld [vmem:[#allocation6 + $0x40] sm:$0xff]
    %v2682 = vld [vmem:[#allocation6 + $0x48] sm:$0xff]
    %v2683 = vld [vmem:[#allocation6 + $0x50] sm:$0xff]
    %v2684 = vld [vmem:[#allocation6 + $0x58] sm:$0xff]
    %v2685 = vld [vmem:[#allocation6 + $0x60] sm:$0xff]
    %v2686 = vld [vmem:[#allocation6 + $0x68] sm:$0xff]
    %v2687 = vld [vmem:[#allocation6 + $0x70] sm:$0xff]
    %v2688 = vld [vmem:[#allocation6 + $0x78] sm:$0xff]
    %v2689 = vld [vmem:[#allocation6 + $0x80] sm:$0xff]
    %v2690 = vld [vmem:[#allocation6 + $0x88] sm:$0xff]
    %v2691 = vld [vmem:[#allocation6 + $0x90] sm:$0xff]
    %v2692 = vld [vmem:[#allocation6 + $0x98] sm:$0xff]
    %v2693 = vld [vmem:[#allocation6 + $0xa0] sm:$0xff]
    %v2694 = vld [vmem:[#allocation6 + $0xa8] sm:$0xff]
    %v2695 = vld [vmem:[#allocation6 + $0xb0] sm:$0xff]
    %v2696 = vld [vmem:[#allocation6 + $0xb8] sm:$0xff]
    %v2697 = vld [vmem:[#allocation6 + $0xc0] sm:$0xff]
    %v2698 = vld [vmem:[#allocation6 + $0xc8] sm:$0xff]
    %v2699 = vld [vmem:[#allocation6 + $0xd0] sm:$0xff]
    %v2700 = vld [vmem:[#allocation6 + $0xd8] sm:$0xff]
    %v2701 = vld [vmem:[#allocation6 + $0xe0] sm:$0xff]
    %v2702 = vld [vmem:[#allocation6 + $0xe8] sm:$0xff]
    %v2703 = vld [vmem:[#allocation6 + $0xf0] sm:$0xff]
    %v2704 = vld [vmem:[#allocation6 + $0xf8] sm:$0xff]
    %v2705 = vld [vmem:[#allocation6 + $0x100] sm:$0xff]
    %v2706 = vld [vmem:[#allocation6 + $0x108] sm:$0xff]
    %v2707 = vld [vmem:[#allocation6 + $0x110] sm:$0xff]
    %v2708 = vld [vmem:[#allocation6 + $0x118] sm:$0xff]
    %v2709 = vld [vmem:[#allocation6 + $0x120] sm:$0xff]
    %v2710 = vld [vmem:[#allocation6 + $0x128] sm:$0xff]
    %v2711 = vld [vmem:[#allocation6 + $0x130] sm:$0xff]
    %v2712 = vld [vmem:[#allocation6 + $0x138] sm:$0xff]
    %v2713 = vld [vmem:[#allocation6 + $0x140] sm:$0xff]
    %v2714 = vld [vmem:[#allocation6 + $0x148] sm:$0xff]
    %v2715 = vld [vmem:[#allocation6 + $0x150] sm:$0xff]
    %v2716 = vld [vmem:[#allocation6 + $0x158] sm:$0xff]
    %v2717 = vld [vmem:[#allocation6 + $0x160] sm:$0xff]
    %v2718 = vld [vmem:[#allocation6 + $0x168] sm:$0xff]
    %v2719 = vld [vmem:[#allocation6 + $0x170] sm:$0xff]
    %v2720 = vld [vmem:[#allocation6 + $0x178] sm:$0xff]
    %v2721 = vld [vmem:[#allocation6 + $0x180] sm:$0xff]
    %v2722 = vld [vmem:[#allocation6 + $0x188] sm:$0xff]
    %v2723 = vld [vmem:[#allocation6 + $0x190] sm:$0xff]
    %v2724 = vld [vmem:[#allocation6 + $0x198] sm:$0xff]
    %v2725 = vld [vmem:[#allocation6 + $0x1a0] sm:$0xff]
    %v2726 = vld [vmem:[#allocation6 + $0x1a8] sm:$0xff]
    %v2727 = vld [vmem:[#allocation6 + $0x1b0] sm:$0xff]
    %v2728 = vld [vmem:[#allocation6 + $0x1b8] sm:$0xff]
    %v2729 = vld [vmem:[#allocation6 + $0x1c0] sm:$0xff]
    %v2730 = vld [vmem:[#allocation6 + $0x1c8] sm:$0xff]
    %v2731 = vld [vmem:[#allocation6 + $0x1d0] sm:$0xff]
    %v2732 = vld [vmem:[#allocation6 + $0x1d8] sm:$0xff]
    %v2733 = vld [vmem:[#allocation6 + $0x1e0] sm:$0xff]
    %v2734 = vld [vmem:[#allocation6 + $0x1e8] sm:$0xff]
    %v2735 = vld [vmem:[#allocation6 + $0x1f0] sm:$0xff]
    %v2736 = vld [vmem:[#allocation6 + $0x1f8] sm:$0xff]
    %v2737 = vld [vmem:[#allocation6 + $0x200] sm:$0xff]
    %v2738 = vld [vmem:[#allocation6 + $0x208] sm:$0xff]
    %v2739 = vld [vmem:[#allocation6 + $0x210] sm:$0xff]
    %v2740 = vld [vmem:[#allocation6 + $0x218] sm:$0xff]
    %v2741 = vld [vmem:[#allocation6 + $0x220] sm:$0xff]
    %v2742 = vld [vmem:[#allocation6 + $0x228] sm:$0xff]
    %v2743 = vld [vmem:[#allocation6 + $0x230] sm:$0xff]
    %v2744 = vld [vmem:[#allocation6 + $0x238] sm:$0xff]
    %v2745 = vld [vmem:[#allocation6 + $0x240] sm:$0xff]
    %v2746 = vld [vmem:[#allocation6 + $0x248] sm:$0xff]
    %v2747 = vld [vmem:[#allocation6 + $0x250] sm:$0xff]
    %v2748 = vld [vmem:[#allocation6 + $0x258] sm:$0xff]
    %v2749 = vld [vmem:[#allocation6 + $0x260] sm:$0xff]
    %v2750 = vld [vmem:[#allocation6 + $0x268] sm:$0xff]
    %v2751 = vld [vmem:[#allocation6 + $0x270] sm:$0xff]
    %v2752 = vld [vmem:[#allocation6 + $0x278] sm:$0xff]
    %v2753 = vld [vmem:[#allocation6 + $0x280] sm:$0xff]
    %v2754 = vld [vmem:[#allocation6 + $0x288] sm:$0xff]
    %v2755 = vld [vmem:[#allocation6 + $0x290] sm:$0xff]
    %v2756 = vld [vmem:[#allocation6 + $0x298] sm:$0xff]
    %v2757 = vld [vmem:[#allocation6 + $0x2a0] sm:$0xff]
    %v2758 = vld [vmem:[#allocation6 + $0x2a8] sm:$0xff]
    %v2759 = vld [vmem:[#allocation6 + $0x2b0] sm:$0xff]
    %v2760 = vld [vmem:[#allocation6 + $0x2b8] sm:$0xff]
    %v2761 = vld [vmem:[#allocation6 + $0x2c0] sm:$0xff]
    %v2762 = vld [vmem:[#allocation6 + $0x2c8] sm:$0xff]
    %v2763 = vld [vmem:[#allocation6 + $0x2d0] sm:$0xff]
    %v2764 = vld [vmem:[#allocation6 + $0x2d8] sm:$0xff]
    %v2765 = vld [vmem:[#allocation6 + $0x2e0] sm:$0xff]
    %v2766 = vld [vmem:[#allocation6 + $0x2e8] sm:$0xff]
    %v2767 = vld [vmem:[#allocation6 + $0x2f0] sm:$0xff]
    %v2768 = vld [vmem:[#allocation6 + $0x2f8] sm:$0xff]
    %v2769 = vld [vmem:[#allocation6 + $0x300] sm:$0xff]
    %v2770 = vld [vmem:[#allocation6 + $0x308] sm:$0xff]
    %v2771 = vld [vmem:[#allocation6 + $0x310] sm:$0xff]
    %v2772 = vld [vmem:[#allocation6 + $0x318] sm:$0xff]
    %v2773 = vld [vmem:[#allocation6 + $0x320] sm:$0xff]
    %v2774 = vld [vmem:[#allocation6 + $0x328] sm:$0xff]
    %v2775 = vld [vmem:[#allocation6 + $0x330] sm:$0xff]
    %v2776 = vld [vmem:[#allocation6 + $0x338] sm:$0xff]
    %v2777 = vld [vmem:[#allocation6 + $0x340] sm:$0xff]
    %v2778 = vld [vmem:[#allocation6 + $0x348] sm:$0xff]
    %v2779 = vld [vmem:[#allocation6 + $0x350] sm:$0xff]
    %v2780 = vld [vmem:[#allocation6 + $0x358] sm:$0xff]
    %v2781 = vld [vmem:[#allocation6 + $0x360] sm:$0xff]
    %v2782 = vld [vmem:[#allocation6 + $0x368] sm:$0xff]
    %v2783 = vld [vmem:[#allocation6 + $0x370] sm:$0xff]
    %v2784 = vld [vmem:[#allocation6 + $0x378] sm:$0xff]
    %v2785 = vld [vmem:[#allocation6 + $0x380] sm:$0xff]
    %v2786 = vld [vmem:[#allocation6 + $0x388] sm:$0xff]
    %v2787 = vld [vmem:[#allocation6 + $0x390] sm:$0xff]
    %v2788 = vld [vmem:[#allocation6 + $0x398] sm:$0xff]
    %v2789 = vld [vmem:[#allocation6 + $0x3a0] sm:$0xff]
    %v2790 = vld [vmem:[#allocation6 + $0x3a8] sm:$0xff]
    %v2791 = vld [vmem:[#allocation6 + $0x3b0] sm:$0xff]
    %v2792 = vld [vmem:[#allocation6 + $0x3b8] sm:$0xff]
    %v2793 = vld [vmem:[#allocation6 + $0x3c0] sm:$0xff]
    %v2794 = vld [vmem:[#allocation6 + $0x3c8] sm:$0xff]
    %v2795 = vld [vmem:[#allocation6 + $0x3d0] sm:$0xff]
    %v2796 = vld [vmem:[#allocation6 + $0x3d8] sm:$0xff]
    %v2797 = vld [vmem:[#allocation6 + $0x3e0] sm:$0xff]
    %v2798 = vld [vmem:[#allocation6 + $0x3e8] sm:$0xff]
    %v2799 = vld [vmem:[#allocation6 + $0x3f0] sm:$0xff]
    %v2800 = vld [vmem:[#allocation6 + $0x3f8] sm:$0xff]
    %v2801 = vld [vmem:[#allocation6 + $0x400] sm:$0xff]
    %v2802 = vld [vmem:[#allocation6 + $0x408] sm:$0xff]
    %v2803 = vld [vmem:[#allocation6 + $0x410] sm:$0xff]
    %v2804 = vld [vmem:[#allocation6 + $0x418] sm:$0xff]
    %v2805 = vld [vmem:[#allocation6 + $0x420] sm:$0xff]
    %v2806 = vld [vmem:[#allocation6 + $0x428] sm:$0xff]
    %v2807 = vld [vmem:[#allocation6 + $0x430] sm:$0xff]
    %v2808 = vld [vmem:[#allocation6 + $0x438] sm:$0xff]
    %v2809 = vld [vmem:[#allocation6 + $0x440] sm:$0xff]
    %v2810 = vld [vmem:[#allocation6 + $0x448] sm:$0xff]
    %v2811 = vld [vmem:[#allocation6 + $0x450] sm:$0xff]
    %v2812 = vld [vmem:[#allocation6 + $0x458] sm:$0xff]
    %v2813 = vld [vmem:[#allocation6 + $0x460] sm:$0xff]
    %v2814 = vld [vmem:[#allocation6 + $0x468] sm:$0xff]
    %v2815 = vld [vmem:[#allocation6 + $0x470] sm:$0xff]
    %v2816 = vld [vmem:[#allocation6 + $0x478] sm:$0xff]
    %2817 = vmatprep.subr.mxu0 0.0
    %2818 = vmatpush1.msra.mxu0 %v2657
    %2819 = vmatprep.subr.mxu0 0.0
    %2820 = vmatpush1.msra.mxu0 %v2658
    %2821 = vmatprep.subr.mxu0 0.0
    %2822 = vmatpush1.msra.mxu0 %v2659
    %2823 = vmatprep.subr.mxu0 0.0
    %2824 = vmatpush1.msra.mxu0 %v2660
    %2825 = vmatprep.subr.mxu0 0.0
    %2826 = vmatpush1.msra.mxu0 %v2661
    %2827 = vmatprep.subr.mxu0 0.0
    %2828 = vmatpush1.msra.mxu0 %v2662
    %2829 = vmatprep.subr.mxu0 0.0
    %2830 = vmatpush1.msra.mxu0 %v2663
    %2831 = vmatprep.subr.mxu0 0.0
    %2832 = vmatpush1.msra.mxu0 %v2664
    %2833 = vmatprep.subr.mxu0 0.0
    %2834 = vmatpush1.msra.mxu0 %v2665
    %2835 = vmatprep.subr.mxu0 0.0
    %2836 = vmatpush1.msra.mxu0 %v2666
    %2837 = vmatprep.subr.mxu0 0.0
    %2838 = vmatpush1.msra.mxu0 %v2667
    %2839 = vmatprep.subr.mxu0 0.0
    %2840 = vmatpush1.msra.mxu0 %v2668
    %2841 = vmatprep.subr.mxu0 0.0
    %2842 = vmatpush1.msra.mxu0 %v2669
    %2843 = vmatprep.subr.mxu0 0.0
    %2844 = vmatpush1.msra.mxu0 %v2670
    %2845 = vmatprep.subr.mxu0 0.0
    %2846 = vmatpush1.msra.mxu0 %v2671
    %2847 = vmatprep.subr.mxu0 0.0
    %2848 = vmatpush1.msra.mxu0 %v2672
    %2849 = vmatprep.subr.mxu0 0.0
    %2850 = vmatpush1.msra.mxu0 0.0
    %2851 = vmatprep.subr.mxu0 0.0
    %2852 = vmatpush1.msra.mxu0 0.0
    %2853 = vmatprep.subr.mxu0 0.0
    %2854 = vmatpush1.msra.mxu0 0.0
    %2855 = vmatprep.subr.mxu0 0.0
    %2856 = vmatpush1.msra.mxu0 0.0
    %2857 = vmatprep.subr.mxu0 0.0
    %2858 = vmatpush1.msra.mxu0 0.0
    %2859 = vmatprep.subr.mxu0 0.0
    %2860 = vmatpush1.msra.mxu0 0.0
    %2861 = vmatprep.subr.mxu0 0.0
    %2862 = vmatpush1.msra.mxu0 0.0
    %2863 = vmatprep.subr.mxu0 0.0
    %2864 = vmatpush1.msra.mxu0 0.0
    %2865 = vmatprep.subr.mxu0 0.0
    %2866 = vmatpush1.msra.mxu0 0.0
    %2867 = vmatprep.subr.mxu0 0.0
    %2868 = vmatpush1.msra.mxu0 0.0
    %2869 = vmatprep.subr.mxu0 0.0
    %2870 = vmatpush1.msra.mxu0 0.0
    %2871 = vmatprep.subr.mxu0 0.0
    %2872 = vmatpush1.msra.mxu0 0.0
    %2873 = vmatprep.subr.mxu0 0.0
    %2874 = vmatpush1.msra.mxu0 0.0
    %2875 = vmatprep.subr.mxu0 0.0
    %2876 = vmatpush1.msra.mxu0 0.0
    %2877 = vmatprep.subr.mxu0 0.0
    %2878 = vmatpush1.msra.mxu0 0.0
    %2879 = vmatprep.subr.mxu0 0.0
    %2880 = vmatpush1.msra.mxu0 0.0
    %2881 = vmatprep.mubr.f32.mxu0 0.0
    %2882 = vmatmul.mubr.f32.gmra.mrb[0].mxu0 %v2673
    %v2883 = vpop.f32.mrb[0].mxu0
    %v2884 = vadd.f32 0.0, %v2883
    %v2885 = vpop.f32.mrb[0].mxu0
    %2886 = vmatprep.mubr.f32.mxu0 0.0
    %2887 = vmatmul.mubr.f32.gmra.mrb[0].mxu0 %v2674
    %v2888 = vpop.f32.mrb[0].mxu0
    %v2889 = vadd.f32 0.0, %v2888
    %v2890 = vpop.f32.mrb[0].mxu0
    %2891 = vmatprep.mubr.f32.mxu0 0.0
    %2892 = vmatmul.mubr.f32.gmra.mrb[0].mxu0 %v2675
    %v2893 = vpop.f32.mrb[0].mxu0
    %v2894 = vadd.f32 0.0, %v2893
    %v2895 = vpop.f32.mrb[0].mxu0
    %2896 = vmatprep.mubr.f32.mxu0 0.0
    %2897 = vmatmul.mubr.f32.gmra.mrb[0].mxu0 %v2676
    %v2898 = vpop.f32.mrb[0].mxu0
    %v2899 = vadd.f32 0.0, %v2898
    %v2900 = vpop.f32.mrb[0].mxu0
    %2901 = vmatprep.mubr.f32.mxu0 0.0
    %2902 = vmatmul.mubr.f32.gmra.mrb[0].mxu0 %v2677
    %v2903 = vpop.f32.mrb[0].mxu0
    %v2904 = vadd.f32 0.0, %v2903
    %v2905 = vpop.f32.mrb[0].mxu0
    %2906 = vmatprep.mubr.f32.mxu0 0.0
    %2907 = vmatmul.mubr.f32.gmra.mrb[0].mxu0 %v2678
    %v2908 = vpop.f32.mrb[0].mxu0
    %v2909 = vadd.f32 0.0, %v2908
    %v2910 = vpop.f32.mrb[0].mxu0
    %2911 = vmatprep.mubr.f32.mxu0 0.0
    %2912 = vmatmul.mubr.f32.gmra.mrb[0].mxu0 %v2679
    %v2913 = vpop.f32.mrb[0].mxu0
    %v2914 = vadd.f32 0.0, %v2913
    %v2915 = vpop.f32.mrb[0].mxu0
    %2916 = vmatprep.mubr.f32.mxu0 0.0
    %2917 = vmatmul.mubr.f32.gmra.mrb[0].mxu0 %v2680
    %v2918 = vpop.f32.mrb[0].mxu0
    %v2919 = vadd.f32 0.0, %v2918
    %v2920 = vpop.f32.mrb[0].mxu0
    %2921 = vmatprep.mubr.f32.mxu0 0.0
    %2922 = vmatmul.mubr.f32.gmra.mrb[0].mxu0 %v2681
    %v2923 = vpop.f32.mrb[0].mxu0
    %v2924 = vadd.f32 0.0, %v2923
    %v2925 = vpop.f32.mrb[0].mxu0
    %2926 = vmatprep.mubr.f32.mxu0 0.0
    %2927 = vmatmul.mubr.f32.gmra.mrb[0].mxu0 %v2682
    %v2928 = vpop.f32.mrb[0].mxu0
    %v2929 = vadd.f32 0.0, %v2928
    %v2930 = vpop.f32.mrb[0].mxu0
    %2931 = vmatprep.mubr.f32.mxu0 0.0
    %2932 = vmatmul.mubr.f32.gmra.mrb[0].mxu0 %v2683
    %v2933 = vpop.f32.mrb[0].mxu0
    %v2934 = vadd.f32 0.0, %v2933
    %v2935 = vpop.f32.mrb[0].mxu0
    %2936 = vmatprep.mubr.f32.mxu0 0.0
    %2937 = vmatmul.mubr.f32.gmra.mrb[0].mxu0 %v2684
    %v2938 = vpop.f32.mrb[0].mxu0
    %v2939 = vadd.f32 0.0, %v2938
    %v2940 = vpop.f32.mrb[0].mxu0
    %2941 = vmatprep.mubr.f32.mxu0 0.0
    %2942 = vmatmul.mubr.f32.gmra.mrb[0].mxu0 %v2685
    %v2943 = vpop.f32.mrb[0].mxu0
    %v2944 = vadd.f32 0.0, %v2943
    %v2945 = vpop.f32.mrb[0].mxu0
    %2946 = vmatprep.mubr.f32.mxu0 0.0
    %2947 = vmatmul.mubr.f32.gmra.mrb[0].mxu0 %v2686
    %v2948 = vpop.f32.mrb[0].mxu0
    %v2949 = vadd.f32 0.0, %v2948
    %v2950 = vpop.f32.mrb[0].mxu0
    %2951 = vmatprep.mubr.f32.mxu0 0.0
    %2952 = vmatmul.mubr.f32.gmra.mrb[0].mxu0 %v2687
    %v2953 = vpop.f32.mrb[0].mxu0
    %v2954 = vadd.f32 0.0, %v2953
    %v2955 = vpop.f32.mrb[0].mxu0
    %2956 = vmatprep.mubr.f32.mxu0 0.0
    %2957 = vmatmul.mubr.f32.gmra.mrb[0].mxu0 %v2688
    %v2958 = vpop.f32.mrb[0].mxu0
    %v2959 = vadd.f32 0.0, %v2958
    %v2960 = vpop.f32.mrb[0].mxu0
    %2961 = vmatprep.mubr.f32.mxu0 0.0
    %2962 = vmatmul.mubr.f32.gmra.mrb[0].mxu0 %v2689
    %v2963 = vpop.f32.mrb[0].mxu0
    %v2964 = vadd.f32 0.0, %v2963
    %v2965 = vpop.f32.mrb[0].mxu0
    %2966 = vmatprep.mubr.f32.mxu0 0.0
    %2967 = vmatmul.mubr.f32.gmra.mrb[0].mxu0 %v2690
    %v2968 = vpop.f32.mrb[0].mxu0
    %v2969 = vadd.f32 0.0, %v2968
    %v2970 = vpop.f32.mrb[0].mxu0
    %2971 = vmatprep.mubr.f32.mxu0 0.0
    %2972 = vmatmul.mubr.f32.gmra.mrb[0].mxu0 %v2691
    %v2973 = vpop.f32.mrb[0].mxu0
    %v2974 = vadd.f32 0.0, %v2973
    %v2975 = vpop.f32.mrb[0].mxu0
    %2976 = vmatprep.mubr.f32.mxu0 0.0
    %2977 = vmatmul.mubr.f32.gmra.mrb[0].mxu0 %v2692
    %v2978 = vpop.f32.mrb[0].mxu0
    %v2979 = vadd.f32 0.0, %v2978
    %v2980 = vpop.f32.mrb[0].mxu0
    %2981 = vmatprep.mubr.f32.mxu0 0.0
    %2982 = vmatmul.mubr.f32.gmra.mrb[0].mxu0 %v2693
    %v2983 = vpop.f32.mrb[0].mxu0
    %v2984 = vadd.f32 0.0, %v2983
    %v2985 = vpop.f32.mrb[0].mxu0
    %2986 = vmatprep.mubr.f32.mxu0 0.0
    %2987 = vmatmul.mubr.f32.gmra.mrb[0].mxu0 %v2694
    %v2988 = vpop.f32.mrb[0].mxu0
    %v2989 = vadd.f32 0.0, %v2988
    %v2990 = vpop.f32.mrb[0].mxu0
    %2991 = vmatprep.mubr.f32.mxu0 0.0
    %2992 = vmatmul.mubr.f32.gmra.mrb[0].mxu0 %v2695
    %v2993 = vpop.f32.mrb[0].mxu0
    %v2994 = vadd.f32 0.0, %v2993
    %v2995 = vpop.f32.mrb[0].mxu0
    %2996 = vmatprep.mubr.f32.mxu0 0.0
    %2997 = vmatmul.mubr.f32.gmra.mrb[0].mxu0 %v2696
    %v2998 = vpop.f32.mrb[0].mxu0
    %v2999 = vadd.f32 0.0, %v2998
    %v3000 = vpop.f32.mrb[0].mxu0
    %3001 = vmatprep.mubr.f32.mxu0 0.0
    %3002 = vmatmul.mubr.f32.gmra.mrb[0].mxu0 %v2697
    %v3003 = vpop.f32.mrb[0].mxu0
    %v3004 = vadd.f32 0.0, %v3003
    %v3005 = vpop.f32.mrb[0].mxu0
    %3006 = vmatprep.mubr.f32.mxu0 0.0
    %3007 = vmatmul.mubr.f32.gmra.mrb[0].mxu0 %v2698
    %v3008 = vpop.f32.mrb[0].mxu0
    %v3009 = vadd.f32 0.0, %v3008
    %v3010 = vpop.f32.mrb[0].mxu0
    %3011 = vmatprep.mubr.f32.mxu0 0.0
    %3012 = vmatmul.mubr.f32.gmra.mrb[0].mxu0 %v2699
    %v3013 = vpop.f32.mrb[0].mxu0
    %v3014 = vadd.f32 0.0, %v3013
    %v3015 = vpop.f32.mrb[0].mxu0
    %3016 = vmatprep.mubr.f32.mxu0 0.0
    %3017 = vmatmul.mubr.f32.gmra.mrb[0].mxu0 %v2700
    %v3018 = vpop.f32.mrb[0].mxu0
    %v3019 = vadd.f32 0.0, %v3018
    %v3020 = vpop.f32.mrb[0].mxu0
    %3021 = vmatprep.mubr.f32.mxu0 0.0
    %3022 = vmatmul.mubr.f32.gmra.mrb[0].mxu0 %v2701
    %v3023 = vpop.f32.mrb[0].mxu0
    %v3024 = vadd.f32 0.0, %v3023
    %v3025 = vpop.f32.mrb[0].mxu0
    %3026 = vmatprep.mubr.f32.mxu0 0.0
    %3027 = vmatmul.mubr.f32.gmra.mrb[0].mxu0 %v2702
    %v3028 = vpop.f32.mrb[0].mxu0
    %v3029 = vadd.f32 0.0, %v3028
    %v3030 = vpop.f32.mrb[0].mxu0
    %3031 = vmatprep.mubr.f32.mxu0 0.0
    %3032 = vmatmul.mubr.f32.gmra.mrb[0].mxu0 %v2703
    %v3033 = vpop.f32.mrb[0].mxu0
    %v3034 = vadd.f32 0.0, %v3033
    %v3035 = vpop.f32.mrb[0].mxu0
    %3036 = vmatprep.mubr.f32.mxu0 0.0
    %3037 = vmatmul.mubr.f32.gmra.mrb[0].mxu0 %v2704
    %v3038 = vpop.f32.mrb[0].mxu0
    %v3039 = vadd.f32 0.0, %v3038
    %v3040 = vpop.f32.mrb[0].mxu0
    %3041 = vmatprep.mubr.f32.mxu0 0.0
    %3042 = vmatmul.mubr.f32.gmra.mrb[0].mxu0 %v2705
    %v3043 = vpop.f32.mrb[0].mxu0
    %v3044 = vadd.f32 0.0, %v3043
    %v3045 = vpop.f32.mrb[0].mxu0
    %3046 = vmatprep.mubr.f32.mxu0 0.0
    %3047 = vmatmul.mubr.f32.gmra.mrb[0].mxu0 %v2706
    %v3048 = vpop.f32.mrb[0].mxu0
    %v3049 = vadd.f32 0.0, %v3048
    %v3050 = vpop.f32.mrb[0].mxu0
    %3051 = vmatprep.mubr.f32.mxu0 0.0
    %3052 = vmatmul.mubr.f32.gmra.mrb[0].mxu0 %v2707
    %v3053 = vpop.f32.mrb[0].mxu0
    %v3054 = vadd.f32 0.0, %v3053
    %v3055 = vpop.f32.mrb[0].mxu0
    %3056 = vmatprep.mubr.f32.mxu0 0.0
    %3057 = vmatmul.mubr.f32.gmra.mrb[0].mxu0 %v2708
    %v3058 = vpop.f32.mrb[0].mxu0
    %v3059 = vadd.f32 0.0, %v3058
    %v3060 = vpop.f32.mrb[0].mxu0
    %3061 = vmatprep.mubr.f32.mxu0 0.0
    %3062 = vmatmul.mubr.f32.gmra.mrb[0].mxu0 %v2709
    %v3063 = vpop.f32.mrb[0].mxu0
    %v3064 = vadd.f32 0.0, %v3063
    %v3065 = vpop.f32.mrb[0].mxu0
    %3066 = vmatprep.mubr.f32.mxu0 0.0
    %3067 = vmatmul.mubr.f32.gmra.mrb[0].mxu0 %v2710
    %v3068 = vpop.f32.mrb[0].mxu0
    %v3069 = vadd.f32 0.0, %v3068
    %v3070 = vpop.f32.mrb[0].mxu0
    %3071 = vmatprep.mubr.f32.mxu0 0.0
    %3072 = vmatmul.mubr.f32.gmra.mrb[0].mxu0 %v2711
    %v3073 = vpop.f32.mrb[0].mxu0
    %v3074 = vadd.f32 0.0, %v3073
    %v3075 = vpop.f32.mrb[0].mxu0
    %3076 = vmatprep.mubr.f32.mxu0 0.0
    %3077 = vmatmul.mubr.f32.gmra.mrb[0].mxu0 %v2712
    %v3078 = vpop.f32.mrb[0].mxu0
    %v3079 = vadd.f32 0.0, %v3078
    %v3080 = vpop.f32.mrb[0].mxu0
    %3081 = vmatprep.mubr.f32.mxu0 0.0
    %3082 = vmatmul.mubr.f32.gmra.mrb[0].mxu0 %v2713
    %v3083 = vpop.f32.mrb[0].mxu0
    %v3084 = vadd.f32 0.0, %v3083
    %v3085 = vpop.f32.mrb[0].mxu0
    %3086 = vmatprep.mubr.f32.mxu0 0.0
    %3087 = vmatmul.mubr.f32.gmra.mrb[0].mxu0 %v2714
    %v3088 = vpop.f32.mrb[0].mxu0
    %v3089 = vadd.f32 0.0, %v3088
    %v3090 = vpop.f32.mrb[0].mxu0
    %3091 = vmatprep.mubr.f32.mxu0 0.0
    %3092 = vmatmul.mubr.f32.gmra.mrb[0].mxu0 %v2715
    %v3093 = vpop.f32.mrb[0].mxu0
    %v3094 = vadd.f32 0.0, %v3093
    %v3095 = vpop.f32.mrb[0].mxu0
    %3096 = vmatprep.mubr.f32.mxu0 0.0
    %3097 = vmatmul.mubr.f32.gmra.mrb[0].mxu0 %v2716
    %v3098 = vpop.f32.mrb[0].mxu0
    %v3099 = vadd.f32 0.0, %v3098
    %v3100 = vpop.f32.mrb[0].mxu0
    %3101 = vmatprep.mubr.f32.mxu0 0.0
    %3102 = vmatmul.mubr.f32.gmra.mrb[0].mxu0 %v2717
    %v3103 = vpop.f32.mrb[0].mxu0
    %v3104 = vadd.f32 0.0, %v3103
    %v3105 = vpop.f32.mrb[0].mxu0
    %3106 = vmatprep.mubr.f32.mxu0 0.0
    %3107 = vmatmul.mubr.f32.gmra.mrb[0].mxu0 %v2718
    %v3108 = vpop.f32.mrb[0].mxu0
    %v3109 = vadd.f32 0.0, %v3108
    %v3110 = vpop.f32.mrb[0].mxu0
    %3111 = vmatprep.mubr.f32.mxu0 0.0
    %3112 = vmatmul.mubr.f32.gmra.mrb[0].mxu0 %v2719
    %v3113 = vpop.f32.mrb[0].mxu0
    %v3114 = vadd.f32 0.0, %v3113
    %v3115 = vpop.f32.mrb[0].mxu0
    %3116 = vmatprep.mubr.f32.mxu0 0.0
    %3117 = vmatmul.mubr.f32.gmra.mrb[0].mxu0 %v2720
    %v3118 = vpop.f32.mrb[0].mxu0
    %v3119 = vadd.f32 0.0, %v3118
    %v3120 = vpop.f32.mrb[0].mxu0
    %3121 = vmatprep.mubr.f32.mxu0 0.0
    %3122 = vmatmul.mubr.f32.gmra.mrb[0].mxu0 %v2721
    %v3123 = vpop.f32.mrb[0].mxu0
    %v3124 = vadd.f32 0.0, %v3123
    %v3125 = vpop.f32.mrb[0].mxu0
    %3126 = vmatprep.mubr.f32.mxu0 0.0
    %3127 = vmatmul.mubr.f32.gmra.mrb[0].mxu0 %v2722
    %v3128 = vpop.f32.mrb[0].mxu0
    %v3129 = vadd.f32 0.0, %v3128
    %v3130 = vpop.f32.mrb[0].mxu0
    %3131 = vmatprep.mubr.f32.mxu0 0.0
    %3132 = vmatmul.mubr.f32.gmra.mrb[0].mxu0 %v2723
    %v3133 = vpop.f32.mrb[0].mxu0
    %v3134 = vadd.f32 0.0, %v3133
    %v3135 = vpop.f32.mrb[0].mxu0
    %3136 = vmatprep.mubr.f32.mxu0 0.0
    %3137 = vmatmul.mubr.f32.gmra.mrb[0].mxu0 %v2724
    %v3138 = vpop.f32.mrb[0].mxu0
    %v3139 = vadd.f32 0.0, %v3138
    %v3140 = vpop.f32.mrb[0].mxu0
    %3141 = vmatprep.mubr.f32.mxu0 0.0
    %3142 = vmatmul.mubr.f32.gmra.mrb[0].mxu0 %v2725
    %v3143 = vpop.f32.mrb[0].mxu0
    %v3144 = vadd.f32 0.0, %v3143
    %v3145 = vpop.f32.mrb[0].mxu0
    %3146 = vmatprep.mubr.f32.mxu0 0.0
    %3147 = vmatmul.mubr.f32.gmra.mrb[0].mxu0 %v2726
    %v3148 = vpop.f32.mrb[0].mxu0
    %v3149 = vadd.f32 0.0, %v3148
    %v3150 = vpop.f32.mrb[0].mxu0
    %3151 = vmatprep.mubr.f32.mxu0 0.0
    %3152 = vmatmul.mubr.f32.gmra.mrb[0].mxu0 %v2727
    %v3153 = vpop.f32.mrb[0].mxu0
    %v3154 = vadd.f32 0.0, %v3153
    %v3155 = vpop.f32.mrb[0].mxu0
    %3156 = vmatprep.mubr.f32.mxu0 0.0
    %3157 = vmatmul.mubr.f32.gmra.mrb[0].mxu0 %v2728
    %v3158 = vpop.f32.mrb[0].mxu0
    %v3159 = vadd.f32 0.0, %v3158
    %v3160 = vpop.f32.mrb[0].mxu0
    %3161 = vmatprep.mubr.f32.mxu0 0.0
    %3162 = vmatmul.mubr.f32.gmra.mrb[0].mxu0 %v2729
    %v3163 = vpop.f32.mrb[0].mxu0
    %v3164 = vadd.f32 0.0, %v3163
    %v3165 = vpop.f32.mrb[0].mxu0
    %3166 = vmatprep.mubr.f32.mxu0 0.0
    %3167 = vmatmul.mubr.f32.gmra.mrb[0].mxu0 %v2730
    %v3168 = vpop.f32.mrb[0].mxu0
    %v3169 = vadd.f32 0.0, %v3168
    %v3170 = vpop.f32.mrb[0].mxu0
    %3171 = vmatprep.mubr.f32.mxu0 0.0
    %3172 = vmatmul.mubr.f32.gmra.mrb[0].mxu0 %v2731
    %v3173 = vpop.f32.mrb[0].mxu0
    %v3174 = vadd.f32 0.0, %v3173
    %v3175 = vpop.f32.mrb[0].mxu0
    %3176 = vmatprep.mubr.f32.mxu0 0.0
    %3177 = vmatmul.mubr.f32.gmra.mrb[0].mxu0 %v2732
    %v3178 = vpop.f32.mrb[0].mxu0
    %v3179 = vadd.f32 0.0, %v3178
    %v3180 = vpop.f32.mrb[0].mxu0
    %3181 = vmatprep.mubr.f32.mxu0 0.0
    %3182 = vmatmul.mubr.f32.gmra.mrb[0].mxu0 %v2733
    %v3183 = vpop.f32.mrb[0].mxu0
    %v3184 = vadd.f32 0.0, %v3183
    %v3185 = vpop.f32.mrb[0].mxu0
    %3186 = vmatprep.mubr.f32.mxu0 0.0
    %3187 = vmatmul.mubr.f32.gmra.mrb[0].mxu0 %v2734
    %v3188 = vpop.f32.mrb[0].mxu0
    %v3189 = vadd.f32 0.0, %v3188
    %v3190 = vpop.f32.mrb[0].mxu0
    %3191 = vmatprep.mubr.f32.mxu0 0.0
    %3192 = vmatmul.mubr.f32.gmra.mrb[0].mxu0 %v2735
    %v3193 = vpop.f32.mrb[0].mxu0
    %v3194 = vadd.f32 0.0, %v3193
    %v3195 = vpop.f32.mrb[0].mxu0
    %3196 = vmatprep.mubr.f32.mxu0 0.0
    %3197 = vmatmul.mubr.f32.gmra.mrb[0].mxu0 %v2736
    %v3198 = vpop.f32.mrb[0].mxu0
    %v3199 = vadd.f32 0.0, %v3198
    %v3200 = vpop.f32.mrb[0].mxu0
    %3201 = vmatprep.mubr.f32.mxu0 0.0
    %3202 = vmatmul.mubr.f32.gmra.mrb[0].mxu0 %v2737
    %v3203 = vpop.f32.mrb[0].mxu0
    %v3204 = vadd.f32 0.0, %v3203
    %v3205 = vpop.f32.mrb[0].mxu0
    %3206 = vmatprep.mubr.f32.mxu0 0.0
    %3207 = vmatmul.mubr.f32.gmra.mrb[0].mxu0 %v2738
    %v3208 = vpop.f32.mrb[0].mxu0
    %v3209 = vadd.f32 0.0, %v3208
    %v3210 = vpop.f32.mrb[0].mxu0
    %3211 = vmatprep.mubr.f32.mxu0 0.0
    %3212 = vmatmul.mubr.f32.gmra.mrb[0].mxu0 %v2739
    %v3213 = vpop.f32.mrb[0].mxu0
    %v3214 = vadd.f32 0.0, %v3213
    %v3215 = vpop.f32.mrb[0].mxu0
    %3216 = vmatprep.mubr.f32.mxu0 0.0
    %3217 = vmatmul.mubr.f32.gmra.mrb[0].mxu0 %v2740
    %v3218 = vpop.f32.mrb[0].mxu0
    %v3219 = vadd.f32 0.0, %v3218
    %v3220 = vpop.f32.mrb[0].mxu0
    %3221 = vmatprep.mubr.f32.mxu0 0.0
    %3222 = vmatmul.mubr.f32.gmra.mrb[0].mxu0 %v2741
    %v3223 = vpop.f32.mrb[0].mxu0
    %v3224 = vadd.f32 0.0, %v3223
    %v3225 = vpop.f32.mrb[0].mxu0
    %3226 = vmatprep.mubr.f32.mxu0 0.0
    %3227 = vmatmul.mubr.f32.gmra.mrb[0].mxu0 %v2742
    %v3228 = vpop.f32.mrb[0].mxu0
    %v3229 = vadd.f32 0.0, %v3228
    %v3230 = vpop.f32.mrb[0].mxu0
    %3231 = vmatprep.mubr.f32.mxu0 0.0
    %3232 = vmatmul.mubr.f32.gmra.mrb[0].mxu0 %v2743
    %v3233 = vpop.f32.mrb[0].mxu0
    %v3234 = vadd.f32 0.0, %v3233
    %v3235 = vpop.f32.mrb[0].mxu0
    %3236 = vmatprep.mubr.f32.mxu0 0.0
    %3237 = vmatmul.mubr.f32.gmra.mrb[0].mxu0 %v2744
    %v3238 = vpop.f32.mrb[0].mxu0
    %v3239 = vadd.f32 0.0, %v3238
    %v3240 = vpop.f32.mrb[0].mxu0
    %3241 = vmatprep.mubr.f32.mxu0 0.0
    %3242 = vmatmul.mubr.f32.gmra.mrb[0].mxu0 %v2745
    %v3243 = vpop.f32.mrb[0].mxu0
    %v3244 = vadd.f32 0.0, %v3243
    %v3245 = vpop.f32.mrb[0].mxu0
    %3246 = vmatprep.mubr.f32.mxu0 0.0
    %3247 = vmatmul.mubr.f32.gmra.mrb[0].mxu0 %v2746
    %v3248 = vpop.f32.mrb[0].mxu0
    %v3249 = vadd.f32 0.0, %v3248
    %v3250 = vpop.f32.mrb[0].mxu0
    %3251 = vmatprep.mubr.f32.mxu0 0.0
    %3252 = vmatmul.mubr.f32.gmra.mrb[0].mxu0 %v2747
    %v3253 = vpop.f32.mrb[0].mxu0
    %v3254 = vadd.f32 0.0, %v3253
    %v3255 = vpop.f32.mrb[0].mxu0
    %3256 = vmatprep.mubr.f32.mxu0 0.0
    %3257 = vmatmul.mubr.f32.gmra.mrb[0].mxu0 %v2748
    %v3258 = vpop.f32.mrb[0].mxu0
    %v3259 = vadd.f32 0.0, %v3258
    %v3260 = vpop.f32.mrb[0].mxu0
    %3261 = vmatprep.mubr.f32.mxu0 0.0
    %3262 = vmatmul.mubr.f32.gmra.mrb[0].mxu0 %v2749
    %v3263 = vpop.f32.mrb[0].mxu0
    %v3264 = vadd.f32 0.0, %v3263
    %v3265 = vpop.f32.mrb[0].mxu0
    %3266 = vmatprep.mubr.f32.mxu0 0.0
    %3267 = vmatmul.mubr.f32.gmra.mrb[0].mxu0 %v2750
    %v3268 = vpop.f32.mrb[0].mxu0
    %v3269 = vadd.f32 0.0, %v3268
    %v3270 = vpop.f32.mrb[0].mxu0
    %3271 = vmatprep.mubr.f32.mxu0 0.0
    %3272 = vmatmul.mubr.f32.gmra.mrb[0].mxu0 %v2751
    %v3273 = vpop.f32.mrb[0].mxu0
    %v3274 = vadd.f32 0.0, %v3273
    %v3275 = vpop.f32.mrb[0].mxu0
    %3276 = vmatprep.mubr.f32.mxu0 0.0
    %3277 = vmatmul.mubr.f32.gmra.mrb[0].mxu0 %v2752
    %v3278 = vpop.f32.mrb[0].mxu0
    %v3279 = vadd.f32 0.0, %v3278
    %v3280 = vpop.f32.mrb[0].mxu0
    %3281 = vmatprep.mubr.f32.mxu0 0.0
    %3282 = vmatmul.mubr.f32.gmra.mrb[0].mxu0 %v2753
    %v3283 = vpop.f32.mrb[0].mxu0
    %v3284 = vadd.f32 0.0, %v3283
    %v3285 = vpop.f32.mrb[0].mxu0
    %3286 = vmatprep.mubr.f32.mxu0 0.0
    %3287 = vmatmul.mubr.f32.gmra.mrb[0].mxu0 %v2754
    %v3288 = vpop.f32.mrb[0].mxu0
    %v3289 = vadd.f32 0.0, %v3288
    %v3290 = vpop.f32.mrb[0].mxu0
    %3291 = vmatprep.mubr.f32.mxu0 0.0
    %3292 = vmatmul.mubr.f32.gmra.mrb[0].mxu0 %v2755
    %v3293 = vpop.f32.mrb[0].mxu0
    %v3294 = vadd.f32 0.0, %v3293
    %v3295 = vpop.f32.mrb[0].mxu0
    %3296 = vmatprep.mubr.f32.mxu0 0.0
    %3297 = vmatmul.mubr.f32.gmra.mrb[0].mxu0 %v2756
    %v3298 = vpop.f32.mrb[0].mxu0
    %v3299 = vadd.f32 0.0, %v3298
    %v3300 = vpop.f32.mrb[0].mxu0
    %3301 = vmatprep.mubr.f32.mxu0 0.0
    %3302 = vmatmul.mubr.f32.gmra.mrb[0].mxu0 %v2757
    %v3303 = vpop.f32.mrb[0].mxu0
    %v3304 = vadd.f32 0.0, %v3303
    %v3305 = vpop.f32.mrb[0].mxu0
    %3306 = vmatprep.mubr.f32.mxu0 0.0
    %3307 = vmatmul.mubr.f32.gmra.mrb[0].mxu0 %v2758
    %v3308 = vpop.f32.mrb[0].mxu0
    %v3309 = vadd.f32 0.0, %v3308
    %v3310 = vpop.f32.mrb[0].mxu0
    %3311 = vmatprep.mubr.f32.mxu0 0.0
    %3312 = vmatmul.mubr.f32.gmra.mrb[0].mxu0 %v2759
    %v3313 = vpop.f32.mrb[0].mxu0
    %v3314 = vadd.f32 0.0, %v3313
    %v3315 = vpop.f32.mrb[0].mxu0
    %3316 = vmatprep.mubr.f32.mxu0 0.0
    %3317 = vmatmul.mubr.f32.gmra.mrb[0].mxu0 %v2760
    %v3318 = vpop.f32.mrb[0].mxu0
    %v3319 = vadd.f32 0.0, %v3318
    %v3320 = vpop.f32.mrb[0].mxu0
    %3321 = vmatprep.mubr.f32.mxu0 0.0
    %3322 = vmatmul.mubr.f32.gmra.mrb[0].mxu0 %v2761
    %v3323 = vpop.f32.mrb[0].mxu0
    %v3324 = vadd.f32 0.0, %v3323
    %v3325 = vpop.f32.mrb[0].mxu0
    %3326 = vmatprep.mubr.f32.mxu0 0.0
    %3327 = vmatmul.mubr.f32.gmra.mrb[0].mxu0 %v2762
    %v3328 = vpop.f32.mrb[0].mxu0
    %v3329 = vadd.f32 0.0, %v3328
    %v3330 = vpop.f32.mrb[0].mxu0
    %3331 = vmatprep.mubr.f32.mxu0 0.0
    %3332 = vmatmul.mubr.f32.gmra.mrb[0].mxu0 %v2763
    %v3333 = vpop.f32.mrb[0].mxu0
    %v3334 = vadd.f32 0.0, %v3333
    %v3335 = vpop.f32.mrb[0].mxu0
    %3336 = vmatprep.mubr.f32.mxu0 0.0
    %3337 = vmatmul.mubr.f32.gmra.mrb[0].mxu0 %v2764
    %v3338 = vpop.f32.mrb[0].mxu0
    %v3339 = vadd.f32 0.0, %v3338
    %v3340 = vpop.f32.mrb[0].mxu0
    %3341 = vmatprep.mubr.f32.mxu0 0.0
    %3342 = vmatmul.mubr.f32.gmra.mrb[0].mxu0 %v2765
    %v3343 = vpop.f32.mrb[0].mxu0
    %v3344 = vadd.f32 0.0, %v3343
    %v3345 = vpop.f32.mrb[0].mxu0
    %3346 = vmatprep.mubr.f32.mxu0 0.0
    %3347 = vmatmul.mubr.f32.gmra.mrb[0].mxu0 %v2766
    %v3348 = vpop.f32.mrb[0].mxu0
    %v3349 = vadd.f32 0.0, %v3348
    %v3350 = vpop.f32.mrb[0].mxu0
    %3351 = vmatprep.mubr.f32.mxu0 0.0
    %3352 = vmatmul.mubr.f32.gmra.mrb[0].mxu0 %v2767
    %v3353 = vpop.f32.mrb[0].mxu0
    %v3354 = vadd.f32 0.0, %v3353
    %v3355 = vpop.f32.mrb[0].mxu0
    %3356 = vmatprep.mubr.f32.mxu0 0.0
    %3357 = vmatmul.mubr.f32.gmra.mrb[0].mxu0 %v2768
    %v3358 = vpop.f32.mrb[0].mxu0
    %v3359 = vadd.f32 0.0, %v3358
    %v3360 = vpop.f32.mrb[0].mxu0
    %3361 = vmatprep.mubr.f32.mxu0 0.0
    %3362 = vmatmul.mubr.f32.gmra.mrb[0].mxu0 %v2769
    %v3363 = vpop.f32.mrb[0].mxu0
    %v3364 = vadd.f32 0.0, %v3363
    %v3365 = vpop.f32.mrb[0].mxu0
    %3366 = vmatprep.mubr.f32.mxu0 0.0
    %3367 = vmatmul.mubr.f32.gmra.mrb[0].mxu0 %v2770
    %v3368 = vpop.f32.mrb[0].mxu0
    %v3369 = vadd.f32 0.0, %v3368
    %v3370 = vpop.f32.mrb[0].mxu0
    %3371 = vmatprep.mubr.f32.mxu0 0.0
    %3372 = vmatmul.mubr.f32.gmra.mrb[0].mxu0 %v2771
    %v3373 = vpop.f32.mrb[0].mxu0
    %v3374 = vadd.f32 0.0, %v3373
    %v3375 = vpop.f32.mrb[0].mxu0
    %3376 = vmatprep.mubr.f32.mxu0 0.0
    %3377 = vmatmul.mubr.f32.gmra.mrb[0].mxu0 %v2772
    %v3378 = vpop.f32.mrb[0].mxu0
    %v3379 = vadd.f32 0.0, %v3378
    %v3380 = vpop.f32.mrb[0].mxu0
    %3381 = vmatprep.mubr.f32.mxu0 0.0
    %3382 = vmatmul.mubr.f32.gmra.mrb[0].mxu0 %v2773
    %v3383 = vpop.f32.mrb[0].mxu0
    %v3384 = vadd.f32 0.0, %v3383
    %v3385 = vpop.f32.mrb[0].mxu0
    %3386 = vmatprep.mubr.f32.mxu0 0.0
    %3387 = vmatmul.mubr.f32.gmra.mrb[0].mxu0 %v2774
    %v3388 = vpop.f32.mrb[0].mxu0
    %v3389 = vadd.f32 0.0, %v3388
    %v3390 = vpop.f32.mrb[0].mxu0
    %3391 = vmatprep.mubr.f32.mxu0 0.0
    %3392 = vmatmul.mubr.f32.gmra.mrb[0].mxu0 %v2775
    %v3393 = vpop.f32.mrb[0].mxu0
    %v3394 = vadd.f32 0.0, %v3393
    %v3395 = vpop.f32.mrb[0].mxu0
    %3396 = vmatprep.mubr.f32.mxu0 0.0
    %3397 = vmatmul.mubr.f32.gmra.mrb[0].mxu0 %v2776
    %v3398 = vpop.f32.mrb[0].mxu0
    %v3399 = vadd.f32 0.0, %v3398
    %v3400 = vpop.f32.mrb[0].mxu0
    %3401 = vmatprep.mubr.f32.mxu0 0.0
    %3402 = vmatmul.mubr.f32.gmra.mrb[0].mxu0 %v2777
    %v3403 = vpop.f32.mrb[0].mxu0
    %v3404 = vadd.f32 0.0, %v3403
    %v3405 = vpop.f32.mrb[0].mxu0
    %3406 = vmatprep.mubr.f32.mxu0 0.0
    %3407 = vmatmul.mubr.f32.gmra.mrb[0].mxu0 %v2778
    %v3408 = vpop.f32.mrb[0].mxu0
    %v3409 = vadd.f32 0.0, %v3408
    %v3410 = vpop.f32.mrb[0].mxu0
    %3411 = vmatprep.mubr.f32.mxu0 0.0
    %3412 = vmatmul.mubr.f32.gmra.mrb[0].mxu0 %v2779
    %v3413 = vpop.f32.mrb[0].mxu0
    %v3414 = vadd.f32 0.0, %v3413
    %v3415 = vpop.f32.mrb[0].mxu0
    %3416 = vmatprep.mubr.f32.mxu0 0.0
    %3417 = vmatmul.mubr.f32.gmra.mrb[0].mxu0 %v2780
    %v3418 = vpop.f32.mrb[0].mxu0
    %v3419 = vadd.f32 0.0, %v3418
    %v3420 = vpop.f32.mrb[0].mxu0
    %3421 = vmatprep.mubr.f32.mxu0 0.0
    %3422 = vmatmul.mubr.f32.gmra.mrb[0].mxu0 %v2781
    %v3423 = vpop.f32.mrb[0].mxu0
    %v3424 = vadd.f32 0.0, %v3423
    %v3425 = vpop.f32.mrb[0].mxu0
    %3426 = vmatprep.mubr.f32.mxu0 0.0
    %3427 = vmatmul.mubr.f32.gmra.mrb[0].mxu0 %v2782
    %v3428 = vpop.f32.mrb[0].mxu0
    %v3429 = vadd.f32 0.0, %v3428
    %v3430 = vpop.f32.mrb[0].mxu0
    %3431 = vmatprep.mubr.f32.mxu0 0.0
    %3432 = vmatmul.mubr.f32.gmra.mrb[0].mxu0 %v2783
    %v3433 = vpop.f32.mrb[0].mxu0
    %v3434 = vadd.f32 0.0, %v3433
    %v3435 = vpop.f32.mrb[0].mxu0
    %3436 = vmatprep.mubr.f32.mxu0 0.0
    %3437 = vmatmul.mubr.f32.gmra.mrb[0].mxu0 %v2784
    %v3438 = vpop.f32.mrb[0].mxu0
    %v3439 = vadd.f32 0.0, %v3438
    %v3440 = vpop.f32.mrb[0].mxu0
    %3441 = vmatprep.mubr.f32.mxu0 0.0
    %3442 = vmatmul.mubr.f32.gmra.mrb[0].mxu0 %v2785
    %v3443 = vpop.f32.mrb[0].mxu0
    %v3444 = vadd.f32 0.0, %v3443
    %v3445 = vpop.f32.mrb[0].mxu0
    %3446 = vmatprep.mubr.f32.mxu0 0.0
    %3447 = vmatmul.mubr.f32.gmra.mrb[0].mxu0 %v2786
    %v3448 = vpop.f32.mrb[0].mxu0
    %v3449 = vadd.f32 0.0, %v3448
    %v3450 = vpop.f32.mrb[0].mxu0
    %3451 = vmatprep.mubr.f32.mxu0 0.0
    %3452 = vmatmul.mubr.f32.gmra.mrb[0].mxu0 %v2787
    %v3453 = vpop.f32.mrb[0].mxu0
    %v3454 = vadd.f32 0.0, %v3453
    %v3455 = vpop.f32.mrb[0].mxu0
    %3456 = vmatprep.mubr.f32.mxu0 0.0
    %3457 = vmatmul.mubr.f32.gmra.mrb[0].mxu0 %v2788
    %v3458 = vpop.f32.mrb[0].mxu0
    %v3459 = vadd.f32 0.0, %v3458
    %v3460 = vpop.f32.mrb[0].mxu0
    %3461 = vmatprep.mubr.f32.mxu0 0.0
    %3462 = vmatmul.mubr.f32.gmra.mrb[0].mxu0 %v2789
    %v3463 = vpop.f32.mrb[0].mxu0
    %v3464 = vadd.f32 0.0, %v3463
    %v3465 = vpop.f32.mrb[0].mxu0
    %3466 = vmatprep.mubr.f32.mxu0 0.0
    %3467 = vmatmul.mubr.f32.gmra.mrb[0].mxu0 %v2790
    %v3468 = vpop.f32.mrb[0].mxu0
    %v3469 = vadd.f32 0.0, %v3468
    %v3470 = vpop.f32.mrb[0].mxu0
    %3471 = vmatprep.mubr.f32.mxu0 0.0
    %3472 = vmatmul.mubr.f32.gmra.mrb[0].mxu0 %v2791
    %v3473 = vpop.f32.mrb[0].mxu0
    %v3474 = vadd.f32 0.0, %v3473
    %v3475 = vpop.f32.mrb[0].mxu0
    %3476 = vmatprep.mubr.f32.mxu0 0.0
    %3477 = vmatmul.mubr.f32.gmra.mrb[0].mxu0 %v2792
    %v3478 = vpop.f32.mrb[0].mxu0
    %v3479 = vadd.f32 0.0, %v3478
    %v3480 = vpop.f32.mrb[0].mxu0
    %3481 = vmatprep.mubr.f32.mxu0 0.0
    %3482 = vmatmul.mubr.f32.gmra.mrb[0].mxu0 %v2793
    %v3483 = vpop.f32.mrb[0].mxu0
    %v3484 = vadd.f32 0.0, %v3483
    %v3485 = vpop.f32.mrb[0].mxu0
    %3486 = vmatprep.mubr.f32.mxu0 0.0
    %3487 = vmatmul.mubr.f32.gmra.mrb[0].mxu0 %v2794
    %v3488 = vpop.f32.mrb[0].mxu0
    %v3489 = vadd.f32 0.0, %v3488
    %v3490 = vpop.f32.mrb[0].mxu0
    %3491 = vmatprep.mubr.f32.mxu0 0.0
    %3492 = vmatmul.mubr.f32.gmra.mrb[0].mxu0 %v2795
    %v3493 = vpop.f32.mrb[0].mxu0
    %v3494 = vadd.f32 0.0, %v3493
    %v3495 = vpop.f32.mrb[0].mxu0
    %3496 = vmatprep.mubr.f32.mxu0 0.0
    %3497 = vmatmul.mubr.f32.gmra.mrb[0].mxu0 %v2796
    %v3498 = vpop.f32.mrb[0].mxu0
    %v3499 = vadd.f32 0.0, %v3498
    %v3500 = vpop.f32.mrb[0].mxu0
    %3501 = vmatprep.mubr.f32.mxu0 0.0
    %3502 = vmatmul.mubr.f32.gmra.mrb[0].mxu0 %v2797
    %v3503 = vpop.f32.mrb[0].mxu0
    %v3504 = vadd.f32 0.0, %v3503
    %v3505 = vpop.f32.mrb[0].mxu0
    %3506 = vmatprep.mubr.f32.mxu0 0.0
    %3507 = vmatmul.mubr.f32.gmra.mrb[0].mxu0 %v2798
    %v3508 = vpop.f32.mrb[0].mxu0
    %v3509 = vadd.f32 0.0, %v3508
    %v3510 = vpop.f32.mrb[0].mxu0
    %3511 = vmatprep.mubr.f32.mxu0 0.0
    %3512 = vmatmul.mubr.f32.gmra.mrb[0].mxu0 %v2799
    %v3513 = vpop.f32.mrb[0].mxu0
    %v3514 = vadd.f32 0.0, %v3513
    %v3515 = vpop.f32.mrb[0].mxu0
    %3516 = vmatprep.mubr.f32.mxu0 0.0
    %3517 = vmatmul.mubr.f32.gmra.mrb[0].mxu0 %v2800
    %v3518 = vpop.f32.mrb[0].mxu0
    %v3519 = vadd.f32 0.0, %v3518
    %v3520 = vpop.f32.mrb[0].mxu0
    %3521 = vmatprep.mubr.f32.mxu0 0.0
    %3522 = vmatmul.mubr.f32.gmra.mrb[0].mxu0 %v2801
    %v3523 = vpop.f32.mrb[0].mxu0
    %v3524 = vadd.f32 0.0, %v3523
    %v3525 = vpop.f32.mrb[0].mxu0
    %3526 = vmatprep.mubr.f32.mxu0 0.0
    %3527 = vmatmul.mubr.f32.gmra.mrb[0].mxu0 %v2802
    %v3528 = vpop.f32.mrb[0].mxu0
    %v3529 = vadd.f32 0.0, %v3528
    %v3530 = vpop.f32.mrb[0].mxu0
    %3531 = vmatprep.mubr.f32.mxu0 0.0
    %3532 = vmatmul.mubr.f32.gmra.mrb[0].mxu0 %v2803
    %v3533 = vpop.f32.mrb[0].mxu0
    %v3534 = vadd.f32 0.0, %v3533
    %v3535 = vpop.f32.mrb[0].mxu0
    %3536 = vmatprep.mubr.f32.mxu0 0.0
    %3537 = vmatmul.mubr.f32.gmra.mrb[0].mxu0 %v2804
    %v3538 = vpop.f32.mrb[0].mxu0
    %v3539 = vadd.f32 0.0, %v3538
    %v3540 = vpop.f32.mrb[0].mxu0
    %3541 = vmatprep.mubr.f32.mxu0 0.0
    %3542 = vmatmul.mubr.f32.gmra.mrb[0].mxu0 %v2805
    %v3543 = vpop.f32.mrb[0].mxu0
    %v3544 = vadd.f32 0.0, %v3543
    %v3545 = vpop.f32.mrb[0].mxu0
    %3546 = vmatprep.mubr.f32.mxu0 0.0
    %3547 = vmatmul.mubr.f32.gmra.mrb[0].mxu0 %v2806
    %v3548 = vpop.f32.mrb[0].mxu0
    %v3549 = vadd.f32 0.0, %v3548
    %v3550 = vpop.f32.mrb[0].mxu0
    %3551 = vmatprep.mubr.f32.mxu0 0.0
    %3552 = vmatmul.mubr.f32.gmra.mrb[0].mxu0 %v2807
    %v3553 = vpop.f32.mrb[0].mxu0
    %v3554 = vadd.f32 0.0, %v3553
    %v3555 = vpop.f32.mrb[0].mxu0
    %3556 = vmatprep.mubr.f32.mxu0 0.0
    %3557 = vmatmul.mubr.f32.gmra.mrb[0].mxu0 %v2808
    %v3558 = vpop.f32.mrb[0].mxu0
    %v3559 = vadd.f32 0.0, %v3558
    %v3560 = vpop.f32.mrb[0].mxu0
    %3561 = vmatprep.mubr.f32.mxu0 0.0
    %3562 = vmatmul.mubr.f32.gmra.mrb[0].mxu0 %v2809
    %v3563 = vpop.f32.mrb[0].mxu0
    %v3564 = vadd.f32 0.0, %v3563
    %v3565 = vpop.f32.mrb[0].mxu0
    %3566 = vmatprep.mubr.f32.mxu0 0.0
    %3567 = vmatmul.mubr.f32.gmra.mrb[0].mxu0 %v2810
    %v3568 = vpop.f32.mrb[0].mxu0
    %v3569 = vadd.f32 0.0, %v3568
    %v3570 = vpop.f32.mrb[0].mxu0
    %3571 = vmatprep.mubr.f32.mxu0 0.0
    %3572 = vmatmul.mubr.f32.gmra.mrb[0].mxu0 %v2811
    %v3573 = vpop.f32.mrb[0].mxu0
    %v3574 = vadd.f32 0.0, %v3573
    %v3575 = vpop.f32.mrb[0].mxu0
    %3576 = vmatprep.mubr.f32.mxu0 0.0
    %3577 = vmatmul.mubr.f32.gmra.mrb[0].mxu0 %v2812
    %v3578 = vpop.f32.mrb[0].mxu0
    %v3579 = vadd.f32 0.0, %v3578
    %v3580 = vpop.f32.mrb[0].mxu0
    %3581 = vmatprep.mubr.f32.mxu0 0.0
    %3582 = vmatmul.mubr.f32.gmra.mrb[0].mxu0 %v2813
    %v3583 = vpop.f32.mrb[0].mxu0
    %v3584 = vadd.f32 0.0, %v3583
    %v3585 = vpop.f32.mrb[0].mxu0
    %3586 = vmatprep.mubr.f32.mxu0 0.0
    %3587 = vmatmul.mubr.f32.gmra.mrb[0].mxu0 %v2814
    %v3588 = vpop.f32.mrb[0].mxu0
    %v3589 = vadd.f32 0.0, %v3588
    %v3590 = vpop.f32.mrb[0].mxu0
    %3591 = vmatprep.mubr.f32.mxu0 0.0
    %3592 = vmatmul.mubr.f32.gmra.mrb[0].mxu0 %v2815
    %v3593 = vpop.f32.mrb[0].mxu0
    %v3594 = vadd.f32 0.0, %v3593
    %v3595 = vpop.f32.mrb[0].mxu0
    %3596 = vmatprep.mubr.f32.mxu0 0.0
    %3597 = vmatmul.mubr.f32.gmra.mrb[0].mxu0 %v2816
    %v3598 = vpop.f32.mrb[0].mxu0
    %v3599 = vadd.f32 0.0, %v3598
    %v3600 = vpop.f32.mrb[0].mxu0
    %3601 = vdwg.mxu0
    %v3602 = vld [vmem:[%s14] sm:$0xff]
    %v3603 = vld [vmem:[%s14 + $0x8] sm:$0xff]
    %v3604 = vld [vmem:[%s14 + $0x10] sm:$0xff]
    %v3605 = vld [vmem:[%s14 + $0x18] sm:$0xff]
    %v3606 = vld [vmem:[%s14 + $0x20] sm:$0xff]
    %v3607 = vld [vmem:[%s14 + $0x28] sm:$0xff]
    %v3608 = vld [vmem:[%s14 + $0x30] sm:$0xff]
    %v3609 = vld [vmem:[%s14 + $0x38] sm:$0xff]
    %v3610 = vld [vmem:[%s14 + $0x40] sm:$0xff]
    %v3611 = vld [vmem:[%s14 + $0x48] sm:$0xff]
    %v3612 = vld [vmem:[%s14 + $0x50] sm:$0xff]
    %v3613 = vld [vmem:[%s14 + $0x58] sm:$0xff]
    %v3614 = vld [vmem:[%s14 + $0x60] sm:$0xff]
    %v3615 = vld [vmem:[%s14 + $0x68] sm:$0xff]
    %v3616 = vld [vmem:[%s14 + $0x70] sm:$0xff]
    %v3617 = vld [vmem:[%s14 + $0x78] sm:$0xff]
    %v3618 = vld [vmem:[%s14 + $0x80] sm:$0xff]
    %v3619 = vld [vmem:[%s14 + $0x88] sm:$0xff]
    %v3620 = vld [vmem:[%s14 + $0x90] sm:$0xff]
    %v3621 = vld [vmem:[%s14 + $0x98] sm:$0xff]
    %v3622 = vld [vmem:[%s14 + $0xa0] sm:$0xff]
    %v3623 = vld [vmem:[%s14 + $0xa8] sm:$0xff]
    %v3624 = vld [vmem:[%s14 + $0xb0] sm:$0xff]
    %v3625 = vld [vmem:[%s14 + $0xb8] sm:$0xff]
    %v3626 = vld [vmem:[%s14 + $0xc0] sm:$0xff]
    %v3627 = vld [vmem:[%s14 + $0xc8] sm:$0xff]
    %v3628 = vld [vmem:[%s14 + $0xd0] sm:$0xff]
    %v3629 = vld [vmem:[%s14 + $0xd8] sm:$0xff]
    %v3630 = vld [vmem:[%s14 + $0xe0] sm:$0xff]
    %v3631 = vld [vmem:[%s14 + $0xe8] sm:$0xff]
    %v3632 = vld [vmem:[%s14 + $0xf0] sm:$0xff]
    %v3633 = vld [vmem:[%s14 + $0xf8] sm:$0xff]
    %v3634 = vld [vmem:[%s14 + $0x100] sm:$0xff]
    %v3635 = vld [vmem:[%s14 + $0x108] sm:$0xff]
    %v3636 = vld [vmem:[%s14 + $0x110] sm:$0xff]
    %v3637 = vld [vmem:[%s14 + $0x118] sm:$0xff]
    %v3638 = vld [vmem:[%s14 + $0x120] sm:$0xff]
    %v3639 = vld [vmem:[%s14 + $0x128] sm:$0xff]
    %v3640 = vld [vmem:[%s14 + $0x130] sm:$0xff]
    %v3641 = vld [vmem:[%s14 + $0x138] sm:$0xff]
    %v3642 = vld [vmem:[%s14 + $0x140] sm:$0xff]
    %v3643 = vld [vmem:[%s14 + $0x148] sm:$0xff]
    %v3644 = vld [vmem:[%s14 + $0x150] sm:$0xff]
    %v3645 = vld [vmem:[%s14 + $0x158] sm:$0xff]
    %v3646 = vld [vmem:[%s14 + $0x160] sm:$0xff]
    %v3647 = vld [vmem:[%s14 + $0x168] sm:$0xff]
    %v3648 = vld [vmem:[%s14 + $0x170] sm:$0xff]
    %v3649 = vld [vmem:[%s14 + $0x178] sm:$0xff]
    %v3650 = vld [vmem:[%s14 + $0x180] sm:$0xff]
    %v3651 = vld [vmem:[%s14 + $0x188] sm:$0xff]
    %v3652 = vld [vmem:[%s14 + $0x190] sm:$0xff]
    %v3653 = vld [vmem:[%s14 + $0x198] sm:$0xff]
    %v3654 = vld [vmem:[%s14 + $0x1a0] sm:$0xff]
    %v3655 = vld [vmem:[%s14 + $0x1a8] sm:$0xff]
    %v3656 = vld [vmem:[%s14 + $0x1b0] sm:$0xff]
    %v3657 = vld [vmem:[%s14 + $0x1b8] sm:$0xff]
    %v3658 = vld [vmem:[%s14 + $0x1c0] sm:$0xff]
    %v3659 = vld [vmem:[%s14 + $0x1c8] sm:$0xff]
    %v3660 = vld [vmem:[%s14 + $0x1d0] sm:$0xff]
    %v3661 = vld [vmem:[%s14 + $0x1d8] sm:$0xff]
    %v3662 = vld [vmem:[%s14 + $0x1e0] sm:$0xff]
    %v3663 = vld [vmem:[%s14 + $0x1e8] sm:$0xff]
    %v3664 = vld [vmem:[%s14 + $0x1f0] sm:$0xff]
    %v3665 = vld [vmem:[%s14 + $0x1f8] sm:$0xff]
    %3666 = vmatprep.subr.mxu0 0.0
    %3667 = vmatpush1.msra.mxu0 %v3602
    %3668 = vmatprep.subr.mxu0 0.0
    %3669 = vmatpush1.msra.mxu0 %v3603
    %3670 = vmatprep.subr.mxu0 0.0
    %3671 = vmatpush1.msra.mxu0 %v3604
    %3672 = vmatprep.subr.mxu0 0.0
    %3673 = vmatpush1.msra.mxu0 %v3605
    %3674 = vmatprep.subr.mxu0 0.0
    %3675 = vmatpush1.msra.mxu0 %v3606
    %3676 = vmatprep.subr.mxu0 0.0
    %3677 = vmatpush1.msra.mxu0 %v3607
    %3678 = vmatprep.subr.mxu0 0.0
    %3679 = vmatpush1.msra.mxu0 %v3608
    %3680 = vmatprep.subr.mxu0 0.0
    %3681 = vmatpush1.msra.mxu0 %v3609
    %3682 = vmatprep.subr.mxu0 0.0
    %3683 = vmatpush1.msra.mxu0 %v3610
    %3684 = vmatprep.subr.mxu0 0.0
    %3685 = vmatpush1.msra.mxu0 %v3611
    %3686 = vmatprep.subr.mxu0 0.0
    %3687 = vmatpush1.msra.mxu0 %v3612
    %3688 = vmatprep.subr.mxu0 0.0
    %3689 = vmatpush1.msra.mxu0 %v3613
    %3690 = vmatprep.subr.mxu0 0.0
    %3691 = vmatpush1.msra.mxu0 %v3614
    %3692 = vmatprep.subr.mxu0 0.0
    %3693 = vmatpush1.msra.mxu0 %v3615
    %3694 = vmatprep.subr.mxu0 0.0
    %3695 = vmatpush1.msra.mxu0 %v3616
    %3696 = vmatprep.subr.mxu0 0.0
    %3697 = vmatpush1.msra.mxu0 %v3617
    %3698 = vmatprep.subr.mxu0 0.0
    %3699 = vmatpush1.msra.mxu0 %v3618
    %3700 = vmatprep.subr.mxu0 0.0
    %3701 = vmatpush1.msra.mxu0 %v3619
    %3702 = vmatprep.subr.mxu0 0.0
    %3703 = vmatpush1.msra.mxu0 %v3620
    %3704 = vmatprep.subr.mxu0 0.0
    %3705 = vmatpush1.msra.mxu0 %v3621
    %3706 = vmatprep.subr.mxu0 0.0
    %3707 = vmatpush1.msra.mxu0 %v3622
    %3708 = vmatprep.subr.mxu0 0.0
    %3709 = vmatpush1.msra.mxu0 %v3623
    %3710 = vmatprep.subr.mxu0 0.0
    %3711 = vmatpush1.msra.mxu0 %v3624
    %3712 = vmatprep.subr.mxu0 0.0
    %3713 = vmatpush1.msra.mxu0 %v3625
    %3714 = vmatprep.subr.mxu0 0.0
    %3715 = vmatpush1.msra.mxu0 %v3626
    %3716 = vmatprep.subr.mxu0 0.0
    %3717 = vmatpush1.msra.mxu0 %v3627
    %3718 = vmatprep.subr.mxu0 0.0
    %3719 = vmatpush1.msra.mxu0 %v3628
    %3720 = vmatprep.subr.mxu0 0.0
    %3721 = vmatpush1.msra.mxu0 %v3629
    %3722 = vmatprep.subr.mxu0 0.0
    %3723 = vmatpush1.msra.mxu0 %v3630
    %3724 = vmatprep.subr.mxu0 0.0
    %3725 = vmatpush1.msra.mxu0 %v3631
    %3726 = vmatprep.subr.mxu0 0.0
    %3727 = vmatpush1.msra.mxu0 %v3632
    %3728 = vmatprep.subr.mxu0 0.0
    %3729 = vmatpush1.msra.mxu0 %v3633
    %3730 = vmatprep.mubr.f32.mxu0 %v2964
    %3731 = vmatmul.mubr.f32.gmra.mrb[0].mxu0 %v2884
    %v3732 = vpop.f32.mrb[0].mxu0
    %v3733 = vadd.f32 0.0, %v3732
    %v3734 = vpop.f32.mrb[0].mxu0
    %3735 = vmatprep.mubr.f32.mxu0 %v2969
    %3736 = vmatmul.mubr.f32.gmra.mrb[0].mxu0 %v2889
    %v3737 = vpop.f32.mrb[0].mxu0
    %v3738 = vadd.f32 0.0, %v3737
    %v3739 = vpop.f32.mrb[0].mxu0
    %3740 = vmatprep.mubr.f32.mxu0 %v2974
    %3741 = vmatmul.mubr.f32.gmra.mrb[0].mxu0 %v2894
    %v3742 = vpop.f32.mrb[0].mxu0
    %v3743 = vadd.f32 0.0, %v3742
    %v3744 = vpop.f32.mrb[0].mxu0
    %3745 = vmatprep.mubr.f32.mxu0 %v2979
    %3746 = vmatmul.mubr.f32.gmra.mrb[0].mxu0 %v2899
    %v3747 = vpop.f32.mrb[0].mxu0
    %v3748 = vadd.f32 0.0, %v3747
    %v3749 = vpop.f32.mrb[0].mxu0
    %3750 = vmatprep.mubr.f32.mxu0 %v2984
    %3751 = vmatmul.mubr.f32.gmra.mrb[0].mxu0 %v2904
    %v3752 = vpop.f32.mrb[0].mxu0
    %v3753 = vadd.f32 0.0, %v3752
    %v3754 = vpop.f32.mrb[0].mxu0
    %3755 = vmatprep.mubr.f32.mxu0 %v2989
    %3756 = vmatmul.mubr.f32.gmra.mrb[0].mxu0 %v2909
    %v3757 = vpop.f32.mrb[0].mxu0
    %v3758 = vadd.f32 0.0, %v3757
    %v3759 = vpop.f32.mrb[0].mxu0
    %3760 = vmatprep.mubr.f32.mxu0 %v2994
    %3761 = vmatmul.mubr.f32.gmra.mrb[0].mxu0 %v2914
    %v3762 = vpop.f32.mrb[0].mxu0
    %v3763 = vadd.f32 0.0, %v3762
    %v3764 = vpop.f32.mrb[0].mxu0
    %3765 = vmatprep.mubr.f32.mxu0 %v2999
    %3766 = vmatmul.mubr.f32.gmra.mrb[0].mxu0 %v2919
    %v3767 = vpop.f32.mrb[0].mxu0
    %v3768 = vadd.f32 0.0, %v3767
    %v3769 = vpop.f32.mrb[0].mxu0
    %3770 = vmatprep.mubr.f32.mxu0 %v3004
    %3771 = vmatmul.mubr.f32.gmra.mrb[0].mxu0 %v2924
    %v3772 = vpop.f32.mrb[0].mxu0
    %v3773 = vadd.f32 0.0, %v3772
    %v3774 = vpop.f32.mrb[0].mxu0
    %3775 = vmatprep.mubr.f32.mxu0 %v3009
    %3776 = vmatmul.mubr.f32.gmra.mrb[0].mxu0 %v2929
    %v3777 = vpop.f32.mrb[0].mxu0
    %v3778 = vadd.f32 0.0, %v3777
    %v3779 = vpop.f32.mrb[0].mxu0
    %3780 = vmatprep.mubr.f32.mxu0 %v3014
    %3781 = vmatmul.mubr.f32.gmra.mrb[0].mxu0 %v2934
    %v3782 = vpop.f32.mrb[0].mxu0
    %v3783 = vadd.f32 0.0, %v3782
    %v3784 = vpop.f32.mrb[0].mxu0
    %3785 = vmatprep.mubr.f32.mxu0 %v3019
    %3786 = vmatmul.mubr.f32.gmra.mrb[0].mxu0 %v2939
    %v3787 = vpop.f32.mrb[0].mxu0
    %v3788 = vadd.f32 0.0, %v3787
    %v3789 = vpop.f32.mrb[0].mxu0
    %3790 = vmatprep.mubr.f32.mxu0 %v3024
    %3791 = vmatmul.mubr.f32.gmra.mrb[0].mxu0 %v2944
    %v3792 = vpop.f32.mrb[0].mxu0
    %v3793 = vadd.f32 0.0, %v3792
    %v3794 = vpop.f32.mrb[0].mxu0
    %3795 = vmatprep.mubr.f32.mxu0 %v3029
    %3796 = vmatmul.mubr.f32.gmra.mrb[0].mxu0 %v2949
    %v3797 = vpop.f32.mrb[0].mxu0
    %v3798 = vadd.f32 0.0, %v3797
    %v3799 = vpop.f32.mrb[0].mxu0
    %3800 = vmatprep.mubr.f32.mxu0 %v3034
    %3801 = vmatmul.mubr.f32.gmra.mrb[0].mxu0 %v2954
    %v3802 = vpop.f32.mrb[0].mxu0
    %v3803 = vadd.f32 0.0, %v3802
    %v3804 = vpop.f32.mrb[0].mxu0
    %3805 = vmatprep.mubr.f32.mxu0 %v3039
    %3806 = vmatmul.mubr.f32.gmra.mrb[0].mxu0 %v2959
    %v3807 = vpop.f32.mrb[0].mxu0
    %v3808 = vadd.f32 0.0, %v3807
    %v3809 = vpop.f32.mrb[0].mxu0
    %3810 = vdwg.mxu0
    %3811 = vmatprep.subr.mxu0 0.0
    %3812 = vmatpush1.msra.mxu0 %v3634
    %3813 = vmatprep.subr.mxu0 0.0
    %3814 = vmatpush1.msra.mxu0 %v3635
    %3815 = vmatprep.subr.mxu0 0.0
    %3816 = vmatpush1.msra.mxu0 %v3636
    %3817 = vmatprep.subr.mxu0 0.0
    %3818 = vmatpush1.msra.mxu0 %v3637
    %3819 = vmatprep.subr.mxu0 0.0
    %3820 = vmatpush1.msra.mxu0 %v3638
    %3821 = vmatprep.subr.mxu0 0.0
    %3822 = vmatpush1.msra.mxu0 %v3639
    %3823 = vmatprep.subr.mxu0 0.0
    %3824 = vmatpush1.msra.mxu0 %v3640
    %3825 = vmatprep.subr.mxu0 0.0
    %3826 = vmatpush1.msra.mxu0 %v3641
    %3827 = vmatprep.subr.mxu0 0.0
    %3828 = vmatpush1.msra.mxu0 %v3642
    %3829 = vmatprep.subr.mxu0 0.0
    %3830 = vmatpush1.msra.mxu0 %v3643
    %3831 = vmatprep.subr.mxu0 0.0
    %3832 = vmatpush1.msra.mxu0 %v3644
    %3833 = vmatprep.subr.mxu0 0.0
    %3834 = vmatpush1.msra.mxu0 %v3645
    %3835 = vmatprep.subr.mxu0 0.0
    %3836 = vmatpush1.msra.mxu0 %v3646
    %3837 = vmatprep.subr.mxu0 0.0
    %3838 = vmatpush1.msra.mxu0 %v3647
    %3839 = vmatprep.subr.mxu0 0.0
    %3840 = vmatpush1.msra.mxu0 %v3648
    %3841 = vmatprep.subr.mxu0 0.0
    %3842 = vmatpush1.msra.mxu0 %v3649
    %3843 = vmatprep.subr.mxu0 0.0
    %3844 = vmatpush1.msra.mxu0 %v3650
    %3845 = vmatprep.subr.mxu0 0.0
    %3846 = vmatpush1.msra.mxu0 %v3651
    %3847 = vmatprep.subr.mxu0 0.0
    %3848 = vmatpush1.msra.mxu0 %v3652
    %3849 = vmatprep.subr.mxu0 0.0
    %3850 = vmatpush1.msra.mxu0 %v3653
    %3851 = vmatprep.subr.mxu0 0.0
    %3852 = vmatpush1.msra.mxu0 %v3654
    %3853 = vmatprep.subr.mxu0 0.0
    %3854 = vmatpush1.msra.mxu0 %v3655
    %3855 = vmatprep.subr.mxu0 0.0
    %3856 = vmatpush1.msra.mxu0 %v3656
    %3857 = vmatprep.subr.mxu0 0.0
    %3858 = vmatpush1.msra.mxu0 %v3657
    %3859 = vmatprep.subr.mxu0 0.0
    %3860 = vmatpush1.msra.mxu0 %v3658
    %3861 = vmatprep.subr.mxu0 0.0
    %3862 = vmatpush1.msra.mxu0 %v3659
    %3863 = vmatprep.subr.mxu0 0.0
    %3864 = vmatpush1.msra.mxu0 %v3660
    %3865 = vmatprep.subr.mxu0 0.0
    %3866 = vmatpush1.msra.mxu0 %v3661
    %3867 = vmatprep.subr.mxu0 0.0
    %3868 = vmatpush1.msra.mxu0 %v3662
    %3869 = vmatprep.subr.mxu0 0.0
    %3870 = vmatpush1.msra.mxu0 %v3663
    %3871 = vmatprep.subr.mxu0 0.0
    %3872 = vmatpush1.msra.mxu0 %v3664
    %3873 = vmatprep.subr.mxu0 0.0
    %3874 = vmatpush1.msra.mxu0 %v3665
    %3875 = vmatprep.mubr.f32.mxu0 %v3204
    %3876 = vmatmul.mubr.f32.gmra.mrb[0].mxu0 %v3124
    %v3877 = vpop.f32.mrb[0].mxu0
    %v3878 = vadd.f32 %v3733, %v3877
    %v3879 = vpop.f32.mrb[0].mxu0
    %3880 = vmatprep.mubr.f32.mxu0 %v3209
    %3881 = vmatmul.mubr.f32.gmra.mrb[0].mxu0 %v3129
    %v3882 = vpop.f32.mrb[0].mxu0
    %v3883 = vadd.f32 %v3738, %v3882
    %v3884 = vpop.f32.mrb[0].mxu0
    %3885 = vmatprep.mubr.f32.mxu0 %v3214
    %3886 = vmatmul.mubr.f32.gmra.mrb[0].mxu0 %v3134
    %v3887 = vpop.f32.mrb[0].mxu0
    %v3888 = vadd.f32 %v3743, %v3887
    %v3889 = vpop.f32.mrb[0].mxu0
    %3890 = vmatprep.mubr.f32.mxu0 %v3219
    %3891 = vmatmul.mubr.f32.gmra.mrb[0].mxu0 %v3139
    %v3892 = vpop.f32.mrb[0].mxu0
    %v3893 = vadd.f32 %v3748, %v3892
    %v3894 = vpop.f32.mrb[0].mxu0
    %3895 = vmatprep.mubr.f32.mxu0 %v3224
    %3896 = vmatmul.mubr.f32.gmra.mrb[0].mxu0 %v3144
    %v3897 = vpop.f32.mrb[0].mxu0
    %v3898 = vadd.f32 %v3753, %v3897
    %v3899 = vpop.f32.mrb[0].mxu0
    %3900 = vmatprep.mubr.f32.mxu0 %v3229
    %3901 = vmatmul.mubr.f32.gmra.mrb[0].mxu0 %v3149
    %v3902 = vpop.f32.mrb[0].mxu0
    %v3903 = vadd.f32 %v3758, %v3902
    %v3904 = vpop.f32.mrb[0].mxu0
    %3905 = vmatprep.mubr.f32.mxu0 %v3234
    %3906 = vmatmul.mubr.f32.gmra.mrb[0].mxu0 %v3154
    %v3907 = vpop.f32.mrb[0].mxu0
    %v3908 = vadd.f32 %v3763, %v3907
    %v3909 = vpop.f32.mrb[0].mxu0
    %3910 = vmatprep.mubr.f32.mxu0 %v3239
    %3911 = vmatmul.mubr.f32.gmra.mrb[0].mxu0 %v3159
    %v3912 = vpop.f32.mrb[0].mxu0
    %v3913 = vadd.f32 %v3768, %v3912
    %v3914 = vpop.f32.mrb[0].mxu0
    %3915 = vmatprep.mubr.f32.mxu0 %v3244
    %3916 = vmatmul.mubr.f32.gmra.mrb[0].mxu0 %v3164
    %v3917 = vpop.f32.mrb[0].mxu0
    %v3918 = vadd.f32 %v3773, %v3917
    %v3919 = vpop.f32.mrb[0].mxu0
    %3920 = vmatprep.mubr.f32.mxu0 %v3249
    %3921 = vmatmul.mubr.f32.gmra.mrb[0].mxu0 %v3169
    %v3922 = vpop.f32.mrb[0].mxu0
    %v3923 = vadd.f32 %v3778, %v3922
    %v3924 = vpop.f32.mrb[0].mxu0
    %3925 = vmatprep.mubr.f32.mxu0 %v3254
    %3926 = vmatmul.mubr.f32.gmra.mrb[0].mxu0 %v3174
    %v3927 = vpop.f32.mrb[0].mxu0
    %v3928 = vadd.f32 %v3783, %v3927
    %v3929 = vpop.f32.mrb[0].mxu0
    %3930 = vmatprep.mubr.f32.mxu0 %v3259
    %3931 = vmatmul.mubr.f32.gmra.mrb[0].mxu0 %v3179
    %v3932 = vpop.f32.mrb[0].mxu0
    %v3933 = vadd.f32 %v3788, %v3932
    %v3934 = vpop.f32.mrb[0].mxu0
    %3935 = vmatprep.mubr.f32.mxu0 %v3264
    %3936 = vmatmul.mubr.f32.gmra.mrb[0].mxu0 %v3184
    %v3937 = vpop.f32.mrb[0].mxu0
    %v3938 = vadd.f32 %v3793, %v3937
    %v3939 = vpop.f32.mrb[0].mxu0
    %3940 = vmatprep.mubr.f32.mxu0 %v3269
    %3941 = vmatmul.mubr.f32.gmra.mrb[0].mxu0 %v3189
    %v3942 = vpop.f32.mrb[0].mxu0
    %v3943 = vadd.f32 %v3798, %v3942
    %v3944 = vpop.f32.mrb[0].mxu0
    %3945 = vmatprep.mubr.f32.mxu0 %v3274
    %3946 = vmatmul.mubr.f32.gmra.mrb[0].mxu0 %v3194
    %v3947 = vpop.f32.mrb[0].mxu0
    %v3948 = vadd.f32 %v3803, %v3947
    %v3949 = vpop.f32.mrb[0].mxu0
    %3950 = vmatprep.mubr.f32.mxu0 %v3279
    %3951 = vmatmul.mubr.f32.gmra.mrb[0].mxu0 %v3199
    %v3952 = vpop.f32.mrb[0].mxu0
    %v3953 = vadd.f32 %v3808, %v3952
    %v3954 = vpop.f32.mrb[0].mxu0
    %3955 = vdwg.mxu0
    %s3956 = scalar_lea.vmem %s14, 512
    %v3957 = vld [vmem:[%s3956] sm:$0xff]
    %v3958 = vld [vmem:[%s3956 + $0x8] sm:$0xff]
    %v3959 = vld [vmem:[%s3956 + $0x10] sm:$0xff]
    %v3960 = vld [vmem:[%s3956 + $0x18] sm:$0xff]
    %v3961 = vld [vmem:[%s3956 + $0x20] sm:$0xff]
    %v3962 = vld [vmem:[%s3956 + $0x28] sm:$0xff]
    %v3963 = vld [vmem:[%s3956 + $0x30] sm:$0xff]
    %v3964 = vld [vmem:[%s3956 + $0x38] sm:$0xff]
    %v3965 = vld [vmem:[%s3956 + $0x40] sm:$0xff]
    %v3966 = vld [vmem:[%s3956 + $0x48] sm:$0xff]
    %v3967 = vld [vmem:[%s3956 + $0x50] sm:$0xff]
    %v3968 = vld [vmem:[%s3956 + $0x58] sm:$0xff]
    %v3969 = vld [vmem:[%s3956 + $0x60] sm:$0xff]
    %v3970 = vld [vmem:[%s3956 + $0x68] sm:$0xff]
    %v3971 = vld [vmem:[%s3956 + $0x70] sm:$0xff]
    %v3972 = vld [vmem:[%s3956 + $0x78] sm:$0xff]
    %v3973 = vld [vmem:[%s3956 + $0x80] sm:$0xff]
    %v3974 = vld [vmem:[%s3956 + $0x88] sm:$0xff]
    %v3975 = vld [vmem:[%s3956 + $0x90] sm:$0xff]
    %v3976 = vld [vmem:[%s3956 + $0x98] sm:$0xff]
    %v3977 = vld [vmem:[%s3956 + $0xa0] sm:$0xff]
    %v3978 = vld [vmem:[%s3956 + $0xa8] sm:$0xff]
    %v3979 = vld [vmem:[%s3956 + $0xb0] sm:$0xff]
    %v3980 = vld [vmem:[%s3956 + $0xb8] sm:$0xff]
    %v3981 = vld [vmem:[%s3956 + $0xc0] sm:$0xff]
    %v3982 = vld [vmem:[%s3956 + $0xc8] sm:$0xff]
    %v3983 = vld [vmem:[%s3956 + $0xd0] sm:$0xff]
    %v3984 = vld [vmem:[%s3956 + $0xd8] sm:$0xff]
    %v3985 = vld [vmem:[%s3956 + $0xe0] sm:$0xff]
    %v3986 = vld [vmem:[%s3956 + $0xe8] sm:$0xff]
    %v3987 = vld [vmem:[%s3956 + $0xf0] sm:$0xff]
    %v3988 = vld [vmem:[%s3956 + $0xf8] sm:$0xff]
    %v3989 = vld [vmem:[%s3956 + $0x100] sm:$0xff]
    %v3990 = vld [vmem:[%s3956 + $0x108] sm:$0xff]
    %v3991 = vld [vmem:[%s3956 + $0x110] sm:$0xff]
    %v3992 = vld [vmem:[%s3956 + $0x118] sm:$0xff]
    %v3993 = vld [vmem:[%s3956 + $0x120] sm:$0xff]
    %v3994 = vld [vmem:[%s3956 + $0x128] sm:$0xff]
    %v3995 = vld [vmem:[%s3956 + $0x130] sm:$0xff]
    %v3996 = vld [vmem:[%s3956 + $0x138] sm:$0xff]
    %v3997 = vld [vmem:[%s3956 + $0x140] sm:$0xff]
    %v3998 = vld [vmem:[%s3956 + $0x148] sm:$0xff]
    %v3999 = vld [vmem:[%s3956 + $0x150] sm:$0xff]
    %v4000 = vld [vmem:[%s3956 + $0x158] sm:$0xff]
    %v4001 = vld [vmem:[%s3956 + $0x160] sm:$0xff]
    %v4002 = vld [vmem:[%s3956 + $0x168] sm:$0xff]
    %v4003 = vld [vmem:[%s3956 + $0x170] sm:$0xff]
    %v4004 = vld [vmem:[%s3956 + $0x178] sm:$0xff]
    %v4005 = vld [vmem:[%s3956 + $0x180] sm:$0xff]
    %v4006 = vld [vmem:[%s3956 + $0x188] sm:$0xff]
    %v4007 = vld [vmem:[%s3956 + $0x190] sm:$0xff]
    %v4008 = vld [vmem:[%s3956 + $0x198] sm:$0xff]
    %v4009 = vld [vmem:[%s3956 + $0x1a0] sm:$0xff]
    %v4010 = vld [vmem:[%s3956 + $0x1a8] sm:$0xff]
    %v4011 = vld [vmem:[%s3956 + $0x1b0] sm:$0xff]
    %v4012 = vld [vmem:[%s3956 + $0x1b8] sm:$0xff]
    %v4013 = vld [vmem:[%s3956 + $0x1c0] sm:$0xff]
    %v4014 = vld [vmem:[%s3956 + $0x1c8] sm:$0xff]
    %v4015 = vld [vmem:[%s3956 + $0x1d0] sm:$0xff]
    %v4016 = vld [vmem:[%s3956 + $0x1d8] sm:$0xff]
    %v4017 = vld [vmem:[%s3956 + $0x1e0] sm:$0xff]
    %v4018 = vld [vmem:[%s3956 + $0x1e8] sm:$0xff]
    %v4019 = vld [vmem:[%s3956 + $0x1f0] sm:$0xff]
    %v4020 = vld [vmem:[%s3956 + $0x1f8] sm:$0xff]
    %4021 = vmatprep.subr.mxu0 0.0
    %4022 = vmatpush1.msra.mxu0 %v3957
    %4023 = vmatprep.subr.mxu0 0.0
    %4024 = vmatpush1.msra.mxu0 %v3958
    %4025 = vmatprep.subr.mxu0 0.0
    %4026 = vmatpush1.msra.mxu0 %v3959
    %4027 = vmatprep.subr.mxu0 0.0
    %4028 = vmatpush1.msra.mxu0 %v3960
    %4029 = vmatprep.subr.mxu0 0.0
    %4030 = vmatpush1.msra.mxu0 %v3961
    %4031 = vmatprep.subr.mxu0 0.0
    %4032 = vmatpush1.msra.mxu0 %v3962
    %4033 = vmatprep.subr.mxu0 0.0
    %4034 = vmatpush1.msra.mxu0 %v3963
    %4035 = vmatprep.subr.mxu0 0.0
    %4036 = vmatpush1.msra.mxu0 %v3964
    %4037 = vmatprep.subr.mxu0 0.0
    %4038 = vmatpush1.msra.mxu0 %v3965
    %4039 = vmatprep.subr.mxu0 0.0
    %4040 = vmatpush1.msra.mxu0 %v3966
    %4041 = vmatprep.subr.mxu0 0.0
    %4042 = vmatpush1.msra.mxu0 %v3967
    %4043 = vmatprep.subr.mxu0 0.0
    %4044 = vmatpush1.msra.mxu0 %v3968
    %4045 = vmatprep.subr.mxu0 0.0
    %4046 = vmatpush1.msra.mxu0 %v3969
    %4047 = vmatprep.subr.mxu0 0.0
    %4048 = vmatpush1.msra.mxu0 %v3970
    %4049 = vmatprep.subr.mxu0 0.0
    %4050 = vmatpush1.msra.mxu0 %v3971
    %4051 = vmatprep.subr.mxu0 0.0
    %4052 = vmatpush1.msra.mxu0 %v3972
    %4053 = vmatprep.subr.mxu0 0.0
    %4054 = vmatpush1.msra.mxu0 %v3973
    %4055 = vmatprep.subr.mxu0 0.0
    %4056 = vmatpush1.msra.mxu0 %v3974
    %4057 = vmatprep.subr.mxu0 0.0
    %4058 = vmatpush1.msra.mxu0 %v3975
    %4059 = vmatprep.subr.mxu0 0.0
    %4060 = vmatpush1.msra.mxu0 %v3976
    %4061 = vmatprep.subr.mxu0 0.0
    %4062 = vmatpush1.msra.mxu0 %v3977
    %4063 = vmatprep.subr.mxu0 0.0
    %4064 = vmatpush1.msra.mxu0 %v3978
    %4065 = vmatprep.subr.mxu0 0.0
    %4066 = vmatpush1.msra.mxu0 %v3979
    %4067 = vmatprep.subr.mxu0 0.0
    %4068 = vmatpush1.msra.mxu0 %v3980
    %4069 = vmatprep.subr.mxu0 0.0
    %4070 = vmatpush1.msra.mxu0 %v3981
    %4071 = vmatprep.subr.mxu0 0.0
    %4072 = vmatpush1.msra.mxu0 %v3982
    %4073 = vmatprep.subr.mxu0 0.0
    %4074 = vmatpush1.msra.mxu0 %v3983
    %4075 = vmatprep.subr.mxu0 0.0
    %4076 = vmatpush1.msra.mxu0 %v3984
    %4077 = vmatprep.subr.mxu0 0.0
    %4078 = vmatpush1.msra.mxu0 %v3985
    %4079 = vmatprep.subr.mxu0 0.0
    %4080 = vmatpush1.msra.mxu0 %v3986
    %4081 = vmatprep.subr.mxu0 0.0
    %4082 = vmatpush1.msra.mxu0 %v3987
    %4083 = vmatprep.subr.mxu0 0.0
    %4084 = vmatpush1.msra.mxu0 %v3988
    %4085 = vmatprep.mubr.f32.mxu0 %v3044
    %4086 = vmatmul.mubr.f32.gmra.mrb[0].mxu0 %v2964
    %v4087 = vpop.f32.mrb[0].mxu0
    %v4088 = vadd.f32 0.0, %v4087
    %v4089 = vpop.f32.mrb[0].mxu0
    %4090 = vmatprep.mubr.f32.mxu0 %v3049
    %4091 = vmatmul.mubr.f32.gmra.mrb[0].mxu0 %v2969
    %v4092 = vpop.f32.mrb[0].mxu0
    %v4093 = vadd.f32 0.0, %v4092
    %v4094 = vpop.f32.mrb[0].mxu0
    %4095 = vmatprep.mubr.f32.mxu0 %v3054
    %4096 = vmatmul.mubr.f32.gmra.mrb[0].mxu0 %v2974
    %v4097 = vpop.f32.mrb[0].mxu0
    %v4098 = vadd.f32 0.0, %v4097
    %v4099 = vpop.f32.mrb[0].mxu0
    %4100 = vmatprep.mubr.f32.mxu0 %v3059
    %4101 = vmatmul.mubr.f32.gmra.mrb[0].mxu0 %v2979
    %v4102 = vpop.f32.mrb[0].mxu0
    %v4103 = vadd.f32 0.0, %v4102
    %v4104 = vpop.f32.mrb[0].mxu0
    %4105 = vmatprep.mubr.f32.mxu0 %v3064
    %4106 = vmatmul.mubr.f32.gmra.mrb[0].mxu0 %v2984
    %v4107 = vpop.f32.mrb[0].mxu0
    %v4108 = vadd.f32 0.0, %v4107
    %v4109 = vpop.f32.mrb[0].mxu0
    %4110 = vmatprep.mubr.f32.mxu0 %v3069
    %4111 = vmatmul.mubr.f32.gmra.mrb[0].mxu0 %v2989
    %v4112 = vpop.f32.mrb[0].mxu0
    %v4113 = vadd.f32 0.0, %v4112
    %v4114 = vpop.f32.mrb[0].mxu0
    %4115 = vmatprep.mubr.f32.mxu0 %v3074
    %4116 = vmatmul.mubr.f32.gmra.mrb[0].mxu0 %v2994
    %v4117 = vpop.f32.mrb[0].mxu0
    %v4118 = vadd.f32 0.0, %v4117
    %v4119 = vpop.f32.mrb[0].mxu0
    %4120 = vmatprep.mubr.f32.mxu0 %v3079
    %4121 = vmatmul.mubr.f32.gmra.mrb[0].mxu0 %v2999
    %v4122 = vpop.f32.mrb[0].mxu0
    %v4123 = vadd.f32 0.0, %v4122
    %v4124 = vpop.f32.mrb[0].mxu0
    %4125 = vmatprep.mubr.f32.mxu0 %v3084
    %4126 = vmatmul.mubr.f32.gmra.mrb[0].mxu0 %v3004
    %v4127 = vpop.f32.mrb[0].mxu0
    %v4128 = vadd.f32 0.0, %v4127
    %v4129 = vpop.f32.mrb[0].mxu0
    %4130 = vmatprep.mubr.f32.mxu0 %v3089
    %4131 = vmatmul.mubr.f32.gmra.mrb[0].mxu0 %v3009
    %v4132 = vpop.f32.mrb[0].mxu0
    %v4133 = vadd.f32 0.0, %v4132
    %v4134 = vpop.f32.mrb[0].mxu0
    %4135 = vmatprep.mubr.f32.mxu0 %v3094
    %4136 = vmatmul.mubr.f32.gmra.mrb[0].mxu0 %v3014
    %v4137 = vpop.f32.mrb[0].mxu0
    %v4138 = vadd.f32 0.0, %v4137
    %v4139 = vpop.f32.mrb[0].mxu0
    %4140 = vmatprep.mubr.f32.mxu0 %v3099
    %4141 = vmatmul.mubr.f32.gmra.mrb[0].mxu0 %v3019
    %v4142 = vpop.f32.mrb[0].mxu0
    %v4143 = vadd.f32 0.0, %v4142
    %v4144 = vpop.f32.mrb[0].mxu0
    %4145 = vmatprep.mubr.f32.mxu0 %v3104
    %4146 = vmatmul.mubr.f32.gmra.mrb[0].mxu0 %v3024
    %v4147 = vpop.f32.mrb[0].mxu0
    %v4148 = vadd.f32 0.0, %v4147
    %v4149 = vpop.f32.mrb[0].mxu0
    %4150 = vmatprep.mubr.f32.mxu0 %v3109
    %4151 = vmatmul.mubr.f32.gmra.mrb[0].mxu0 %v3029
    %v4152 = vpop.f32.mrb[0].mxu0
    %v4153 = vadd.f32 0.0, %v4152
    %v4154 = vpop.f32.mrb[0].mxu0
    %4155 = vmatprep.mubr.f32.mxu0 %v3114
    %4156 = vmatmul.mubr.f32.gmra.mrb[0].mxu0 %v3034
    %v4157 = vpop.f32.mrb[0].mxu0
    %v4158 = vadd.f32 0.0, %v4157
    %v4159 = vpop.f32.mrb[0].mxu0
    %4160 = vmatprep.mubr.f32.mxu0 %v3119
    %4161 = vmatmul.mubr.f32.gmra.mrb[0].mxu0 %v3039
    %v4162 = vpop.f32.mrb[0].mxu0
    %v4163 = vadd.f32 0.0, %v4162
    %v4164 = vpop.f32.mrb[0].mxu0
    %4165 = vdwg.mxu0
    %4166 = vmatprep.subr.mxu0 0.0
    %4167 = vmatpush1.msra.mxu0 %v3989
    %4168 = vmatprep.subr.mxu0 0.0
    %4169 = vmatpush1.msra.mxu0 %v3990
    %4170 = vmatprep.subr.mxu0 0.0
    %4171 = vmatpush1.msra.mxu0 %v3991
    %4172 = vmatprep.subr.mxu0 0.0
    %4173 = vmatpush1.msra.mxu0 %v3992
    %4174 = vmatprep.subr.mxu0 0.0
    %4175 = vmatpush1.msra.mxu0 %v3993
    %4176 = vmatprep.subr.mxu0 0.0
    %4177 = vmatpush1.msra.mxu0 %v3994
    %4178 = vmatprep.subr.mxu0 0.0
    %4179 = vmatpush1.msra.mxu0 %v3995
    %4180 = vmatprep.subr.mxu0 0.0
    %4181 = vmatpush1.msra.mxu0 %v3996
    %4182 = vmatprep.subr.mxu0 0.0
    %4183 = vmatpush1.msra.mxu0 %v3997
    %4184 = vmatprep.subr.mxu0 0.0
    %4185 = vmatpush1.msra.mxu0 %v3998
    %4186 = vmatprep.subr.mxu0 0.0
    %4187 = vmatpush1.msra.mxu0 %v3999
    %4188 = vmatprep.subr.mxu0 0.0
    %4189 = vmatpush1.msra.mxu0 %v4000
    %4190 = vmatprep.subr.mxu0 0.0
    %4191 = vmatpush1.msra.mxu0 %v4001
    %4192 = vmatprep.subr.mxu0 0.0
    %4193 = vmatpush1.msra.mxu0 %v4002
    %4194 = vmatprep.subr.mxu0 0.0
    %4195 = vmatpush1.msra.mxu0 %v4003
    %4196 = vmatprep.subr.mxu0 0.0
    %4197 = vmatpush1.msra.mxu0 %v4004
    %4198 = vmatprep.subr.mxu0 0.0
    %4199 = vmatpush1.msra.mxu0 %v4005
    %4200 = vmatprep.subr.mxu0 0.0
    %4201 = vmatpush1.msra.mxu0 %v4006
    %4202 = vmatprep.subr.mxu0 0.0
    %4203 = vmatpush1.msra.mxu0 %v4007
    %4204 = vmatprep.subr.mxu0 0.0
    %4205 = vmatpush1.msra.mxu0 %v4008
    %4206 = vmatprep.subr.mxu0 0.0
    %4207 = vmatpush1.msra.mxu0 %v4009
    %4208 = vmatprep.subr.mxu0 0.0
    %4209 = vmatpush1.msra.mxu0 %v4010
    %4210 = vmatprep.subr.mxu0 0.0
    %4211 = vmatpush1.msra.mxu0 %v4011
    %4212 = vmatprep.subr.mxu0 0.0
    %4213 = vmatpush1.msra.mxu0 %v4012
    %4214 = vmatprep.subr.mxu0 0.0
    %4215 = vmatpush1.msra.mxu0 %v4013
    %4216 = vmatprep.subr.mxu0 0.0
    %4217 = vmatpush1.msra.mxu0 %v4014
    %4218 = vmatprep.subr.mxu0 0.0
    %4219 = vmatpush1.msra.mxu0 %v4015
    %4220 = vmatprep.subr.mxu0 0.0
    %4221 = vmatpush1.msra.mxu0 %v4016
    %4222 = vmatprep.subr.mxu0 0.0
    %4223 = vmatpush1.msra.mxu0 %v4017
    %4224 = vmatprep.subr.mxu0 0.0
    %4225 = vmatpush1.msra.mxu0 %v4018
    %4226 = vmatprep.subr.mxu0 0.0
    %4227 = vmatpush1.msra.mxu0 %v4019
    %4228 = vmatprep.subr.mxu0 0.0
    %4229 = vmatpush1.msra.mxu0 %v4020
    %4230 = vmatprep.mubr.f32.mxu0 %v3284
    %4231 = vmatmul.mubr.f32.gmra.mrb[0].mxu0 %v3204
    %v4232 = vpop.f32.mrb[0].mxu0
    %v4233 = vadd.f32 %v4088, %v4232
    %v4234 = vpop.f32.mrb[0].mxu0
    %4235 = vmatprep.mubr.f32.mxu0 %v3289
    %4236 = vmatmul.mubr.f32.gmra.mrb[0].mxu0 %v3209
    %v4237 = vpop.f32.mrb[0].mxu0
    %v4238 = vadd.f32 %v4093, %v4237
    %v4239 = vpop.f32.mrb[0].mxu0
    %4240 = vmatprep.mubr.f32.mxu0 %v3294
    %4241 = vmatmul.mubr.f32.gmra.mrb[0].mxu0 %v3214
    %v4242 = vpop.f32.mrb[0].mxu0
    %v4243 = vadd.f32 %v4098, %v4242
    %v4244 = vpop.f32.mrb[0].mxu0
    %4245 = vmatprep.mubr.f32.mxu0 %v3299
    %4246 = vmatmul.mubr.f32.gmra.mrb[0].mxu0 %v3219
    %v4247 = vpop.f32.mrb[0].mxu0
    %v4248 = vadd.f32 %v4103, %v4247
    %v4249 = vpop.f32.mrb[0].mxu0
    %4250 = vmatprep.mubr.f32.mxu0 %v3304
    %4251 = vmatmul.mubr.f32.gmra.mrb[0].mxu0 %v3224
    %v4252 = vpop.f32.mrb[0].mxu0
    %v4253 = vadd.f32 %v4108, %v4252
    %v4254 = vpop.f32.mrb[0].mxu0
    %4255 = vmatprep.mubr.f32.mxu0 %v3309
    %4256 = vmatmul.mubr.f32.gmra.mrb[0].mxu0 %v3229
    %v4257 = vpop.f32.mrb[0].mxu0
    %v4258 = vadd.f32 %v4113, %v4257
    %v4259 = vpop.f32.mrb[0].mxu0
    %4260 = vmatprep.mubr.f32.mxu0 %v3314
    %4261 = vmatmul.mubr.f32.gmra.mrb[0].mxu0 %v3234
    %v4262 = vpop.f32.mrb[0].mxu0
    %v4263 = vadd.f32 %v4118, %v4262
    %v4264 = vpop.f32.mrb[0].mxu0
    %4265 = vmatprep.mubr.f32.mxu0 %v3319
    %4266 = vmatmul.mubr.f32.gmra.mrb[0].mxu0 %v3239
    %v4267 = vpop.f32.mrb[0].mxu0
    %v4268 = vadd.f32 %v4123, %v4267
    %v4269 = vpop.f32.mrb[0].mxu0
    %4270 = vmatprep.mubr.f32.mxu0 %v3324
    %4271 = vmatmul.mubr.f32.gmra.mrb[0].mxu0 %v3244
    %v4272 = vpop.f32.mrb[0].mxu0
    %v4273 = vadd.f32 %v4128, %v4272
    %v4274 = vpop.f32.mrb[0].mxu0
    %4275 = vmatprep.mubr.f32.mxu0 %v3329
    %4276 = vmatmul.mubr.f32.gmra.mrb[0].mxu0 %v3249
    %v4277 = vpop.f32.mrb[0].mxu0
    %v4278 = vadd.f32 %v4133, %v4277
    %v4279 = vpop.f32.mrb[0].mxu0
    %4280 = vmatprep.mubr.f32.mxu0 %v3334
    %4281 = vmatmul.mubr.f32.gmra.mrb[0].mxu0 %v3254
    %v4282 = vpop.f32.mrb[0].mxu0
    %v4283 = vadd.f32 %v4138, %v4282
    %v4284 = vpop.f32.mrb[0].mxu0
    %4285 = vmatprep.mubr.f32.mxu0 %v3339
    %4286 = vmatmul.mubr.f32.gmra.mrb[0].mxu0 %v3259
    %v4287 = vpop.f32.mrb[0].mxu0
    %v4288 = vadd.f32 %v4143, %v4287
    %v4289 = vpop.f32.mrb[0].mxu0
    %4290 = vmatprep.mubr.f32.mxu0 %v3344
    %4291 = vmatmul.mubr.f32.gmra.mrb[0].mxu0 %v3264
    %v4292 = vpop.f32.mrb[0].mxu0
    %v4293 = vadd.f32 %v4148, %v4292
    %v4294 = vpop.f32.mrb[0].mxu0
    %4295 = vmatprep.mubr.f32.mxu0 %v3349
    %4296 = vmatmul.mubr.f32.gmra.mrb[0].mxu0 %v3269
    %v4297 = vpop.f32.mrb[0].mxu0
    %v4298 = vadd.f32 %v4153, %v4297
    %v4299 = vpop.f32.mrb[0].mxu0
    %4300 = vmatprep.mubr.f32.mxu0 %v3354
    %4301 = vmatmul.mubr.f32.gmra.mrb[0].mxu0 %v3274
    %v4302 = vpop.f32.mrb[0].mxu0
    %v4303 = vadd.f32 %v4158, %v4302
    %v4304 = vpop.f32.mrb[0].mxu0
    %4305 = vmatprep.mubr.f32.mxu0 %v3359
    %4306 = vmatmul.mubr.f32.gmra.mrb[0].mxu0 %v3279
    %v4307 = vpop.f32.mrb[0].mxu0
    %v4308 = vadd.f32 %v4163, %v4307
    %v4309 = vpop.f32.mrb[0].mxu0
    %4310 = vdwg.mxu0
    %s4311 = scalar_lea.vmem %s14, 1024
    %v4312 = vld [vmem:[%s4311] sm:$0xff]
    %v4313 = vld [vmem:[%s4311 + $0x8] sm:$0xff]
    %v4314 = vld [vmem:[%s4311 + $0x10] sm:$0xff]
    %v4315 = vld [vmem:[%s4311 + $0x18] sm:$0xff]
    %v4316 = vld [vmem:[%s4311 + $0x20] sm:$0xff]
    %v4317 = vld [vmem:[%s4311 + $0x28] sm:$0xff]
    %v4318 = vld [vmem:[%s4311 + $0x30] sm:$0xff]
    %v4319 = vld [vmem:[%s4311 + $0x38] sm:$0xff]
    %v4320 = vld [vmem:[%s4311 + $0x40] sm:$0xff]
    %v4321 = vld [vmem:[%s4311 + $0x48] sm:$0xff]
    %v4322 = vld [vmem:[%s4311 + $0x50] sm:$0xff]
    %v4323 = vld [vmem:[%s4311 + $0x58] sm:$0xff]
    %v4324 = vld [vmem:[%s4311 + $0x60] sm:$0xff]
    %v4325 = vld [vmem:[%s4311 + $0x68] sm:$0xff]
    %v4326 = vld [vmem:[%s4311 + $0x70] sm:$0xff]
    %v4327 = vld [vmem:[%s4311 + $0x78] sm:$0xff]
    %v4328 = vld [vmem:[%s4311 + $0x80] sm:$0xff]
    %v4329 = vld [vmem:[%s4311 + $0x88] sm:$0xff]
    %v4330 = vld [vmem:[%s4311 + $0x90] sm:$0xff]
    %v4331 = vld [vmem:[%s4311 + $0x98] sm:$0xff]
    %v4332 = vld [vmem:[%s4311 + $0xa0] sm:$0xff]
    %v4333 = vld [vmem:[%s4311 + $0xa8] sm:$0xff]
    %v4334 = vld [vmem:[%s4311 + $0xb0] sm:$0xff]
    %v4335 = vld [vmem:[%s4311 + $0xb8] sm:$0xff]
    %v4336 = vld [vmem:[%s4311 + $0xc0] sm:$0xff]
    %v4337 = vld [vmem:[%s4311 + $0xc8] sm:$0xff]
    %v4338 = vld [vmem:[%s4311 + $0xd0] sm:$0xff]
    %v4339 = vld [vmem:[%s4311 + $0xd8] sm:$0xff]
    %v4340 = vld [vmem:[%s4311 + $0xe0] sm:$0xff]
    %v4341 = vld [vmem:[%s4311 + $0xe8] sm:$0xff]
    %v4342 = vld [vmem:[%s4311 + $0xf0] sm:$0xff]
    %v4343 = vld [vmem:[%s4311 + $0xf8] sm:$0xff]
    %v4344 = vld [vmem:[%s4311 + $0x100] sm:$0xff]
    %v4345 = vld [vmem:[%s4311 + $0x108] sm:$0xff]
    %v4346 = vld [vmem:[%s4311 + $0x110] sm:$0xff]
    %v4347 = vld [vmem:[%s4311 + $0x118] sm:$0xff]
    %v4348 = vld [vmem:[%s4311 + $0x120] sm:$0xff]
    %v4349 = vld [vmem:[%s4311 + $0x128] sm:$0xff]
    %v4350 = vld [vmem:[%s4311 + $0x130] sm:$0xff]
    %v4351 = vld [vmem:[%s4311 + $0x138] sm:$0xff]
    %v4352 = vld [vmem:[%s4311 + $0x140] sm:$0xff]
    %v4353 = vld [vmem:[%s4311 + $0x148] sm:$0xff]
    %v4354 = vld [vmem:[%s4311 + $0x150] sm:$0xff]
    %v4355 = vld [vmem:[%s4311 + $0x158] sm:$0xff]
    %v4356 = vld [vmem:[%s4311 + $0x160] sm:$0xff]
    %v4357 = vld [vmem:[%s4311 + $0x168] sm:$0xff]
    %v4358 = vld [vmem:[%s4311 + $0x170] sm:$0xff]
    %v4359 = vld [vmem:[%s4311 + $0x178] sm:$0xff]
    %v4360 = vld [vmem:[%s4311 + $0x180] sm:$0xff]
    %v4361 = vld [vmem:[%s4311 + $0x188] sm:$0xff]
    %v4362 = vld [vmem:[%s4311 + $0x190] sm:$0xff]
    %v4363 = vld [vmem:[%s4311 + $0x198] sm:$0xff]
    %v4364 = vld [vmem:[%s4311 + $0x1a0] sm:$0xff]
    %v4365 = vld [vmem:[%s4311 + $0x1a8] sm:$0xff]
    %v4366 = vld [vmem:[%s4311 + $0x1b0] sm:$0xff]
    %v4367 = vld [vmem:[%s4311 + $0x1b8] sm:$0xff]
    %v4368 = vld [vmem:[%s4311 + $0x1c0] sm:$0xff]
    %v4369 = vld [vmem:[%s4311 + $0x1c8] sm:$0xff]
    %v4370 = vld [vmem:[%s4311 + $0x1d0] sm:$0xff]
    %v4371 = vld [vmem:[%s4311 + $0x1d8] sm:$0xff]
    %v4372 = vld [vmem:[%s4311 + $0x1e0] sm:$0xff]
    %v4373 = vld [vmem:[%s4311 + $0x1e8] sm:$0xff]
    %v4374 = vld [vmem:[%s4311 + $0x1f0] sm:$0xff]
    %v4375 = vld [vmem:[%s4311 + $0x1f8] sm:$0xff]
    %4376 = vmatprep.subr.mxu0 0.0
    %4377 = vmatpush1.msra.mxu0 %v4312
    %4378 = vmatprep.subr.mxu0 0.0
    %4379 = vmatpush1.msra.mxu0 %v4313
    %4380 = vmatprep.subr.mxu0 0.0
    %4381 = vmatpush1.msra.mxu0 %v4314
    %4382 = vmatprep.subr.mxu0 0.0
    %4383 = vmatpush1.msra.mxu0 %v4315
    %4384 = vmatprep.subr.mxu0 0.0
    %4385 = vmatpush1.msra.mxu0 %v4316
    %4386 = vmatprep.subr.mxu0 0.0
    %4387 = vmatpush1.msra.mxu0 %v4317
    %4388 = vmatprep.subr.mxu0 0.0
    %4389 = vmatpush1.msra.mxu0 %v4318
    %4390 = vmatprep.subr.mxu0 0.0
    %4391 = vmatpush1.msra.mxu0 %v4319
    %4392 = vmatprep.subr.mxu0 0.0
    %4393 = vmatpush1.msra.mxu0 %v4320
    %4394 = vmatprep.subr.mxu0 0.0
    %4395 = vmatpush1.msra.mxu0 %v4321
    %4396 = vmatprep.subr.mxu0 0.0
    %4397 = vmatpush1.msra.mxu0 %v4322
    %4398 = vmatprep.subr.mxu0 0.0
    %4399 = vmatpush1.msra.mxu0 %v4323
    %4400 = vmatprep.subr.mxu0 0.0
    %4401 = vmatpush1.msra.mxu0 %v4324
    %4402 = vmatprep.subr.mxu0 0.0
    %4403 = vmatpush1.msra.mxu0 %v4325
    %4404 = vmatprep.subr.mxu0 0.0
    %4405 = vmatpush1.msra.mxu0 %v4326
    %4406 = vmatprep.subr.mxu0 0.0
    %4407 = vmatpush1.msra.mxu0 %v4327
    %4408 = vmatprep.subr.mxu0 0.0
    %4409 = vmatpush1.msra.mxu0 %v4328
    %4410 = vmatprep.subr.mxu0 0.0
    %4411 = vmatpush1.msra.mxu0 %v4329
    %4412 = vmatprep.subr.mxu0 0.0
    %4413 = vmatpush1.msra.mxu0 %v4330
    %4414 = vmatprep.subr.mxu0 0.0
    %4415 = vmatpush1.msra.mxu0 %v4331
    %4416 = vmatprep.subr.mxu0 0.0
    %4417 = vmatpush1.msra.mxu0 %v4332
    %4418 = vmatprep.subr.mxu0 0.0
    %4419 = vmatpush1.msra.mxu0 %v4333
    %4420 = vmatprep.subr.mxu0 0.0
    %4421 = vmatpush1.msra.mxu0 %v4334
    %4422 = vmatprep.subr.mxu0 0.0
    %4423 = vmatpush1.msra.mxu0 %v4335
    %4424 = vmatprep.subr.mxu0 0.0
    %4425 = vmatpush1.msra.mxu0 %v4336
    %4426 = vmatprep.subr.mxu0 0.0
    %4427 = vmatpush1.msra.mxu0 %v4337
    %4428 = vmatprep.subr.mxu0 0.0
    %4429 = vmatpush1.msra.mxu0 %v4338
    %4430 = vmatprep.subr.mxu0 0.0
    %4431 = vmatpush1.msra.mxu0 %v4339
    %4432 = vmatprep.subr.mxu0 0.0
    %4433 = vmatpush1.msra.mxu0 %v4340
    %4434 = vmatprep.subr.mxu0 0.0
    %4435 = vmatpush1.msra.mxu0 %v4341
    %4436 = vmatprep.subr.mxu0 0.0
    %4437 = vmatpush1.msra.mxu0 %v4342
    %4438 = vmatprep.subr.mxu0 0.0
    %4439 = vmatpush1.msra.mxu0 %v4343
    %4440 = vmatprep.mubr.f32.mxu0 %v3204
    %4441 = vmatmul.mubr.f32.gmra.mrb[0].mxu0 %v3124
    %v4442 = vpop.f32.mrb[0].mxu0
    %v4443 = vadd.f32 0.0, %v4442
    %v4444 = vpop.f32.mrb[0].mxu0
    %4445 = vmatprep.mubr.f32.mxu0 %v3209
    %4446 = vmatmul.mubr.f32.gmra.mrb[0].mxu0 %v3129
    %v4447 = vpop.f32.mrb[0].mxu0
    %v4448 = vadd.f32 0.0, %v4447
    %v4449 = vpop.f32.mrb[0].mxu0
    %4450 = vmatprep.mubr.f32.mxu0 %v3214
    %4451 = vmatmul.mubr.f32.gmra.mrb[0].mxu0 %v3134
    %v4452 = vpop.f32.mrb[0].mxu0
    %v4453 = vadd.f32 0.0, %v4452
    %v4454 = vpop.f32.mrb[0].mxu0
    %4455 = vmatprep.mubr.f32.mxu0 %v3219
    %4456 = vmatmul.mubr.f32.gmra.mrb[0].mxu0 %v3139
    %v4457 = vpop.f32.mrb[0].mxu0
    %v4458 = vadd.f32 0.0, %v4457
    %v4459 = vpop.f32.mrb[0].mxu0
    %4460 = vmatprep.mubr.f32.mxu0 %v3224
    %4461 = vmatmul.mubr.f32.gmra.mrb[0].mxu0 %v3144
    %v4462 = vpop.f32.mrb[0].mxu0
    %v4463 = vadd.f32 0.0, %v4462
    %v4464 = vpop.f32.mrb[0].mxu0
    %4465 = vmatprep.mubr.f32.mxu0 %v3229
    %4466 = vmatmul.mubr.f32.gmra.mrb[0].mxu0 %v3149
    %v4467 = vpop.f32.mrb[0].mxu0
    %v4468 = vadd.f32 0.0, %v4467
    %v4469 = vpop.f32.mrb[0].mxu0
    %4470 = vmatprep.mubr.f32.mxu0 %v3234
    %4471 = vmatmul.mubr.f32.gmra.mrb[0].mxu0 %v3154
    %v4472 = vpop.f32.mrb[0].mxu0
    %v4473 = vadd.f32 0.0, %v4472
    %v4474 = vpop.f32.mrb[0].mxu0
    %4475 = vmatprep.mubr.f32.mxu0 %v3239
    %4476 = vmatmul.mubr.f32.gmra.mrb[0].mxu0 %v3159
    %v4477 = vpop.f32.mrb[0].mxu0
    %v4478 = vadd.f32 0.0, %v4477
    %v4479 = vpop.f32.mrb[0].mxu0
    %4480 = vmatprep.mubr.f32.mxu0 %v3244
    %4481 = vmatmul.mubr.f32.gmra.mrb[0].mxu0 %v3164
    %v4482 = vpop.f32.mrb[0].mxu0
    %v4483 = vadd.f32 0.0, %v4482
    %v4484 = vpop.f32.mrb[0].mxu0
    %4485 = vmatprep.mubr.f32.mxu0 %v3249
    %4486 = vmatmul.mubr.f32.gmra.mrb[0].mxu0 %v3169
    %v4487 = vpop.f32.mrb[0].mxu0
    %v4488 = vadd.f32 0.0, %v4487
    %v4489 = vpop.f32.mrb[0].mxu0
    %4490 = vmatprep.mubr.f32.mxu0 %v3254
    %4491 = vmatmul.mubr.f32.gmra.mrb[0].mxu0 %v3174
    %v4492 = vpop.f32.mrb[0].mxu0
    %v4493 = vadd.f32 0.0, %v4492
    %v4494 = vpop.f32.mrb[0].mxu0
    %4495 = vmatprep.mubr.f32.mxu0 %v3259
    %4496 = vmatmul.mubr.f32.gmra.mrb[0].mxu0 %v3179
    %v4497 = vpop.f32.mrb[0].mxu0
    %v4498 = vadd.f32 0.0, %v4497
    %v4499 = vpop.f32.mrb[0].mxu0
    %4500 = vmatprep.mubr.f32.mxu0 %v3264
    %4501 = vmatmul.mubr.f32.gmra.mrb[0].mxu0 %v3184
    %v4502 = vpop.f32.mrb[0].mxu0
    %v4503 = vadd.f32 0.0, %v4502
    %v4504 = vpop.f32.mrb[0].mxu0
    %4505 = vmatprep.mubr.f32.mxu0 %v3269
    %4506 = vmatmul.mubr.f32.gmra.mrb[0].mxu0 %v3189
    %v4507 = vpop.f32.mrb[0].mxu0
    %v4508 = vadd.f32 0.0, %v4507
    %v4509 = vpop.f32.mrb[0].mxu0
    %4510 = vmatprep.mubr.f32.mxu0 %v3274
    %4511 = vmatmul.mubr.f32.gmra.mrb[0].mxu0 %v3194
    %v4512 = vpop.f32.mrb[0].mxu0
    %v4513 = vadd.f32 0.0, %v4512
    %v4514 = vpop.f32.mrb[0].mxu0
    %4515 = vmatprep.mubr.f32.mxu0 %v3279
    %4516 = vmatmul.mubr.f32.gmra.mrb[0].mxu0 %v3199
    %v4517 = vpop.f32.mrb[0].mxu0
    %v4518 = vadd.f32 0.0, %v4517
    %v4519 = vpop.f32.mrb[0].mxu0
    %4520 = vdwg.mxu0
    %4521 = vmatprep.subr.mxu0 0.0
    %4522 = vmatpush1.msra.mxu0 %v4344
    %4523 = vmatprep.subr.mxu0 0.0
    %4524 = vmatpush1.msra.mxu0 %v4345
    %4525 = vmatprep.subr.mxu0 0.0
    %4526 = vmatpush1.msra.mxu0 %v4346
    %4527 = vmatprep.subr.mxu0 0.0
    %4528 = vmatpush1.msra.mxu0 %v4347
    %4529 = vmatprep.subr.mxu0 0.0
    %4530 = vmatpush1.msra.mxu0 %v4348
    %4531 = vmatprep.subr.mxu0 0.0
    %4532 = vmatpush1.msra.mxu0 %v4349
    %4533 = vmatprep.subr.mxu0 0.0
    %4534 = vmatpush1.msra.mxu0 %v4350
    %4535 = vmatprep.subr.mxu0 0.0
    %4536 = vmatpush1.msra.mxu0 %v4351
    %4537 = vmatprep.subr.mxu0 0.0
    %4538 = vmatpush1.msra.mxu0 %v4352
    %4539 = vmatprep.subr.mxu0 0.0
    %4540 = vmatpush1.msra.mxu0 %v4353
    %4541 = vmatprep.subr.mxu0 0.0
    %4542 = vmatpush1.msra.mxu0 %v4354
    %4543 = vmatprep.subr.mxu0 0.0
    %4544 = vmatpush1.msra.mxu0 %v4355
    %4545 = vmatprep.subr.mxu0 0.0
    %4546 = vmatpush1.msra.mxu0 %v4356
    %4547 = vmatprep.subr.mxu0 0.0
    %4548 = vmatpush1.msra.mxu0 %v4357
    %4549 = vmatprep.subr.mxu0 0.0
    %4550 = vmatpush1.msra.mxu0 %v4358
    %4551 = vmatprep.subr.mxu0 0.0
    %4552 = vmatpush1.msra.mxu0 %v4359
    %4553 = vmatprep.subr.mxu0 0.0
    %4554 = vmatpush1.msra.mxu0 %v4360
    %4555 = vmatprep.subr.mxu0 0.0
    %4556 = vmatpush1.msra.mxu0 %v4361
    %4557 = vmatprep.subr.mxu0 0.0
    %4558 = vmatpush1.msra.mxu0 %v4362
    %4559 = vmatprep.subr.mxu0 0.0
    %4560 = vmatpush1.msra.mxu0 %v4363
    %4561 = vmatprep.subr.mxu0 0.0
    %4562 = vmatpush1.msra.mxu0 %v4364
    %4563 = vmatprep.subr.mxu0 0.0
    %4564 = vmatpush1.msra.mxu0 %v4365
    %4565 = vmatprep.subr.mxu0 0.0
    %4566 = vmatpush1.msra.mxu0 %v4366
    %4567 = vmatprep.subr.mxu0 0.0
    %4568 = vmatpush1.msra.mxu0 %v4367
    %4569 = vmatprep.subr.mxu0 0.0
    %4570 = vmatpush1.msra.mxu0 %v4368
    %4571 = vmatprep.subr.mxu0 0.0
    %4572 = vmatpush1.msra.mxu0 %v4369
    %4573 = vmatprep.subr.mxu0 0.0
    %4574 = vmatpush1.msra.mxu0 %v4370
    %4575 = vmatprep.subr.mxu0 0.0
    %4576 = vmatpush1.msra.mxu0 %v4371
    %4577 = vmatprep.subr.mxu0 0.0
    %4578 = vmatpush1.msra.mxu0 %v4372
    %4579 = vmatprep.subr.mxu0 0.0
    %4580 = vmatpush1.msra.mxu0 %v4373
    %4581 = vmatprep.subr.mxu0 0.0
    %4582 = vmatpush1.msra.mxu0 %v4374
    %4583 = vmatprep.subr.mxu0 0.0
    %4584 = vmatpush1.msra.mxu0 %v4375
    %4585 = vmatprep.mubr.f32.mxu0 %v3444
    %4586 = vmatmul.mubr.f32.gmra.mrb[0].mxu0 %v3364
    %v4587 = vpop.f32.mrb[0].mxu0
    %v4588 = vadd.f32 %v4443, %v4587
    %v4589 = vpop.f32.mrb[0].mxu0
    %4590 = vmatprep.mubr.f32.mxu0 %v3449
    %4591 = vmatmul.mubr.f32.gmra.mrb[0].mxu0 %v3369
    %v4592 = vpop.f32.mrb[0].mxu0
    %v4593 = vadd.f32 %v4448, %v4592
    %v4594 = vpop.f32.mrb[0].mxu0
    %4595 = vmatprep.mubr.f32.mxu0 %v3454
    %4596 = vmatmul.mubr.f32.gmra.mrb[0].mxu0 %v3374
    %v4597 = vpop.f32.mrb[0].mxu0
    %v4598 = vadd.f32 %v4453, %v4597
    %v4599 = vpop.f32.mrb[0].mxu0
    %4600 = vmatprep.mubr.f32.mxu0 %v3459
    %4601 = vmatmul.mubr.f32.gmra.mrb[0].mxu0 %v3379
    %v4602 = vpop.f32.mrb[0].mxu0
    %v4603 = vadd.f32 %v4458, %v4602
    %v4604 = vpop.f32.mrb[0].mxu0
    %4605 = vmatprep.mubr.f32.mxu0 %v3464
    %4606 = vmatmul.mubr.f32.gmra.mrb[0].mxu0 %v3384
    %v4607 = vpop.f32.mrb[0].mxu0
    %v4608 = vadd.f32 %v4463, %v4607
    %v4609 = vpop.f32.mrb[0].mxu0
    %4610 = vmatprep.mubr.f32.mxu0 %v3469
    %4611 = vmatmul.mubr.f32.gmra.mrb[0].mxu0 %v3389
    %v4612 = vpop.f32.mrb[0].mxu0
    %v4613 = vadd.f32 %v4468, %v4612
    %v4614 = vpop.f32.mrb[0].mxu0
    %4615 = vmatprep.mubr.f32.mxu0 %v3474
    %4616 = vmatmul.mubr.f32.gmra.mrb[0].mxu0 %v3394
    %v4617 = vpop.f32.mrb[0].mxu0
    %v4618 = vadd.f32 %v4473, %v4617
    %v4619 = vpop.f32.mrb[0].mxu0
    %4620 = vmatprep.mubr.f32.mxu0 %v3479
    %4621 = vmatmul.mubr.f32.gmra.mrb[0].mxu0 %v3399
    %v4622 = vpop.f32.mrb[0].mxu0
    %v4623 = vadd.f32 %v4478, %v4622
    %v4624 = vpop.f32.mrb[0].mxu0
    %4625 = vmatprep.mubr.f32.mxu0 %v3484
    %4626 = vmatmul.mubr.f32.gmra.mrb[0].mxu0 %v3404
    %v4627 = vpop.f32.mrb[0].mxu0
    %v4628 = vadd.f32 %v4483, %v4627
    %v4629 = vpop.f32.mrb[0].mxu0
    %4630 = vmatprep.mubr.f32.mxu0 %v3489
    %4631 = vmatmul.mubr.f32.gmra.mrb[0].mxu0 %v3409
    %v4632 = vpop.f32.mrb[0].mxu0
    %v4633 = vadd.f32 %v4488, %v4632
    %v4634 = vpop.f32.mrb[0].mxu0
    %4635 = vmatprep.mubr.f32.mxu0 %v3494
    %4636 = vmatmul.mubr.f32.gmra.mrb[0].mxu0 %v3414
    %v4637 = vpop.f32.mrb[0].mxu0
    %v4638 = vadd.f32 %v4493, %v4637
    %v4639 = vpop.f32.mrb[0].mxu0
    %4640 = vmatprep.mubr.f32.mxu0 %v3499
    %4641 = vmatmul.mubr.f32.gmra.mrb[0].mxu0 %v3419
    %v4642 = vpop.f32.mrb[0].mxu0
    %v4643 = vadd.f32 %v4498, %v4642
    %v4644 = vpop.f32.mrb[0].mxu0
    %4645 = vmatprep.mubr.f32.mxu0 %v3504
    %4646 = vmatmul.mubr.f32.gmra.mrb[0].mxu0 %v3424
    %v4647 = vpop.f32.mrb[0].mxu0
    %v4648 = vadd.f32 %v4503, %v4647
    %v4649 = vpop.f32.mrb[0].mxu0
    %4650 = vmatprep.mubr.f32.mxu0 %v3509
    %4651 = vmatmul.mubr.f32.gmra.mrb[0].mxu0 %v3429
    %v4652 = vpop.f32.mrb[0].mxu0
    %v4653 = vadd.f32 %v4508, %v4652
    %v4654 = vpop.f32.mrb[0].mxu0
    %4655 = vmatprep.mubr.f32.mxu0 %v3514
    %4656 = vmatmul.mubr.f32.gmra.mrb[0].mxu0 %v3434
    %v4657 = vpop.f32.mrb[0].mxu0
    %v4658 = vadd.f32 %v4513, %v4657
    %v4659 = vpop.f32.mrb[0].mxu0
    %4660 = vmatprep.mubr.f32.mxu0 %v3519
    %4661 = vmatmul.mubr.f32.gmra.mrb[0].mxu0 %v3439
    %v4662 = vpop.f32.mrb[0].mxu0
    %v4663 = vadd.f32 %v4518, %v4662
    %v4664 = vpop.f32.mrb[0].mxu0
    %4665 = vdwg.mxu0
    %s4666 = scalar_lea.vmem %s14, 1536
    %v4667 = vld [vmem:[%s4666] sm:$0xff]
    %v4668 = vld [vmem:[%s4666 + $0x8] sm:$0xff]
    %v4669 = vld [vmem:[%s4666 + $0x10] sm:$0xff]
    %v4670 = vld [vmem:[%s4666 + $0x18] sm:$0xff]
    %v4671 = vld [vmem:[%s4666 + $0x20] sm:$0xff]
    %v4672 = vld [vmem:[%s4666 + $0x28] sm:$0xff]
    %v4673 = vld [vmem:[%s4666 + $0x30] sm:$0xff]
    %v4674 = vld [vmem:[%s4666 + $0x38] sm:$0xff]
    %v4675 = vld [vmem:[%s4666 + $0x40] sm:$0xff]
    %v4676 = vld [vmem:[%s4666 + $0x48] sm:$0xff]
    %v4677 = vld [vmem:[%s4666 + $0x50] sm:$0xff]
    %v4678 = vld [vmem:[%s4666 + $0x58] sm:$0xff]
    %v4679 = vld [vmem:[%s4666 + $0x60] sm:$0xff]
    %v4680 = vld [vmem:[%s4666 + $0x68] sm:$0xff]
    %v4681 = vld [vmem:[%s4666 + $0x70] sm:$0xff]
    %v4682 = vld [vmem:[%s4666 + $0x78] sm:$0xff]
    %v4683 = vld [vmem:[%s4666 + $0x80] sm:$0xff]
    %v4684 = vld [vmem:[%s4666 + $0x88] sm:$0xff]
    %v4685 = vld [vmem:[%s4666 + $0x90] sm:$0xff]
    %v4686 = vld [vmem:[%s4666 + $0x98] sm:$0xff]
    %v4687 = vld [vmem:[%s4666 + $0xa0] sm:$0xff]
    %v4688 = vld [vmem:[%s4666 + $0xa8] sm:$0xff]
    %v4689 = vld [vmem:[%s4666 + $0xb0] sm:$0xff]
    %v4690 = vld [vmem:[%s4666 + $0xb8] sm:$0xff]
    %v4691 = vld [vmem:[%s4666 + $0xc0] sm:$0xff]
    %v4692 = vld [vmem:[%s4666 + $0xc8] sm:$0xff]
    %v4693 = vld [vmem:[%s4666 + $0xd0] sm:$0xff]
    %v4694 = vld [vmem:[%s4666 + $0xd8] sm:$0xff]
    %v4695 = vld [vmem:[%s4666 + $0xe0] sm:$0xff]
    %v4696 = vld [vmem:[%s4666 + $0xe8] sm:$0xff]
    %v4697 = vld [vmem:[%s4666 + $0xf0] sm:$0xff]
    %v4698 = vld [vmem:[%s4666 + $0xf8] sm:$0xff]
    %v4699 = vld [vmem:[%s4666 + $0x100] sm:$0xff]
    %v4700 = vld [vmem:[%s4666 + $0x108] sm:$0xff]
    %v4701 = vld [vmem:[%s4666 + $0x110] sm:$0xff]
    %v4702 = vld [vmem:[%s4666 + $0x118] sm:$0xff]
    %v4703 = vld [vmem:[%s4666 + $0x120] sm:$0xff]
    %v4704 = vld [vmem:[%s4666 + $0x128] sm:$0xff]
    %v4705 = vld [vmem:[%s4666 + $0x130] sm:$0xff]
    %v4706 = vld [vmem:[%s4666 + $0x138] sm:$0xff]
    %v4707 = vld [vmem:[%s4666 + $0x140] sm:$0xff]
    %v4708 = vld [vmem:[%s4666 + $0x148] sm:$0xff]
    %v4709 = vld [vmem:[%s4666 + $0x150] sm:$0xff]
    %v4710 = vld [vmem:[%s4666 + $0x158] sm:$0xff]
    %v4711 = vld [vmem:[%s4666 + $0x160] sm:$0xff]
    %v4712 = vld [vmem:[%s4666 + $0x168] sm:$0xff]
    %v4713 = vld [vmem:[%s4666 + $0x170] sm:$0xff]
    %v4714 = vld [vmem:[%s4666 + $0x178] sm:$0xff]
    %v4715 = vld [vmem:[%s4666 + $0x180] sm:$0xff]
    %v4716 = vld [vmem:[%s4666 + $0x188] sm:$0xff]
    %v4717 = vld [vmem:[%s4666 + $0x190] sm:$0xff]
    %v4718 = vld [vmem:[%s4666 + $0x198] sm:$0xff]
    %v4719 = vld [vmem:[%s4666 + $0x1a0] sm:$0xff]
    %v4720 = vld [vmem:[%s4666 + $0x1a8] sm:$0xff]
    %v4721 = vld [vmem:[%s4666 + $0x1b0] sm:$0xff]
    %v4722 = vld [vmem:[%s4666 + $0x1b8] sm:$0xff]
    %v4723 = vld [vmem:[%s4666 + $0x1c0] sm:$0xff]
    %v4724 = vld [vmem:[%s4666 + $0x1c8] sm:$0xff]
    %v4725 = vld [vmem:[%s4666 + $0x1d0] sm:$0xff]
    %v4726 = vld [vmem:[%s4666 + $0x1d8] sm:$0xff]
    %v4727 = vld [vmem:[%s4666 + $0x1e0] sm:$0xff]
    %v4728 = vld [vmem:[%s4666 + $0x1e8] sm:$0xff]
    %v4729 = vld [vmem:[%s4666 + $0x1f0] sm:$0xff]
    %v4730 = vld [vmem:[%s4666 + $0x1f8] sm:$0xff]
    %4731 = vmatprep.subr.mxu0 0.0
    %4732 = vmatpush1.msra.mxu0 %v4667
    %4733 = vmatprep.subr.mxu0 0.0
    %4734 = vmatpush1.msra.mxu0 %v4668
    %4735 = vmatprep.subr.mxu0 0.0
    %4736 = vmatpush1.msra.mxu0 %v4669
    %4737 = vmatprep.subr.mxu0 0.0
    %4738 = vmatpush1.msra.mxu0 %v4670
    %4739 = vmatprep.subr.mxu0 0.0
    %4740 = vmatpush1.msra.mxu0 %v4671
    %4741 = vmatprep.subr.mxu0 0.0
    %4742 = vmatpush1.msra.mxu0 %v4672
    %4743 = vmatprep.subr.mxu0 0.0
    %4744 = vmatpush1.msra.mxu0 %v4673
    %4745 = vmatprep.subr.mxu0 0.0
    %4746 = vmatpush1.msra.mxu0 %v4674
    %4747 = vmatprep.subr.mxu0 0.0
    %4748 = vmatpush1.msra.mxu0 %v4675
    %4749 = vmatprep.subr.mxu0 0.0
    %4750 = vmatpush1.msra.mxu0 %v4676
    %4751 = vmatprep.subr.mxu0 0.0
    %4752 = vmatpush1.msra.mxu0 %v4677
    %4753 = vmatprep.subr.mxu0 0.0
    %4754 = vmatpush1.msra.mxu0 %v4678
    %4755 = vmatprep.subr.mxu0 0.0
    %4756 = vmatpush1.msra.mxu0 %v4679
    %4757 = vmatprep.subr.mxu0 0.0
    %4758 = vmatpush1.msra.mxu0 %v4680
    %4759 = vmatprep.subr.mxu0 0.0
    %4760 = vmatpush1.msra.mxu0 %v4681
    %4761 = vmatprep.subr.mxu0 0.0
    %4762 = vmatpush1.msra.mxu0 %v4682
    %4763 = vmatprep.subr.mxu0 0.0
    %4764 = vmatpush1.msra.mxu0 %v4683
    %4765 = vmatprep.subr.mxu0 0.0
    %4766 = vmatpush1.msra.mxu0 %v4684
    %4767 = vmatprep.subr.mxu0 0.0
    %4768 = vmatpush1.msra.mxu0 %v4685
    %4769 = vmatprep.subr.mxu0 0.0
    %4770 = vmatpush1.msra.mxu0 %v4686
    %4771 = vmatprep.subr.mxu0 0.0
    %4772 = vmatpush1.msra.mxu0 %v4687
    %4773 = vmatprep.subr.mxu0 0.0
    %4774 = vmatpush1.msra.mxu0 %v4688
    %4775 = vmatprep.subr.mxu0 0.0
    %4776 = vmatpush1.msra.mxu0 %v4689
    %4777 = vmatprep.subr.mxu0 0.0
    %4778 = vmatpush1.msra.mxu0 %v4690
    %4779 = vmatprep.subr.mxu0 0.0
    %4780 = vmatpush1.msra.mxu0 %v4691
    %4781 = vmatprep.subr.mxu0 0.0
    %4782 = vmatpush1.msra.mxu0 %v4692
    %4783 = vmatprep.subr.mxu0 0.0
    %4784 = vmatpush1.msra.mxu0 %v4693
    %4785 = vmatprep.subr.mxu0 0.0
    %4786 = vmatpush1.msra.mxu0 %v4694
    %4787 = vmatprep.subr.mxu0 0.0
    %4788 = vmatpush1.msra.mxu0 %v4695
    %4789 = vmatprep.subr.mxu0 0.0
    %4790 = vmatpush1.msra.mxu0 %v4696
    %4791 = vmatprep.subr.mxu0 0.0
    %4792 = vmatpush1.msra.mxu0 %v4697
    %4793 = vmatprep.subr.mxu0 0.0
    %4794 = vmatpush1.msra.mxu0 %v4698
    %4795 = vmatprep.mubr.f32.mxu0 %v3284
    %4796 = vmatmul.mubr.f32.gmra.mrb[0].mxu0 %v3204
    %v4797 = vpop.f32.mrb[0].mxu0
    %v4798 = vadd.f32 0.0, %v4797
    %v4799 = vpop.f32.mrb[0].mxu0
    %4800 = vmatprep.mubr.f32.mxu0 %v3289
    %4801 = vmatmul.mubr.f32.gmra.mrb[0].mxu0 %v3209
    %v4802 = vpop.f32.mrb[0].mxu0
    %v4803 = vadd.f32 0.0, %v4802
    %v4804 = vpop.f32.mrb[0].mxu0
    %4805 = vmatprep.mubr.f32.mxu0 %v3294
    %4806 = vmatmul.mubr.f32.gmra.mrb[0].mxu0 %v3214
    %v4807 = vpop.f32.mrb[0].mxu0
    %v4808 = vadd.f32 0.0, %v4807
    %v4809 = vpop.f32.mrb[0].mxu0
    %4810 = vmatprep.mubr.f32.mxu0 %v3299
    %4811 = vmatmul.mubr.f32.gmra.mrb[0].mxu0 %v3219
    %v4812 = vpop.f32.mrb[0].mxu0
    %v4813 = vadd.f32 0.0, %v4812
    %v4814 = vpop.f32.mrb[0].mxu0
    %4815 = vmatprep.mubr.f32.mxu0 %v3304
    %4816 = vmatmul.mubr.f32.gmra.mrb[0].mxu0 %v3224
    %v4817 = vpop.f32.mrb[0].mxu0
    %v4818 = vadd.f32 0.0, %v4817
    %v4819 = vpop.f32.mrb[0].mxu0
    %4820 = vmatprep.mubr.f32.mxu0 %v3309
    %4821 = vmatmul.mubr.f32.gmra.mrb[0].mxu0 %v3229
    %v4822 = vpop.f32.mrb[0].mxu0
    %v4823 = vadd.f32 0.0, %v4822
    %v4824 = vpop.f32.mrb[0].mxu0
    %4825 = vmatprep.mubr.f32.mxu0 %v3314
    %4826 = vmatmul.mubr.f32.gmra.mrb[0].mxu0 %v3234
    %v4827 = vpop.f32.mrb[0].mxu0
    %v4828 = vadd.f32 0.0, %v4827
    %v4829 = vpop.f32.mrb[0].mxu0
    %4830 = vmatprep.mubr.f32.mxu0 %v3319
    %4831 = vmatmul.mubr.f32.gmra.mrb[0].mxu0 %v3239
    %v4832 = vpop.f32.mrb[0].mxu0
    %v4833 = vadd.f32 0.0, %v4832
    %v4834 = vpop.f32.mrb[0].mxu0
    %4835 = vmatprep.mubr.f32.mxu0 %v3324
    %4836 = vmatmul.mubr.f32.gmra.mrb[0].mxu0 %v3244
    %v4837 = vpop.f32.mrb[0].mxu0
    %v4838 = vadd.f32 0.0, %v4837
    %v4839 = vpop.f32.mrb[0].mxu0
    %4840 = vmatprep.mubr.f32.mxu0 %v3329
    %4841 = vmatmul.mubr.f32.gmra.mrb[0].mxu0 %v3249
    %v4842 = vpop.f32.mrb[0].mxu0
    %v4843 = vadd.f32 0.0, %v4842
    %v4844 = vpop.f32.mrb[0].mxu0
    %4845 = vmatprep.mubr.f32.mxu0 %v3334
    %4846 = vmatmul.mubr.f32.gmra.mrb[0].mxu0 %v3254
    %v4847 = vpop.f32.mrb[0].mxu0
    %v4848 = vadd.f32 0.0, %v4847
    %v4849 = vpop.f32.mrb[0].mxu0
    %4850 = vmatprep.mubr.f32.mxu0 %v3339
    %4851 = vmatmul.mubr.f32.gmra.mrb[0].mxu0 %v3259
    %v4852 = vpop.f32.mrb[0].mxu0
    %v4853 = vadd.f32 0.0, %v4852
    %v4854 = vpop.f32.mrb[0].mxu0
    %4855 = vmatprep.mubr.f32.mxu0 %v3344
    %4856 = vmatmul.mubr.f32.gmra.mrb[0].mxu0 %v3264
    %v4857 = vpop.f32.mrb[0].mxu0
    %v4858 = vadd.f32 0.0, %v4857
    %v4859 = vpop.f32.mrb[0].mxu0
    %4860 = vmatprep.mubr.f32.mxu0 %v3349
    %4861 = vmatmul.mubr.f32.gmra.mrb[0].mxu0 %v3269
    %v4862 = vpop.f32.mrb[0].mxu0
    %v4863 = vadd.f32 0.0, %v4862
    %v4864 = vpop.f32.mrb[0].mxu0
    %4865 = vmatprep.mubr.f32.mxu0 %v3354
    %4866 = vmatmul.mubr.f32.gmra.mrb[0].mxu0 %v3274
    %v4867 = vpop.f32.mrb[0].mxu0
    %v4868 = vadd.f32 0.0, %v4867
    %v4869 = vpop.f32.mrb[0].mxu0
    %4870 = vmatprep.mubr.f32.mxu0 %v3359
    %4871 = vmatmul.mubr.f32.gmra.mrb[0].mxu0 %v3279
    %v4872 = vpop.f32.mrb[0].mxu0
    %v4873 = vadd.f32 0.0, %v4872
    %v4874 = vpop.f32.mrb[0].mxu0
    %4875 = vdwg.mxu0
    %4876 = vmatprep.subr.mxu0 0.0
    %4877 = vmatpush1.msra.mxu0 %v4699
    %4878 = vmatprep.subr.mxu0 0.0
    %4879 = vmatpush1.msra.mxu0 %v4700
    %4880 = vmatprep.subr.mxu0 0.0
    %4881 = vmatpush1.msra.mxu0 %v4701
    %4882 = vmatprep.subr.mxu0 0.0
    %4883 = vmatpush1.msra.mxu0 %v4702
    %4884 = vmatprep.subr.mxu0 0.0
    %4885 = vmatpush1.msra.mxu0 %v4703
    %4886 = vmatprep.subr.mxu0 0.0
    %4887 = vmatpush1.msra.mxu0 %v4704
    %4888 = vmatprep.subr.mxu0 0.0
    %4889 = vmatpush1.msra.mxu0 %v4705
    %4890 = vmatprep.subr.mxu0 0.0
    %4891 = vmatpush1.msra.mxu0 %v4706
    %4892 = vmatprep.subr.mxu0 0.0
    %4893 = vmatpush1.msra.mxu0 %v4707
    %4894 = vmatprep.subr.mxu0 0.0
    %4895 = vmatpush1.msra.mxu0 %v4708
    %4896 = vmatprep.subr.mxu0 0.0
    %4897 = vmatpush1.msra.mxu0 %v4709
    %4898 = vmatprep.subr.mxu0 0.0
    %4899 = vmatpush1.msra.mxu0 %v4710
    %4900 = vmatprep.subr.mxu0 0.0
    %4901 = vmatpush1.msra.mxu0 %v4711
    %4902 = vmatprep.subr.mxu0 0.0
    %4903 = vmatpush1.msra.mxu0 %v4712
    %4904 = vmatprep.subr.mxu0 0.0
    %4905 = vmatpush1.msra.mxu0 %v4713
    %4906 = vmatprep.subr.mxu0 0.0
    %4907 = vmatpush1.msra.mxu0 %v4714
    %4908 = vmatprep.subr.mxu0 0.0
    %4909 = vmatpush1.msra.mxu0 %v4715
    %4910 = vmatprep.subr.mxu0 0.0
    %4911 = vmatpush1.msra.mxu0 %v4716
    %4912 = vmatprep.subr.mxu0 0.0
    %4913 = vmatpush1.msra.mxu0 %v4717
    %4914 = vmatprep.subr.mxu0 0.0
    %4915 = vmatpush1.msra.mxu0 %v4718
    %4916 = vmatprep.subr.mxu0 0.0
    %4917 = vmatpush1.msra.mxu0 %v4719
    %4918 = vmatprep.subr.mxu0 0.0
    %4919 = vmatpush1.msra.mxu0 %v4720
    %4920 = vmatprep.subr.mxu0 0.0
    %4921 = vmatpush1.msra.mxu0 %v4721
    %4922 = vmatprep.subr.mxu0 0.0
    %4923 = vmatpush1.msra.mxu0 %v4722
    %4924 = vmatprep.subr.mxu0 0.0
    %4925 = vmatpush1.msra.mxu0 %v4723
    %4926 = vmatprep.subr.mxu0 0.0
    %4927 = vmatpush1.msra.mxu0 %v4724
    %4928 = vmatprep.subr.mxu0 0.0
    %4929 = vmatpush1.msra.mxu0 %v4725
    %4930 = vmatprep.subr.mxu0 0.0
    %4931 = vmatpush1.msra.mxu0 %v4726
    %4932 = vmatprep.subr.mxu0 0.0
    %4933 = vmatpush1.msra.mxu0 %v4727
    %4934 = vmatprep.subr.mxu0 0.0
    %4935 = vmatpush1.msra.mxu0 %v4728
    %4936 = vmatprep.subr.mxu0 0.0
    %4937 = vmatpush1.msra.mxu0 %v4729
    %4938 = vmatprep.subr.mxu0 0.0
    %4939 = vmatpush1.msra.mxu0 %v4730
    %4940 = vmatprep.mubr.f32.mxu0 %v3524
    %4941 = vmatmul.mubr.f32.gmra.mrb[0].mxu0 %v3444
    %v4942 = vpop.f32.mrb[0].mxu0
    %v4943 = vadd.f32 %v4798, %v4942
    %v4944 = vpop.f32.mrb[0].mxu0
    %4945 = vmatprep.mubr.f32.mxu0 %v3529
    %4946 = vmatmul.mubr.f32.gmra.mrb[0].mxu0 %v3449
    %v4947 = vpop.f32.mrb[0].mxu0
    %v4948 = vadd.f32 %v4803, %v4947
    %v4949 = vpop.f32.mrb[0].mxu0
    %4950 = vmatprep.mubr.f32.mxu0 %v3534
    %4951 = vmatmul.mubr.f32.gmra.mrb[0].mxu0 %v3454
    %v4952 = vpop.f32.mrb[0].mxu0
    %v4953 = vadd.f32 %v4808, %v4952
    %v4954 = vpop.f32.mrb[0].mxu0
    %4955 = vmatprep.mubr.f32.mxu0 %v3539
    %4956 = vmatmul.mubr.f32.gmra.mrb[0].mxu0 %v3459
    %v4957 = vpop.f32.mrb[0].mxu0
    %v4958 = vadd.f32 %v4813, %v4957
    %v4959 = vpop.f32.mrb[0].mxu0
    %4960 = vmatprep.mubr.f32.mxu0 %v3544
    %4961 = vmatmul.mubr.f32.gmra.mrb[0].mxu0 %v3464
    %v4962 = vpop.f32.mrb[0].mxu0
    %v4963 = vadd.f32 %v4818, %v4962
    %v4964 = vpop.f32.mrb[0].mxu0
    %4965 = vmatprep.mubr.f32.mxu0 %v3549
    %4966 = vmatmul.mubr.f32.gmra.mrb[0].mxu0 %v3469
    %v4967 = vpop.f32.mrb[0].mxu0
    %v4968 = vadd.f32 %v4823, %v4967
    %v4969 = vpop.f32.mrb[0].mxu0
    %4970 = vmatprep.mubr.f32.mxu0 %v3554
    %4971 = vmatmul.mubr.f32.gmra.mrb[0].mxu0 %v3474
    %v4972 = vpop.f32.mrb[0].mxu0
    %v4973 = vadd.f32 %v4828, %v4972
    %v4974 = vpop.f32.mrb[0].mxu0
    %4975 = vmatprep.mubr.f32.mxu0 %v3559
    %4976 = vmatmul.mubr.f32.gmra.mrb[0].mxu0 %v3479
    %v4977 = vpop.f32.mrb[0].mxu0
    %v4978 = vadd.f32 %v4833, %v4977
    %v4979 = vpop.f32.mrb[0].mxu0
    %4980 = vmatprep.mubr.f32.mxu0 %v3564
    %4981 = vmatmul.mubr.f32.gmra.mrb[0].mxu0 %v3484
    %v4982 = vpop.f32.mrb[0].mxu0
    %v4983 = vadd.f32 %v4838, %v4982
    %v4984 = vpop.f32.mrb[0].mxu0
    %4985 = vmatprep.mubr.f32.mxu0 %v3569
    %4986 = vmatmul.mubr.f32.gmra.mrb[0].mxu0 %v3489
    %v4987 = vpop.f32.mrb[0].mxu0
    %v4988 = vadd.f32 %v4843, %v4987
    %v4989 = vpop.f32.mrb[0].mxu0
    %4990 = vmatprep.mubr.f32.mxu0 %v3574
    %4991 = vmatmul.mubr.f32.gmra.mrb[0].mxu0 %v3494
    %v4992 = vpop.f32.mrb[0].mxu0
    %v4993 = vadd.f32 %v4848, %v4992
    %v4994 = vpop.f32.mrb[0].mxu0
    %4995 = vmatprep.mubr.f32.mxu0 %v3579
    %4996 = vmatmul.mubr.f32.gmra.mrb[0].mxu0 %v3499
    %v4997 = vpop.f32.mrb[0].mxu0
    %v4998 = vadd.f32 %v4853, %v4997
    %v4999 = vpop.f32.mrb[0].mxu0
    %5000 = vmatprep.mubr.f32.mxu0 %v3584
    %5001 = vmatmul.mubr.f32.gmra.mrb[0].mxu0 %v3504
    %v5002 = vpop.f32.mrb[0].mxu0
    %v5003 = vadd.f32 %v4858, %v5002
    %v5004 = vpop.f32.mrb[0].mxu0
    %5005 = vmatprep.mubr.f32.mxu0 %v3589
    %5006 = vmatmul.mubr.f32.gmra.mrb[0].mxu0 %v3509
    %v5007 = vpop.f32.mrb[0].mxu0
    %v5008 = vadd.f32 %v4863, %v5007
    %v5009 = vpop.f32.mrb[0].mxu0
    %5010 = vmatprep.mubr.f32.mxu0 %v3594
    %5011 = vmatmul.mubr.f32.gmra.mrb[0].mxu0 %v3514
    %v5012 = vpop.f32.mrb[0].mxu0
    %v5013 = vadd.f32 %v4868, %v5012
    %v5014 = vpop.f32.mrb[0].mxu0
    %5015 = vmatprep.mubr.f32.mxu0 %v3599
    %5016 = vmatmul.mubr.f32.gmra.mrb[0].mxu0 %v3519
    %v5017 = vpop.f32.mrb[0].mxu0
    %v5018 = vadd.f32 %v4873, %v5017
    %v5019 = vpop.f32.mrb[0].mxu0
    %5020 = vdwg.mxu0
    %v5021 = vld [vmem:[%s15] sm:$0x1]
    %v5023 = vlaneseq
    %v5024 = vshrl.u32 %v5023, 7
    %v5025 = vsub.s32 0, %v5024
    %v5026 = vrot.slane %v5021, %v5025
    %v5028 = vadd.f32 %v3878, %v5026
    %v5029 = vadd.f32 %v3883, %v5026
    %v5030 = vadd.f32 %v3888, %v5026
    %v5031 = vadd.f32 %v3893, %v5026
    %v5032 = vadd.f32 %v3898, %v5026
    %v5033 = vadd.f32 %v3903, %v5026
    %v5034 = vadd.f32 %v3908, %v5026
    %v5035 = vadd.f32 %v3913, %v5026
    %v5036 = vadd.f32 %v3918, %v5026
    %v5037 = vadd.f32 %v3923, %v5026
    %v5038 = vadd.f32 %v3928, %v5026
    %v5039 = vadd.f32 %v3933, %v5026
    %v5040 = vadd.f32 %v3938, %v5026
    %v5041 = vadd.f32 %v3943, %v5026
    %v5042 = vadd.f32 %v3948, %v5026
    %v5043 = vadd.f32 %v3953, %v5026
    %v5044 = vadd.f32 %v4233, %v5026
    %v5045 = vadd.f32 %v4238, %v5026
    %v5046 = vadd.f32 %v4243, %v5026
    %v5047 = vadd.f32 %v4248, %v5026
    %v5048 = vadd.f32 %v4253, %v5026
    %v5049 = vadd.f32 %v4258, %v5026
    %v5050 = vadd.f32 %v4263, %v5026
    %v5051 = vadd.f32 %v4268, %v5026
    %v5052 = vadd.f32 %v4273, %v5026
    %v5053 = vadd.f32 %v4278, %v5026
    %v5054 = vadd.f32 %v4283, %v5026
    %v5055 = vadd.f32 %v4288, %v5026
    %v5056 = vadd.f32 %v4293, %v5026
    %v5057 = vadd.f32 %v4298, %v5026
    %v5058 = vadd.f32 %v4303, %v5026
    %v5059 = vadd.f32 %v4308, %v5026
    %v5060 = vadd.f32 %v4588, %v5026
    %v5061 = vadd.f32 %v4593, %v5026
    %v5062 = vadd.f32 %v4598, %v5026
    %v5063 = vadd.f32 %v4603, %v5026
    %v5064 = vadd.f32 %v4608, %v5026
    %v5065 = vadd.f32 %v4613, %v5026
    %v5066 = vadd.f32 %v4618, %v5026
    %v5067 = vadd.f32 %v4623, %v5026
    %v5068 = vadd.f32 %v4628, %v5026
    %v5069 = vadd.f32 %v4633, %v5026
    %v5070 = vadd.f32 %v4638, %v5026
    %v5071 = vadd.f32 %v4643, %v5026
    %v5072 = vadd.f32 %v4648, %v5026
    %v5073 = vadd.f32 %v4653, %v5026
    %v5074 = vadd.f32 %v4658, %v5026
    %v5075 = vadd.f32 %v4663, %v5026
    %v5076 = vadd.f32 %v4943, %v5026
    %v5077 = vadd.f32 %v4948, %v5026
    %v5078 = vadd.f32 %v4953, %v5026
    %v5079 = vadd.f32 %v4958, %v5026
    %v5080 = vadd.f32 %v4963, %v5026
    %v5081 = vadd.f32 %v4968, %v5026
    %v5082 = vadd.f32 %v4973, %v5026
    %v5083 = vadd.f32 %v4978, %v5026
    %v5084 = vadd.f32 %v4983, %v5026
    %v5085 = vadd.f32 %v4988, %v5026
    %v5086 = vadd.f32 %v4993, %v5026
    %v5087 = vadd.f32 %v4998, %v5026
    %v5088 = vadd.f32 %v5003, %v5026
    %v5089 = vadd.f32 %v5008, %v5026
    %v5090 = vadd.f32 %v5013, %v5026
    %v5091 = vadd.f32 %v5018, %v5026
    %v5092 = vtanh.pop %v5028
    %v5093 = vtanh.pop %v5029
    %v5094 = vtanh.pop %v5030
    %v5095 = vtanh.pop %v5031
    %v5096 = vtanh.pop %v5032
    %v5097 = vtanh.pop %v5033
    %v5098 = vtanh.pop %v5034
    %v5099 = vtanh.pop %v5035
    %v5100 = vtanh.pop %v5036
    %v5101 = vtanh.pop %v5037
    %v5102 = vtanh.pop %v5038
    %v5103 = vtanh.pop %v5039
    %v5104 = vtanh.pop %v5040
    %v5105 = vtanh.pop %v5041
    %v5106 = vtanh.pop %v5042
    %v5107 = vtanh.pop %v5043
    %v5108 = vtanh.pop %v5044
    %v5109 = vtanh.pop %v5045
    %v5110 = vtanh.pop %v5046
    %v5111 = vtanh.pop %v5047
    %v5112 = vtanh.pop %v5048
    %v5113 = vtanh.pop %v5049
    %v5114 = vtanh.pop %v5050
    %v5115 = vtanh.pop %v5051
    %v5116 = vtanh.pop %v5052
    %v5117 = vtanh.pop %v5053
    %v5118 = vtanh.pop %v5054
    %v5119 = vtanh.pop %v5055
    %v5120 = vtanh.pop %v5056
    %v5121 = vtanh.pop %v5057
    %v5122 = vtanh.pop %v5058
    %v5123 = vtanh.pop %v5059
    %v5124 = vtanh.pop %v5060
    %v5125 = vtanh.pop %v5061
    %v5126 = vtanh.pop %v5062
    %v5127 = vtanh.pop %v5063
    %v5128 = vtanh.pop %v5064
    %v5129 = vtanh.pop %v5065
    %v5130 = vtanh.pop %v5066
    %v5131 = vtanh.pop %v5067
    %v5132 = vtanh.pop %v5068
    %v5133 = vtanh.pop %v5069
    %v5134 = vtanh.pop %v5070
    %v5135 = vtanh.pop %v5071
    %v5136 = vtanh.pop %v5072
    %v5137 = vtanh.pop %v5073
    %v5138 = vtanh.pop %v5074
    %v5139 = vtanh.pop %v5075
    %v5140 = vtanh.pop %v5076
    %v5141 = vtanh.pop %v5077
    %v5142 = vtanh.pop %v5078
    %v5143 = vtanh.pop %v5079
    %v5144 = vtanh.pop %v5080
    %v5145 = vtanh.pop %v5081
    %v5146 = vtanh.pop %v5082
    %v5147 = vtanh.pop %v5083
    %v5148 = vtanh.pop %v5084
    %v5149 = vtanh.pop %v5085
    %v5150 = vtanh.pop %v5086
    %v5151 = vtanh.pop %v5087
    %v5152 = vtanh.pop %v5088
    %v5153 = vtanh.pop %v5089
    %v5154 = vtanh.pop %v5090
    %v5155 = vtanh.pop %v5091
    %v5156 = vld [vmem:[#allocation7] sm:$0xff]
    %v5157 = vld [vmem:[#allocation7 + $0x8] sm:$0xff]
    %v5158 = vld [vmem:[#allocation7 + $0x10] sm:$0xff]
    %v5159 = vld [vmem:[#allocation7 + $0x18] sm:$0xff]
    %v5160 = vld [vmem:[#allocation7 + $0x20] sm:$0xff]
    %v5161 = vld [vmem:[#allocation7 + $0x28] sm:$0xff]
    %v5162 = vld [vmem:[#allocation7 + $0x30] sm:$0xff]
    %v5163 = vld [vmem:[#allocation7 + $0x38] sm:$0xff]
    %v5164 = vld [vmem:[#allocation7 + $0x40] sm:$0xff]
    %v5165 = vld [vmem:[#allocation7 + $0x48] sm:$0xff]
    %v5166 = vld [vmem:[#allocation7 + $0x50] sm:$0xff]
    %v5167 = vld [vmem:[#allocation7 + $0x58] sm:$0xff]
    %v5168 = vld [vmem:[#allocation7 + $0x60] sm:$0xff]
    %v5169 = vld [vmem:[#allocation7 + $0x68] sm:$0xff]
    %v5170 = vld [vmem:[#allocation7 + $0x70] sm:$0xff]
    %v5171 = vld [vmem:[#allocation7 + $0x78] sm:$0xff]
    %v5172 = vld [vmem:[#allocation7 + $0x80] sm:$0xff]
    %v5173 = vld [vmem:[#allocation7 + $0x88] sm:$0xff]
    %v5174 = vld [vmem:[#allocation7 + $0x90] sm:$0xff]
    %v5175 = vld [vmem:[#allocation7 + $0x98] sm:$0xff]
    %v5176 = vld [vmem:[#allocation7 + $0xa0] sm:$0xff]
    %v5177 = vld [vmem:[#allocation7 + $0xa8] sm:$0xff]
    %v5178 = vld [vmem:[#allocation7 + $0xb0] sm:$0xff]
    %v5179 = vld [vmem:[#allocation7 + $0xb8] sm:$0xff]
    %v5180 = vld [vmem:[#allocation7 + $0xc0] sm:$0xff]
    %v5181 = vld [vmem:[#allocation7 + $0xc8] sm:$0xff]
    %v5182 = vld [vmem:[#allocation7 + $0xd0] sm:$0xff]
    %v5183 = vld [vmem:[#allocation7 + $0xd8] sm:$0xff]
    %v5184 = vld [vmem:[#allocation7 + $0xe0] sm:$0xff]
    %v5185 = vld [vmem:[#allocation7 + $0xe8] sm:$0xff]
    %v5186 = vld [vmem:[#allocation7 + $0xf0] sm:$0xff]
    %v5187 = vld [vmem:[#allocation7 + $0xf8] sm:$0xff]
    %v5188 = vld [vmem:[#allocation7 + $0x100] sm:$0xff]
    %v5189 = vld [vmem:[#allocation7 + $0x108] sm:$0xff]
    %v5190 = vld [vmem:[#allocation7 + $0x110] sm:$0xff]
    %v5191 = vld [vmem:[#allocation7 + $0x118] sm:$0xff]
    %v5192 = vld [vmem:[#allocation7 + $0x120] sm:$0xff]
    %v5193 = vld [vmem:[#allocation7 + $0x128] sm:$0xff]
    %v5194 = vld [vmem:[#allocation7 + $0x130] sm:$0xff]
    %v5195 = vld [vmem:[#allocation7 + $0x138] sm:$0xff]
    %v5196 = vld [vmem:[#allocation7 + $0x140] sm:$0xff]
    %v5197 = vld [vmem:[#allocation7 + $0x148] sm:$0xff]
    %v5198 = vld [vmem:[#allocation7 + $0x150] sm:$0xff]
    %v5199 = vld [vmem:[#allocation7 + $0x158] sm:$0xff]
    %v5200 = vld [vmem:[#allocation7 + $0x160] sm:$0xff]
    %v5201 = vld [vmem:[#allocation7 + $0x168] sm:$0xff]
    %v5202 = vld [vmem:[#allocation7 + $0x170] sm:$0xff]
    %v5203 = vld [vmem:[#allocation7 + $0x178] sm:$0xff]
    %v5204 = vld [vmem:[#allocation7 + $0x180] sm:$0xff]
    %v5205 = vld [vmem:[#allocation7 + $0x188] sm:$0xff]
    %v5206 = vld [vmem:[#allocation7 + $0x190] sm:$0xff]
    %v5207 = vld [vmem:[#allocation7 + $0x198] sm:$0xff]
    %v5208 = vld [vmem:[#allocation7 + $0x1a0] sm:$0xff]
    %v5209 = vld [vmem:[#allocation7 + $0x1a8] sm:$0xff]
    %v5210 = vld [vmem:[#allocation7 + $0x1b0] sm:$0xff]
    %v5211 = vld [vmem:[#allocation7 + $0x1b8] sm:$0xff]
    %v5212 = vld [vmem:[#allocation7 + $0x1c0] sm:$0xff]
    %v5213 = vld [vmem:[#allocation7 + $0x1c8] sm:$0xff]
    %v5214 = vld [vmem:[#allocation7 + $0x1d0] sm:$0xff]
    %v5215 = vld [vmem:[#allocation7 + $0x1d8] sm:$0xff]
    %v5216 = vld [vmem:[#allocation7 + $0x1e0] sm:$0xff]
    %v5217 = vld [vmem:[#allocation7 + $0x1e8] sm:$0xff]
    %v5218 = vld [vmem:[#allocation7 + $0x1f0] sm:$0xff]
    %v5219 = vld [vmem:[#allocation7 + $0x1f8] sm:$0xff]
    %v5220 = vld [vmem:[#allocation7 + $0x200] sm:$0xff]
    %v5221 = vld [vmem:[#allocation7 + $0x208] sm:$0xff]
    %v5222 = vld [vmem:[#allocation7 + $0x210] sm:$0xff]
    %v5223 = vld [vmem:[#allocation7 + $0x218] sm:$0xff]
    %v5224 = vld [vmem:[#allocation7 + $0x220] sm:$0xff]
    %v5225 = vld [vmem:[#allocation7 + $0x228] sm:$0xff]
    %v5226 = vld [vmem:[#allocation7 + $0x230] sm:$0xff]
    %v5227 = vld [vmem:[#allocation7 + $0x238] sm:$0xff]
    %v5228 = vld [vmem:[#allocation7 + $0x240] sm:$0xff]
    %v5229 = vld [vmem:[#allocation7 + $0x248] sm:$0xff]
    %v5230 = vld [vmem:[#allocation7 + $0x250] sm:$0xff]
    %v5231 = vld [vmem:[#allocation7 + $0x258] sm:$0xff]
    %v5232 = vld [vmem:[#allocation7 + $0x260] sm:$0xff]
    %v5233 = vld [vmem:[#allocation7 + $0x268] sm:$0xff]
    %v5234 = vld [vmem:[#allocation7 + $0x270] sm:$0xff]
    %v5235 = vld [vmem:[#allocation7 + $0x278] sm:$0xff]
    %v5236 = vld [vmem:[#allocation7 + $0x280] sm:$0xff]
    %v5237 = vld [vmem:[#allocation7 + $0x288] sm:$0xff]
    %v5238 = vld [vmem:[#allocation7 + $0x290] sm:$0xff]
    %v5239 = vld [vmem:[#allocation7 + $0x298] sm:$0xff]
    %v5240 = vld [vmem:[#allocation7 + $0x2a0] sm:$0xff]
    %v5241 = vld [vmem:[#allocation7 + $0x2a8] sm:$0xff]
    %v5242 = vld [vmem:[#allocation7 + $0x2b0] sm:$0xff]
    %v5243 = vld [vmem:[#allocation7 + $0x2b8] sm:$0xff]
    %v5244 = vld [vmem:[#allocation7 + $0x2c0] sm:$0xff]
    %v5245 = vld [vmem:[#allocation7 + $0x2c8] sm:$0xff]
    %v5246 = vld [vmem:[#allocation7 + $0x2d0] sm:$0xff]
    %v5247 = vld [vmem:[#allocation7 + $0x2d8] sm:$0xff]
    %v5248 = vld [vmem:[#allocation7 + $0x2e0] sm:$0xff]
    %v5249 = vld [vmem:[#allocation7 + $0x2e8] sm:$0xff]
    %v5250 = vld [vmem:[#allocation7 + $0x2f0] sm:$0xff]
    %v5251 = vld [vmem:[#allocation7 + $0x2f8] sm:$0xff]
    %v5252 = vld [vmem:[#allocation7 + $0x300] sm:$0xff]
    %v5253 = vld [vmem:[#allocation7 + $0x308] sm:$0xff]
    %v5254 = vld [vmem:[#allocation7 + $0x310] sm:$0xff]
    %v5255 = vld [vmem:[#allocation7 + $0x318] sm:$0xff]
    %v5256 = vld [vmem:[#allocation7 + $0x320] sm:$0xff]
    %v5257 = vld [vmem:[#allocation7 + $0x328] sm:$0xff]
    %v5258 = vld [vmem:[#allocation7 + $0x330] sm:$0xff]
    %v5259 = vld [vmem:[#allocation7 + $0x338] sm:$0xff]
    %v5260 = vld [vmem:[#allocation7 + $0x340] sm:$0xff]
    %v5261 = vld [vmem:[#allocation7 + $0x348] sm:$0xff]
    %v5262 = vld [vmem:[#allocation7 + $0x350] sm:$0xff]
    %v5263 = vld [vmem:[#allocation7 + $0x358] sm:$0xff]
    %v5264 = vld [vmem:[#allocation7 + $0x360] sm:$0xff]
    %v5265 = vld [vmem:[#allocation7 + $0x368] sm:$0xff]
    %v5266 = vld [vmem:[#allocation7 + $0x370] sm:$0xff]
    %v5267 = vld [vmem:[#allocation7 + $0x378] sm:$0xff]
    %v5268 = vld [vmem:[#allocation7 + $0x380] sm:$0xff]
    %v5269 = vld [vmem:[#allocation7 + $0x388] sm:$0xff]
    %v5270 = vld [vmem:[#allocation7 + $0x390] sm:$0xff]
    %v5271 = vld [vmem:[#allocation7 + $0x398] sm:$0xff]
    %v5272 = vld [vmem:[#allocation7 + $0x3a0] sm:$0xff]
    %v5273 = vld [vmem:[#allocation7 + $0x3a8] sm:$0xff]
    %v5274 = vld [vmem:[#allocation7 + $0x3b0] sm:$0xff]
    %v5275 = vld [vmem:[#allocation7 + $0x3b8] sm:$0xff]
    %v5276 = vld [vmem:[#allocation7 + $0x3c0] sm:$0xff]
    %v5277 = vld [vmem:[#allocation7 + $0x3c8] sm:$0xff]
    %v5278 = vld [vmem:[#allocation7 + $0x3d0] sm:$0xff]
    %v5279 = vld [vmem:[#allocation7 + $0x3d8] sm:$0xff]
    %v5280 = vld [vmem:[#allocation7 + $0x3e0] sm:$0xff]
    %v5281 = vld [vmem:[#allocation7 + $0x3e8] sm:$0xff]
    %v5282 = vld [vmem:[#allocation7 + $0x3f0] sm:$0xff]
    %v5283 = vld [vmem:[#allocation7 + $0x3f8] sm:$0xff]
    %v5284 = vld [vmem:[#allocation7 + $0x400] sm:$0xff]
    %v5285 = vld [vmem:[#allocation7 + $0x408] sm:$0xff]
    %v5286 = vld [vmem:[#allocation7 + $0x410] sm:$0xff]
    %v5287 = vld [vmem:[#allocation7 + $0x418] sm:$0xff]
    %v5288 = vld [vmem:[#allocation7 + $0x420] sm:$0xff]
    %v5289 = vld [vmem:[#allocation7 + $0x428] sm:$0xff]
    %v5290 = vld [vmem:[#allocation7 + $0x430] sm:$0xff]
    %v5291 = vld [vmem:[#allocation7 + $0x438] sm:$0xff]
    %v5292 = vld [vmem:[#allocation7 + $0x440] sm:$0xff]
    %v5293 = vld [vmem:[#allocation7 + $0x448] sm:$0xff]
    %v5294 = vld [vmem:[#allocation7 + $0x450] sm:$0xff]
    %v5295 = vld [vmem:[#allocation7 + $0x458] sm:$0xff]
    %v5296 = vld [vmem:[#allocation7 + $0x460] sm:$0xff]
    %v5297 = vld [vmem:[#allocation7 + $0x468] sm:$0xff]
    %v5298 = vld [vmem:[#allocation7 + $0x470] sm:$0xff]
    %v5299 = vld [vmem:[#allocation7 + $0x478] sm:$0xff]
    %v5300 = vld [vmem:[#allocation7 + $0x480] sm:$0xff]
    %v5301 = vld [vmem:[#allocation7 + $0x488] sm:$0xff]
    %v5302 = vld [vmem:[#allocation7 + $0x490] sm:$0xff]
    %v5303 = vld [vmem:[#allocation7 + $0x498] sm:$0xff]
    %v5304 = vld [vmem:[#allocation7 + $0x4a0] sm:$0xff]
    %v5305 = vld [vmem:[#allocation7 + $0x4a8] sm:$0xff]
    %v5306 = vld [vmem:[#allocation7 + $0x4b0] sm:$0xff]
    %v5307 = vld [vmem:[#allocation7 + $0x4b8] sm:$0xff]
    %v5308 = vld [vmem:[#allocation7 + $0x4c0] sm:$0xff]
    %v5309 = vld [vmem:[#allocation7 + $0x4c8] sm:$0xff]
    %v5310 = vld [vmem:[#allocation7 + $0x4d0] sm:$0xff]
    %v5311 = vld [vmem:[#allocation7 + $0x4d8] sm:$0xff]
    %v5312 = vld [vmem:[#allocation7 + $0x4e0] sm:$0xff]
    %v5313 = vld [vmem:[#allocation7 + $0x4e8] sm:$0xff]
    %v5314 = vld [vmem:[#allocation7 + $0x4f0] sm:$0xff]
    %v5315 = vld [vmem:[#allocation7 + $0x4f8] sm:$0xff]
    %v5316 = vld [vmem:[#allocation7 + $0x500] sm:$0xff]
    %v5317 = vld [vmem:[#allocation7 + $0x508] sm:$0xff]
    %v5318 = vld [vmem:[#allocation7 + $0x510] sm:$0xff]
    %v5319 = vld [vmem:[#allocation7 + $0x518] sm:$0xff]
    %v5320 = vld [vmem:[#allocation7 + $0x520] sm:$0xff]
    %v5321 = vld [vmem:[#allocation7 + $0x528] sm:$0xff]
    %v5322 = vld [vmem:[#allocation7 + $0x530] sm:$0xff]
    %v5323 = vld [vmem:[#allocation7 + $0x538] sm:$0xff]
    %v5324 = vld [vmem:[#allocation7 + $0x540] sm:$0xff]
    %v5325 = vld [vmem:[#allocation7 + $0x548] sm:$0xff]
    %v5326 = vld [vmem:[#allocation7 + $0x550] sm:$0xff]
    %v5327 = vld [vmem:[#allocation7 + $0x558] sm:$0xff]
    %v5328 = vld [vmem:[#allocation7 + $0x560] sm:$0xff]
    %v5329 = vld [vmem:[#allocation7 + $0x568] sm:$0xff]
    %v5330 = vld [vmem:[#allocation7 + $0x570] sm:$0xff]
    %v5331 = vld [vmem:[#allocation7 + $0x578] sm:$0xff]
    %v5332 = vld [vmem:[#allocation7 + $0x580] sm:$0xff]
    %v5333 = vld [vmem:[#allocation7 + $0x588] sm:$0xff]
    %v5334 = vld [vmem:[#allocation7 + $0x590] sm:$0xff]
    %v5335 = vld [vmem:[#allocation7 + $0x598] sm:$0xff]
    %v5336 = vld [vmem:[#allocation7 + $0x5a0] sm:$0xff]
    %v5337 = vld [vmem:[#allocation7 + $0x5a8] sm:$0xff]
    %v5338 = vld [vmem:[#allocation7 + $0x5b0] sm:$0xff]
    %v5339 = vld [vmem:[#allocation7 + $0x5b8] sm:$0xff]
    %v5340 = vld [vmem:[#allocation7 + $0x5c0] sm:$0xff]
    %v5341 = vld [vmem:[#allocation7 + $0x5c8] sm:$0xff]
    %v5342 = vld [vmem:[#allocation7 + $0x5d0] sm:$0xff]
    %v5343 = vld [vmem:[#allocation7 + $0x5d8] sm:$0xff]
    %v5344 = vld [vmem:[#allocation7 + $0x5e0] sm:$0xff]
    %v5345 = vld [vmem:[#allocation7 + $0x5e8] sm:$0xff]
    %v5346 = vld [vmem:[#allocation7 + $0x5f0] sm:$0xff]
    %v5347 = vld [vmem:[#allocation7 + $0x5f8] sm:$0xff]
    %v5348 = vld [vmem:[#allocation7 + $0x600] sm:$0xff]
    %v5349 = vld [vmem:[#allocation7 + $0x608] sm:$0xff]
    %v5350 = vld [vmem:[#allocation7 + $0x610] sm:$0xff]
    %v5351 = vld [vmem:[#allocation7 + $0x618] sm:$0xff]
    %v5352 = vld [vmem:[#allocation7 + $0x620] sm:$0xff]
    %v5353 = vld [vmem:[#allocation7 + $0x628] sm:$0xff]
    %v5354 = vld [vmem:[#allocation7 + $0x630] sm:$0xff]
    %v5355 = vld [vmem:[#allocation7 + $0x638] sm:$0xff]
    %v5356 = vld [vmem:[#allocation7 + $0x640] sm:$0xff]
    %v5357 = vld [vmem:[#allocation7 + $0x648] sm:$0xff]
    %v5358 = vld [vmem:[#allocation7 + $0x650] sm:$0xff]
    %v5359 = vld [vmem:[#allocation7 + $0x658] sm:$0xff]
    %v5360 = vld [vmem:[#allocation7 + $0x660] sm:$0xff]
    %v5361 = vld [vmem:[#allocation7 + $0x668] sm:$0xff]
    %v5362 = vld [vmem:[#allocation7 + $0x670] sm:$0xff]
    %v5363 = vld [vmem:[#allocation7 + $0x678] sm:$0xff]
    %v5364 = vld [vmem:[#allocation7 + $0x680] sm:$0xff]
    %v5365 = vld [vmem:[#allocation7 + $0x688] sm:$0xff]
    %v5366 = vld [vmem:[#allocation7 + $0x690] sm:$0xff]
    %v5367 = vld [vmem:[#allocation7 + $0x698] sm:$0xff]
    %v5368 = vld [vmem:[#allocation7 + $0x6a0] sm:$0xff]
    %v5369 = vld [vmem:[#allocation7 + $0x6a8] sm:$0xff]
    %v5370 = vld [vmem:[#allocation7 + $0x6b0] sm:$0xff]
    %v5371 = vld [vmem:[#allocation7 + $0x6b8] sm:$0xff]
    %v5372 = vld [vmem:[#allocation7 + $0x6c0] sm:$0xff]
    %v5373 = vld [vmem:[#allocation7 + $0x6c8] sm:$0xff]
    %v5374 = vld [vmem:[#allocation7 + $0x6d0] sm:$0xff]
    %v5375 = vld [vmem:[#allocation7 + $0x6d8] sm:$0xff]
    %v5376 = vld [vmem:[#allocation7 + $0x6e0] sm:$0xff]
    %v5377 = vld [vmem:[#allocation7 + $0x6e8] sm:$0xff]
    %v5378 = vld [vmem:[#allocation7 + $0x6f0] sm:$0xff]
    %v5379 = vld [vmem:[#allocation7 + $0x6f8] sm:$0xff]
    %v5380 = vld [vmem:[#allocation7 + $0x700] sm:$0xff]
    %v5381 = vld [vmem:[#allocation7 + $0x708] sm:$0xff]
    %v5382 = vld [vmem:[#allocation7 + $0x710] sm:$0xff]
    %v5383 = vld [vmem:[#allocation7 + $0x718] sm:$0xff]
    %v5384 = vld [vmem:[#allocation7 + $0x720] sm:$0xff]
    %v5385 = vld [vmem:[#allocation7 + $0x728] sm:$0xff]
    %v5386 = vld [vmem:[#allocation7 + $0x730] sm:$0xff]
    %v5387 = vld [vmem:[#allocation7 + $0x738] sm:$0xff]
    %v5388 = vld [vmem:[#allocation7 + $0x740] sm:$0xff]
    %v5389 = vld [vmem:[#allocation7 + $0x748] sm:$0xff]
    %v5390 = vld [vmem:[#allocation7 + $0x750] sm:$0xff]
    %v5391 = vld [vmem:[#allocation7 + $0x758] sm:$0xff]
    %v5392 = vld [vmem:[#allocation7 + $0x760] sm:$0xff]
    %v5393 = vld [vmem:[#allocation7 + $0x768] sm:$0xff]
    %v5394 = vld [vmem:[#allocation7 + $0x770] sm:$0xff]
    %v5395 = vld [vmem:[#allocation7 + $0x778] sm:$0xff]
    %v5396 = vld [vmem:[#allocation7 + $0x780] sm:$0xff]
    %v5397 = vld [vmem:[#allocation7 + $0x788] sm:$0xff]
    %v5398 = vld [vmem:[#allocation7 + $0x790] sm:$0xff]
    %v5399 = vld [vmem:[#allocation7 + $0x798] sm:$0xff]
    %v5400 = vld [vmem:[#allocation7 + $0x7a0] sm:$0xff]
    %v5401 = vld [vmem:[#allocation7 + $0x7a8] sm:$0xff]
    %v5402 = vld [vmem:[#allocation7 + $0x7b0] sm:$0xff]
    %v5403 = vld [vmem:[#allocation7 + $0x7b8] sm:$0xff]
    %v5404 = vld [vmem:[#allocation7 + $0x7c0] sm:$0xff]
    %v5405 = vld [vmem:[#allocation7 + $0x7c8] sm:$0xff]
    %v5406 = vld [vmem:[#allocation7 + $0x7d0] sm:$0xff]
    %v5407 = vld [vmem:[#allocation7 + $0x7d8] sm:$0xff]
    %v5408 = vld [vmem:[#allocation7 + $0x7e0] sm:$0xff]
    %v5409 = vld [vmem:[#allocation7 + $0x7e8] sm:$0xff]
    %v5410 = vld [vmem:[#allocation7 + $0x7f0] sm:$0xff]
    %v5411 = vld [vmem:[#allocation7 + $0x7f8] sm:$0xff]
    %5412 = vmatprep.subr.mxu0 0.0
    %5413 = vmatpush1.msra.mxu0 %v5092
    %5414 = vmatprep.subr.mxu0 0.0
    %5415 = vmatpush1.msra.mxu0 %v5093
    %5416 = vmatprep.subr.mxu0 0.0
    %5417 = vmatpush1.msra.mxu0 %v5094
    %5418 = vmatprep.subr.mxu0 0.0
    %5419 = vmatpush1.msra.mxu0 %v5095
    %5420 = vmatprep.subr.mxu0 0.0
    %5421 = vmatpush1.msra.mxu0 %v5096
    %5422 = vmatprep.subr.mxu0 0.0
    %5423 = vmatpush1.msra.mxu0 %v5097
    %5424 = vmatprep.subr.mxu0 0.0
    %5425 = vmatpush1.msra.mxu0 %v5098
    %5426 = vmatprep.subr.mxu0 0.0
    %5427 = vmatpush1.msra.mxu0 %v5099
    %5428 = vmatprep.subr.mxu0 0.0
    %5429 = vmatpush1.msra.mxu0 %v5100
    %5430 = vmatprep.subr.mxu0 0.0
    %5431 = vmatpush1.msra.mxu0 %v5101
    %5432 = vmatprep.subr.mxu0 0.0
    %5433 = vmatpush1.msra.mxu0 %v5102
    %5434 = vmatprep.subr.mxu0 0.0
    %5435 = vmatpush1.msra.mxu0 %v5103
    %5436 = vmatprep.subr.mxu0 0.0
    %5437 = vmatpush1.msra.mxu0 %v5104
    %5438 = vmatprep.subr.mxu0 0.0
    %5439 = vmatpush1.msra.mxu0 %v5105
    %5440 = vmatprep.subr.mxu0 0.0
    %5441 = vmatpush1.msra.mxu0 %v5106
    %5442 = vmatprep.subr.mxu0 0.0
    %5443 = vmatpush1.msra.mxu0 %v5107
    %5444 = vmatprep.subr.mxu0 0.0
    %5445 = vmatpush1.msra.mxu0 %v5108
    %5446 = vmatprep.subr.mxu0 0.0
    %5447 = vmatpush1.msra.mxu0 %v5109
    %5448 = vmatprep.subr.mxu0 0.0
    %5449 = vmatpush1.msra.mxu0 %v5110
    %5450 = vmatprep.subr.mxu0 0.0
    %5451 = vmatpush1.msra.mxu0 %v5111
    %5452 = vmatprep.subr.mxu0 0.0
    %5453 = vmatpush1.msra.mxu0 %v5112
    %5454 = vmatprep.subr.mxu0 0.0
    %5455 = vmatpush1.msra.mxu0 %v5113
    %5456 = vmatprep.subr.mxu0 0.0
    %5457 = vmatpush1.msra.mxu0 %v5114
    %5458 = vmatprep.subr.mxu0 0.0
    %5459 = vmatpush1.msra.mxu0 %v5115
    %5460 = vmatprep.subr.mxu0 0.0
    %5461 = vmatpush1.msra.mxu0 %v5116
    %5462 = vmatprep.subr.mxu0 0.0
    %5463 = vmatpush1.msra.mxu0 %v5117
    %5464 = vmatprep.subr.mxu0 0.0
    %5465 = vmatpush1.msra.mxu0 %v5118
    %5466 = vmatprep.subr.mxu0 0.0
    %5467 = vmatpush1.msra.mxu0 %v5119
    %5468 = vmatprep.subr.mxu0 0.0
    %5469 = vmatpush1.msra.mxu0 %v5120
    %5470 = vmatprep.subr.mxu0 0.0
    %5471 = vmatpush1.msra.mxu0 %v5121
    %5472 = vmatprep.subr.mxu0 0.0
    %5473 = vmatpush1.msra.mxu0 %v5122
    %5474 = vmatprep.subr.mxu0 0.0
    %5475 = vmatpush1.msra.mxu0 %v5123
    %5476 = vmatprep.mubr.f32.mxu0 %v5157
    %5477 = vmatmul.mubr.f32.gmra.mrb[0].mxu0 %v5156
    %v5478 = vpop.f32.mrb[0].mxu0
    %v5479 = vadd.f32 0.0, %v5478
    %v5480 = vpop.f32.mrb[0].mxu0
    %5481 = vmatprep.mubr.f32.mxu0 %v5161
    %5482 = vmatmul.mubr.f32.gmra.mrb[0].mxu0 %v5160
    %v5483 = vpop.f32.mrb[0].mxu0
    %v5484 = vadd.f32 0.0, %v5483
    %v5485 = vpop.f32.mrb[0].mxu0
    %5486 = vmatprep.mubr.f32.mxu0 %v5165
    %5487 = vmatmul.mubr.f32.gmra.mrb[0].mxu0 %v5164
    %v5488 = vpop.f32.mrb[0].mxu0
    %v5489 = vadd.f32 0.0, %v5488
    %v5490 = vpop.f32.mrb[0].mxu0
    %5491 = vmatprep.mubr.f32.mxu0 %v5169
    %5492 = vmatmul.mubr.f32.gmra.mrb[0].mxu0 %v5168
    %v5493 = vpop.f32.mrb[0].mxu0
    %v5494 = vadd.f32 0.0, %v5493
    %v5495 = vpop.f32.mrb[0].mxu0
    %5496 = vmatprep.mubr.f32.mxu0 %v5173
    %5497 = vmatmul.mubr.f32.gmra.mrb[0].mxu0 %v5172
    %v5498 = vpop.f32.mrb[0].mxu0
    %v5499 = vadd.f32 0.0, %v5498
    %v5500 = vpop.f32.mrb[0].mxu0
    %5501 = vmatprep.mubr.f32.mxu0 %v5177
    %5502 = vmatmul.mubr.f32.gmra.mrb[0].mxu0 %v5176
    %v5503 = vpop.f32.mrb[0].mxu0
    %v5504 = vadd.f32 0.0, %v5503
    %v5505 = vpop.f32.mrb[0].mxu0
    %5506 = vmatprep.mubr.f32.mxu0 %v5181
    %5507 = vmatmul.mubr.f32.gmra.mrb[0].mxu0 %v5180
    %v5508 = vpop.f32.mrb[0].mxu0
    %v5509 = vadd.f32 0.0, %v5508
    %v5510 = vpop.f32.mrb[0].mxu0
    %5511 = vmatprep.mubr.f32.mxu0 %v5185
    %5512 = vmatmul.mubr.f32.gmra.mrb[0].mxu0 %v5184
    %v5513 = vpop.f32.mrb[0].mxu0
    %v5514 = vadd.f32 0.0, %v5513
    %v5515 = vpop.f32.mrb[0].mxu0
    %5516 = vmatprep.mubr.f32.mxu0 %v5189
    %5517 = vmatmul.mubr.f32.gmra.mrb[0].mxu0 %v5188
    %v5518 = vpop.f32.mrb[0].mxu0
    %v5519 = vadd.f32 0.0, %v5518
    %v5520 = vpop.f32.mrb[0].mxu0
    %5521 = vmatprep.mubr.f32.mxu0 %v5193
    %5522 = vmatmul.mubr.f32.gmra.mrb[0].mxu0 %v5192
    %v5523 = vpop.f32.mrb[0].mxu0
    %v5524 = vadd.f32 0.0, %v5523
    %v5525 = vpop.f32.mrb[0].mxu0
    %5526 = vmatprep.mubr.f32.mxu0 %v5197
    %5527 = vmatmul.mubr.f32.gmra.mrb[0].mxu0 %v5196
    %v5528 = vpop.f32.mrb[0].mxu0
    %v5529 = vadd.f32 0.0, %v5528
    %v5530 = vpop.f32.mrb[0].mxu0
    %5531 = vmatprep.mubr.f32.mxu0 %v5201
    %5532 = vmatmul.mubr.f32.gmra.mrb[0].mxu0 %v5200
    %v5533 = vpop.f32.mrb[0].mxu0
    %v5534 = vadd.f32 0.0, %v5533
    %v5535 = vpop.f32.mrb[0].mxu0
    %5536 = vmatprep.mubr.f32.mxu0 %v5205
    %5537 = vmatmul.mubr.f32.gmra.mrb[0].mxu0 %v5204
    %v5538 = vpop.f32.mrb[0].mxu0
    %v5539 = vadd.f32 0.0, %v5538
    %v5540 = vpop.f32.mrb[0].mxu0
    %5541 = vmatprep.mubr.f32.mxu0 %v5209
    %5542 = vmatmul.mubr.f32.gmra.mrb[0].mxu0 %v5208
    %v5543 = vpop.f32.mrb[0].mxu0
    %v5544 = vadd.f32 0.0, %v5543
    %v5545 = vpop.f32.mrb[0].mxu0
    %5546 = vmatprep.mubr.f32.mxu0 %v5213
    %5547 = vmatmul.mubr.f32.gmra.mrb[0].mxu0 %v5212
    %v5548 = vpop.f32.mrb[0].mxu0
    %v5549 = vadd.f32 0.0, %v5548
    %v5550 = vpop.f32.mrb[0].mxu0
    %5551 = vmatprep.mubr.f32.mxu0 %v5217
    %5552 = vmatmul.mubr.f32.gmra.mrb[0].mxu0 %v5216
    %v5553 = vpop.f32.mrb[0].mxu0
    %v5554 = vadd.f32 0.0, %v5553
    %v5555 = vpop.f32.mrb[0].mxu0
    %5556 = vmatprep.mubr.f32.mxu0 %v5221
    %5557 = vmatmul.mubr.f32.gmra.mrb[0].mxu0 %v5220
    %v5558 = vpop.f32.mrb[0].mxu0
    %v5559 = vadd.f32 0.0, %v5558
    %v5560 = vpop.f32.mrb[0].mxu0
    %5561 = vmatprep.mubr.f32.mxu0 %v5225
    %5562 = vmatmul.mubr.f32.gmra.mrb[0].mxu0 %v5224
    %v5563 = vpop.f32.mrb[0].mxu0
    %v5564 = vadd.f32 0.0, %v5563
    %v5565 = vpop.f32.mrb[0].mxu0
    %5566 = vmatprep.mubr.f32.mxu0 %v5229
    %5567 = vmatmul.mubr.f32.gmra.mrb[0].mxu0 %v5228
    %v5568 = vpop.f32.mrb[0].mxu0
    %v5569 = vadd.f32 0.0, %v5568
    %v5570 = vpop.f32.mrb[0].mxu0
    %5571 = vmatprep.mubr.f32.mxu0 %v5233
    %5572 = vmatmul.mubr.f32.gmra.mrb[0].mxu0 %v5232
    %v5573 = vpop.f32.mrb[0].mxu0
    %v5574 = vadd.f32 0.0, %v5573
    %v5575 = vpop.f32.mrb[0].mxu0
    %5576 = vmatprep.mubr.f32.mxu0 %v5237
    %5577 = vmatmul.mubr.f32.gmra.mrb[0].mxu0 %v5236
    %v5578 = vpop.f32.mrb[0].mxu0
    %v5579 = vadd.f32 0.0, %v5578
    %v5580 = vpop.f32.mrb[0].mxu0
    %5581 = vmatprep.mubr.f32.mxu0 %v5241
    %5582 = vmatmul.mubr.f32.gmra.mrb[0].mxu0 %v5240
    %v5583 = vpop.f32.mrb[0].mxu0
    %v5584 = vadd.f32 0.0, %v5583
    %v5585 = vpop.f32.mrb[0].mxu0
    %5586 = vmatprep.mubr.f32.mxu0 %v5245
    %5587 = vmatmul.mubr.f32.gmra.mrb[0].mxu0 %v5244
    %v5588 = vpop.f32.mrb[0].mxu0
    %v5589 = vadd.f32 0.0, %v5588
    %v5590 = vpop.f32.mrb[0].mxu0
    %5591 = vmatprep.mubr.f32.mxu0 %v5249
    %5592 = vmatmul.mubr.f32.gmra.mrb[0].mxu0 %v5248
    %v5593 = vpop.f32.mrb[0].mxu0
    %v5594 = vadd.f32 0.0, %v5593
    %v5595 = vpop.f32.mrb[0].mxu0
    %5596 = vmatprep.mubr.f32.mxu0 %v5253
    %5597 = vmatmul.mubr.f32.gmra.mrb[0].mxu0 %v5252
    %v5598 = vpop.f32.mrb[0].mxu0
    %v5599 = vadd.f32 0.0, %v5598
    %v5600 = vpop.f32.mrb[0].mxu0
    %5601 = vmatprep.mubr.f32.mxu0 %v5257
    %5602 = vmatmul.mubr.f32.gmra.mrb[0].mxu0 %v5256
    %v5603 = vpop.f32.mrb[0].mxu0
    %v5604 = vadd.f32 0.0, %v5603
    %v5605 = vpop.f32.mrb[0].mxu0
    %5606 = vmatprep.mubr.f32.mxu0 %v5261
    %5607 = vmatmul.mubr.f32.gmra.mrb[0].mxu0 %v5260
    %v5608 = vpop.f32.mrb[0].mxu0
    %v5609 = vadd.f32 0.0, %v5608
    %v5610 = vpop.f32.mrb[0].mxu0
    %5611 = vmatprep.mubr.f32.mxu0 %v5265
    %5612 = vmatmul.mubr.f32.gmra.mrb[0].mxu0 %v5264
    %v5613 = vpop.f32.mrb[0].mxu0
    %v5614 = vadd.f32 0.0, %v5613
    %v5615 = vpop.f32.mrb[0].mxu0
    %5616 = vmatprep.mubr.f32.mxu0 %v5269
    %5617 = vmatmul.mubr.f32.gmra.mrb[0].mxu0 %v5268
    %v5618 = vpop.f32.mrb[0].mxu0
    %v5619 = vadd.f32 0.0, %v5618
    %v5620 = vpop.f32.mrb[0].mxu0
    %5621 = vmatprep.mubr.f32.mxu0 %v5273
    %5622 = vmatmul.mubr.f32.gmra.mrb[0].mxu0 %v5272
    %v5623 = vpop.f32.mrb[0].mxu0
    %v5624 = vadd.f32 0.0, %v5623
    %v5625 = vpop.f32.mrb[0].mxu0
    %5626 = vmatprep.mubr.f32.mxu0 %v5277
    %5627 = vmatmul.mubr.f32.gmra.mrb[0].mxu0 %v5276
    %v5628 = vpop.f32.mrb[0].mxu0
    %v5629 = vadd.f32 0.0, %v5628
    %v5630 = vpop.f32.mrb[0].mxu0
    %5631 = vmatprep.mubr.f32.mxu0 %v5281
    %5632 = vmatmul.mubr.f32.gmra.mrb[0].mxu0 %v5280
    %v5633 = vpop.f32.mrb[0].mxu0
    %v5634 = vadd.f32 0.0, %v5633
    %v5635 = vpop.f32.mrb[0].mxu0
    %5636 = vmatprep.mubr.f32.mxu0 %v5285
    %5637 = vmatmul.mubr.f32.gmra.mrb[0].mxu0 %v5284
    %v5638 = vpop.f32.mrb[0].mxu0
    %v5639 = vadd.f32 0.0, %v5638
    %v5640 = vpop.f32.mrb[0].mxu0
    %5641 = vmatprep.mubr.f32.mxu0 %v5289
    %5642 = vmatmul.mubr.f32.gmra.mrb[0].mxu0 %v5288
    %v5643 = vpop.f32.mrb[0].mxu0
    %v5644 = vadd.f32 0.0, %v5643
    %v5645 = vpop.f32.mrb[0].mxu0
    %5646 = vmatprep.mubr.f32.mxu0 %v5293
    %5647 = vmatmul.mubr.f32.gmra.mrb[0].mxu0 %v5292
    %v5648 = vpop.f32.mrb[0].mxu0
    %v5649 = vadd.f32 0.0, %v5648
    %v5650 = vpop.f32.mrb[0].mxu0
    %5651 = vmatprep.mubr.f32.mxu0 %v5297
    %5652 = vmatmul.mubr.f32.gmra.mrb[0].mxu0 %v5296
    %v5653 = vpop.f32.mrb[0].mxu0
    %v5654 = vadd.f32 0.0, %v5653
    %v5655 = vpop.f32.mrb[0].mxu0
    %5656 = vmatprep.mubr.f32.mxu0 %v5301
    %5657 = vmatmul.mubr.f32.gmra.mrb[0].mxu0 %v5300
    %v5658 = vpop.f32.mrb[0].mxu0
    %v5659 = vadd.f32 0.0, %v5658
    %v5660 = vpop.f32.mrb[0].mxu0
    %5661 = vmatprep.mubr.f32.mxu0 %v5305
    %5662 = vmatmul.mubr.f32.gmra.mrb[0].mxu0 %v5304
    %v5663 = vpop.f32.mrb[0].mxu0
    %v5664 = vadd.f32 0.0, %v5663
    %v5665 = vpop.f32.mrb[0].mxu0
    %5666 = vmatprep.mubr.f32.mxu0 %v5309
    %5667 = vmatmul.mubr.f32.gmra.mrb[0].mxu0 %v5308
    %v5668 = vpop.f32.mrb[0].mxu0
    %v5669 = vadd.f32 0.0, %v5668
    %v5670 = vpop.f32.mrb[0].mxu0
    %5671 = vmatprep.mubr.f32.mxu0 %v5313
    %5672 = vmatmul.mubr.f32.gmra.mrb[0].mxu0 %v5312
    %v5673 = vpop.f32.mrb[0].mxu0
    %v5674 = vadd.f32 0.0, %v5673
    %v5675 = vpop.f32.mrb[0].mxu0
    %5676 = vmatprep.mubr.f32.mxu0 %v5317
    %5677 = vmatmul.mubr.f32.gmra.mrb[0].mxu0 %v5316
    %v5678 = vpop.f32.mrb[0].mxu0
    %v5679 = vadd.f32 0.0, %v5678
    %v5680 = vpop.f32.mrb[0].mxu0
    %5681 = vmatprep.mubr.f32.mxu0 %v5321
    %5682 = vmatmul.mubr.f32.gmra.mrb[0].mxu0 %v5320
    %v5683 = vpop.f32.mrb[0].mxu0
    %v5684 = vadd.f32 0.0, %v5683
    %v5685 = vpop.f32.mrb[0].mxu0
    %5686 = vmatprep.mubr.f32.mxu0 %v5325
    %5687 = vmatmul.mubr.f32.gmra.mrb[0].mxu0 %v5324
    %v5688 = vpop.f32.mrb[0].mxu0
    %v5689 = vadd.f32 0.0, %v5688
    %v5690 = vpop.f32.mrb[0].mxu0
    %5691 = vmatprep.mubr.f32.mxu0 %v5329
    %5692 = vmatmul.mubr.f32.gmra.mrb[0].mxu0 %v5328
    %v5693 = vpop.f32.mrb[0].mxu0
    %v5694 = vadd.f32 0.0, %v5693
    %v5695 = vpop.f32.mrb[0].mxu0
    %5696 = vmatprep.mubr.f32.mxu0 %v5333
    %5697 = vmatmul.mubr.f32.gmra.mrb[0].mxu0 %v5332
    %v5698 = vpop.f32.mrb[0].mxu0
    %v5699 = vadd.f32 0.0, %v5698
    %v5700 = vpop.f32.mrb[0].mxu0
    %5701 = vmatprep.mubr.f32.mxu0 %v5337
    %5702 = vmatmul.mubr.f32.gmra.mrb[0].mxu0 %v5336
    %v5703 = vpop.f32.mrb[0].mxu0
    %v5704 = vadd.f32 0.0, %v5703
    %v5705 = vpop.f32.mrb[0].mxu0
    %5706 = vmatprep.mubr.f32.mxu0 %v5341
    %5707 = vmatmul.mubr.f32.gmra.mrb[0].mxu0 %v5340
    %v5708 = vpop.f32.mrb[0].mxu0
    %v5709 = vadd.f32 0.0, %v5708
    %v5710 = vpop.f32.mrb[0].mxu0
    %5711 = vmatprep.mubr.f32.mxu0 %v5345
    %5712 = vmatmul.mubr.f32.gmra.mrb[0].mxu0 %v5344
    %v5713 = vpop.f32.mrb[0].mxu0
    %v5714 = vadd.f32 0.0, %v5713
    %v5715 = vpop.f32.mrb[0].mxu0
    %5716 = vmatprep.mubr.f32.mxu0 %v5349
    %5717 = vmatmul.mubr.f32.gmra.mrb[0].mxu0 %v5348
    %v5718 = vpop.f32.mrb[0].mxu0
    %v5719 = vadd.f32 0.0, %v5718
    %v5720 = vpop.f32.mrb[0].mxu0
    %5721 = vmatprep.mubr.f32.mxu0 %v5353
    %5722 = vmatmul.mubr.f32.gmra.mrb[0].mxu0 %v5352
    %v5723 = vpop.f32.mrb[0].mxu0
    %v5724 = vadd.f32 0.0, %v5723
    %v5725 = vpop.f32.mrb[0].mxu0
    %5726 = vmatprep.mubr.f32.mxu0 %v5357
    %5727 = vmatmul.mubr.f32.gmra.mrb[0].mxu0 %v5356
    %v5728 = vpop.f32.mrb[0].mxu0
    %v5729 = vadd.f32 0.0, %v5728
    %v5730 = vpop.f32.mrb[0].mxu0
    %5731 = vmatprep.mubr.f32.mxu0 %v5361
    %5732 = vmatmul.mubr.f32.gmra.mrb[0].mxu0 %v5360
    %v5733 = vpop.f32.mrb[0].mxu0
    %v5734 = vadd.f32 0.0, %v5733
    %v5735 = vpop.f32.mrb[0].mxu0
    %5736 = vmatprep.mubr.f32.mxu0 %v5365
    %5737 = vmatmul.mubr.f32.gmra.mrb[0].mxu0 %v5364
    %v5738 = vpop.f32.mrb[0].mxu0
    %v5739 = vadd.f32 0.0, %v5738
    %v5740 = vpop.f32.mrb[0].mxu0
    %5741 = vmatprep.mubr.f32.mxu0 %v5369
    %5742 = vmatmul.mubr.f32.gmra.mrb[0].mxu0 %v5368
    %v5743 = vpop.f32.mrb[0].mxu0
    %v5744 = vadd.f32 0.0, %v5743
    %v5745 = vpop.f32.mrb[0].mxu0
    %5746 = vmatprep.mubr.f32.mxu0 %v5373
    %5747 = vmatmul.mubr.f32.gmra.mrb[0].mxu0 %v5372
    %v5748 = vpop.f32.mrb[0].mxu0
    %v5749 = vadd.f32 0.0, %v5748
    %v5750 = vpop.f32.mrb[0].mxu0
    %5751 = vmatprep.mubr.f32.mxu0 %v5377
    %5752 = vmatmul.mubr.f32.gmra.mrb[0].mxu0 %v5376
    %v5753 = vpop.f32.mrb[0].mxu0
    %v5754 = vadd.f32 0.0, %v5753
    %v5755 = vpop.f32.mrb[0].mxu0
    %5756 = vmatprep.mubr.f32.mxu0 %v5381
    %5757 = vmatmul.mubr.f32.gmra.mrb[0].mxu0 %v5380
    %v5758 = vpop.f32.mrb[0].mxu0
    %v5759 = vadd.f32 0.0, %v5758
    %v5760 = vpop.f32.mrb[0].mxu0
    %5761 = vmatprep.mubr.f32.mxu0 %v5385
    %5762 = vmatmul.mubr.f32.gmra.mrb[0].mxu0 %v5384
    %v5763 = vpop.f32.mrb[0].mxu0
    %v5764 = vadd.f32 0.0, %v5763
    %v5765 = vpop.f32.mrb[0].mxu0
    %5766 = vmatprep.mubr.f32.mxu0 %v5389
    %5767 = vmatmul.mubr.f32.gmra.mrb[0].mxu0 %v5388
    %v5768 = vpop.f32.mrb[0].mxu0
    %v5769 = vadd.f32 0.0, %v5768
    %v5770 = vpop.f32.mrb[0].mxu0
    %5771 = vmatprep.mubr.f32.mxu0 %v5393
    %5772 = vmatmul.mubr.f32.gmra.mrb[0].mxu0 %v5392
    %v5773 = vpop.f32.mrb[0].mxu0
    %v5774 = vadd.f32 0.0, %v5773
    %v5775 = vpop.f32.mrb[0].mxu0
    %5776 = vmatprep.mubr.f32.mxu0 %v5397
    %5777 = vmatmul.mubr.f32.gmra.mrb[0].mxu0 %v5396
    %v5778 = vpop.f32.mrb[0].mxu0
    %v5779 = vadd.f32 0.0, %v5778
    %v5780 = vpop.f32.mrb[0].mxu0
    %5781 = vmatprep.mubr.f32.mxu0 %v5401
    %5782 = vmatmul.mubr.f32.gmra.mrb[0].mxu0 %v5400
    %v5783 = vpop.f32.mrb[0].mxu0
    %v5784 = vadd.f32 0.0, %v5783
    %v5785 = vpop.f32.mrb[0].mxu0
    %5786 = vmatprep.mubr.f32.mxu0 %v5405
    %5787 = vmatmul.mubr.f32.gmra.mrb[0].mxu0 %v5404
    %v5788 = vpop.f32.mrb[0].mxu0
    %v5789 = vadd.f32 0.0, %v5788
    %v5790 = vpop.f32.mrb[0].mxu0
    %5791 = vmatprep.mubr.f32.mxu0 %v5409
    %5792 = vmatmul.mubr.f32.gmra.mrb[0].mxu0 %v5408
    %v5793 = vpop.f32.mrb[0].mxu0
    %v5794 = vadd.f32 0.0, %v5793
    %v5795 = vpop.f32.mrb[0].mxu0
    %5796 = vdwg.mxu0
    %5797 = vmatprep.subr.mxu0 0.0
    %5798 = vmatpush1.msra.mxu0 %v5124
    %5799 = vmatprep.subr.mxu0 0.0
    %5800 = vmatpush1.msra.mxu0 %v5125
    %5801 = vmatprep.subr.mxu0 0.0
    %5802 = vmatpush1.msra.mxu0 %v5126
    %5803 = vmatprep.subr.mxu0 0.0
    %5804 = vmatpush1.msra.mxu0 %v5127
    %5805 = vmatprep.subr.mxu0 0.0
    %5806 = vmatpush1.msra.mxu0 %v5128
    %5807 = vmatprep.subr.mxu0 0.0
    %5808 = vmatpush1.msra.mxu0 %v5129
    %5809 = vmatprep.subr.mxu0 0.0
    %5810 = vmatpush1.msra.mxu0 %v5130
    %5811 = vmatprep.subr.mxu0 0.0
    %5812 = vmatpush1.msra.mxu0 %v5131
    %5813 = vmatprep.subr.mxu0 0.0
    %5814 = vmatpush1.msra.mxu0 %v5132
    %5815 = vmatprep.subr.mxu0 0.0
    %5816 = vmatpush1.msra.mxu0 %v5133
    %5817 = vmatprep.subr.mxu0 0.0
    %5818 = vmatpush1.msra.mxu0 %v5134
    %5819 = vmatprep.subr.mxu0 0.0
    %5820 = vmatpush1.msra.mxu0 %v5135
    %5821 = vmatprep.subr.mxu0 0.0
    %5822 = vmatpush1.msra.mxu0 %v5136
    %5823 = vmatprep.subr.mxu0 0.0
    %5824 = vmatpush1.msra.mxu0 %v5137
    %5825 = vmatprep.subr.mxu0 0.0
    %5826 = vmatpush1.msra.mxu0 %v5138
    %5827 = vmatprep.subr.mxu0 0.0
    %5828 = vmatpush1.msra.mxu0 %v5139
    %5829 = vmatprep.subr.mxu0 0.0
    %5830 = vmatpush1.msra.mxu0 %v5140
    %5831 = vmatprep.subr.mxu0 0.0
    %5832 = vmatpush1.msra.mxu0 %v5141
    %5833 = vmatprep.subr.mxu0 0.0
    %5834 = vmatpush1.msra.mxu0 %v5142
    %5835 = vmatprep.subr.mxu0 0.0
    %5836 = vmatpush1.msra.mxu0 %v5143
    %5837 = vmatprep.subr.mxu0 0.0
    %5838 = vmatpush1.msra.mxu0 %v5144
    %5839 = vmatprep.subr.mxu0 0.0
    %5840 = vmatpush1.msra.mxu0 %v5145
    %5841 = vmatprep.subr.mxu0 0.0
    %5842 = vmatpush1.msra.mxu0 %v5146
    %5843 = vmatprep.subr.mxu0 0.0
    %5844 = vmatpush1.msra.mxu0 %v5147
    %5845 = vmatprep.subr.mxu0 0.0
    %5846 = vmatpush1.msra.mxu0 %v5148
    %5847 = vmatprep.subr.mxu0 0.0
    %5848 = vmatpush1.msra.mxu0 %v5149
    %5849 = vmatprep.subr.mxu0 0.0
    %5850 = vmatpush1.msra.mxu0 %v5150
    %5851 = vmatprep.subr.mxu0 0.0
    %5852 = vmatpush1.msra.mxu0 %v5151
    %5853 = vmatprep.subr.mxu0 0.0
    %5854 = vmatpush1.msra.mxu0 %v5152
    %5855 = vmatprep.subr.mxu0 0.0
    %5856 = vmatpush1.msra.mxu0 %v5153
    %5857 = vmatprep.subr.mxu0 0.0
    %5858 = vmatpush1.msra.mxu0 %v5154
    %5859 = vmatprep.subr.mxu0 0.0
    %5860 = vmatpush1.msra.mxu0 %v5155
    %5861 = vmatprep.mubr.f32.mxu0 %v5159
    %5862 = vmatmul.mubr.f32.gmra.mrb[0].mxu0 %v5158
    %v5863 = vpop.f32.mrb[0].mxu0
    %v5864 = vadd.f32 %v5479, %v5863
    %v5865 = vpop.f32.mrb[0].mxu0
    %5866 = vmatprep.mubr.f32.mxu0 %v5163
    %5867 = vmatmul.mubr.f32.gmra.mrb[0].mxu0 %v5162
    %v5868 = vpop.f32.mrb[0].mxu0
    %v5869 = vadd.f32 %v5484, %v5868
    %v5870 = vpop.f32.mrb[0].mxu0
    %5871 = vmatprep.mubr.f32.mxu0 %v5167
    %5872 = vmatmul.mubr.f32.gmra.mrb[0].mxu0 %v5166
    %v5873 = vpop.f32.mrb[0].mxu0
    %v5874 = vadd.f32 %v5489, %v5873
    %v5875 = vpop.f32.mrb[0].mxu0
    %5876 = vmatprep.mubr.f32.mxu0 %v5171
    %5877 = vmatmul.mubr.f32.gmra.mrb[0].mxu0 %v5170
    %v5878 = vpop.f32.mrb[0].mxu0
    %v5879 = vadd.f32 %v5494, %v5878
    %v5880 = vpop.f32.mrb[0].mxu0
    %5881 = vmatprep.mubr.f32.mxu0 %v5175
    %5882 = vmatmul.mubr.f32.gmra.mrb[0].mxu0 %v5174
    %v5883 = vpop.f32.mrb[0].mxu0
    %v5884 = vadd.f32 %v5499, %v5883
    %v5885 = vpop.f32.mrb[0].mxu0
    %5886 = vmatprep.mubr.f32.mxu0 %v5179
    %5887 = vmatmul.mubr.f32.gmra.mrb[0].mxu0 %v5178
    %v5888 = vpop.f32.mrb[0].mxu0
    %v5889 = vadd.f32 %v5504, %v5888
    %v5890 = vpop.f32.mrb[0].mxu0
    %5891 = vmatprep.mubr.f32.mxu0 %v5183
    %5892 = vmatmul.mubr.f32.gmra.mrb[0].mxu0 %v5182
    %v5893 = vpop.f32.mrb[0].mxu0
    %v5894 = vadd.f32 %v5509, %v5893
    %v5895 = vpop.f32.mrb[0].mxu0
    %5896 = vmatprep.mubr.f32.mxu0 %v5187
    %5897 = vmatmul.mubr.f32.gmra.mrb[0].mxu0 %v5186
    %v5898 = vpop.f32.mrb[0].mxu0
    %v5899 = vadd.f32 %v5514, %v5898
    %v5900 = vpop.f32.mrb[0].mxu0
    %5901 = vmatprep.mubr.f32.mxu0 %v5191
    %5902 = vmatmul.mubr.f32.gmra.mrb[0].mxu0 %v5190
    %v5903 = vpop.f32.mrb[0].mxu0
    %v5904 = vadd.f32 %v5519, %v5903
    %v5905 = vpop.f32.mrb[0].mxu0
    %5906 = vmatprep.mubr.f32.mxu0 %v5195
    %5907 = vmatmul.mubr.f32.gmra.mrb[0].mxu0 %v5194
    %v5908 = vpop.f32.mrb[0].mxu0
    %v5909 = vadd.f32 %v5524, %v5908
    %v5910 = vpop.f32.mrb[0].mxu0
    %5911 = vmatprep.mubr.f32.mxu0 %v5199
    %5912 = vmatmul.mubr.f32.gmra.mrb[0].mxu0 %v5198
    %v5913 = vpop.f32.mrb[0].mxu0
    %v5914 = vadd.f32 %v5529, %v5913
    %v5915 = vpop.f32.mrb[0].mxu0
    %5916 = vmatprep.mubr.f32.mxu0 %v5203
    %5917 = vmatmul.mubr.f32.gmra.mrb[0].mxu0 %v5202
    %v5918 = vpop.f32.mrb[0].mxu0
    %v5919 = vadd.f32 %v5534, %v5918
    %v5920 = vpop.f32.mrb[0].mxu0
    %5921 = vmatprep.mubr.f32.mxu0 %v5207
    %5922 = vmatmul.mubr.f32.gmra.mrb[0].mxu0 %v5206
    %v5923 = vpop.f32.mrb[0].mxu0
    %v5924 = vadd.f32 %v5539, %v5923
    %v5925 = vpop.f32.mrb[0].mxu0
    %5926 = vmatprep.mubr.f32.mxu0 %v5211
    %5927 = vmatmul.mubr.f32.gmra.mrb[0].mxu0 %v5210
    %v5928 = vpop.f32.mrb[0].mxu0
    %v5929 = vadd.f32 %v5544, %v5928
    %v5930 = vpop.f32.mrb[0].mxu0
    %5931 = vmatprep.mubr.f32.mxu0 %v5215
    %5932 = vmatmul.mubr.f32.gmra.mrb[0].mxu0 %v5214
    %v5933 = vpop.f32.mrb[0].mxu0
    %v5934 = vadd.f32 %v5549, %v5933
    %v5935 = vpop.f32.mrb[0].mxu0
    %5936 = vmatprep.mubr.f32.mxu0 %v5219
    %5937 = vmatmul.mubr.f32.gmra.mrb[0].mxu0 %v5218
    %v5938 = vpop.f32.mrb[0].mxu0
    %v5939 = vadd.f32 %v5554, %v5938
    %v5940 = vpop.f32.mrb[0].mxu0
    %5941 = vmatprep.mubr.f32.mxu0 %v5223
    %5942 = vmatmul.mubr.f32.gmra.mrb[0].mxu0 %v5222
    %v5943 = vpop.f32.mrb[0].mxu0
    %v5944 = vadd.f32 %v5559, %v5943
    %v5945 = vpop.f32.mrb[0].mxu0
    %5946 = vmatprep.mubr.f32.mxu0 %v5227
    %5947 = vmatmul.mubr.f32.gmra.mrb[0].mxu0 %v5226
    %v5948 = vpop.f32.mrb[0].mxu0
    %v5949 = vadd.f32 %v5564, %v5948
    %v5950 = vpop.f32.mrb[0].mxu0
    %5951 = vmatprep.mubr.f32.mxu0 %v5231
    %5952 = vmatmul.mubr.f32.gmra.mrb[0].mxu0 %v5230
    %v5953 = vpop.f32.mrb[0].mxu0
    %v5954 = vadd.f32 %v5569, %v5953
    %v5955 = vpop.f32.mrb[0].mxu0
    %5956 = vmatprep.mubr.f32.mxu0 %v5235
    %5957 = vmatmul.mubr.f32.gmra.mrb[0].mxu0 %v5234
    %v5958 = vpop.f32.mrb[0].mxu0
    %v5959 = vadd.f32 %v5574, %v5958
    %v5960 = vpop.f32.mrb[0].mxu0
    %5961 = vmatprep.mubr.f32.mxu0 %v5239
    %5962 = vmatmul.mubr.f32.gmra.mrb[0].mxu0 %v5238
    %v5963 = vpop.f32.mrb[0].mxu0
    %v5964 = vadd.f32 %v5579, %v5963
    %v5965 = vpop.f32.mrb[0].mxu0
    %5966 = vmatprep.mubr.f32.mxu0 %v5243
    %5967 = vmatmul.mubr.f32.gmra.mrb[0].mxu0 %v5242
    %v5968 = vpop.f32.mrb[0].mxu0
    %v5969 = vadd.f32 %v5584, %v5968
    %v5970 = vpop.f32.mrb[0].mxu0
    %5971 = vmatprep.mubr.f32.mxu0 %v5247
    %5972 = vmatmul.mubr.f32.gmra.mrb[0].mxu0 %v5246
    %v5973 = vpop.f32.mrb[0].mxu0
    %v5974 = vadd.f32 %v5589, %v5973
    %v5975 = vpop.f32.mrb[0].mxu0
    %5976 = vmatprep.mubr.f32.mxu0 %v5251
    %5977 = vmatmul.mubr.f32.gmra.mrb[0].mxu0 %v5250
    %v5978 = vpop.f32.mrb[0].mxu0
    %v5979 = vadd.f32 %v5594, %v5978
    %v5980 = vpop.f32.mrb[0].mxu0
    %5981 = vmatprep.mubr.f32.mxu0 %v5255
    %5982 = vmatmul.mubr.f32.gmra.mrb[0].mxu0 %v5254
    %v5983 = vpop.f32.mrb[0].mxu0
    %v5984 = vadd.f32 %v5599, %v5983
    %v5985 = vpop.f32.mrb[0].mxu0
    %5986 = vmatprep.mubr.f32.mxu0 %v5259
    %5987 = vmatmul.mubr.f32.gmra.mrb[0].mxu0 %v5258
    %v5988 = vpop.f32.mrb[0].mxu0
    %v5989 = vadd.f32 %v5604, %v5988
    %v5990 = vpop.f32.mrb[0].mxu0
    %5991 = vmatprep.mubr.f32.mxu0 %v5263
    %5992 = vmatmul.mubr.f32.gmra.mrb[0].mxu0 %v5262
    %v5993 = vpop.f32.mrb[0].mxu0
    %v5994 = vadd.f32 %v5609, %v5993
    %v5995 = vpop.f32.mrb[0].mxu0
    %5996 = vmatprep.mubr.f32.mxu0 %v5267
    %5997 = vmatmul.mubr.f32.gmra.mrb[0].mxu0 %v5266
    %v5998 = vpop.f32.mrb[0].mxu0
    %v5999 = vadd.f32 %v5614, %v5998
    %v6000 = vpop.f32.mrb[0].mxu0
    %6001 = vmatprep.mubr.f32.mxu0 %v5271
    %6002 = vmatmul.mubr.f32.gmra.mrb[0].mxu0 %v5270
    %v6003 = vpop.f32.mrb[0].mxu0
    %v6004 = vadd.f32 %v5619, %v6003
    %v6005 = vpop.f32.mrb[0].mxu0
    %6006 = vmatprep.mubr.f32.mxu0 %v5275
    %6007 = vmatmul.mubr.f32.gmra.mrb[0].mxu0 %v5274
    %v6008 = vpop.f32.mrb[0].mxu0
    %v6009 = vadd.f32 %v5624, %v6008
    %v6010 = vpop.f32.mrb[0].mxu0
    %6011 = vmatprep.mubr.f32.mxu0 %v5279
    %6012 = vmatmul.mubr.f32.gmra.mrb[0].mxu0 %v5278
    %v6013 = vpop.f32.mrb[0].mxu0
    %v6014 = vadd.f32 %v5629, %v6013
    %v6015 = vpop.f32.mrb[0].mxu0
    %6016 = vmatprep.mubr.f32.mxu0 %v5283
    %6017 = vmatmul.mubr.f32.gmra.mrb[0].mxu0 %v5282
    %v6018 = vpop.f32.mrb[0].mxu0
    %v6019 = vadd.f32 %v5634, %v6018
    %v6020 = vpop.f32.mrb[0].mxu0
    %6021 = vmatprep.mubr.f32.mxu0 %v5287
    %6022 = vmatmul.mubr.f32.gmra.mrb[0].mxu0 %v5286
    %v6023 = vpop.f32.mrb[0].mxu0
    %v6024 = vadd.f32 %v5639, %v6023
    %v6025 = vpop.f32.mrb[0].mxu0
    %6026 = vmatprep.mubr.f32.mxu0 %v5291
    %6027 = vmatmul.mubr.f32.gmra.mrb[0].mxu0 %v5290
    %v6028 = vpop.f32.mrb[0].mxu0
    %v6029 = vadd.f32 %v5644, %v6028
    %v6030 = vpop.f32.mrb[0].mxu0
    %6031 = vmatprep.mubr.f32.mxu0 %v5295
    %6032 = vmatmul.mubr.f32.gmra.mrb[0].mxu0 %v5294
    %v6033 = vpop.f32.mrb[0].mxu0
    %v6034 = vadd.f32 %v5649, %v6033
    %v6035 = vpop.f32.mrb[0].mxu0
    %6036 = vmatprep.mubr.f32.mxu0 %v5299
    %6037 = vmatmul.mubr.f32.gmra.mrb[0].mxu0 %v5298
    %v6038 = vpop.f32.mrb[0].mxu0
    %v6039 = vadd.f32 %v5654, %v6038
    %v6040 = vpop.f32.mrb[0].mxu0
    %6041 = vmatprep.mubr.f32.mxu0 %v5303
    %6042 = vmatmul.mubr.f32.gmra.mrb[0].mxu0 %v5302
    %v6043 = vpop.f32.mrb[0].mxu0
    %v6044 = vadd.f32 %v5659, %v6043
    %v6045 = vpop.f32.mrb[0].mxu0
    %6046 = vmatprep.mubr.f32.mxu0 %v5307
    %6047 = vmatmul.mubr.f32.gmra.mrb[0].mxu0 %v5306
    %v6048 = vpop.f32.mrb[0].mxu0
    %v6049 = vadd.f32 %v5664, %v6048
    %v6050 = vpop.f32.mrb[0].mxu0
    %6051 = vmatprep.mubr.f32.mxu0 %v5311
    %6052 = vmatmul.mubr.f32.gmra.mrb[0].mxu0 %v5310
    %v6053 = vpop.f32.mrb[0].mxu0
    %v6054 = vadd.f32 %v5669, %v6053
    %v6055 = vpop.f32.mrb[0].mxu0
    %6056 = vmatprep.mubr.f32.mxu0 %v5315
    %6057 = vmatmul.mubr.f32.gmra.mrb[0].mxu0 %v5314
    %v6058 = vpop.f32.mrb[0].mxu0
    %v6059 = vadd.f32 %v5674, %v6058
    %v6060 = vpop.f32.mrb[0].mxu0
    %6061 = vmatprep.mubr.f32.mxu0 %v5319
    %6062 = vmatmul.mubr.f32.gmra.mrb[0].mxu0 %v5318
    %v6063 = vpop.f32.mrb[0].mxu0
    %v6064 = vadd.f32 %v5679, %v6063
    %v6065 = vpop.f32.mrb[0].mxu0
    %6066 = vmatprep.mubr.f32.mxu0 %v5323
    %6067 = vmatmul.mubr.f32.gmra.mrb[0].mxu0 %v5322
    %v6068 = vpop.f32.mrb[0].mxu0
    %v6069 = vadd.f32 %v5684, %v6068
    %v6070 = vpop.f32.mrb[0].mxu0
    %6071 = vmatprep.mubr.f32.mxu0 %v5327
    %6072 = vmatmul.mubr.f32.gmra.mrb[0].mxu0 %v5326
    %v6073 = vpop.f32.mrb[0].mxu0
    %v6074 = vadd.f32 %v5689, %v6073
    %v6075 = vpop.f32.mrb[0].mxu0
    %6076 = vmatprep.mubr.f32.mxu0 %v5331
    %6077 = vmatmul.mubr.f32.gmra.mrb[0].mxu0 %v5330
    %v6078 = vpop.f32.mrb[0].mxu0
    %v6079 = vadd.f32 %v5694, %v6078
    %v6080 = vpop.f32.mrb[0].mxu0
    %6081 = vmatprep.mubr.f32.mxu0 %v5335
    %6082 = vmatmul.mubr.f32.gmra.mrb[0].mxu0 %v5334
    %v6083 = vpop.f32.mrb[0].mxu0
    %v6084 = vadd.f32 %v5699, %v6083
    %v6085 = vpop.f32.mrb[0].mxu0
    %6086 = vmatprep.mubr.f32.mxu0 %v5339
    %6087 = vmatmul.mubr.f32.gmra.mrb[0].mxu0 %v5338
    %v6088 = vpop.f32.mrb[0].mxu0
    %v6089 = vadd.f32 %v5704, %v6088
    %v6090 = vpop.f32.mrb[0].mxu0
    %6091 = vmatprep.mubr.f32.mxu0 %v5343
    %6092 = vmatmul.mubr.f32.gmra.mrb[0].mxu0 %v5342
    %v6093 = vpop.f32.mrb[0].mxu0
    %v6094 = vadd.f32 %v5709, %v6093
    %v6095 = vpop.f32.mrb[0].mxu0
    %6096 = vmatprep.mubr.f32.mxu0 %v5347
    %6097 = vmatmul.mubr.f32.gmra.mrb[0].mxu0 %v5346
    %v6098 = vpop.f32.mrb[0].mxu0
    %v6099 = vadd.f32 %v5714, %v6098
    %v6100 = vpop.f32.mrb[0].mxu0
    %6101 = vmatprep.mubr.f32.mxu0 %v5351
    %6102 = vmatmul.mubr.f32.gmra.mrb[0].mxu0 %v5350
    %v6103 = vpop.f32.mrb[0].mxu0
    %v6104 = vadd.f32 %v5719, %v6103
    %v6105 = vpop.f32.mrb[0].mxu0
    %6106 = vmatprep.mubr.f32.mxu0 %v5355
    %6107 = vmatmul.mubr.f32.gmra.mrb[0].mxu0 %v5354
    %v6108 = vpop.f32.mrb[0].mxu0
    %v6109 = vadd.f32 %v5724, %v6108
    %v6110 = vpop.f32.mrb[0].mxu0
    %6111 = vmatprep.mubr.f32.mxu0 %v5359
    %6112 = vmatmul.mubr.f32.gmra.mrb[0].mxu0 %v5358
    %v6113 = vpop.f32.mrb[0].mxu0
    %v6114 = vadd.f32 %v5729, %v6113
    %v6115 = vpop.f32.mrb[0].mxu0
    %6116 = vmatprep.mubr.f32.mxu0 %v5363
    %6117 = vmatmul.mubr.f32.gmra.mrb[0].mxu0 %v5362
    %v6118 = vpop.f32.mrb[0].mxu0
    %v6119 = vadd.f32 %v5734, %v6118
    %v6120 = vpop.f32.mrb[0].mxu0
    %6121 = vmatprep.mubr.f32.mxu0 %v5367
    %6122 = vmatmul.mubr.f32.gmra.mrb[0].mxu0 %v5366
    %v6123 = vpop.f32.mrb[0].mxu0
    %v6124 = vadd.f32 %v5739, %v6123
    %v6125 = vpop.f32.mrb[0].mxu0
    %6126 = vmatprep.mubr.f32.mxu0 %v5371
    %6127 = vmatmul.mubr.f32.gmra.mrb[0].mxu0 %v5370
    %v6128 = vpop.f32.mrb[0].mxu0
    %v6129 = vadd.f32 %v5744, %v6128
    %v6130 = vpop.f32.mrb[0].mxu0
    %6131 = vmatprep.mubr.f32.mxu0 %v5375
    %6132 = vmatmul.mubr.f32.gmra.mrb[0].mxu0 %v5374
    %v6133 = vpop.f32.mrb[0].mxu0
    %v6134 = vadd.f32 %v5749, %v6133
    %v6135 = vpop.f32.mrb[0].mxu0
    %6136 = vmatprep.mubr.f32.mxu0 %v5379
    %6137 = vmatmul.mubr.f32.gmra.mrb[0].mxu0 %v5378
    %v6138 = vpop.f32.mrb[0].mxu0
    %v6139 = vadd.f32 %v5754, %v6138
    %v6140 = vpop.f32.mrb[0].mxu0
    %6141 = vmatprep.mubr.f32.mxu0 %v5383
    %6142 = vmatmul.mubr.f32.gmra.mrb[0].mxu0 %v5382
    %v6143 = vpop.f32.mrb[0].mxu0
    %v6144 = vadd.f32 %v5759, %v6143
    %v6145 = vpop.f32.mrb[0].mxu0
    %6146 = vmatprep.mubr.f32.mxu0 %v5387
    %6147 = vmatmul.mubr.f32.gmra.mrb[0].mxu0 %v5386
    %v6148 = vpop.f32.mrb[0].mxu0
    %v6149 = vadd.f32 %v5764, %v6148
    %v6150 = vpop.f32.mrb[0].mxu0
    %6151 = vmatprep.mubr.f32.mxu0 %v5391
    %6152 = vmatmul.mubr.f32.gmra.mrb[0].mxu0 %v5390
    %v6153 = vpop.f32.mrb[0].mxu0
    %v6154 = vadd.f32 %v5769, %v6153
    %v6155 = vpop.f32.mrb[0].mxu0
    %6156 = vmatprep.mubr.f32.mxu0 %v5395
    %6157 = vmatmul.mubr.f32.gmra.mrb[0].mxu0 %v5394
    %v6158 = vpop.f32.mrb[0].mxu0
    %v6159 = vadd.f32 %v5774, %v6158
    %v6160 = vpop.f32.mrb[0].mxu0
    %6161 = vmatprep.mubr.f32.mxu0 %v5399
    %6162 = vmatmul.mubr.f32.gmra.mrb[0].mxu0 %v5398
    %v6163 = vpop.f32.mrb[0].mxu0
    %v6164 = vadd.f32 %v5779, %v6163
    %v6165 = vpop.f32.mrb[0].mxu0
    %6166 = vmatprep.mubr.f32.mxu0 %v5403
    %6167 = vmatmul.mubr.f32.gmra.mrb[0].mxu0 %v5402
    %v6168 = vpop.f32.mrb[0].mxu0
    %v6169 = vadd.f32 %v5784, %v6168
    %v6170 = vpop.f32.mrb[0].mxu0
    %6171 = vmatprep.mubr.f32.mxu0 %v5407
    %6172 = vmatmul.mubr.f32.gmra.mrb[0].mxu0 %v5406
    %v6173 = vpop.f32.mrb[0].mxu0
    %v6174 = vadd.f32 %v5789, %v6173
    %v6175 = vpop.f32.mrb[0].mxu0
    %6176 = vmatprep.mubr.f32.mxu0 %v5411
    %6177 = vmatmul.mubr.f32.gmra.mrb[0].mxu0 %v5410
    %v6178 = vpop.f32.mrb[0].mxu0
    %v6179 = vadd.f32 %v5794, %v6178
    %v6180 = vpop.f32.mrb[0].mxu0
    %6181 = vdwg.mxu0
    %vm6182 = vcmask 23552
    %6183 = vst.msk [vmem:[%s17] sm:$0xff] %vm6182, %v5864
    %6184 = vst.msk [vmem:[%s17 + $0x8] sm:$0xff] %vm6182, %v5869
    %6185 = vst.msk [vmem:[%s17 + $0x10] sm:$0xff] %vm6182, %v5874
    %6186 = vst.msk [vmem:[%s17 + $0x18] sm:$0xff] %vm6182, %v5879
    %6187 = vst.msk [vmem:[%s17 + $0x20] sm:$0xff] %vm6182, %v5884
    %6188 = vst.msk [vmem:[%s17 + $0x28] sm:$0xff] %vm6182, %v5889
    %6189 = vst.msk [vmem:[%s17 + $0x30] sm:$0xff] %vm6182, %v5894
    %6190 = vst.msk [vmem:[%s17 + $0x38] sm:$0xff] %vm6182, %v5899
    %6191 = vst.msk [vmem:[%s17 + $0x40] sm:$0xff] %vm6182, %v5904
    %6192 = vst.msk [vmem:[%s17 + $0x48] sm:$0xff] %vm6182, %v5909
    %6193 = vst.msk [vmem:[%s17 + $0x50] sm:$0xff] %vm6182, %v5914
    %6194 = vst.msk [vmem:[%s17 + $0x58] sm:$0xff] %vm6182, %v5919
    %6195 = vst.msk [vmem:[%s17 + $0x60] sm:$0xff] %vm6182, %v5924
    %6196 = vst.msk [vmem:[%s17 + $0x68] sm:$0xff] %vm6182, %v5929
    %6197 = vst.msk [vmem:[%s17 + $0x70] sm:$0xff] %vm6182, %v5934
    %6198 = vst.msk [vmem:[%s17 + $0x78] sm:$0xff] %vm6182, %v5939
    %6199 = vst.msk [vmem:[%s17 + $0x80] sm:$0xff] %vm6182, %v5944
    %6200 = vst.msk [vmem:[%s17 + $0x88] sm:$0xff] %vm6182, %v5949
    %6201 = vst.msk [vmem:[%s17 + $0x90] sm:$0xff] %vm6182, %v5954
    %6202 = vst.msk [vmem:[%s17 + $0x98] sm:$0xff] %vm6182, %v5959
    %6203 = vst.msk [vmem:[%s17 + $0xa0] sm:$0xff] %vm6182, %v5964
    %6204 = vst.msk [vmem:[%s17 + $0xa8] sm:$0xff] %vm6182, %v5969
    %6205 = vst.msk [vmem:[%s17 + $0xb0] sm:$0xff] %vm6182, %v5974
    %6206 = vst.msk [vmem:[%s17 + $0xb8] sm:$0xff] %vm6182, %v5979
    %6207 = vst.msk [vmem:[%s17 + $0xc0] sm:$0xff] %vm6182, %v5984
    %6208 = vst.msk [vmem:[%s17 + $0xc8] sm:$0xff] %vm6182, %v5989
    %6209 = vst.msk [vmem:[%s17 + $0xd0] sm:$0xff] %vm6182, %v5994
    %6210 = vst.msk [vmem:[%s17 + $0xd8] sm:$0xff] %vm6182, %v5999
    %6211 = vst.msk [vmem:[%s17 + $0xe0] sm:$0xff] %vm6182, %v6004
    %6212 = vst.msk [vmem:[%s17 + $0xe8] sm:$0xff] %vm6182, %v6009
    %6213 = vst.msk [vmem:[%s17 + $0xf0] sm:$0xff] %vm6182, %v6014
    %6214 = vst.msk [vmem:[%s17 + $0xf8] sm:$0xff] %vm6182, %v6019
    %6215 = vst.msk [vmem:[%s17 + $0x100] sm:$0xff] %vm6182, %v6024
    %6216 = vst.msk [vmem:[%s17 + $0x108] sm:$0xff] %vm6182, %v6029
    %6217 = vst.msk [vmem:[%s17 + $0x110] sm:$0xff] %vm6182, %v6034
    %6218 = vst.msk [vmem:[%s17 + $0x118] sm:$0xff] %vm6182, %v6039
    %6219 = vst.msk [vmem:[%s17 + $0x120] sm:$0xff] %vm6182, %v6044
    %6220 = vst.msk [vmem:[%s17 + $0x128] sm:$0xff] %vm6182, %v6049
    %6221 = vst.msk [vmem:[%s17 + $0x130] sm:$0xff] %vm6182, %v6054
    %6222 = vst.msk [vmem:[%s17 + $0x138] sm:$0xff] %vm6182, %v6059
    %6223 = vst.msk [vmem:[%s17 + $0x140] sm:$0xff] %vm6182, %v6064
    %6224 = vst.msk [vmem:[%s17 + $0x148] sm:$0xff] %vm6182, %v6069
    %6225 = vst.msk [vmem:[%s17 + $0x150] sm:$0xff] %vm6182, %v6074
    %6226 = vst.msk [vmem:[%s17 + $0x158] sm:$0xff] %vm6182, %v6079
    %6227 = vst.msk [vmem:[%s17 + $0x160] sm:$0xff] %vm6182, %v6084
    %6228 = vst.msk [vmem:[%s17 + $0x168] sm:$0xff] %vm6182, %v6089
    %6229 = vst.msk [vmem:[%s17 + $0x170] sm:$0xff] %vm6182, %v6094
    %6230 = vst.msk [vmem:[%s17 + $0x178] sm:$0xff] %vm6182, %v6099
    %6231 = vst.msk [vmem:[%s17 + $0x180] sm:$0xff] %vm6182, %v6104
    %6232 = vst.msk [vmem:[%s17 + $0x188] sm:$0xff] %vm6182, %v6109
    %6233 = vst.msk [vmem:[%s17 + $0x190] sm:$0xff] %vm6182, %v6114
    %6234 = vst.msk [vmem:[%s17 + $0x198] sm:$0xff] %vm6182, %v6119
    %6235 = vst.msk [vmem:[%s17 + $0x1a0] sm:$0xff] %vm6182, %v6124
    %6236 = vst.msk [vmem:[%s17 + $0x1a8] sm:$0xff] %vm6182, %v6129
    %6237 = vst.msk [vmem:[%s17 + $0x1b0] sm:$0xff] %vm6182, %v6134
    %6238 = vst.msk [vmem:[%s17 + $0x1b8] sm:$0xff] %vm6182, %v6139
    %6239 = vst.msk [vmem:[%s17 + $0x1c0] sm:$0xff] %vm6182, %v6144
    %6240 = vst.msk [vmem:[%s17 + $0x1c8] sm:$0xff] %vm6182, %v6149
    %6241 = vst.msk [vmem:[%s17 + $0x1d0] sm:$0xff] %vm6182, %v6154
    %6242 = vst.msk [vmem:[%s17 + $0x1d8] sm:$0xff] %vm6182, %v6159
    %6243 = vst.msk [vmem:[%s17 + $0x1e0] sm:$0xff] %vm6182, %v6164
    %6244 = vst.msk [vmem:[%s17 + $0x1e8] sm:$0xff] %vm6182, %v6169
    %6245 = vst.msk [vmem:[%s17 + $0x1f0] sm:$0xff] %vm6182, %v6174
    %6246 = vst.msk [vmem:[%s17 + $0x1f8] sm:$0xff] %vm6182, %v6179
    // Predicated region
    $region86: #{generator_forward.1} parent=1 // pred_check
      _
    $region87: #{generator_forward.1} parent=1 // pred_check_branch
      %6248 = sbr.rel (0) target = $region89
    $region88: #{generator_forward.1} parent=1 // pred_region
      _
    $region89: #{generator_forward.1} parent=1 // pred_fallthru
      _
    // Predicated region
    $region90: #{generator_forward.1} parent=1 // pred_check
      _
    $region91: #{generator_forward.1} parent=1 // pred_check_branch
      %6250 = sbr.rel (0) target = $region93
    $region92: #{generator_forward.1} parent=1 // pred_region
      _
    $region93: #{generator_forward.1} parent=1 // pred_fallthru
      _
    %6251 = vsyncpa [#allocation3], 1
    %6252 = vsyncpa [#allocation5], 1
    %6253 = vsyncpa [#allocation8], 1

</llo_original>
